<compile_context>
chip_gen: v7x
topology: tpu7x:2x2x1
jax: 0.10.0
libtpu: 0.0.40
codegen_flags: <defaults>
</compile_context>

<pallas_src>
import functools

import jax
import jax.numpy as jnp
from jax import lax
from jax.experimental import pallas as pl
from jax.experimental.pallas import tpu as pltpu

_BN_EPS = 1e-5
_LANES = 128


def _slab(c):
    """Channel slab width: smallest multiple of 128 lanes covering c."""
    return max(_LANES, ((c + _LANES - 1) // _LANES) * _LANES)


def _vmem_limit_bytes():
    # Generation-aware scoped-VMEM budget (v7x: 64 MiB/TC, v5e/v6e: 128 MiB).
    try:
        cap = int(pltpu.get_tpu_info().vmem_capacity_bytes)
        if cap <= 0:
            raise ValueError("bad vmem capacity")
        return int(min(cap * 3 // 4, 96 * 1024 * 1024))
    except Exception:
        return 32 * 1024 * 1024


def _cparams(*semantics):
    return pltpu.CompilerParams(dimension_semantics=tuple(semantics),
                                vmem_limit_bytes=_vmem_limit_bytes())


def _row_tile(m):
    # Largest lane-dense row tile <= 2048 that divides the row count: the
    # elementwise / 1x1-matmul passes are HBM-bound, so bigger tiles amortize
    # per-grid-step overhead and approach the HBM roofline.
    for t in (2048, 1024, 512, 256, 128, 64, 32, 16, 8):
        if m % t == 0:
            return t
    raise ValueError(f"row count {m} must be a multiple of 8")


def _bn_coeffs(sum_v, sq_v, g_v, b_v, inv_n):
    """Per-channel affine (scale, shift) for train-mode BN from sum / sum-of-squares."""
    mu = sum_v * inv_n
    var = sq_v * inv_n - mu * mu            # one-pass biased variance
    inv = lax.rsqrt(var + _BN_EPS)
    scale = g_v * inv
    shift = b_v - mu * scale
    return scale, shift


def _reduce_partials(st_partials, gb, inv_n):
    """Reduce (T, 2, C) partial stats and combine with packed (2, C) gamma/beta."""
    st = jnp.sum(st_partials, axis=0)        # (2, C)
    return _bn_coeffs(st[0:1, :], st[1:2, :], gb[0:1, :], gb[1:2, :], inv_n)


# ----------------------------- Pallas kernels ------------------------------ #

def _conv1x1_stats_kernel(x_ref, w_ref, y_ref, st_ref):
    """1x1 conv as bf16 MXU matmul; emit this tile's bn partial stats (2, C)."""
    y = jnp.dot(x_ref[...], w_ref[...], preferred_element_type=jnp.float32)
    y_ref[...] = y.astype(y_ref.dtype)
    st_ref[0:1, :] = jnp.sum(y, axis=0, keepdims=True)
    st_ref[1:2, :] = jnp.sum(y * y, axis=0, keepdims=True)


def _conv3x3_fused_kernel(h, w, inv_n, y1_ref, s1_ref, gb1_ref, w2_ref,
                          y2_ref, st_ref, pad_m, pad_0, pad_p):
    """Fused bn1+relu + zero-padding + 3x3 conv (stride 1) + bn2 partial stats.

    One image per grid step.  The activation is written into three vertically
    zero-padded VMEM buffers (one per horizontal tap offset); each of the 9 taps
    is then an MXU matmul whose LHS is a contiguous, sublane-aligned slice."""
    hw = h * w
    cm = y1_ref.shape[-1]

    # bn1 affine from the conv1 pass's per-tile partial stats.
    scale, shift = _reduce_partials(s1_ref[...], gb1_ref[...], inv_n)
    a = jnp.maximum(y1_ref[...].astype(jnp.float32) * scale + shift, 0.0)
    a = a.astype(jnp.bfloat16)                                   # (hw, cm)

    # Zero the vertical padding rows every step (cheap, megacore-safe).
    zrow = jnp.zeros((w, cm), jnp.bfloat16)
    for buf in (pad_m, pad_0, pad_p):
        buf[pl.ds(0, w), :] = zrow                               # top pad rows
        buf[pl.ds((h + 1) * w, w), :] = zrow                     # bottom pad rows
    pad_0[pl.ds(w, hw), :] = a                                   # dw = 0

    # Horizontal tap offsets: slices of the padded dw=0 buffer with the
    # image-row-boundary columns masked to zero.
    col = lax.broadcasted_iota(jnp.int32, (hw, cm), 0) % w
    right = pad_0[pl.ds(w + 1, hw), :]                           # a[i, j+1]
    pad_p[pl.ds(w, hw), :] = jnp.where(col != (w - 1), right, jnp.zeros_like(right))
    left = pad_0[pl.ds(w - 1, hw), :]                            # a[i, j-1]
    pad_m[pl.ds(w, hw), :] = jnp.where(col != 0, left, jnp.zeros_like(left))

    # 3x3 conv = 9 MXU matmuls; every LHS slice starts at kh*w (sublane aligned
    # when w % 8 == 0) and the vertical zero pads provide the dh = +/-1 borders.
    # TODO(synk): tile along h (bounded f32 accumulator + deeper pipeline) for
    # real resolutions (56x56+); whole-image accumulation is fine at demo sizes.
    bufs = (pad_m, pad_0, pad_p)
    acc = jnp.zeros((hw, cm), jnp.float32)
    for kh in range(3):
        for kw in range(3):
            lhs = bufs[kw][pl.ds(kh * w, hw), :]
            acc = acc + jnp.dot(lhs, w2_ref[kh * 3 + kw],
                                preferred_element_type=jnp.float32)

    y2_ref[...] = acc.astype(y2_ref.dtype)
    st_ref[0:1, :] = jnp.sum(acc, axis=0, keepdims=True)
    st_ref[1:2, :] = jnp.sum(acc * acc, axis=0, keepdims=True)


def _bn_relu_conv1x1_stats_kernel(inv_n, x_ref, s2_ref, gb2_ref, w_ref, y_ref, st_ref):
    """Fused bn2+relu (from per-image partial stats) -> conv3 (1x1) -> bn3 partial stats."""
    scale, shift = _reduce_partials(s2_ref[...], gb2_ref[...], inv_n)
    xn = jnp.maximum(x_ref[...].astype(jnp.float32) * scale + shift, 0.0)
    y = jnp.dot(xn.astype(jnp.bfloat16), w_ref[...], preferred_element_type=jnp.float32)
    y_ref[...] = y.astype(y_ref.dtype)
    st_ref[0:1, :] = jnp.sum(y, axis=0, keepdims=True)
    st_ref[1:2, :] = jnp.sum(y * y, axis=0, keepdims=True)


def _bn_add_relu_kernel(inv_n, y_ref, s3_ref, gb3_ref, r_ref, o_ref):
    """Fused bn3 + identity residual add + ReLU; lane-dense (tm, slab) store."""
    scale, shift = _reduce_partials(s3_ref[...], gb3_ref[...], inv_n)
    y = y_ref[...].astype(jnp.float32) * scale + shift
    z = y + r_ref[...].astype(jnp.float32)
    o_ref[...] = jnp.maximum(z, 0.0)


# ------------------------------ pallas_call glue ---------------------------- #

def _conv1_pass(xb, w1p, tm):
    m, s_in = xb.shape
    s_mid = w1p.shape[1]
    t = m // tm
    return pl.pallas_call(
        _conv1x1_stats_kernel,
        grid=(t,),
        in_specs=[pl.BlockSpec((tm, s_in), lambda i: (i, 0)),
                  pl.BlockSpec((s_in, s_mid), lambda i: (0, 0))],
        out_specs=(pl.BlockSpec((tm, s_mid), lambda i: (i, 0)),
                   pl.BlockSpec((None, 2, s_mid), lambda i: (i, 0, 0))),
        out_shape=(jax.ShapeDtypeStruct((m, s_mid), jnp.bfloat16),
                   jax.ShapeDtypeStruct((t, 2, s_mid), jnp.float32)),
        compiler_params=_cparams("parallel"),
    )(xb, w1p)


def _conv2_pass(y1raw, st1, gb1, w2p, n, h, w):
    hw = h * w
    s_mid = y1raw.shape[-1]
    t1 = st1.shape[0]
    return pl.pallas_call(
        functools.partial(_conv3x3_fused_kernel, h, w, 1.0 / (n * hw)),
        grid=(n,),
        in_specs=[pl.BlockSpec((None, hw, s_mid), lambda i: (i, 0, 0)),
                  pl.BlockSpec((t1, 2, s_mid), lambda i: (0, 0, 0)),
                  pl.BlockSpec((2, s_mid), lambda i: (0, 0)),
                  pl.BlockSpec((9, s_mid, s_mid), lambda i: (0, 0, 0))],
        out_specs=(pl.BlockSpec((None, hw, s_mid), lambda i: (i, 0, 0)),
                   pl.BlockSpec((None, 2, s_mid), lambda i: (i, 0, 0))),
        out_shape=(jax.ShapeDtypeStruct((n, hw, s_mid), jnp.bfloat16),
                   jax.ShapeDtypeStruct((n, 2, s_mid), jnp.float32)),
        scratch_shapes=[pltpu.VMEM(((h + 2) * w, s_mid), jnp.bfloat16),
                        pltpu.VMEM(((h + 2) * w, s_mid), jnp.bfloat16),
                        pltpu.VMEM(((h + 2) * w, s_mid), jnp.bfloat16)],
        compiler_params=_cparams("parallel"),
    )(y1raw, st1, gb1, w2p)


def _bn_relu_conv3_pass(y2raw, st2, gb2, w3p, tm, n_rows):
    m, s_mid = y2raw.shape
    s_out = w3p.shape[1]
    npart = st2.shape[0]
    t = m // tm
    return pl.pallas_call(
        functools.partial(_bn_relu_conv1x1_stats_kernel, 1.0 / n_rows),
        grid=(t,),
        in_specs=[pl.BlockSpec((tm, s_mid), lambda i: (i, 0)),
                  pl.BlockSpec((npart, 2, s_mid), lambda i: (0, 0, 0)),
                  pl.BlockSpec((2, s_mid), lambda i: (0, 0)),
                  pl.BlockSpec((s_mid, s_out), lambda i: (0, 0))],
        out_specs=(pl.BlockSpec((tm, s_out), lambda i: (i, 0)),
                   pl.BlockSpec((None, 2, s_out), lambda i: (i, 0, 0))),
        out_shape=(jax.ShapeDtypeStruct((m, s_out), jnp.bfloat16),
                   jax.ShapeDtypeStruct((t, 2, s_out), jnp.float32)),
        compiler_params=_cparams("parallel"),
    )(y2raw, st2, gb2, w3p)


def _bn_add_relu_pass(y3raw, st3, gb3, resid, tm, n_rows):
    m, s_out = y3raw.shape
    tpart = st3.shape[0]
    t = m // tm
    return pl.pallas_call(
        functools.partial(_bn_add_relu_kernel, 1.0 / n_rows),
        grid=(t,),
        in_specs=[pl.BlockSpec((tm, s_out), lambda i: (i, 0)),
                  pl.BlockSpec((tpart, 2, s_out), lambda i: (0, 0, 0)),
                  pl.BlockSpec((2, s_out), lambda i: (0, 0)),
                  pl.BlockSpec((tm, s_out), lambda i: (i, 0))],
        out_specs=pl.BlockSpec((tm, s_out), lambda i: (i, 0)),
        out_shape=jax.ShapeDtypeStruct((m, s_out), jnp.float32),
        compiler_params=_cparams("parallel"),
    )(y3raw, st3, gb3, resid)


# ------------------------------- parameters --------------------------------- #

def init_params(key, inplanes, planes):
    """f32 parameters in PyTorch layouts (freshly-constructed-module style)."""
    ks = jax.random.split(key, 9)
    return dict(
        w1=0.1 * jax.random.normal(ks[0], (inplanes, planes), jnp.float32),        # conv1 (Cin, Cout)
        w2=0.1 * jax.random.normal(ks[1], (planes, planes, 3, 3), jnp.float32),    # conv2 (Cout, Cin, kh, kw)
        w3=0.1 * jax.random.normal(ks[2], (planes, planes * 4), jnp.float32),      # conv3 (Cin, Cout)
        g1=1.0 + 0.1 * jax.random.normal(ks[3], (planes,), jnp.float32),
        b1=0.1 * jax.random.normal(ks[4], (planes,), jnp.float32),
        g2=1.0 + 0.1 * jax.random.normal(ks[5], (planes,), jnp.float32),
        b2=0.1 * jax.random.normal(ks[6], (planes,), jnp.float32),
        g3=1.0 + 0.1 * jax.random.normal(ks[7], (planes * 4,), jnp.float32),
        b3=0.1 * jax.random.normal(ks[8], (planes * 4,), jnp.float32),
    )


def _prepare_kernel_params(params):
    """Pad channel dims to 128-multiple lane slabs, cast weights to bf16, pack gamma/beta."""
    cin, planes = params["w1"].shape
    cout = params["w3"].shape[1]
    s_in, s_mid, s_out = _slab(cin), _slab(planes), _slab(cout)

    def pad2(a, r, c):
        return jnp.zeros((r, c), jnp.float32).at[:a.shape[0], :a.shape[1]].set(a)

    def gb(g, b, s):
        out = jnp.zeros((2, s), jnp.float32)
        return out.at[0, :g.shape[0]].set(g).at[1, :b.shape[0]].set(b)

    w2t = jnp.transpose(params["w2"], (2, 3, 1, 0)).reshape(9, planes, planes)     # (tap, Cin, Cout)
    w2p = jnp.zeros((9, s_mid, s_mid), jnp.float32).at[:, :planes, :planes].set(w2t)
    return dict(
        s_in=s_in, s_mid=s_mid, s_out=s_out,
        w1p=pad2(params["w1"], s_in, s_mid).astype(jnp.bfloat16),
        w2p=w2p.astype(jnp.bfloat16),
        w3p=pad2(params["w3"], s_mid, s_out).astype(jnp.bfloat16),
        gb1=gb(params["g1"], params["b1"], s_mid),
        gb2=gb(params["g2"], params["b2"], s_mid),
        gb3=gb(params["g3"], params["b3"], s_out),
    )


# -------------------------------- forward ----------------------------------- #

def bottleneck_forward(x_nchw, params, stride=1):
    cin, planes = params["w1"].shape
    cout = params["w3"].shape[1]
    if stride != 1 or cin != cout:
        # TODO(synk): `downsample` is an arbitrary caller-supplied nn.Module; only the
        # identity-residual (downsample=None, stride=1) path of the reference forward
        # is implemented here.
        raise NotImplementedError("identity residual requires stride=1 and inplanes == 4*planes")

    kp = _prepare_kernel_params(params)
    s_in, s_mid, s_out = kp["s_in"], kp["s_mid"], kp["s_out"]

    # TODO(synk): at a network boundary only; chained blocks should keep the
    # lane-padded bf16 NHWC slab between them to avoid these HBM-sized passes.
    x = jnp.transpose(x_nchw, (0, 2, 3, 1))                        # NHWC
    n, h, w, _ = x.shape
    hw = h * w
    m = n * hw
    tm = _row_tile(m)

    xb = jnp.pad(x.reshape(m, cin).astype(jnp.bfloat16), ((0, 0), (0, s_in - cin)))

    # conv1 (1x1) + bn1 partial stats (row-tiled, parallel grid)
    y1raw, st1 = _conv1_pass(xb, kp["w1p"], tm)
    # fused bn1+relu + zero-pad + conv2 (3x3, pad=1) + bn2 partial stats (per image)
    y2raw, st2 = _conv2_pass(y1raw.reshape(n, hw, s_mid), st1, kp["gb1"], kp["w2p"], n, h, w)
    # fused bn2+relu + conv3 (1x1) + bn3 partial stats (row-tiled)
    y3raw, st3 = _bn_relu_conv3_pass(y2raw.reshape(m, s_mid), st2, kp["gb2"], kp["w3p"], tm, m)
    # fused bn3 + identity residual add + relu (lane-dense store)
    out_pad = _bn_add_relu_pass(y3raw, st3, kp["gb3"], xb, tm, m)

    out = out_pad[:, :cout].reshape(n, h, w, cout)
    return jnp.transpose(out, (0, 3, 1, 2))                        # back to NCHW f32


# --------------------------- pure-JAX reference ------------------------------ #

def _reference_forward(x_nchw, params):
    """Independent reference (XLA conv/matmul) mirroring the kernel's bf16 handoffs."""
    rnd = lambda a: a.astype(jnp.bfloat16).astype(jnp.float32)
    hi = lax.Precision.HIGHEST
    x = jnp.transpose(x_nchw, (0, 2, 3, 1)).astype(jnp.float32)
    n, h, w, cin = x.shape
    planes = params["w1"].shape[1]

    def bn_apply(y_q, y_stat, g, b):
        mu = jnp.mean(y_stat, axis=0)
        var = jnp.mean(y_stat * y_stat, axis=0) - mu * mu
        scale = g * lax.rsqrt(var + _BN_EPS)
        shift = b - mu * scale
        return y_q * scale + shift

    xf = rnd(x.reshape(-1, cin))
    y1 = jnp.dot(xf, rnd(params["w1"]), precision=hi)
    y1n = rnd(jnp.maximum(bn_apply(rnd(y1), y1, params["g1"], params["b1"]), 0.0))
    w2_hwio = rnd(jnp.transpose(params["w2"], (2, 3, 1, 0)))
    y2 = lax.conv_general_dilated(
        y1n.reshape(n, h, w, planes), w2_hwio, window_strides=(1, 1),
        padding=((1, 1), (1, 1)), dimension_numbers=("NHWC", "HWIO", "NHWC"),
        precision=hi).reshape(-1, planes)
    y2n = rnd(jnp.maximum(bn_apply(rnd(y2), y2, params["g2"], params["b2"]), 0.0))
    y3 = jnp.dot(y2n, rnd(params["w3"]), precision=hi)
    out = jnp.maximum(bn_apply(rnd(y3), y3, params["g3"], params["b3"]) + xf, 0.0)
    return jnp.transpose(out.reshape(n, h, w, params["w3"].shape[1]), (0, 3, 1, 2))


if __name__ == "__main__":
    planes = 4
    inplanes = planes * 4          # identity residual (downsample=None) path
    N, H, W = 2, 16, 16

    key = jax.random.PRNGKey(0)
    kx, kparam = jax.random.split(key)
    x = jax.random.normal(kx, (N, inplanes, H, W), jnp.float32)   # NCHW, as the PyTorch module expects
    params = init_params(kparam, inplanes, planes)

    out = jax.jit(bottleneck_forward)(x, params)
    out = jax.block_until_ready(out)
    assert out.shape == (N, planes * 4, H, W), out.shape
    assert bool(jnp.all(jnp.isfinite(out)))

    ref = jax.block_until_ready(_reference_forward(x, params))
    err = float(jnp.max(jnp.abs(out - ref)))
    assert err < 1e-1, f"mismatch vs pure-JAX reference: max abs err = {err}"

    print("KERNEL_OK")
</pallas_src>

<mosaic_0001>
module attributes {stable_mosaic.version = 11 : i64} {
  func.func @_conv1x1_stats_kernel(%arg0: i32, %arg1: memref<512x128xbf16, #tpu.memory_space<vmem>>, %arg2: memref<128x128xbf16, #tpu.memory_space<vmem>>, %arg3: memref<512x128xbf16, #tpu.memory_space<vmem>>, %arg4: memref<1x2x128xf32, #tpu.memory_space<vmem>>) attributes {dimension_semantics = [#tpu.dimension_semantics<parallel>], iteration_bounds = array<i64: 1>, scalar_prefetch = 0 : i64, scratch_operands = 0 : i64, tpu.core_type = #tpu.core_type<tc>, window_params = [{transform_indices = @transform_0, window_bounds = array<i64: 512, 128>}, {pipeline_mode = #tpu.pipeline_mode<synchronous>, transform_indices = @transform_1, window_bounds = array<i64: 128, 128>}, {transform_indices = @transform_2, window_bounds = array<i64: 512, 128>}, {transform_indices = @transform_3, window_bounds = array<i64: 1, 2, 128>}]} {
    %c0 = arith.constant 0 : index
    %c0_0 = arith.constant 0 : index
    %0 = vector.load %arg1[%c0, %c0_0] : memref<512x128xbf16, #tpu.memory_space<vmem>>, vector<512x128xbf16>
    %c0_1 = arith.constant 0 : index
    %c0_2 = arith.constant 0 : index
    %1 = vector.load %arg2[%c0_1, %c0_2] : memref<128x128xbf16, #tpu.memory_space<vmem>>, vector<128x128xbf16>
    %cst = arith.constant dense<0.000000e+00> : vector<512x128xf32>
    %2 = tpu.matmul %0, %1, %cst {dimension_numbers = #tpu.dot_dimension_numbers<[1], [0], [0], [1], [0, 0, 1, 1], [], []>} : vector<512x128xbf16>, vector<128x128xbf16>, vector<512x128xf32> -> vector<512x128xf32>
    %3 = arith.truncf %2 : vector<512x128xf32> to vector<512x128xbf16>
    %c0_3 = arith.constant 0 : index
    %c0_4 = arith.constant 0 : index
    %4 = vector.load %arg3[%c0_3, %c0_4] : memref<512x128xbf16, #tpu.memory_space<vmem>>, vector<512x128xbf16>
    tpu.vector_store %arg3[%c0_3, %c0_4], %3 {strides = array<i32>} : memref<512x128xbf16, #tpu.memory_space<vmem>>, vector<512x128xbf16>,
    %cst_5 = arith.constant dense<0.000000e+00> : vector<128xf32>
    %5 = vector.multi_reduction <add>, %2, %cst_5 [0] : vector<512x128xf32> to vector<128xf32>
    %6 = vector.shape_cast %5 : vector<128xf32> to vector<1x128xf32>
    %c0_6 = arith.constant 0 : index
    %c0_7 = arith.constant 0 : index
    %c0_8 = arith.constant 0 : index
    %7 = vector.load %arg4[%c0_6, %c0_7, %c0_8] : memref<1x2x128xf32, #tpu.memory_space<vmem>>, vector<1x1x128xf32>
    %8 = vector.shape_cast %7 : vector<1x1x128xf32> to vector<1x128xf32>
    %9 = vector.shape_cast %6 : vector<1x128xf32> to vector<1x1x128xf32>
    tpu.vector_store %arg4[%c0_6, %c0_7, %c0_8], %9 {strides = array<i32>} : memref<1x2x128xf32, #tpu.memory_space<vmem>>, vector<1x1x128xf32>,
    %10 = arith.mulf %2, %2 : vector<512x128xf32>
    %cst_9 = arith.constant dense<0.000000e+00> : vector<128xf32>
    %11 = vector.multi_reduction <add>, %10, %cst_9 [0] : vector<512x128xf32> to vector<128xf32>
    %12 = vector.shape_cast %11 : vector<128xf32> to vector<1x128xf32>
    %c0_10 = arith.constant 0 : index
    %c1 = arith.constant 1 : index
    %c0_11 = arith.constant 0 : index
    %13 = vector.load %arg4[%c0_10, %c1, %c0_11] : memref<1x2x128xf32, #tpu.memory_space<vmem>>, vector<1x1x128xf32>
    %14 = vector.shape_cast %13 : vector<1x1x128xf32> to vector<1x128xf32>
    %15 = vector.shape_cast %12 : vector<1x128xf32> to vector<1x1x128xf32>
    tpu.vector_store %arg4[%c0_10, %c1, %c0_11], %15 {strides = array<i32>} : memref<1x2x128xf32, #tpu.memory_space<vmem>>, vector<1x1x128xf32>,
    return
  }
  func.func @transform_0(%arg0: i32) -> (i32, i32) {
    %c0_i32 = arith.constant 0 : i32
    %c0_i32_0 = arith.constant 0 : i32
    return %arg0, %c0_i32 : i32, i32
  }
  func.func @transform_1(%arg0: i32) -> (i32, i32) {
    %c0_i32 = arith.constant 0 : i32
    %c0_i32_0 = arith.constant 0 : i32
    %c0_i32_1 = arith.constant 0 : i32
    return %c0_i32, %c0_i32_0 : i32, i32
  }
  func.func @transform_2(%arg0: i32) -> (i32, i32) {
    %c0_i32 = arith.constant 0 : i32
    %c0_i32_0 = arith.constant 0 : i32
    return %arg0, %c0_i32 : i32, i32
  }
  func.func @transform_3(%arg0: i32) -> (i32, i32, i32) {
    %c0_i32 = arith.constant 0 : i32
    %c0_i32_0 = arith.constant 0 : i32
    %c0_i32_1 = arith.constant 0 : i32
    return %arg0, %c0_i32, %c0_i32_0 : i32, i32, i32
  }
}

module attributes {stable_mosaic.version = 11 : i64} {
  func.func @_conv3x3_fused_kernel(%arg0: i32, %arg1: memref<1x256x128xbf16, #tpu.memory_space<vmem>>, %arg2: memref<1x2x128xf32, #tpu.memory_space<vmem>>, %arg3: memref<2x128xf32, #tpu.memory_space<vmem>>, %arg4: memref<9x128x128xbf16, #tpu.memory_space<vmem>>, %arg5: memref<1x256x128xbf16, #tpu.memory_space<vmem>>, %arg6: memref<1x2x128xf32, #tpu.memory_space<vmem>>, %arg7: memref<288x128xbf16, #tpu.memory_space<vmem>>, %arg8: memref<288x128xbf16, #tpu.memory_space<vmem>>, %arg9: memref<288x128xbf16, #tpu.memory_space<vmem>>) attributes {dimension_semantics = [#tpu.dimension_semantics<parallel>], iteration_bounds = array<i64: 2>, scalar_prefetch = 0 : i64, scratch_operands = 3 : i64, tpu.core_type = #tpu.core_type<tc>, window_params = [{transform_indices = @transform_0, window_bounds = array<i64: 1, 256, 128>}, {pipeline_mode = #tpu.pipeline_mode<synchronous>, transform_indices = @transform_1, window_bounds = array<i64: 1, 2, 128>}, {pipeline_mode = #tpu.pipeline_mode<synchronous>, transform_indices = @transform_2, window_bounds = array<i64: 2, 128>}, {pipeline_mode = #tpu.pipeline_mode<synchronous>, transform_indices = @transform_3, window_bounds = array<i64: 9, 128, 128>}, {transform_indices = @transform_4, window_bounds = array<i64: 1, 256, 128>}, {transform_indices = @transform_5, window_bounds = array<i64: 1, 2, 128>}]} {
    %c0 = arith.constant 0 : index
    %c0_0 = arith.constant 0 : index
    %c0_1 = arith.constant 0 : index
    %0 = vector.load %arg2[%c0, %c0_0, %c0_1] : memref<1x2x128xf32, #tpu.memory_space<vmem>>, vector<1x2x128xf32>
    %c0_2 = arith.constant 0 : index
    %c0_3 = arith.constant 0 : index
    %1 = vector.load %arg3[%c0_2, %c0_3] : memref<2x128xf32, #tpu.memory_space<vmem>>, vector<2x128xf32>
    %cst = arith.constant dense<0.000000e+00> : vector<2x128xf32>
    %2 = vector.multi_reduction <add>, %0, %cst [0] : vector<1x2x128xf32> to vector<2x128xf32>
    %3 = vector.extract_strided_slice %2 {offsets = [0, 0], sizes = [1, 128], strides = [1, 1]} : vector<2x128xf32> to vector<1x128xf32>
    %4 = vector.extract_strided_slice %2 {offsets = [1, 0], sizes = [1, 128], strides = [1, 1]} : vector<2x128xf32> to vector<1x128xf32>
    %5 = vector.extract_strided_slice %1 {offsets = [0, 0], sizes = [1, 128], strides = [1, 1]} : vector<2x128xf32> to vector<1x128xf32>
    %6 = vector.extract_strided_slice %1 {offsets = [1, 0], sizes = [1, 128], strides = [1, 1]} : vector<2x128xf32> to vector<1x128xf32>
    %cst_4 = arith.constant 0.001953125 : f32
    %7 = vector.broadcast %cst_4 : f32 to vector<1x128xf32>
    %8 = arith.mulf %3, %7 : vector<1x128xf32>
    %cst_5 = arith.constant 0.001953125 : f32
    %9 = vector.broadcast %cst_5 : f32 to vector<1x128xf32>
    %10 = arith.mulf %4, %9 : vector<1x128xf32>
    %11 = arith.mulf %8, %8 : vector<1x128xf32>
    %12 = arith.subf %10, %11 : vector<1x128xf32>
    %cst_6 = arith.constant 9.99999974E-6 : f32
    %13 = vector.broadcast %cst_6 : f32 to vector<1x128xf32>
    %14 = arith.addf %12, %13 : vector<1x128xf32>
    %15 = math.rsqrt %14 : vector<1x128xf32>
    %16 = arith.mulf %5, %15 : vector<1x128xf32>
    %17 = arith.mulf %8, %16 : vector<1x128xf32>
    %18 = arith.subf %6, %17 : vector<1x128xf32>
    %c0_7 = arith.constant 0 : index
    %c0_8 = arith.constant 0 : index
    %c0_9 = arith.constant 0 : index
    %19 = vector.load %arg1[%c0_7, %c0_8, %c0_9] : memref<1x256x128xbf16, #tpu.memory_space<vmem>>, vector<1x256x128xbf16>
    %20 = vector.shape_cast %19 : vector<1x256x128xbf16> to vector<256x128xbf16>
    %21 = arith.extf %20 : vector<256x128xbf16> to vector<256x128xf32>
    %22 = vector.broadcast %16 : vector<1x128xf32> to vector<256x128xf32>
    %23 = arith.mulf %21, %22 : vector<256x128xf32>
    %24 = vector.broadcast %18 : vector<1x128xf32> to vector<256x128xf32>
    %25 = arith.addf %23, %24 : vector<256x128xf32>
    %cst_10 = arith.constant 0.000000e+00 : f32
    %26 = vector.broadcast %cst_10 : f32 to vector<256x128xf32>
    %27 = arith.maximumf %25, %26 : vector<256x128xf32>
    %28 = arith.truncf %27 : vector<256x128xf32> to vector<256x128xbf16>
    %cst_11 = arith.constant 0.000000e+00 : bf16
    %29 = vector.broadcast %cst_11 : bf16 to vector<16x128xbf16>
    %c0_12 = arith.constant 0 : index
    %c0_13 = arith.constant 0 : index
    %30 = vector.load %arg7[%c0_12, %c0_13] : memref<288x128xbf16, #tpu.memory_space<vmem>>, vector<16x128xbf16>
    tpu.vector_store %arg7[%c0_12, %c0_13], %29 {strides = array<i32>} : memref<288x128xbf16, #tpu.memory_space<vmem>>, vector<16x128xbf16>,
    %c272 = arith.constant 272 : index
    %c0_14 = arith.constant 0 : index
    %31 = vector.load %arg7[%c272, %c0_14] : memref<288x128xbf16, #tpu.memory_space<vmem>>, vector<16x128xbf16>
    tpu.vector_store %arg7[%c272, %c0_14], %29 {strides = array<i32>} : memref<288x128xbf16, #tpu.memory_space<vmem>>, vector<16x128xbf16>,
    %c0_15 = arith.constant 0 : index
    %c0_16 = arith.constant 0 : index
    %32 = vector.load %arg8[%c0_15, %c0_16] : memref<288x128xbf16, #tpu.memory_space<vmem>>, vector<16x128xbf16>
    tpu.vector_store %arg8[%c0_15, %c0_16], %29 {strides = array<i32>} : memref<288x128xbf16, #tpu.memory_space<vmem>>, vector<16x128xbf16>,
    %c272_17 = arith.constant 272 : index
    %c0_18 = arith.constant 0 : index
    %33 = vector.load %arg8[%c272_17, %c0_18] : memref<288x128xbf16, #tpu.memory_space<vmem>>, vector<16x128xbf16>
    tpu.vector_store %arg8[%c272_17, %c0_18], %29 {strides = array<i32>} : memref<288x128xbf16, #tpu.memory_space<vmem>>, vector<16x128xbf16>,
    %c0_19 = arith.constant 0 : index
    %c0_20 = arith.constant 0 : index
    %34 = vector.load %arg9[%c0_19, %c0_20] : memref<288x128xbf16, #tpu.memory_space<vmem>>, vector<16x128xbf16>
    tpu.vector_store %arg9[%c0_19, %c0_20], %29 {strides = array<i32>} : memref<288x128xbf16, #tpu.memory_space<vmem>>, vector<16x128xbf16>,
    %c272_21 = arith.constant 272 : index
    %c0_22 = arith.constant 0 : index
    %35 = vector.load %arg9[%c272_21, %c0_22] : memref<288x128xbf16, #tpu.memory_space<vmem>>, vector<16x128xbf16>
    tpu.vector_store %arg9[%c272_21, %c0_22], %29 {strides = array<i32>} : memref<288x128xbf16, #tpu.memory_space<vmem>>, vector<16x128xbf16>,
    %c16 = arith.constant 16 : index
    %c0_23 = arith.constant 0 : index
    %36 = vector.load %arg8[%c16, %c0_23] : memref<288x128xbf16, #tpu.memory_space<vmem>>, vector<256x128xbf16>
    tpu.vector_store %arg8[%c16, %c0_23], %28 {strides = array<i32>} : memref<288x128xbf16, #tpu.memory_space<vmem>>, vector<256x128xbf16>,
    %37 = tpu.iota {dimensions = array<i32: 0>} : vector<256x128xi32>
    %c16_i32 = arith.constant 16 : i32
    %c0_i32 = arith.constant 0 : i32
    %38 = arith.cmpi eq, %c16_i32, %c0_i32 : i32
    %c1_i32 = arith.constant 1 : i32
    %39 = arith.select %38, %c1_i32, %c16_i32 : i32
    %40 = vector.broadcast %39 : i32 to vector<256x128xi32>
    %41 = arith.remsi %37, %40 : vector<256x128xi32>
    %c0_i32_24 = arith.constant 0 : i32
    %42 = vector.broadcast %c0_i32_24 : i32 to vector<256x128xi32>
    %43 = arith.cmpi ne, %41, %42 : vector<256x128xi32>
    %c0_i32_25 = arith.constant 0 : i32
    %44 = vector.broadcast %c0_i32_25 : i32 to vector<256x128xi32>
    %45 = arith.cmpi slt, %41, %44 : vector<256x128xi32>
    %c0_i32_26 = arith.constant 0 : i32
    %46 = arith.cmpi slt, %39, %c0_i32_26 : i32
    %47 = vector.broadcast %46 : i1 to vector<256x128xi1>
    %48 = vector.broadcast %47 : vector<256x128xi1> to vector<256x128xi1>
    %49 = arith.xori %45, %48 : vector<256x128xi1>
    %50 = arith.andi %49, %43 : vector<256x128xi1>
    %51 = vector.broadcast %39 : i32 to vector<256x128xi32>
    %52 = arith.addi %41, %51 : vector<256x128xi32>
    %53 = arith.select %50, %52, %41 : vector<256x128xi1>, vector<256x128xi32>
    %c17 = arith.constant 17 : index
    %c0_27 = arith.constant 0 : index
    %54 = vector.load %arg8[%c17, %c0_27] : memref<288x128xbf16, #tpu.memory_space<vmem>>, vector<256x128xbf16>
    %c15_i32 = arith.constant 15 : i32
    %55 = vector.broadcast %c15_i32 : i32 to vector<256x128xi32>
    %56 = arith.cmpi ne, %53, %55 : vector<256x128xi32>
    %cst_28 = arith.constant 0.000000e+00 : bf16
    %57 = vector.broadcast %cst_28 : bf16 to vector<256x128xbf16>
    %58 = arith.select %56, %54, %57 : vector<256x128xi1>, vector<256x128xbf16>
    %c16_29 = arith.constant 16 : index
    %c0_30 = arith.constant 0 : index
    %59 = vector.load %arg9[%c16_29, %c0_30] : memref<288x128xbf16, #tpu.memory_space<vmem>>, vector<256x128xbf16>
    tpu.vector_store %arg9[%c16_29, %c0_30], %58 {strides = array<i32>} : memref<288x128xbf16, #tpu.memory_space<vmem>>, vector<256x128xbf16>,
    %c15 = arith.constant 15 : index
    %c0_31 = arith.constant 0 : index
    %60 = vector.load %arg8[%c15, %c0_31] : memref<288x128xbf16, #tpu.memory_space<vmem>>, vector<256x128xbf16>
    %c0_i32_32 = arith.constant 0 : i32
    %61 = vector.broadcast %c0_i32_32 : i32 to vector<256x128xi32>
    %62 = arith.cmpi ne, %53, %61 : vector<256x128xi32>
    %cst_33 = arith.constant 0.000000e+00 : bf16
    %63 = vector.broadcast %cst_33 : bf16 to vector<256x128xbf16>
    %64 = arith.select %62, %60, %63 : vector<256x128xi1>, vector<256x128xbf16>
    %c16_34 = arith.constant 16 : index
    %c0_35 = arith.constant 0 : index
    %65 = vector.load %arg7[%c16_34, %c0_35] : memref<288x128xbf16, #tpu.memory_space<vmem>>, vector<256x128xbf16>
    tpu.vector_store %arg7[%c16_34, %c0_35], %64 {strides = array<i32>} : memref<288x128xbf16, #tpu.memory_space<vmem>>, vector<256x128xbf16>,
    %cst_36 = arith.constant 0.000000e+00 : f32
    %66 = vector.broadcast %cst_36 : f32 to vector<256x128xf32>
    %c0_37 = arith.constant 0 : index
    %c0_38 = arith.constant 0 : index
    %67 = vector.load %arg7[%c0_37, %c0_38] : memref<288x128xbf16, #tpu.memory_space<vmem>>, vector<256x128xbf16>
    %c0_39 = arith.constant 0 : index
    %c0_40 = arith.constant 0 : index
    %c0_41 = arith.constant 0 : index
    %68 = vector.load %arg4[%c0_39, %c0_40, %c0_41] : memref<9x128x128xbf16, #tpu.memory_space<vmem>>, vector<1x128x128xbf16>
    %69 = vector.shape_cast %68 : vector<1x128x128xbf16> to vector<128x128xbf16>
    %cst_42 = arith.constant dense<0.000000e+00> : vector<256x128xf32>
    %70 = tpu.matmul %67, %69, %cst_42 {dimension_numbers = #tpu.dot_dimension_numbers<[1], [0], [0], [1], [0, 0, 1, 1], [], []>} : vector<256x128xbf16>, vector<128x128xbf16>, vector<256x128xf32> -> vector<256x128xf32>
    %71 = arith.addf %66, %70 : vector<256x128xf32>
    %c0_43 = arith.constant 0 : index
    %c0_44 = arith.constant 0 : index
    %72 = vector.load %arg8[%c0_43, %c0_44] : memref<288x128xbf16, #tpu.memory_space<vmem>>, vector<256x128xbf16>
    %c1 = arith.constant 1 : index
    %c0_45 = arith.constant 0 : index
    %c0_46 = arith.constant 0 : index
    %73 = vector.load %arg4[%c1, %c0_45, %c0_46] : memref<9x128x128xbf16, #tpu.memory_space<vmem>>, vector<1x128x128xbf16>
    %74 = vector.shape_cast %73 : vector<1x128x128xbf16> to vector<128x128xbf16>
    %cst_47 = arith.constant dense<0.000000e+00> : vector<256x128xf32>
    %75 = tpu.matmul %72, %74, %cst_47 {dimension_numbers = #tpu.dot_dimension_numbers<[1], [0], [0], [1], [0, 0, 1, 1], [], []>} : vector<256x128xbf16>, vector<128x128xbf16>, vector<256x128xf32> -> vector<256x128xf32>
    %76 = arith.addf %71, %75 : vector<256x128xf32>
    %c0_48 = arith.constant 0 : index
    %c0_49 = arith.constant 0 : index
    %77 = vector.load %arg9[%c0_48, %c0_49] : memref<288x128xbf16, #tpu.memory_space<vmem>>, vector<256x128xbf16>
    %c2 = arith.constant 2 : index
    %c0_50 = arith.constant 0 : index
    %c0_51 = arith.constant 0 : index
    %78 = vector.load %arg4[%c2, %c0_50, %c0_51] : memref<9x128x128xbf16, #tpu.memory_space<vmem>>, vector<1x128x128xbf16>
    %79 = vector.shape_cast %78 : vector<1x128x128xbf16> to vector<128x128xbf16>
    %cst_52 = arith.constant dense<0.000000e+00> : vector<256x128xf32>
    %80 = tpu.matmul %77, %79, %cst_52 {dimension_numbers = #tpu.dot_dimension_numbers<[1], [0], [0], [1], [0, 0, 1, 1], [], []>} : vector<256x128xbf16>, vector<128x128xbf16>, vector<256x128xf32> -> vector<256x128xf32>
    %81 = arith.addf %76, %80 : vector<256x128xf32>
    %c16_53 = arith.constant 16 : index
    %c0_54 = arith.constant 0 : index
    %82 = vector.load %arg7[%c16_53, %c0_54] : memref<288x128xbf16, #tpu.memory_space<vmem>>, vector<256x128xbf16>
    %c3 = arith.constant 3 : index
    %c0_55 = arith.constant 0 : index
    %c0_56 = arith.constant 0 : index
    %83 = vector.load %arg4[%c3, %c0_55, %c0_56] : memref<9x128x128xbf16, #tpu.memory_space<vmem>>, vector<1x128x128xbf16>
    %84 = vector.shape_cast %83 : vector<1x128x128xbf16> to vector<128x128xbf16>
    %cst_57 = arith.constant dense<0.000000e+00> : vector<256x128xf32>
    %85 = tpu.matmul %82, %84, %cst_57 {dimension_numbers = #tpu.dot_dimension_numbers<[1], [0], [0], [1], [0, 0, 1, 1], [], []>} : vector<256x128xbf16>, vector<128x128xbf16>, vector<256x128xf32> -> vector<256x128xf32>
    %86 = arith.addf %81, %85 : vector<256x128xf32>
    %c16_58 = arith.constant 16 : index
    %c0_59 = arith.constant 0 : index
    %87 = vector.load %arg8[%c16_58, %c0_59] : memref<288x128xbf16, #tpu.memory_space<vmem>>, vector<256x128xbf16>
    %c4 = arith.constant 4 : index
    %c0_60 = arith.constant 0 : index
    %c0_61 = arith.constant 0 : index
    %88 = vector.load %arg4[%c4, %c0_60, %c0_61] : memref<9x128x128xbf16, #tpu.memory_space<vmem>>, vector<1x128x128xbf16>
    %89 = vector.shape_cast %88 : vector<1x128x128xbf16> to vector<128x128xbf16>
    %cst_62 = arith.constant dense<0.000000e+00> : vector<256x128xf32>
    %90 = tpu.matmul %87, %89, %cst_62 {dimension_numbers = #tpu.dot_dimension_numbers<[1], [0], [0], [1], [0, 0, 1, 1], [], []>} : vector<256x128xbf16>, vector<128x128xbf16>, vector<256x128xf32> -> vector<256x128xf32>
    %91 = arith.addf %86, %90 : vector<256x128xf32>
    %c16_63 = arith.constant 16 : index
    %c0_64 = arith.constant 0 : index
    %92 = vector.load %arg9[%c16_63, %c0_64] : memref<288x128xbf16, #tpu.memory_space<vmem>>, vector<256x128xbf16>
    %c5 = arith.constant 5 : index
    %c0_65 = arith.constant 0 : index
    %c0_66 = arith.constant 0 : index
    %93 = vector.load %arg4[%c5, %c0_65, %c0_66] : memref<9x128x128xbf16, #tpu.memory_space<vmem>>, vector<1x128x128xbf16>
    %94 = vector.shape_cast %93 : vector<1x128x128xbf16> to vector<128x128xbf16>
    %cst_67 = arith.constant dense<0.000000e+00> : vector<256x128xf32>
    %95 = tpu.matmul %92, %94, %cst_67 {dimension_numbers = #tpu.dot_dimension_numbers<[1], [0], [0], [1], [0, 0, 1, 1], [], []>} : vector<256x128xbf16>, vector<128x128xbf16>, vector<256x128xf32> -> vector<256x128xf32>
    %96 = arith.addf %91, %95 : vector<256x128xf32>
    %c32 = arith.constant 32 : index
    %c0_68 = arith.constant 0 : index
    %97 = vector.load %arg7[%c32, %c0_68] : memref<288x128xbf16, #tpu.memory_space<vmem>>, vector<256x128xbf16>
    %c6 = arith.constant 6 : index
    %c0_69 = arith.constant 0 : index
    %c0_70 = arith.constant 0 : index
    %98 = vector.load %arg4[%c6, %c0_69, %c0_70] : memref<9x128x128xbf16, #tpu.memory_space<vmem>>, vector<1x128x128xbf16>
    %99 = vector.shape_cast %98 : vector<1x128x128xbf16> to vector<128x128xbf16>
    %cst_71 = arith.constant dense<0.000000e+00> : vector<256x128xf32>
    %100 = tpu.matmul %97, %99, %cst_71 {dimension_numbers = #tpu.dot_dimension_numbers<[1], [0], [0], [1], [0, 0, 1, 1], [], []>} : vector<256x128xbf16>, vector<128x128xbf16>, vector<256x128xf32> -> vector<256x128xf32>
    %101 = arith.addf %96, %100 : vector<256x128xf32>
    %c32_72 = arith.constant 32 : index
    %c0_73 = arith.constant 0 : index
    %102 = vector.load %arg8[%c32_72, %c0_73] : memref<288x128xbf16, #tpu.memory_space<vmem>>, vector<256x128xbf16>
    %c7 = arith.constant 7 : index
    %c0_74 = arith.constant 0 : index
    %c0_75 = arith.constant 0 : index
    %103 = vector.load %arg4[%c7, %c0_74, %c0_75] : memref<9x128x128xbf16, #tpu.memory_space<vmem>>, vector<1x128x128xbf16>
    %104 = vector.shape_cast %103 : vector<1x128x128xbf16> to vector<128x128xbf16>
    %cst_76 = arith.constant dense<0.000000e+00> : vector<256x128xf32>
    %105 = tpu.matmul %102, %104, %cst_76 {dimension_numbers = #tpu.dot_dimension_numbers<[1], [0], [0], [1], [0, 0, 1, 1], [], []>} : vector<256x128xbf16>, vector<128x128xbf16>, vector<256x128xf32> -> vector<256x128xf32>
    %106 = arith.addf %101, %105 : vector<256x128xf32>
    %c32_77 = arith.constant 32 : index
    %c0_78 = arith.constant 0 : index
    %107 = vector.load %arg9[%c32_77, %c0_78] : memref<288x128xbf16, #tpu.memory_space<vmem>>, vector<256x128xbf16>
    %c8 = arith.constant 8 : index
    %c0_79 = arith.constant 0 : index
    %c0_80 = arith.constant 0 : index
    %108 = vector.load %arg4[%c8, %c0_79, %c0_80] : memref<9x128x128xbf16, #tpu.memory_space<vmem>>, vector<1x128x128xbf16>
    %109 = vector.shape_cast %108 : vector<1x128x128xbf16> to vector<128x128xbf16>
    %cst_81 = arith.constant dense<0.000000e+00> : vector<256x128xf32>
    %110 = tpu.matmul %107, %109, %cst_81 {dimension_numbers = #tpu.dot_dimension_numbers<[1], [0], [0], [1], [0, 0, 1, 1], [], []>} : vector<256x128xbf16>, vector<128x128xbf16>, vector<256x128xf32> -> vector<256x128xf32>
    %111 = arith.addf %106, %110 : vector<256x128xf32>
    %112 = arith.truncf %111 : vector<256x128xf32> to vector<256x128xbf16>
    %c0_82 = arith.constant 0 : index
    %c0_83 = arith.constant 0 : index
    %c0_84 = arith.constant 0 : index
    %113 = vector.load %arg5[%c0_82, %c0_83, %c0_84] : memref<1x256x128xbf16, #tpu.memory_space<vmem>>, vector<1x256x128xbf16>
    %114 = vector.shape_cast %113 : vector<1x256x128xbf16> to vector<256x128xbf16>
    %115 = vector.shape_cast %112 : vector<256x128xbf16> to vector<1x256x128xbf16>
    tpu.vector_store %arg5[%c0_82, %c0_83, %c0_84], %115 {strides = array<i32>} : memref<1x256x128xbf16, #tpu.memory_space<vmem>>, vector<1x256x128xbf16>,
    %cst_85 = arith.constant dense<0.000000e+00> : vector<128xf32>
    %116 = vector.multi_reduction <add>, %111, %cst_85 [0] : vector<256x128xf32> to vector<128xf32>
    %117 = vector.shape_cast %116 : vector<128xf32> to vector<1x128xf32>
    %c0_86 = arith.constant 0 : index
    %c0_87 = arith.constant 0 : index
    %c0_88 = arith.constant 0 : index
    %118 = vector.load %arg6[%c0_86, %c0_87, %c0_88] : memref<1x2x128xf32, #tpu.memory_space<vmem>>, vector<1x1x128xf32>
    %119 = vector.shape_cast %118 : vector<1x1x128xf32> to vector<1x128xf32>
    %120 = vector.shape_cast %117 : vector<1x128xf32> to vector<1x1x128xf32>
    tpu.vector_store %arg6[%c0_86, %c0_87, %c0_88], %120 {strides = array<i32>} : memref<1x2x128xf32, #tpu.memory_space<vmem>>, vector<1x1x128xf32>,
    %121 = arith.mulf %111, %111 : vector<256x128xf32>
    %cst_89 = arith.constant dense<0.000000e+00> : vector<128xf32>
    %122 = vector.multi_reduction <add>, %121, %cst_89 [0] : vector<256x128xf32> to vector<128xf32>
    %123 = vector.shape_cast %122 : vector<128xf32> to vector<1x128xf32>
    %c0_90 = arith.constant 0 : index
    %c1_91 = arith.constant 1 : index
    %c0_92 = arith.constant 0 : index
    %124 = vector.load %arg6[%c0_90, %c1_91, %c0_92] : memref<1x2x128xf32, #tpu.memory_space<vmem>>, vector<1x1x128xf32>
    %125 = vector.shape_cast %124 : vector<1x1x128xf32> to vector<1x128xf32>
    %126 = vector.shape_cast %123 : vector<1x128xf32> to vector<1x1x128xf32>
    tpu.vector_store %arg6[%c0_90, %c1_91, %c0_92], %126 {strides = array<i32>} : memref<1x2x128xf32, #tpu.memory_space<vmem>>, vector<1x1x128xf32>,
    return
  }
  func.func @transform_0(%arg0: i32) -> (i32, i32, i32) {
    %c0_i32 = arith.constant 0 : i32
    %c0_i32_0 = arith.constant 0 : i32
    %c0_i32_1 = arith.constant 0 : i32
    return %arg0, %c0_i32, %c0_i32_0 : i32, i32, i32
  }
  func.func @transform_1(%arg0: i32) -> (i32, i32, i32) {
    %c0_i32 = arith.constant 0 : i32
    %c0_i32_0 = arith.constant 0 : i32
    %c0_i32_1 = arith.constant 0 : i32
    %c0_i32_2 = arith.constant 0 : i32
    return %c0_i32, %c0_i32_0, %c0_i32_1 : i32, i32, i32
  }
  func.func @transform_2(%arg0: i32) -> (i32, i32) {
    %c0_i32 = arith.constant 0 : i32
    %c0_i32_0 = arith.constant 0 : i32
    %c0_i32_1 = arith.constant 0 : i32
    return %c0_i32, %c0_i32_0 : i32, i32
  }
  func.func @transform_3(%arg0: i32) -> (i32, i32, i32) {
    %c0_i32 = arith.constant 0 : i32
    %c0_i32_0 = arith.constant 0 : i32
    %c0_i32_1 = arith.constant 0 : i32
    %c0_i32_2 = arith.constant 0 : i32
    return %c0_i32, %c0_i32_0, %c0_i32_1 : i32, i32, i32
  }
  func.func @transform_4(%arg0: i32) -> (i32, i32, i32) {
    %c0_i32 = arith.constant 0 : i32
    %c0_i32_0 = arith.constant 0 : i32
    %c0_i32_1 = arith.constant 0 : i32
    return %arg0, %c0_i32, %c0_i32_0 : i32, i32, i32
  }
  func.func @transform_5(%arg0: i32) -> (i32, i32, i32) {
    %c0_i32 = arith.constant 0 : i32
    %c0_i32_0 = arith.constant 0 : i32
    %c0_i32_1 = arith.constant 0 : i32
    return %arg0, %c0_i32, %c0_i32_0 : i32, i32, i32
  }
}

module attributes {stable_mosaic.version = 11 : i64} {
  func.func @_bn_relu_conv1x1_stats_kernel(%arg0: i32, %arg1: memref<512x128xbf16, #tpu.memory_space<vmem>>, %arg2: memref<2x2x128xf32, #tpu.memory_space<vmem>>, %arg3: memref<2x128xf32, #tpu.memory_space<vmem>>, %arg4: memref<128x128xbf16, #tpu.memory_space<vmem>>, %arg5: memref<512x128xbf16, #tpu.memory_space<vmem>>, %arg6: memref<1x2x128xf32, #tpu.memory_space<vmem>>) attributes {dimension_semantics = [#tpu.dimension_semantics<parallel>], iteration_bounds = array<i64: 1>, scalar_prefetch = 0 : i64, scratch_operands = 0 : i64, tpu.core_type = #tpu.core_type<tc>, window_params = [{transform_indices = @transform_0, window_bounds = array<i64: 512, 128>}, {pipeline_mode = #tpu.pipeline_mode<synchronous>, transform_indices = @transform_1, window_bounds = array<i64: 2, 2, 128>}, {pipeline_mode = #tpu.pipeline_mode<synchronous>, transform_indices = @transform_2, window_bounds = array<i64: 2, 128>}, {pipeline_mode = #tpu.pipeline_mode<synchronous>, transform_indices = @transform_3, window_bounds = array<i64: 128, 128>}, {transform_indices = @transform_4, window_bounds = array<i64: 512, 128>}, {transform_indices = @transform_5, window_bounds = array<i64: 1, 2, 128>}]} {
    %c0 = arith.constant 0 : index
    %c0_0 = arith.constant 0 : index
    %c0_1 = arith.constant 0 : index
    %0 = vector.load %arg2[%c0, %c0_0, %c0_1] : memref<2x2x128xf32, #tpu.memory_space<vmem>>, vector<2x2x128xf32>
    %c0_2 = arith.constant 0 : index
    %c0_3 = arith.constant 0 : index
    %1 = vector.load %arg3[%c0_2, %c0_3] : memref<2x128xf32, #tpu.memory_space<vmem>>, vector<2x128xf32>
    %cst = arith.constant dense<0.000000e+00> : vector<2x128xf32>
    %2 = vector.multi_reduction <add>, %0, %cst [0] : vector<2x2x128xf32> to vector<2x128xf32>
    %3 = vector.extract_strided_slice %2 {offsets = [0, 0], sizes = [1, 128], strides = [1, 1]} : vector<2x128xf32> to vector<1x128xf32>
    %4 = vector.extract_strided_slice %2 {offsets = [1, 0], sizes = [1, 128], strides = [1, 1]} : vector<2x128xf32> to vector<1x128xf32>
    %5 = vector.extract_strided_slice %1 {offsets = [0, 0], sizes = [1, 128], strides = [1, 1]} : vector<2x128xf32> to vector<1x128xf32>
    %6 = vector.extract_strided_slice %1 {offsets = [1, 0], sizes = [1, 128], strides = [1, 1]} : vector<2x128xf32> to vector<1x128xf32>
    %cst_4 = arith.constant 0.001953125 : f32
    %7 = vector.broadcast %cst_4 : f32 to vector<1x128xf32>
    %8 = arith.mulf %3, %7 : vector<1x128xf32>
    %cst_5 = arith.constant 0.001953125 : f32
    %9 = vector.broadcast %cst_5 : f32 to vector<1x128xf32>
    %10 = arith.mulf %4, %9 : vector<1x128xf32>
    %11 = arith.mulf %8, %8 : vector<1x128xf32>
    %12 = arith.subf %10, %11 : vector<1x128xf32>
    %cst_6 = arith.constant 9.99999974E-6 : f32
    %13 = vector.broadcast %cst_6 : f32 to vector<1x128xf32>
    %14 = arith.addf %12, %13 : vector<1x128xf32>
    %15 = math.rsqrt %14 : vector<1x128xf32>
    %16 = arith.mulf %5, %15 : vector<1x128xf32>
    %17 = arith.mulf %8, %16 : vector<1x128xf32>
    %18 = arith.subf %6, %17 : vector<1x128xf32>
    %c0_7 = arith.constant 0 : index
    %c0_8 = arith.constant 0 : index
    %19 = vector.load %arg1[%c0_7, %c0_8] : memref<512x128xbf16, #tpu.memory_space<vmem>>, vector<512x128xbf16>
    %20 = arith.extf %19 : vector<512x128xbf16> to vector<512x128xf32>
    %21 = vector.broadcast %16 : vector<1x128xf32> to vector<512x128xf32>
    %22 = arith.mulf %20, %21 : vector<512x128xf32>
    %23 = vector.broadcast %18 : vector<1x128xf32> to vector<512x128xf32>
    %24 = arith.addf %22, %23 : vector<512x128xf32>
    %cst_9 = arith.constant 0.000000e+00 : f32
    %25 = vector.broadcast %cst_9 : f32 to vector<512x128xf32>
    %26 = arith.maximumf %24, %25 : vector<512x128xf32>
    %27 = arith.truncf %26 : vector<512x128xf32> to vector<512x128xbf16>
    %c0_10 = arith.constant 0 : index
    %c0_11 = arith.constant 0 : index
    %28 = vector.load %arg4[%c0_10, %c0_11] : memref<128x128xbf16, #tpu.memory_space<vmem>>, vector<128x128xbf16>
    %cst_12 = arith.constant dense<0.000000e+00> : vector<512x128xf32>
    %29 = tpu.matmul %27, %28, %cst_12 {dimension_numbers = #tpu.dot_dimension_numbers<[1], [0], [0], [1], [0, 0, 1, 1], [], []>} : vector<512x128xbf16>, vector<128x128xbf16>, vector<512x128xf32> -> vector<512x128xf32>
    %30 = arith.truncf %29 : vector<512x128xf32> to vector<512x128xbf16>
    %c0_13 = arith.constant 0 : index
    %c0_14 = arith.constant 0 : index
    %31 = vector.load %arg5[%c0_13, %c0_14] : memref<512x128xbf16, #tpu.memory_space<vmem>>, vector<512x128xbf16>
    tpu.vector_store %arg5[%c0_13, %c0_14], %30 {strides = array<i32>} : memref<512x128xbf16, #tpu.memory_space<vmem>>, vector<512x128xbf16>,
    %cst_15 = arith.constant dense<0.000000e+00> : vector<128xf32>
    %32 = vector.multi_reduction <add>, %29, %cst_15 [0] : vector<512x128xf32> to vector<128xf32>
    %33 = vector.shape_cast %32 : vector<128xf32> to vector<1x128xf32>
    %c0_16 = arith.constant 0 : index
    %c0_17 = arith.constant 0 : index
    %c0_18 = arith.constant 0 : index
    %34 = vector.load %arg6[%c0_16, %c0_17, %c0_18] : memref<1x2x128xf32, #tpu.memory_space<vmem>>, vector<1x1x128xf32>
    %35 = vector.shape_cast %34 : vector<1x1x128xf32> to vector<1x128xf32>
    %36 = vector.shape_cast %33 : vector<1x128xf32> to vector<1x1x128xf32>
    tpu.vector_store %arg6[%c0_16, %c0_17, %c0_18], %36 {strides = array<i32>} : memref<1x2x128xf32, #tpu.memory_space<vmem>>, vector<1x1x128xf32>,
    %37 = arith.mulf %29, %29 : vector<512x128xf32>
    %cst_19 = arith.constant dense<0.000000e+00> : vector<128xf32>
    %38 = vector.multi_reduction <add>, %37, %cst_19 [0] : vector<512x128xf32> to vector<128xf32>
    %39 = vector.shape_cast %38 : vector<128xf32> to vector<1x128xf32>
    %c0_20 = arith.constant 0 : index
    %c1 = arith.constant 1 : index
    %c0_21 = arith.constant 0 : index
    %40 = vector.load %arg6[%c0_20, %c1, %c0_21] : memref<1x2x128xf32, #tpu.memory_space<vmem>>, vector<1x1x128xf32>
    %41 = vector.shape_cast %40 : vector<1x1x128xf32> to vector<1x128xf32>
    %42 = vector.shape_cast %39 : vector<1x128xf32> to vector<1x1x128xf32>
    tpu.vector_store %arg6[%c0_20, %c1, %c0_21], %42 {strides = array<i32>} : memref<1x2x128xf32, #tpu.memory_space<vmem>>, vector<1x1x128xf32>,
    return
  }
  func.func @transform_0(%arg0: i32) -> (i32, i32) {
    %c0_i32 = arith.constant 0 : i32
    %c0_i32_0 = arith.constant 0 : i32
    return %arg0, %c0_i32 : i32, i32
  }
  func.func @transform_1(%arg0: i32) -> (i32, i32, i32) {
    %c0_i32 = arith.constant 0 : i32
    %c0_i32_0 = arith.constant 0 : i32
    %c0_i32_1 = arith.constant 0 : i32
    %c0_i32_2 = arith.constant 0 : i32
    return %c0_i32, %c0_i32_0, %c0_i32_1 : i32, i32, i32
  }
  func.func @transform_2(%arg0: i32) -> (i32, i32) {
    %c0_i32 = arith.constant 0 : i32
    %c0_i32_0 = arith.constant 0 : i32
    %c0_i32_1 = arith.constant 0 : i32
    return %c0_i32, %c0_i32_0 : i32, i32
  }
  func.func @transform_3(%arg0: i32) -> (i32, i32) {
    %c0_i32 = arith.constant 0 : i32
    %c0_i32_0 = arith.constant 0 : i32
    %c0_i32_1 = arith.constant 0 : i32
    return %c0_i32, %c0_i32_0 : i32, i32
  }
  func.func @transform_4(%arg0: i32) -> (i32, i32) {
    %c0_i32 = arith.constant 0 : i32
    %c0_i32_0 = arith.constant 0 : i32
    return %arg0, %c0_i32 : i32, i32
  }
  func.func @transform_5(%arg0: i32) -> (i32, i32, i32) {
    %c0_i32 = arith.constant 0 : i32
    %c0_i32_0 = arith.constant 0 : i32
    %c0_i32_1 = arith.constant 0 : i32
    return %arg0, %c0_i32, %c0_i32_0 : i32, i32, i32
  }
}

module attributes {stable_mosaic.version = 11 : i64} {
  func.func @_bn_add_relu_kernel(%arg0: i32, %arg1: memref<512x128xbf16, #tpu.memory_space<vmem>>, %arg2: memref<1x2x128xf32, #tpu.memory_space<vmem>>, %arg3: memref<2x128xf32, #tpu.memory_space<vmem>>, %arg4: memref<512x128xbf16, #tpu.memory_space<vmem>>, %arg5: memref<512x128xf32, #tpu.memory_space<vmem>>) attributes {dimension_semantics = [#tpu.dimension_semantics<parallel>], iteration_bounds = array<i64: 1>, scalar_prefetch = 0 : i64, scratch_operands = 0 : i64, tpu.core_type = #tpu.core_type<tc>, window_params = [{transform_indices = @transform_0, window_bounds = array<i64: 512, 128>}, {pipeline_mode = #tpu.pipeline_mode<synchronous>, transform_indices = @transform_1, window_bounds = array<i64: 1, 2, 128>}, {pipeline_mode = #tpu.pipeline_mode<synchronous>, transform_indices = @transform_2, window_bounds = array<i64: 2, 128>}, {transform_indices = @transform_3, window_bounds = array<i64: 512, 128>}, {transform_indices = @transform_4, window_bounds = array<i64: 512, 128>}]} {
    %c0 = arith.constant 0 : index
    %c0_0 = arith.constant 0 : index
    %c0_1 = arith.constant 0 : index
    %0 = vector.load %arg2[%c0, %c0_0, %c0_1] : memref<1x2x128xf32, #tpu.memory_space<vmem>>, vector<1x2x128xf32>
    %c0_2 = arith.constant 0 : index
    %c0_3 = arith.constant 0 : index
    %1 = vector.load %arg3[%c0_2, %c0_3] : memref<2x128xf32, #tpu.memory_space<vmem>>, vector<2x128xf32>
    %cst = arith.constant dense<0.000000e+00> : vector<2x128xf32>
    %2 = vector.multi_reduction <add>, %0, %cst [0] : vector<1x2x128xf32> to vector<2x128xf32>
    %3 = vector.extract_strided_slice %2 {offsets = [0, 0], sizes = [1, 128], strides = [1, 1]} : vector<2x128xf32> to vector<1x128xf32>
    %4 = vector.extract_strided_slice %2 {offsets = [1, 0], sizes = [1, 128], strides = [1, 1]} : vector<2x128xf32> to vector<1x128xf32>
    %5 = vector.extract_strided_slice %1 {offsets = [0, 0], sizes = [1, 128], strides = [1, 1]} : vector<2x128xf32> to vector<1x128xf32>
    %6 = vector.extract_strided_slice %1 {offsets = [1, 0], sizes = [1, 128], strides = [1, 1]} : vector<2x128xf32> to vector<1x128xf32>
    %cst_4 = arith.constant 0.001953125 : f32
    %7 = vector.broadcast %cst_4 : f32 to vector<1x128xf32>
    %8 = arith.mulf %3, %7 : vector<1x128xf32>
    %cst_5 = arith.constant 0.001953125 : f32
    %9 = vector.broadcast %cst_5 : f32 to vector<1x128xf32>
    %10 = arith.mulf %4, %9 : vector<1x128xf32>
    %11 = arith.mulf %8, %8 : vector<1x128xf32>
    %12 = arith.subf %10, %11 : vector<1x128xf32>
    %cst_6 = arith.constant 9.99999974E-6 : f32
    %13 = vector.broadcast %cst_6 : f32 to vector<1x128xf32>
    %14 = arith.addf %12, %13 : vector<1x128xf32>
    %15 = math.rsqrt %14 : vector<1x128xf32>
    %16 = arith.mulf %5, %15 : vector<1x128xf32>
    %17 = arith.mulf %8, %16 : vector<1x128xf32>
    %18 = arith.subf %6, %17 : vector<1x128xf32>
    %c0_7 = arith.constant 0 : index
    %c0_8 = arith.constant 0 : index
    %19 = vector.load %arg1[%c0_7, %c0_8] : memref<512x128xbf16, #tpu.memory_space<vmem>>, vector<512x128xbf16>
    %20 = arith.extf %19 : vector<512x128xbf16> to vector<512x128xf32>
    %21 = vector.broadcast %16 : vector<1x128xf32> to vector<512x128xf32>
    %22 = arith.mulf %20, %21 : vector<512x128xf32>
    %23 = vector.broadcast %18 : vector<1x128xf32> to vector<512x128xf32>
    %24 = arith.addf %22, %23 : vector<512x128xf32>
    %c0_9 = arith.constant 0 : index
    %c0_10 = arith.constant 0 : index
    %25 = vector.load %arg4[%c0_9, %c0_10] : memref<512x128xbf16, #tpu.memory_space<vmem>>, vector<512x128xbf16>
    %26 = arith.extf %25 : vector<512x128xbf16> to vector<512x128xf32>
    %27 = arith.addf %24, %26 : vector<512x128xf32>
    %cst_11 = arith.constant 0.000000e+00 : f32
    %28 = vector.broadcast %cst_11 : f32 to vector<512x128xf32>
    %29 = arith.maximumf %27, %28 : vector<512x128xf32>
    %c0_12 = arith.constant 0 : index
    %c0_13 = arith.constant 0 : index
    %30 = vector.load %arg5[%c0_12, %c0_13] : memref<512x128xf32, #tpu.memory_space<vmem>>, vector<512x128xf32>
    tpu.vector_store %arg5[%c0_12, %c0_13], %29 {strides = array<i32>} : memref<512x128xf32, #tpu.memory_space<vmem>>, vector<512x128xf32>,
    return
  }
  func.func @transform_0(%arg0: i32) -> (i32, i32) {
    %c0_i32 = arith.constant 0 : i32
    %c0_i32_0 = arith.constant 0 : i32
    return %arg0, %c0_i32 : i32, i32
  }
  func.func @transform_1(%arg0: i32) -> (i32, i32, i32) {
    %c0_i32 = arith.constant 0 : i32
    %c0_i32_0 = arith.constant 0 : i32
    %c0_i32_1 = arith.constant 0 : i32
    %c0_i32_2 = arith.constant 0 : i32
    return %c0_i32, %c0_i32_0, %c0_i32_1 : i32, i32, i32
  }
  func.func @transform_2(%arg0: i32) -> (i32, i32) {
    %c0_i32 = arith.constant 0 : i32
    %c0_i32_0 = arith.constant 0 : i32
    %c0_i32_1 = arith.constant 0 : i32
    return %c0_i32, %c0_i32_0 : i32, i32
  }
  func.func @transform_3(%arg0: i32) -> (i32, i32) {
    %c0_i32 = arith.constant 0 : i32
    %c0_i32_0 = arith.constant 0 : i32
    return %arg0, %c0_i32 : i32, i32
  }
  func.func @transform_4(%arg0: i32) -> (i32, i32) {
    %c0_i32 = arith.constant 0 : i32
    %c0_i32_0 = arith.constant 0 : i32
    return %arg0, %c0_i32 : i32, i32
  }
}

</mosaic_0001>

<llo_original>
// kernel: bottleneck_forward.4
$region0: #{bottleneck_forward.4}
  #allocation0 [shape = 'u32[]', space=smem, size = 0x4, offset = 0x4, fixed_abs, tag = 'smem constant byte address 0x4 - core index']
  #allocation1 [shape = 'u32[144,128]{1,0:T(1,128)}', space=vmem, size = 0x12000, scoped, tag = 'internal scratch']
  %s0 = inlined_call_operand.vmem [shape: bf16[512,128], index: 0, kind: input, shape index: {}]
  %s1 = inlined_call_operand.vmem [shape: bf16[128,128], index: 1, kind: input, shape index: {}]
  %s2 = inlined_call_operand.vmem [shape: bf16[512,128], index: 2, kind: output, shape index: {0}]
  %s3 = inlined_call_operand.vmem [shape: f32[1,2,128], index: 3, kind: output, shape index: {1}]
  %4 = xla_tuple %s2, %s3
  %s5 = sld [smem:[#allocation0]]
  $region26: #{bottleneck_forward.4} parent=0
    _
  %s7 = ssub.s32 1, %s5
  %s8 = scalar_select 0, %s7, %s5
  // Predicated region
  $region2: #{bottleneck_forward.4} parent=0 // pred_check
    _
  $region3: #{bottleneck_forward.4} parent=0 // pred_check_branch
    %10 = sbr.rel (0) target = $region5
  $region4: #{bottleneck_forward.4} parent=0 // pred_region
    _
  $region5: #{bottleneck_forward.4} parent=0 // pred_fallthru
    _
  // Predicated region
  $region6: #{bottleneck_forward.4} parent=0 // pred_check
    _
  $region7: #{bottleneck_forward.4} parent=0 // pred_check_branch
    %12 = sbr.rel (0) target = $region9
  $region8: #{bottleneck_forward.4} parent=0 // pred_region
    _
  $region9: #{bottleneck_forward.4} parent=0 // pred_fallthru
    _
  %v14 = vld [vmem:[%s0] sm:$0xf]
  %v15 = vld [vmem:[%s0 + $0x4] sm:$0xf]
  %v16 = vld [vmem:[%s0 + $0x8] sm:$0xf]
  %v17 = vld [vmem:[%s0 + $0xc] sm:$0xf]
  %v18 = vld [vmem:[%s0 + $0x10] sm:$0xf]
  %v19 = vld [vmem:[%s0 + $0x14] sm:$0xf]
  %v20 = vld [vmem:[%s0 + $0x18] sm:$0xf]
  %v21 = vld [vmem:[%s0 + $0x1c] sm:$0xf]
  %v22 = vld [vmem:[%s0 + $0x20] sm:$0xf]
  %v23 = vld [vmem:[%s0 + $0x24] sm:$0xf]
  %v24 = vld [vmem:[%s0 + $0x28] sm:$0xf]
  %v25 = vld [vmem:[%s0 + $0x2c] sm:$0xf]
  %v26 = vld [vmem:[%s0 + $0x30] sm:$0xf]
  %v27 = vld [vmem:[%s0 + $0x34] sm:$0xf]
  %v28 = vld [vmem:[%s0 + $0x38] sm:$0xf]
  %v29 = vld [vmem:[%s0 + $0x3c] sm:$0xf]
  %v30 = vld [vmem:[%s0 + $0x40] sm:$0xf]
  %v31 = vld [vmem:[%s0 + $0x44] sm:$0xf]
  %v32 = vld [vmem:[%s0 + $0x48] sm:$0xf]
  %v33 = vld [vmem:[%s0 + $0x4c] sm:$0xf]
  %v34 = vld [vmem:[%s0 + $0x50] sm:$0xf]
  %v35 = vld [vmem:[%s0 + $0x54] sm:$0xf]
  %v36 = vld [vmem:[%s0 + $0x58] sm:$0xf]
  %v37 = vld [vmem:[%s0 + $0x5c] sm:$0xf]
  %v38 = vld [vmem:[%s0 + $0x60] sm:$0xf]
  %v39 = vld [vmem:[%s0 + $0x64] sm:$0xf]
  %v40 = vld [vmem:[%s0 + $0x68] sm:$0xf]
  %v41 = vld [vmem:[%s0 + $0x6c] sm:$0xf]
  %v42 = vld [vmem:[%s0 + $0x70] sm:$0xf]
  %v43 = vld [vmem:[%s0 + $0x74] sm:$0xf]
  %v44 = vld [vmem:[%s0 + $0x78] sm:$0xf]
  %v45 = vld [vmem:[%s0 + $0x7c] sm:$0xf]
  %v46 = vld [vmem:[%s0 + $0x80] sm:$0xf]
  %v47 = vld [vmem:[%s0 + $0x84] sm:$0xf]
  %v48 = vld [vmem:[%s0 + $0x88] sm:$0xf]
  %v49 = vld [vmem:[%s0 + $0x8c] sm:$0xf]
  %v50 = vld [vmem:[%s0 + $0x90] sm:$0xf]
  %v51 = vld [vmem:[%s0 + $0x94] sm:$0xf]
  %v52 = vld [vmem:[%s0 + $0x98] sm:$0xf]
  %v53 = vld [vmem:[%s0 + $0x9c] sm:$0xf]
  %v54 = vld [vmem:[%s0 + $0xa0] sm:$0xf]
  %v55 = vld [vmem:[%s0 + $0xa4] sm:$0xf]
  %v56 = vld [vmem:[%s0 + $0xa8] sm:$0xf]
  %v57 = vld [vmem:[%s0 + $0xac] sm:$0xf]
  %v58 = vld [vmem:[%s0 + $0xb0] sm:$0xf]
  %v59 = vld [vmem:[%s0 + $0xb4] sm:$0xf]
  %v60 = vld [vmem:[%s0 + $0xb8] sm:$0xf]
  %v61 = vld [vmem:[%s0 + $0xbc] sm:$0xf]
  %v62 = vld [vmem:[%s0 + $0xc0] sm:$0xf]
  %v63 = vld [vmem:[%s0 + $0xc4] sm:$0xf]
  %v64 = vld [vmem:[%s0 + $0xc8] sm:$0xf]
  %v65 = vld [vmem:[%s0 + $0xcc] sm:$0xf]
  %v66 = vld [vmem:[%s0 + $0xd0] sm:$0xf]
  %v67 = vld [vmem:[%s0 + $0xd4] sm:$0xf]
  %v68 = vld [vmem:[%s0 + $0xd8] sm:$0xf]
  %v69 = vld [vmem:[%s0 + $0xdc] sm:$0xf]
  %v70 = vld [vmem:[%s0 + $0xe0] sm:$0xf]
  %v71 = vld [vmem:[%s0 + $0xe4] sm:$0xf]
  %v72 = vld [vmem:[%s0 + $0xe8] sm:$0xf]
  %v73 = vld [vmem:[%s0 + $0xec] sm:$0xf]
  %v74 = vld [vmem:[%s0 + $0xf0] sm:$0xf]
  %v75 = vld [vmem:[%s0 + $0xf4] sm:$0xf]
  %v76 = vld [vmem:[%s0 + $0xf8] sm:$0xf]
  %v77 = vld [vmem:[%s0 + $0xfc] sm:$0xf]
  %v78 = vld [vmem:[%s1] sm:$0xf]
  %v79 = vld [vmem:[%s1 + $0x4] sm:$0xf]
  %v80 = vld [vmem:[%s1 + $0x8] sm:$0xf]
  %v81 = vld [vmem:[%s1 + $0xc] sm:$0xf]
  %v82 = vld [vmem:[%s1 + $0x10] sm:$0xf]
  %v83 = vld [vmem:[%s1 + $0x14] sm:$0xf]
  %v84 = vld [vmem:[%s1 + $0x18] sm:$0xf]
  %v85 = vld [vmem:[%s1 + $0x1c] sm:$0xf]
  %v86 = vld [vmem:[%s1 + $0x20] sm:$0xf]
  %v87 = vld [vmem:[%s1 + $0x24] sm:$0xf]
  %v88 = vld [vmem:[%s1 + $0x28] sm:$0xf]
  %v89 = vld [vmem:[%s1 + $0x2c] sm:$0xf]
  %v90 = vld [vmem:[%s1 + $0x30] sm:$0xf]
  %v91 = vld [vmem:[%s1 + $0x34] sm:$0xf]
  %v92 = vld [vmem:[%s1 + $0x38] sm:$0xf]
  %v93 = vld [vmem:[%s1 + $0x3c] sm:$0xf]
  %v158 = vunpack.c.l.b16 %v14
  %v159 = vunpack.c.l.b16 %v15
  %v160 = vunpack.c.l.b16 %v16
  %v161 = vunpack.c.l.b16 %v17
  %v162 = vunpack.c.l.b16 %v18
  %v163 = vunpack.c.l.b16 %v19
  %v164 = vunpack.c.l.b16 %v20
  %v165 = vunpack.c.l.b16 %v21
  %v166 = vunpack.c.l.b16 %v22
  %v167 = vunpack.c.l.b16 %v23
  %v168 = vunpack.c.l.b16 %v24
  %v169 = vunpack.c.l.b16 %v25
  %v170 = vunpack.c.l.b16 %v26
  %v171 = vunpack.c.l.b16 %v27
  %v172 = vunpack.c.l.b16 %v28
  %v173 = vunpack.c.l.b16 %v29
  %v174 = vunpack.c.l.b16 %v30
  %v175 = vunpack.c.l.b16 %v31
  %v176 = vunpack.c.l.b16 %v32
  %v177 = vunpack.c.l.b16 %v33
  %v178 = vunpack.c.l.b16 %v34
  %v179 = vunpack.c.l.b16 %v35
  %v180 = vunpack.c.l.b16 %v36
  %v181 = vunpack.c.l.b16 %v37
  %v182 = vunpack.c.l.b16 %v38
  %v183 = vunpack.c.l.b16 %v39
  %v184 = vunpack.c.l.b16 %v40
  %v185 = vunpack.c.l.b16 %v41
  %v186 = vunpack.c.l.b16 %v42
  %v187 = vunpack.c.l.b16 %v43
  %v188 = vunpack.c.l.b16 %v44
  %v189 = vunpack.c.l.b16 %v45
  %v190 = vunpack.c.l.b16 %v46
  %v191 = vunpack.c.l.b16 %v47
  %v192 = vunpack.c.l.b16 %v48
  %v193 = vunpack.c.l.b16 %v49
  %v194 = vunpack.c.l.b16 %v50
  %v195 = vunpack.c.l.b16 %v51
  %v196 = vunpack.c.l.b16 %v52
  %v197 = vunpack.c.l.b16 %v53
  %v198 = vunpack.c.l.b16 %v54
  %v199 = vunpack.c.l.b16 %v55
  %v200 = vunpack.c.l.b16 %v56
  %v201 = vunpack.c.l.b16 %v57
  %v202 = vunpack.c.l.b16 %v58
  %v203 = vunpack.c.l.b16 %v59
  %v204 = vunpack.c.l.b16 %v60
  %v205 = vunpack.c.l.b16 %v61
  %v206 = vunpack.c.l.b16 %v62
  %v207 = vunpack.c.l.b16 %v63
  %v208 = vunpack.c.l.b16 %v64
  %v209 = vunpack.c.l.b16 %v65
  %v210 = vunpack.c.l.b16 %v66
  %v211 = vunpack.c.l.b16 %v67
  %v212 = vunpack.c.l.b16 %v68
  %v213 = vunpack.c.l.b16 %v69
  %v214 = vunpack.c.l.b16 %v70
  %v215 = vunpack.c.l.b16 %v71
  %v216 = vunpack.c.l.b16 %v72
  %v217 = vunpack.c.l.b16 %v73
  %v218 = vunpack.c.l.b16 %v74
  %v219 = vunpack.c.l.b16 %v75
  %v220 = vunpack.c.l.b16 %v76
  %v221 = vunpack.c.l.b16 %v77
  %v222 = vpack.c.b16 %v159, %v158
  %v223 = vpack.c.b16 %v161, %v160
  %v224 = vpack.c.b16 %v163, %v162
  %v225 = vpack.c.b16 %v165, %v164
  %v226 = vpack.c.b16 %v167, %v166
  %v227 = vpack.c.b16 %v169, %v168
  %v228 = vpack.c.b16 %v171, %v170
  %v229 = vpack.c.b16 %v173, %v172
  %v230 = vpack.c.b16 %v175, %v174
  %v231 = vpack.c.b16 %v177, %v176
  %v232 = vpack.c.b16 %v179, %v178
  %v233 = vpack.c.b16 %v181, %v180
  %v234 = vpack.c.b16 %v183, %v182
  %v235 = vpack.c.b16 %v185, %v184
  %v236 = vpack.c.b16 %v187, %v186
  %v237 = vpack.c.b16 %v189, %v188
  %v238 = vpack.c.b16 %v191, %v190
  %v239 = vpack.c.b16 %v193, %v192
  %v240 = vpack.c.b16 %v195, %v194
  %v241 = vpack.c.b16 %v197, %v196
  %v242 = vpack.c.b16 %v199, %v198
  %v243 = vpack.c.b16 %v201, %v200
  %v244 = vpack.c.b16 %v203, %v202
  %v245 = vpack.c.b16 %v205, %v204
  %v246 = vpack.c.b16 %v207, %v206
  %v247 = vpack.c.b16 %v209, %v208
  %v248 = vpack.c.b16 %v211, %v210
  %v249 = vpack.c.b16 %v213, %v212
  %v250 = vpack.c.b16 %v215, %v214
  %v251 = vpack.c.b16 %v217, %v216
  %v252 = vpack.c.b16 %v219, %v218
  %v253 = vpack.c.b16 %v221, %v220
  %v302 = vunpack.c.l.b16 %v78
  %v303 = vunpack.c.l.b16 %v79
  %v304 = vunpack.c.l.b16 %v80
  %v305 = vunpack.c.l.b16 %v81
  %v306 = vunpack.c.l.b16 %v82
  %v307 = vunpack.c.l.b16 %v83
  %v308 = vunpack.c.l.b16 %v84
  %v309 = vunpack.c.l.b16 %v85
  %v310 = vunpack.c.l.b16 %v86
  %v311 = vunpack.c.l.b16 %v87
  %v312 = vunpack.c.l.b16 %v88
  %v313 = vunpack.c.l.b16 %v89
  %v314 = vunpack.c.l.b16 %v90
  %v315 = vunpack.c.l.b16 %v91
  %v316 = vunpack.c.l.b16 %v92
  %v317 = vunpack.c.l.b16 %v93
  %v318 = vpack.c.b16 %v303, %v302
  %v319 = vpack.c.b16 %v305, %v304
  %v320 = vpack.c.b16 %v307, %v306
  %v321 = vpack.c.b16 %v309, %v308
  %v322 = vpack.c.b16 %v311, %v310
  %v323 = vpack.c.b16 %v313, %v312
  %v324 = vpack.c.b16 %v315, %v314
  %v325 = vpack.c.b16 %v317, %v316
  %334 = vmatprep.subr.bf16.mxu0 0
  %335 = vmatpush1.bf16.msra.mxu0 %v318
  %336 = vmatprep.subr.bf16.mxu0 0
  %337 = vmatpush1.bf16.msra.mxu0 %v319
  %338 = vmatprep.subr.bf16.mxu0 0
  %339 = vmatpush1.bf16.msra.mxu0 %v320
  %340 = vmatprep.subr.bf16.mxu0 0
  %341 = vmatpush1.bf16.msra.mxu0 %v321
  %342 = vmatprep.subr.bf16.mxu0 0
  %343 = vmatpush1.bf16.msra.mxu0 %v322
  %344 = vmatprep.subr.bf16.mxu0 0
  %345 = vmatpush1.bf16.msra.mxu0 %v323
  %346 = vmatprep.subr.bf16.mxu0 0
  %347 = vmatpush1.bf16.msra.mxu0 %v324
  %348 = vmatprep.subr.bf16.mxu0 0
  %349 = vmatpush1.bf16.msra.mxu0 %v325
  %350 = vmatprep.subr.bf16.mxu0 0
  %351 = vmatpush1.bf16.msra.mxu0 0
  %352 = vmatprep.subr.bf16.mxu0 0
  %353 = vmatpush1.bf16.msra.mxu0 0
  %354 = vmatprep.subr.bf16.mxu0 0
  %355 = vmatpush1.bf16.msra.mxu0 0
  %356 = vmatprep.subr.bf16.mxu0 0
  %357 = vmatpush1.bf16.msra.mxu0 0
  %358 = vmatprep.subr.bf16.mxu0 0
  %359 = vmatpush1.bf16.msra.mxu0 0
  %360 = vmatprep.subr.bf16.mxu0 0
  %361 = vmatpush1.bf16.msra.mxu0 0
  %362 = vmatprep.subr.bf16.mxu0 0
  %363 = vmatpush1.bf16.msra.mxu0 0
  %364 = vmatprep.subr.bf16.mxu0 0
  %365 = vmatpush1.bf16.msra.mxu0 0
  %366 = vmatprep.mubr.bf16.mxu0 0
  %367 = vmatmul.mubr.bf16.gmra.mrb[0].mxu0 %v222
  %v368 = vpop.f32.mrb[0].mxu0
  %v369 = vadd.f32 0.0, %v368
  %v370 = vpop.f32.mrb[0].mxu0
  %v371 = vpop.f32.mrb[0].mxu0
  %v372 = vadd.f32 0.0, %v371
  %v373 = vpop.f32.mrb[0].mxu0
  %374 = vmatprep.mubr.bf16.mxu0 0
  %375 = vmatmul.mubr.bf16.gmra.mrb[0].mxu0 %v223
  %v376 = vpop.f32.mrb[0].mxu0
  %v377 = vadd.f32 0.0, %v376
  %v378 = vpop.f32.mrb[0].mxu0
  %v379 = vpop.f32.mrb[0].mxu0
  %v380 = vadd.f32 0.0, %v379
  %v381 = vpop.f32.mrb[0].mxu0
  %382 = vmatprep.mubr.bf16.mxu0 0
  %383 = vmatmul.mubr.bf16.gmra.mrb[0].mxu0 %v224
  %v384 = vpop.f32.mrb[0].mxu0
  %v385 = vadd.f32 0.0, %v384
  %v386 = vpop.f32.mrb[0].mxu0
  %v387 = vpop.f32.mrb[0].mxu0
  %v388 = vadd.f32 0.0, %v387
  %v389 = vpop.f32.mrb[0].mxu0
  %390 = vmatprep.mubr.bf16.mxu0 0
  %391 = vmatmul.mubr.bf16.gmra.mrb[0].mxu0 %v225
  %v392 = vpop.f32.mrb[0].mxu0
  %v393 = vadd.f32 0.0, %v392
  %v394 = vpop.f32.mrb[0].mxu0
  %v395 = vpop.f32.mrb[0].mxu0
  %v396 = vadd.f32 0.0, %v395
  %v397 = vpop.f32.mrb[0].mxu0
  %398 = vmatprep.mubr.bf16.mxu0 0
  %399 = vmatmul.mubr.bf16.gmra.mrb[0].mxu0 %v226
  %v400 = vpop.f32.mrb[0].mxu0
  %v401 = vadd.f32 0.0, %v400
  %v402 = vpop.f32.mrb[0].mxu0
  %v403 = vpop.f32.mrb[0].mxu0
  %v404 = vadd.f32 0.0, %v403
  %v405 = vpop.f32.mrb[0].mxu0
  %406 = vmatprep.mubr.bf16.mxu0 0
  %407 = vmatmul.mubr.bf16.gmra.mrb[0].mxu0 %v227
  %v408 = vpop.f32.mrb[0].mxu0
  %v409 = vadd.f32 0.0, %v408
  %v410 = vpop.f32.mrb[0].mxu0
  %v411 = vpop.f32.mrb[0].mxu0
  %v412 = vadd.f32 0.0, %v411
  %v413 = vpop.f32.mrb[0].mxu0
  %414 = vmatprep.mubr.bf16.mxu0 0
  %415 = vmatmul.mubr.bf16.gmra.mrb[0].mxu0 %v228
  %v416 = vpop.f32.mrb[0].mxu0
  %v417 = vadd.f32 0.0, %v416
  %v418 = vpop.f32.mrb[0].mxu0
  %v419 = vpop.f32.mrb[0].mxu0
  %v420 = vadd.f32 0.0, %v419
  %v421 = vpop.f32.mrb[0].mxu0
  %422 = vmatprep.mubr.bf16.mxu0 0
  %423 = vmatmul.mubr.bf16.gmra.mrb[0].mxu0 %v229
  %v424 = vpop.f32.mrb[0].mxu0
  %v425 = vadd.f32 0.0, %v424
  %v426 = vpop.f32.mrb[0].mxu0
  %v427 = vpop.f32.mrb[0].mxu0
  %v428 = vadd.f32 0.0, %v427
  %v429 = vpop.f32.mrb[0].mxu0
  %430 = vmatprep.mubr.bf16.mxu0 0
  %431 = vmatmul.mubr.bf16.gmra.mrb[0].mxu0 %v230
  %v432 = vpop.f32.mrb[0].mxu0
  %v433 = vadd.f32 0.0, %v432
  %v434 = vpop.f32.mrb[0].mxu0
  %v435 = vpop.f32.mrb[0].mxu0
  %v436 = vadd.f32 0.0, %v435
  %v437 = vpop.f32.mrb[0].mxu0
  %438 = vmatprep.mubr.bf16.mxu0 0
  %439 = vmatmul.mubr.bf16.gmra.mrb[0].mxu0 %v231
  %v440 = vpop.f32.mrb[0].mxu0
  %v441 = vadd.f32 0.0, %v440
  %v442 = vpop.f32.mrb[0].mxu0
  %v443 = vpop.f32.mrb[0].mxu0
  %v444 = vadd.f32 0.0, %v443
  %v445 = vpop.f32.mrb[0].mxu0
  %446 = vmatprep.mubr.bf16.mxu0 0
  %447 = vmatmul.mubr.bf16.gmra.mrb[0].mxu0 %v232
  %v448 = vpop.f32.mrb[0].mxu0
  %v449 = vadd.f32 0.0, %v448
  %v450 = vpop.f32.mrb[0].mxu0
  %v451 = vpop.f32.mrb[0].mxu0
  %v452 = vadd.f32 0.0, %v451
  %v453 = vpop.f32.mrb[0].mxu0
  %454 = vmatprep.mubr.bf16.mxu0 0
  %455 = vmatmul.mubr.bf16.gmra.mrb[0].mxu0 %v233
  %v456 = vpop.f32.mrb[0].mxu0
  %v457 = vadd.f32 0.0, %v456
  %v458 = vpop.f32.mrb[0].mxu0
  %v459 = vpop.f32.mrb[0].mxu0
  %v460 = vadd.f32 0.0, %v459
  %v461 = vpop.f32.mrb[0].mxu0
  %462 = vmatprep.mubr.bf16.mxu0 0
  %463 = vmatmul.mubr.bf16.gmra.mrb[0].mxu0 %v234
  %v464 = vpop.f32.mrb[0].mxu0
  %v465 = vadd.f32 0.0, %v464
  %v466 = vpop.f32.mrb[0].mxu0
  %v467 = vpop.f32.mrb[0].mxu0
  %v468 = vadd.f32 0.0, %v467
  %v469 = vpop.f32.mrb[0].mxu0
  %470 = vmatprep.mubr.bf16.mxu0 0
  %471 = vmatmul.mubr.bf16.gmra.mrb[0].mxu0 %v235
  %v472 = vpop.f32.mrb[0].mxu0
  %v473 = vadd.f32 0.0, %v472
  %v474 = vpop.f32.mrb[0].mxu0
  %v475 = vpop.f32.mrb[0].mxu0
  %v476 = vadd.f32 0.0, %v475
  %v477 = vpop.f32.mrb[0].mxu0
  %478 = vmatprep.mubr.bf16.mxu0 0
  %479 = vmatmul.mubr.bf16.gmra.mrb[0].mxu0 %v236
  %v480 = vpop.f32.mrb[0].mxu0
  %v481 = vadd.f32 0.0, %v480
  %v482 = vpop.f32.mrb[0].mxu0
  %v483 = vpop.f32.mrb[0].mxu0
  %v484 = vadd.f32 0.0, %v483
  %v485 = vpop.f32.mrb[0].mxu0
  %486 = vmatprep.mubr.bf16.mxu0 0
  %487 = vmatmul.mubr.bf16.gmra.mrb[0].mxu0 %v237
  %v488 = vpop.f32.mrb[0].mxu0
  %v489 = vadd.f32 0.0, %v488
  %v490 = vpop.f32.mrb[0].mxu0
  %v491 = vpop.f32.mrb[0].mxu0
  %v492 = vadd.f32 0.0, %v491
  %v493 = vpop.f32.mrb[0].mxu0
  %494 = vmatprep.mubr.bf16.mxu0 0
  %495 = vmatmul.mubr.bf16.gmra.mrb[0].mxu0 %v238
  %v496 = vpop.f32.mrb[0].mxu0
  %v497 = vadd.f32 0.0, %v496
  %v498 = vpop.f32.mrb[0].mxu0
  %v499 = vpop.f32.mrb[0].mxu0
  %v500 = vadd.f32 0.0, %v499
  %v501 = vpop.f32.mrb[0].mxu0
  %502 = vmatprep.mubr.bf16.mxu0 0
  %503 = vmatmul.mubr.bf16.gmra.mrb[0].mxu0 %v239
  %v504 = vpop.f32.mrb[0].mxu0
  %v505 = vadd.f32 0.0, %v504
  %v506 = vpop.f32.mrb[0].mxu0
  %v507 = vpop.f32.mrb[0].mxu0
  %v508 = vadd.f32 0.0, %v507
  %v509 = vpop.f32.mrb[0].mxu0
  %510 = vmatprep.mubr.bf16.mxu0 0
  %511 = vmatmul.mubr.bf16.gmra.mrb[0].mxu0 %v240
  %v512 = vpop.f32.mrb[0].mxu0
  %v513 = vadd.f32 0.0, %v512
  %v514 = vpop.f32.mrb[0].mxu0
  %v515 = vpop.f32.mrb[0].mxu0
  %v516 = vadd.f32 0.0, %v515
  %v517 = vpop.f32.mrb[0].mxu0
  %518 = vmatprep.mubr.bf16.mxu0 0
  %519 = vmatmul.mubr.bf16.gmra.mrb[0].mxu0 %v241
  %v520 = vpop.f32.mrb[0].mxu0
  %v521 = vadd.f32 0.0, %v520
  %v522 = vpop.f32.mrb[0].mxu0
  %v523 = vpop.f32.mrb[0].mxu0
  %v524 = vadd.f32 0.0, %v523
  %v525 = vpop.f32.mrb[0].mxu0
  %526 = vmatprep.mubr.bf16.mxu0 0
  %527 = vmatmul.mubr.bf16.gmra.mrb[0].mxu0 %v242
  %v528 = vpop.f32.mrb[0].mxu0
  %v529 = vadd.f32 0.0, %v528
  %v530 = vpop.f32.mrb[0].mxu0
  %v531 = vpop.f32.mrb[0].mxu0
  %v532 = vadd.f32 0.0, %v531
  %v533 = vpop.f32.mrb[0].mxu0
  %534 = vmatprep.mubr.bf16.mxu0 0
  %535 = vmatmul.mubr.bf16.gmra.mrb[0].mxu0 %v243
  %v536 = vpop.f32.mrb[0].mxu0
  %v537 = vadd.f32 0.0, %v536
  %v538 = vpop.f32.mrb[0].mxu0
  %v539 = vpop.f32.mrb[0].mxu0
  %v540 = vadd.f32 0.0, %v539
  %v541 = vpop.f32.mrb[0].mxu0
  %542 = vmatprep.mubr.bf16.mxu0 0
  %543 = vmatmul.mubr.bf16.gmra.mrb[0].mxu0 %v244
  %v544 = vpop.f32.mrb[0].mxu0
  %v545 = vadd.f32 0.0, %v544
  %v546 = vpop.f32.mrb[0].mxu0
  %v547 = vpop.f32.mrb[0].mxu0
  %v548 = vadd.f32 0.0, %v547
  %v549 = vpop.f32.mrb[0].mxu0
  %550 = vmatprep.mubr.bf16.mxu0 0
  %551 = vmatmul.mubr.bf16.gmra.mrb[0].mxu0 %v245
  %v552 = vpop.f32.mrb[0].mxu0
  %v553 = vadd.f32 0.0, %v552
  %v554 = vpop.f32.mrb[0].mxu0
  %v555 = vpop.f32.mrb[0].mxu0
  %v556 = vadd.f32 0.0, %v555
  %v557 = vpop.f32.mrb[0].mxu0
  %558 = vmatprep.mubr.bf16.mxu0 0
  %559 = vmatmul.mubr.bf16.gmra.mrb[0].mxu0 %v246
  %v560 = vpop.f32.mrb[0].mxu0
  %v561 = vadd.f32 0.0, %v560
  %v562 = vpop.f32.mrb[0].mxu0
  %v563 = vpop.f32.mrb[0].mxu0
  %v564 = vadd.f32 0.0, %v563
  %v565 = vpop.f32.mrb[0].mxu0
  %566 = vmatprep.mubr.bf16.mxu0 0
  %567 = vmatmul.mubr.bf16.gmra.mrb[0].mxu0 %v247
  %v568 = vpop.f32.mrb[0].mxu0
  %v569 = vadd.f32 0.0, %v568
  %v570 = vpop.f32.mrb[0].mxu0
  %v571 = vpop.f32.mrb[0].mxu0
  %v572 = vadd.f32 0.0, %v571
  %v573 = vpop.f32.mrb[0].mxu0
  %574 = vmatprep.mubr.bf16.mxu0 0
  %575 = vmatmul.mubr.bf16.gmra.mrb[0].mxu0 %v248
  %v576 = vpop.f32.mrb[0].mxu0
  %v577 = vadd.f32 0.0, %v576
  %v578 = vpop.f32.mrb[0].mxu0
  %v579 = vpop.f32.mrb[0].mxu0
  %v580 = vadd.f32 0.0, %v579
  %v581 = vpop.f32.mrb[0].mxu0
  %582 = vmatprep.mubr.bf16.mxu0 0
  %583 = vmatmul.mubr.bf16.gmra.mrb[0].mxu0 %v249
  %v584 = vpop.f32.mrb[0].mxu0
  %v585 = vadd.f32 0.0, %v584
  %v586 = vpop.f32.mrb[0].mxu0
  %v587 = vpop.f32.mrb[0].mxu0
  %v588 = vadd.f32 0.0, %v587
  %v589 = vpop.f32.mrb[0].mxu0
  %590 = vmatprep.mubr.bf16.mxu0 0
  %591 = vmatmul.mubr.bf16.gmra.mrb[0].mxu0 %v250
  %v592 = vpop.f32.mrb[0].mxu0
  %v593 = vadd.f32 0.0, %v592
  %v594 = vpop.f32.mrb[0].mxu0
  %v595 = vpop.f32.mrb[0].mxu0
  %v596 = vadd.f32 0.0, %v595
  %v597 = vpop.f32.mrb[0].mxu0
  %598 = vmatprep.mubr.bf16.mxu0 0
  %599 = vmatmul.mubr.bf16.gmra.mrb[0].mxu0 %v251
  %v600 = vpop.f32.mrb[0].mxu0
  %v601 = vadd.f32 0.0, %v600
  %v602 = vpop.f32.mrb[0].mxu0
  %v603 = vpop.f32.mrb[0].mxu0
  %v604 = vadd.f32 0.0, %v603
  %v605 = vpop.f32.mrb[0].mxu0
  %606 = vmatprep.mubr.bf16.mxu0 0
  %607 = vmatmul.mubr.bf16.gmra.mrb[0].mxu0 %v252
  %v608 = vpop.f32.mrb[0].mxu0
  %v609 = vadd.f32 0.0, %v608
  %v610 = vpop.f32.mrb[0].mxu0
  %v611 = vpop.f32.mrb[0].mxu0
  %v612 = vadd.f32 0.0, %v611
  %v613 = vpop.f32.mrb[0].mxu0
  %614 = vmatprep.mubr.bf16.mxu0 0
  %615 = vmatmul.mubr.bf16.gmra.mrb[0].mxu0 %v253
  %v616 = vpop.f32.mrb[0].mxu0
  %v617 = vadd.f32 0.0, %v616
  %v618 = vpop.f32.mrb[0].mxu0
  %v619 = vpop.f32.mrb[0].mxu0
  %v620 = vadd.f32 0.0, %v619
  %v621 = vpop.f32.mrb[0].mxu0
  %622 = vdwg.mxu0
  %v623 = vpack.c.bf16 %v372, %v369
  %v624 = vpack.c.bf16 %v380, %v377
  %v625 = vpack.c.bf16 %v388, %v385
  %v626 = vpack.c.bf16 %v396, %v393
  %v627 = vpack.c.bf16 %v404, %v401
  %v628 = vpack.c.bf16 %v412, %v409
  %v629 = vpack.c.bf16 %v420, %v417
  %v630 = vpack.c.bf16 %v428, %v425
  %v631 = vpack.c.bf16 %v436, %v433
  %v632 = vpack.c.bf16 %v444, %v441
  %v633 = vpack.c.bf16 %v452, %v449
  %v634 = vpack.c.bf16 %v460, %v457
  %v635 = vpack.c.bf16 %v468, %v465
  %v636 = vpack.c.bf16 %v476, %v473
  %v637 = vpack.c.bf16 %v484, %v481
  %v638 = vpack.c.bf16 %v492, %v489
  %v639 = vpack.c.bf16 %v500, %v497
  %v640 = vpack.c.bf16 %v508, %v505
  %v641 = vpack.c.bf16 %v516, %v513
  %v642 = vpack.c.bf16 %v524, %v521
  %v643 = vpack.c.bf16 %v532, %v529
  %v644 = vpack.c.bf16 %v540, %v537
  %v645 = vpack.c.bf16 %v548, %v545
  %v646 = vpack.c.bf16 %v556, %v553
  %v647 = vpack.c.bf16 %v564, %v561
  %v648 = vpack.c.bf16 %v572, %v569
  %v649 = vpack.c.bf16 %v580, %v577
  %v650 = vpack.c.bf16 %v588, %v585
  %v651 = vpack.c.bf16 %v596, %v593
  %v652 = vpack.c.bf16 %v604, %v601
  %v653 = vpack.c.bf16 %v612, %v609
  %v654 = vpack.c.bf16 %v620, %v617
  %v687 = vunpack.c.l.b16 %v623
  %v688 = vunpack.c.h.b16 %v623
  %v689 = vunpack.c.l.b16 %v624
  %v690 = vunpack.c.h.b16 %v624
  %v691 = vunpack.c.l.b16 %v625
  %v692 = vunpack.c.h.b16 %v625
  %v693 = vunpack.c.l.b16 %v626
  %v694 = vunpack.c.h.b16 %v626
  %v695 = vunpack.c.l.b16 %v627
  %v696 = vunpack.c.h.b16 %v627
  %v697 = vunpack.c.l.b16 %v628
  %v698 = vunpack.c.h.b16 %v628
  %v699 = vunpack.c.l.b16 %v629
  %v700 = vunpack.c.h.b16 %v629
  %v701 = vunpack.c.l.b16 %v630
  %v702 = vunpack.c.h.b16 %v630
  %v703 = vunpack.c.l.b16 %v631
  %v704 = vunpack.c.h.b16 %v631
  %v705 = vunpack.c.l.b16 %v632
  %v706 = vunpack.c.h.b16 %v632
  %v707 = vunpack.c.l.b16 %v633
  %v708 = vunpack.c.h.b16 %v633
  %v709 = vunpack.c.l.b16 %v634
  %v710 = vunpack.c.h.b16 %v634
  %v711 = vunpack.c.l.b16 %v635
  %v712 = vunpack.c.h.b16 %v635
  %v713 = vunpack.c.l.b16 %v636
  %v714 = vunpack.c.h.b16 %v636
  %v715 = vunpack.c.l.b16 %v637
  %v716 = vunpack.c.h.b16 %v637
  %v717 = vunpack.c.l.b16 %v638
  %v718 = vunpack.c.h.b16 %v638
  %v719 = vunpack.c.l.b16 %v639
  %v720 = vunpack.c.h.b16 %v639
  %v721 = vunpack.c.l.b16 %v640
  %v722 = vunpack.c.h.b16 %v640
  %v723 = vunpack.c.l.b16 %v641
  %v724 = vunpack.c.h.b16 %v641
  %v725 = vunpack.c.l.b16 %v642
  %v726 = vunpack.c.h.b16 %v642
  %v727 = vunpack.c.l.b16 %v643
  %v728 = vunpack.c.h.b16 %v643
  %v729 = vunpack.c.l.b16 %v644
  %v730 = vunpack.c.h.b16 %v644
  %v731 = vunpack.c.l.b16 %v645
  %v732 = vunpack.c.h.b16 %v645
  %v733 = vunpack.c.l.b16 %v646
  %v734 = vunpack.c.h.b16 %v646
  %v735 = vunpack.c.l.b16 %v647
  %v736 = vunpack.c.h.b16 %v647
  %v737 = vunpack.c.l.b16 %v648
  %v738 = vunpack.c.h.b16 %v648
  %v739 = vunpack.c.l.b16 %v649
  %v740 = vunpack.c.h.b16 %v649
  %v741 = vunpack.c.l.b16 %v650
  %v742 = vunpack.c.h.b16 %v650
  %v743 = vunpack.c.l.b16 %v651
  %v744 = vunpack.c.h.b16 %v651
  %v745 = vunpack.c.l.b16 %v652
  %v746 = vunpack.c.h.b16 %v652
  %v747 = vunpack.c.l.b16 %v653
  %v748 = vunpack.c.h.b16 %v653
  %v749 = vunpack.c.l.b16 %v654
  %v750 = vunpack.c.h.b16 %v654
  %v751 = vpack.c.b16 %v687, %v687
  %v752 = vpack.c.b16 %v688, %v688
  %v753 = vpack.c.b16 %v689, %v689
  %v754 = vpack.c.b16 %v690, %v690
  %v755 = vpack.c.b16 %v691, %v691
  %v756 = vpack.c.b16 %v692, %v692
  %v757 = vpack.c.b16 %v693, %v693
  %v758 = vpack.c.b16 %v694, %v694
  %v759 = vpack.c.b16 %v695, %v695
  %v760 = vpack.c.b16 %v696, %v696
  %v761 = vpack.c.b16 %v697, %v697
  %v762 = vpack.c.b16 %v698, %v698
  %v763 = vpack.c.b16 %v699, %v699
  %v764 = vpack.c.b16 %v700, %v700
  %v765 = vpack.c.b16 %v701, %v701
  %v766 = vpack.c.b16 %v702, %v702
  %v767 = vpack.c.b16 %v703, %v703
  %v768 = vpack.c.b16 %v704, %v704
  %v769 = vpack.c.b16 %v705, %v705
  %v770 = vpack.c.b16 %v706, %v706
  %v771 = vpack.c.b16 %v707, %v707
  %v772 = vpack.c.b16 %v708, %v708
  %v773 = vpack.c.b16 %v709, %v709
  %v774 = vpack.c.b16 %v710, %v710
  %v775 = vpack.c.b16 %v711, %v711
  %v776 = vpack.c.b16 %v712, %v712
  %v777 = vpack.c.b16 %v713, %v713
  %v778 = vpack.c.b16 %v714, %v714
  %v779 = vpack.c.b16 %v715, %v715
  %v780 = vpack.c.b16 %v716, %v716
  %v781 = vpack.c.b16 %v717, %v717
  %v782 = vpack.c.b16 %v718, %v718
  %v783 = vpack.c.b16 %v719, %v719
  %v784 = vpack.c.b16 %v720, %v720
  %v785 = vpack.c.b16 %v721, %v721
  %v786 = vpack.c.b16 %v722, %v722
  %v787 = vpack.c.b16 %v723, %v723
  %v788 = vpack.c.b16 %v724, %v724
  %v789 = vpack.c.b16 %v725, %v725
  %v790 = vpack.c.b16 %v726, %v726
  %v791 = vpack.c.b16 %v727, %v727
  %v792 = vpack.c.b16 %v728, %v728
  %v793 = vpack.c.b16 %v729, %v729
  %v794 = vpack.c.b16 %v730, %v730
  %v795 = vpack.c.b16 %v731, %v731
  %v796 = vpack.c.b16 %v732, %v732
  %v797 = vpack.c.b16 %v733, %v733
  %v798 = vpack.c.b16 %v734, %v734
  %v799 = vpack.c.b16 %v735, %v735
  %v800 = vpack.c.b16 %v736, %v736
  %v801 = vpack.c.b16 %v737, %v737
  %v802 = vpack.c.b16 %v738, %v738
  %v803 = vpack.c.b16 %v739, %v739
  %v804 = vpack.c.b16 %v740, %v740
  %v805 = vpack.c.b16 %v741, %v741
  %v806 = vpack.c.b16 %v742, %v742
  %v807 = vpack.c.b16 %v743, %v743
  %v808 = vpack.c.b16 %v744, %v744
  %v809 = vpack.c.b16 %v745, %v745
  %v810 = vpack.c.b16 %v746, %v746
  %v811 = vpack.c.b16 %v747, %v747
  %v812 = vpack.c.b16 %v748, %v748
  %v813 = vpack.c.b16 %v749, %v749
  %v814 = vpack.c.b16 %v750, %v750
  %879 = vst [vmem:[%s2] sm:$0xf] %v751
  %880 = vst [vmem:[%s2 + $0x4] sm:$0xf] %v752
  %881 = vst [vmem:[%s2 + $0x8] sm:$0xf] %v753
  %882 = vst [vmem:[%s2 + $0xc] sm:$0xf] %v754
  %883 = vst [vmem:[%s2 + $0x10] sm:$0xf] %v755
  %884 = vst [vmem:[%s2 + $0x14] sm:$0xf] %v756
  %885 = vst [vmem:[%s2 + $0x18] sm:$0xf] %v757
  %886 = vst [vmem:[%s2 + $0x1c] sm:$0xf] %v758
  %887 = vst [vmem:[%s2 + $0x20] sm:$0xf] %v759
  %888 = vst [vmem:[%s2 + $0x24] sm:$0xf] %v760
  %889 = vst [vmem:[%s2 + $0x28] sm:$0xf] %v761
  %890 = vst [vmem:[%s2 + $0x2c] sm:$0xf] %v762
  %891 = vst [vmem:[%s2 + $0x30] sm:$0xf] %v763
  %892 = vst [vmem:[%s2 + $0x34] sm:$0xf] %v764
  %893 = vst [vmem:[%s2 + $0x38] sm:$0xf] %v765
  %894 = vst [vmem:[%s2 + $0x3c] sm:$0xf] %v766
  %895 = vst [vmem:[%s2 + $0x40] sm:$0xf] %v767
  %896 = vst [vmem:[%s2 + $0x44] sm:$0xf] %v768
  %897 = vst [vmem:[%s2 + $0x48] sm:$0xf] %v769
  %898 = vst [vmem:[%s2 + $0x4c] sm:$0xf] %v770
  %899 = vst [vmem:[%s2 + $0x50] sm:$0xf] %v771
  %900 = vst [vmem:[%s2 + $0x54] sm:$0xf] %v772
  %901 = vst [vmem:[%s2 + $0x58] sm:$0xf] %v773
  %902 = vst [vmem:[%s2 + $0x5c] sm:$0xf] %v774
  %903 = vst [vmem:[%s2 + $0x60] sm:$0xf] %v775
  %904 = vst [vmem:[%s2 + $0x64] sm:$0xf] %v776
  %905 = vst [vmem:[%s2 + $0x68] sm:$0xf] %v777
  %906 = vst [vmem:[%s2 + $0x6c] sm:$0xf] %v778
  %907 = vst [vmem:[%s2 + $0x70] sm:$0xf] %v779
  %908 = vst [vmem:[%s2 + $0x74] sm:$0xf] %v780
  %909 = vst [vmem:[%s2 + $0x78] sm:$0xf] %v781
  %910 = vst [vmem:[%s2 + $0x7c] sm:$0xf] %v782
  %911 = vst [vmem:[%s2 + $0x80] sm:$0xf] %v783
  %912 = vst [vmem:[%s2 + $0x84] sm:$0xf] %v784
  %913 = vst [vmem:[%s2 + $0x88] sm:$0xf] %v785
  %914 = vst [vmem:[%s2 + $0x8c] sm:$0xf] %v786
  %915 = vst [vmem:[%s2 + $0x90] sm:$0xf] %v787
  %916 = vst [vmem:[%s2 + $0x94] sm:$0xf] %v788
  %917 = vst [vmem:[%s2 + $0x98] sm:$0xf] %v789
  %918 = vst [vmem:[%s2 + $0x9c] sm:$0xf] %v790
  %919 = vst [vmem:[%s2 + $0xa0] sm:$0xf] %v791
  %920 = vst [vmem:[%s2 + $0xa4] sm:$0xf] %v792
  %921 = vst [vmem:[%s2 + $0xa8] sm:$0xf] %v793
  %922 = vst [vmem:[%s2 + $0xac] sm:$0xf] %v794
  %923 = vst [vmem:[%s2 + $0xb0] sm:$0xf] %v795
  %924 = vst [vmem:[%s2 + $0xb4] sm:$0xf] %v796
  %925 = vst [vmem:[%s2 + $0xb8] sm:$0xf] %v797
  %926 = vst [vmem:[%s2 + $0xbc] sm:$0xf] %v798
  %927 = vst [vmem:[%s2 + $0xc0] sm:$0xf] %v799
  %928 = vst [vmem:[%s2 + $0xc4] sm:$0xf] %v800
  %929 = vst [vmem:[%s2 + $0xc8] sm:$0xf] %v801
  %930 = vst [vmem:[%s2 + $0xcc] sm:$0xf] %v802
  %931 = vst [vmem:[%s2 + $0xd0] sm:$0xf] %v803
  %932 = vst [vmem:[%s2 + $0xd4] sm:$0xf] %v804
  %933 = vst [vmem:[%s2 + $0xd8] sm:$0xf] %v805
  %934 = vst [vmem:[%s2 + $0xdc] sm:$0xf] %v806
  %935 = vst [vmem:[%s2 + $0xe0] sm:$0xf] %v807
  %936 = vst [vmem:[%s2 + $0xe4] sm:$0xf] %v808
  %937 = vst [vmem:[%s2 + $0xe8] sm:$0xf] %v809
  %938 = vst [vmem:[%s2 + $0xec] sm:$0xf] %v810
  %939 = vst [vmem:[%s2 + $0xf0] sm:$0xf] %v811
  %940 = vst [vmem:[%s2 + $0xf4] sm:$0xf] %v812
  %941 = vst [vmem:[%s2 + $0xf8] sm:$0xf] %v813
  %942 = vst [vmem:[%s2 + $0xfc] sm:$0xf] %v814
  %v943 = vadd.f32 %v369, %v372
  %v944 = vadd.f32 %v943, %v377
  %v945 = vadd.f32 %v944, %v380
  %v946 = vadd.f32 %v945, %v385
  %v947 = vadd.f32 %v946, %v388
  %v948 = vadd.f32 %v947, %v393
  %v949 = vadd.f32 %v948, %v396
  %v950 = vadd.f32 %v949, %v401
  %v951 = vadd.f32 %v950, %v404
  %v952 = vadd.f32 %v951, %v409
  %v953 = vadd.f32 %v952, %v412
  %v954 = vadd.f32 %v953, %v417
  %v955 = vadd.f32 %v954, %v420
  %v956 = vadd.f32 %v955, %v425
  %v957 = vadd.f32 %v956, %v428
  %v958 = vadd.f32 %v957, %v433
  %v959 = vadd.f32 %v958, %v436
  %v960 = vadd.f32 %v959, %v441
  %v961 = vadd.f32 %v960, %v444
  %v962 = vadd.f32 %v961, %v449
  %v963 = vadd.f32 %v962, %v452
  %v964 = vadd.f32 %v963, %v457
  %v965 = vadd.f32 %v964, %v460
  %v966 = vadd.f32 %v965, %v465
  %v967 = vadd.f32 %v966, %v468
  %v968 = vadd.f32 %v967, %v473
  %v969 = vadd.f32 %v968, %v476
  %v970 = vadd.f32 %v969, %v481
  %v971 = vadd.f32 %v970, %v484
  %v972 = vadd.f32 %v971, %v489
  %v973 = vadd.f32 %v972, %v492
  %v974 = vadd.f32 %v973, %v497
  %v975 = vadd.f32 %v974, %v500
  %v976 = vadd.f32 %v975, %v505
  %v977 = vadd.f32 %v976, %v508
  %v978 = vadd.f32 %v977, %v513
  %v979 = vadd.f32 %v978, %v516
  %v980 = vadd.f32 %v979, %v521
  %v981 = vadd.f32 %v980, %v524
  %v982 = vadd.f32 %v981, %v529
  %v983 = vadd.f32 %v982, %v532
  %v984 = vadd.f32 %v983, %v537
  %v985 = vadd.f32 %v984, %v540
  %v986 = vadd.f32 %v985, %v545
  %v987 = vadd.f32 %v986, %v548
  %v988 = vadd.f32 %v987, %v553
  %v989 = vadd.f32 %v988, %v556
  %v990 = vadd.f32 %v989, %v561
  %v991 = vadd.f32 %v990, %v564
  %v992 = vadd.f32 %v991, %v569
  %v993 = vadd.f32 %v992, %v572
  %v994 = vadd.f32 %v993, %v577
  %v995 = vadd.f32 %v994, %v580
  %v996 = vadd.f32 %v995, %v585
  %v997 = vadd.f32 %v996, %v588
  %v998 = vadd.f32 %v997, %v593
  %v999 = vadd.f32 %v998, %v596
  %v1000 = vadd.f32 %v999, %v601
  %v1001 = vadd.f32 %v1000, %v604
  %v1002 = vadd.f32 %v1001, %v609
  %v1003 = vadd.f32 %v1002, %v612
  %v1004 = vadd.f32 %v1003, %v617
  %v1005 = vadd.f32 %v1004, %v620
  %v1006 = vrot.slane %v1005, 4
  %v1007 = vadd.f32 %v1005, %v1006
  %v1008 = vrot.slane %v1007, 2
  %v1009 = vadd.f32 %v1007, %v1008
  %v1010 = vrot.slane %v1009, 1
  %v1011 = vadd.f32 %v1009, %v1010
  %1012 = vst [vmem:[%s3] sm:$0x1] %v1011
  %v1013 = vmul.f32 %v369, %v369
  %v1014 = vmul.f32 %v372, %v372
  %v1015 = vmul.f32 %v377, %v377
  %v1016 = vmul.f32 %v380, %v380
  %v1017 = vmul.f32 %v385, %v385
  %v1018 = vmul.f32 %v388, %v388
  %v1019 = vmul.f32 %v393, %v393
  %v1020 = vmul.f32 %v396, %v396
  %v1021 = vmul.f32 %v401, %v401
  %v1022 = vmul.f32 %v404, %v404
  %v1023 = vmul.f32 %v409, %v409
  %v1024 = vmul.f32 %v412, %v412
  %v1025 = vmul.f32 %v417, %v417
  %v1026 = vmul.f32 %v420, %v420
  %v1027 = vmul.f32 %v425, %v425
  %v1028 = vmul.f32 %v428, %v428
  %v1029 = vmul.f32 %v433, %v433
  %v1030 = vmul.f32 %v436, %v436
  %v1031 = vmul.f32 %v441, %v441
  %v1032 = vmul.f32 %v444, %v444
  %v1033 = vmul.f32 %v449, %v449
  %v1034 = vmul.f32 %v452, %v452
  %v1035 = vmul.f32 %v457, %v457
  %v1036 = vmul.f32 %v460, %v460
  %v1037 = vmul.f32 %v465, %v465
  %v1038 = vmul.f32 %v468, %v468
  %v1039 = vmul.f32 %v473, %v473
  %v1040 = vmul.f32 %v476, %v476
  %v1041 = vmul.f32 %v481, %v481
  %v1042 = vmul.f32 %v484, %v484
  %v1043 = vmul.f32 %v489, %v489
  %v1044 = vmul.f32 %v492, %v492
  %v1045 = vmul.f32 %v497, %v497
  %v1046 = vmul.f32 %v500, %v500
  %v1047 = vmul.f32 %v505, %v505
  %v1048 = vmul.f32 %v508, %v508
  %v1049 = vmul.f32 %v513, %v513
  %v1050 = vmul.f32 %v516, %v516
  %v1051 = vmul.f32 %v521, %v521
  %v1052 = vmul.f32 %v524, %v524
  %v1053 = vmul.f32 %v529, %v529
  %v1054 = vmul.f32 %v532, %v532
  %v1055 = vmul.f32 %v537, %v537
  %v1056 = vmul.f32 %v540, %v540
  %v1057 = vmul.f32 %v545, %v545
  %v1058 = vmul.f32 %v548, %v548
  %v1059 = vmul.f32 %v553, %v553
  %v1060 = vmul.f32 %v556, %v556
  %v1061 = vmul.f32 %v561, %v561
  %v1062 = vmul.f32 %v564, %v564
  %v1063 = vmul.f32 %v569, %v569
  %v1064 = vmul.f32 %v572, %v572
  %v1065 = vmul.f32 %v577, %v577
  %v1066 = vmul.f32 %v580, %v580
  %v1067 = vmul.f32 %v585, %v585
  %v1068 = vmul.f32 %v588, %v588
  %v1069 = vmul.f32 %v593, %v593
  %v1070 = vmul.f32 %v596, %v596
  %v1071 = vmul.f32 %v601, %v601
  %v1072 = vmul.f32 %v604, %v604
  %v1073 = vmul.f32 %v609, %v609
  %v1074 = vmul.f32 %v612, %v612
  %v1075 = vmul.f32 %v617, %v617
  %v1076 = vmul.f32 %v620, %v620
  %v1077 = vadd.f32 %v1013, %v1014
  %v1078 = vadd.f32 %v1077, %v1015
  %v1079 = vadd.f32 %v1078, %v1016
  %v1080 = vadd.f32 %v1079, %v1017
  %v1081 = vadd.f32 %v1080, %v1018
  %v1082 = vadd.f32 %v1081, %v1019
  %v1083 = vadd.f32 %v1082, %v1020
  %v1084 = vadd.f32 %v1083, %v1021
  %v1085 = vadd.f32 %v1084, %v1022
  %v1086 = vadd.f32 %v1085, %v1023
  %v1087 = vadd.f32 %v1086, %v1024
  %v1088 = vadd.f32 %v1087, %v1025
  %v1089 = vadd.f32 %v1088, %v1026
  %v1090 = vadd.f32 %v1089, %v1027
  %v1091 = vadd.f32 %v1090, %v1028
  %v1092 = vadd.f32 %v1091, %v1029
  %v1093 = vadd.f32 %v1092, %v1030
  %v1094 = vadd.f32 %v1093, %v1031
  %v1095 = vadd.f32 %v1094, %v1032
  %v1096 = vadd.f32 %v1095, %v1033
  %v1097 = vadd.f32 %v1096, %v1034
  %v1098 = vadd.f32 %v1097, %v1035
  %v1099 = vadd.f32 %v1098, %v1036
  %v1100 = vadd.f32 %v1099, %v1037
  %v1101 = vadd.f32 %v1100, %v1038
  %v1102 = vadd.f32 %v1101, %v1039
  %v1103 = vadd.f32 %v1102, %v1040
  %v1104 = vadd.f32 %v1103, %v1041
  %v1105 = vadd.f32 %v1104, %v1042
  %v1106 = vadd.f32 %v1105, %v1043
  %v1107 = vadd.f32 %v1106, %v1044
  %v1108 = vadd.f32 %v1107, %v1045
  %v1109 = vadd.f32 %v1108, %v1046
  %v1110 = vadd.f32 %v1109, %v1047
  %v1111 = vadd.f32 %v1110, %v1048
  %v1112 = vadd.f32 %v1111, %v1049
  %v1113 = vadd.f32 %v1112, %v1050
  %v1114 = vadd.f32 %v1113, %v1051
  %v1115 = vadd.f32 %v1114, %v1052
  %v1116 = vadd.f32 %v1115, %v1053
  %v1117 = vadd.f32 %v1116, %v1054
  %v1118 = vadd.f32 %v1117, %v1055
  %v1119 = vadd.f32 %v1118, %v1056
  %v1120 = vadd.f32 %v1119, %v1057
  %v1121 = vadd.f32 %v1120, %v1058
  %v1122 = vadd.f32 %v1121, %v1059
  %v1123 = vadd.f32 %v1122, %v1060
  %v1124 = vadd.f32 %v1123, %v1061
  %v1125 = vadd.f32 %v1124, %v1062
  %v1126 = vadd.f32 %v1125, %v1063
  %v1127 = vadd.f32 %v1126, %v1064
  %v1128 = vadd.f32 %v1127, %v1065
  %v1129 = vadd.f32 %v1128, %v1066
  %v1130 = vadd.f32 %v1129, %v1067
  %v1131 = vadd.f32 %v1130, %v1068
  %v1132 = vadd.f32 %v1131, %v1069
  %v1133 = vadd.f32 %v1132, %v1070
  %v1134 = vadd.f32 %v1133, %v1071
  %v1135 = vadd.f32 %v1134, %v1072
  %v1136 = vadd.f32 %v1135, %v1073
  %v1137 = vadd.f32 %v1136, %v1074
  %v1138 = vadd.f32 %v1137, %v1075
  %v1139 = vadd.f32 %v1138, %v1076
  %v1140 = vrot.slane %v1139, 4
  %v1141 = vadd.f32 %v1139, %v1140
  %v1142 = vrot.slane %v1141, 2
  %v1143 = vadd.f32 %v1141, %v1142
  %v1144 = vrot.slane %v1143, 1
  %v1145 = vadd.f32 %v1143, %v1144
  %1146 = vst [vmem:[%s3 + $0x1] sm:$0x1] %v1145
  // Predicated region
  $region10: #{bottleneck_forward.4} parent=0 // pred_check
    _
  $region11: #{bottleneck_forward.4} parent=0 // pred_check_branch
    %1148 = sbr.rel (0) target = $region13
  $region12: #{bottleneck_forward.4} parent=0 // pred_region
    _
  $region13: #{bottleneck_forward.4} parent=0 // pred_fallthru
    _
  // Predicated region
  $region14: #{bottleneck_forward.4} parent=0 // pred_check
    _
  $region15: #{bottleneck_forward.4} parent=0 // pred_check_branch
    %1150 = sbr.rel (0) target = $region17
  $region16: #{bottleneck_forward.4} parent=0 // pred_region
    _
  $region17: #{bottleneck_forward.4} parent=0 // pred_fallthru
    _
  // Predicated region
  $region18: #{bottleneck_forward.4} parent=0 // pred_check
    _
  $region19: #{bottleneck_forward.4} parent=0 // pred_check_branch
    %1152 = sbr.rel (0) target = $region21
  $region20: #{bottleneck_forward.4} parent=0 // pred_region
    _
  $region21: #{bottleneck_forward.4} parent=0 // pred_fallthru
    _
  // Predicated region
  $region22: #{bottleneck_forward.4} parent=0 // pred_check
    _
  $region23: #{bottleneck_forward.4} parent=0 // pred_check_branch
    %1154 = sbr.rel (0) target = $region25
  $region24: #{bottleneck_forward.4} parent=0 // pred_region
    _
  $region25: #{bottleneck_forward.4} parent=0 // pred_fallthru
    _

// kernel: bottleneck_forward.6
$region0: #{bottleneck_forward.6}
  #allocation0 [shape = 'u32[]', space=smem, size = 0x4, offset = 0x4, fixed_abs, tag = 'smem constant byte address 0x4 - core index']
  #allocation1 [shape = 'u32[144,128]{1,0:T(1,128)}', space=vmem, size = 0x12000, scoped, tag = 'internal scratch']
  %s0 = inlined_call_operand.vmem [shape: bf16[512,128], index: 0, kind: input, shape index: {}]
  %s1 = inlined_call_operand.vmem [shape: f32[2,2,128], index: 1, kind: input, shape index: {}]
  %s2 = inlined_call_operand.vmem [shape: f32[2,128], index: 2, kind: input, shape index: {}]
  %s3 = inlined_call_operand.vmem [shape: bf16[128,128], index: 3, kind: input, shape index: {}]
  %s4 = inlined_call_operand.vmem [shape: bf16[512,128], index: 4, kind: output, shape index: {0}]
  %s5 = inlined_call_operand.vmem [shape: f32[1,2,128], index: 5, kind: output, shape index: {1}]
  %6 = xla_tuple %s4, %s5
  %s7 = sld [smem:[#allocation0]]
  $region34: #{bottleneck_forward.6} parent=0
    _
  %s9 = ssub.s32 1, %s7
  %s10 = scalar_select 0, %s9, %s7
  // Predicated region
  $region2: #{bottleneck_forward.6} parent=0 // pred_check
    _
  $region3: #{bottleneck_forward.6} parent=0 // pred_check_branch
    %12 = sbr.rel (0) target = $region5
  $region4: #{bottleneck_forward.6} parent=0 // pred_region
    _
  $region5: #{bottleneck_forward.6} parent=0 // pred_fallthru
    _
  // Predicated region
  $region6: #{bottleneck_forward.6} parent=0 // pred_check
    _
  $region7: #{bottleneck_forward.6} parent=0 // pred_check_branch
    %14 = sbr.rel (0) target = $region9
  $region8: #{bottleneck_forward.6} parent=0 // pred_region
    _
  $region9: #{bottleneck_forward.6} parent=0 // pred_fallthru
    _
  // Predicated region
  $region10: #{bottleneck_forward.6} parent=0 // pred_check
    _
  $region11: #{bottleneck_forward.6} parent=0 // pred_check_branch
    %16 = sbr.rel (0) target = $region13
  $region12: #{bottleneck_forward.6} parent=0 // pred_region
    _
  $region13: #{bottleneck_forward.6} parent=0 // pred_fallthru
    _
  // Predicated region
  $region14: #{bottleneck_forward.6} parent=0 // pred_check
    _
  $region15: #{bottleneck_forward.6} parent=0 // pred_check_branch
    %18 = sbr.rel (0) target = $region17
  $region16: #{bottleneck_forward.6} parent=0 // pred_region
    _
  $region17: #{bottleneck_forward.6} parent=0 // pred_fallthru
    _
  %v20 = vld [vmem:[%s1] sm:$0x3]
  %v21 = vld [vmem:[%s1 + $0x2] sm:$0x3]
  %v22 = vld [vmem:[%s2] sm:$0x3]
  %vm23 = vcmask 1041408
  %v24 = vsel %vm23, %v20, 0.0
  %v25 = vsel %vm23, %v21, 0.0
  %v26 = vadd.f32 %v24, %v25
  %v27 = vmul.f32 %v26, 0.001953125
  %v28 = vmul.f32 %v27, %v27
  %v30 = vrot.slane %v28, 7
  %v32 = vsub.f32 %v27, %v30
  %v33 = vadd.f32 %v32, 1e-05
  %v34 = vrsqrt.pop %v33
  %v36 = vrot.slane %v34, 1
  %v38 = vmul.f32 %v22, %v36
  %v39 = vmul.f32 %v27, %v38
  %v41 = vrot.slane %v39, 7
  %v43 = vsub.f32 %v22, %v41
  %v44 = vld [vmem:[%s0] sm:$0xf]
  %v45 = vld [vmem:[%s0 + $0x4] sm:$0xf]
  %v46 = vld [vmem:[%s0 + $0x8] sm:$0xf]
  %v47 = vld [vmem:[%s0 + $0xc] sm:$0xf]
  %v48 = vld [vmem:[%s0 + $0x10] sm:$0xf]
  %v49 = vld [vmem:[%s0 + $0x14] sm:$0xf]
  %v50 = vld [vmem:[%s0 + $0x18] sm:$0xf]
  %v51 = vld [vmem:[%s0 + $0x1c] sm:$0xf]
  %v52 = vld [vmem:[%s0 + $0x20] sm:$0xf]
  %v53 = vld [vmem:[%s0 + $0x24] sm:$0xf]
  %v54 = vld [vmem:[%s0 + $0x28] sm:$0xf]
  %v55 = vld [vmem:[%s0 + $0x2c] sm:$0xf]
  %v56 = vld [vmem:[%s0 + $0x30] sm:$0xf]
  %v57 = vld [vmem:[%s0 + $0x34] sm:$0xf]
  %v58 = vld [vmem:[%s0 + $0x38] sm:$0xf]
  %v59 = vld [vmem:[%s0 + $0x3c] sm:$0xf]
  %v60 = vld [vmem:[%s0 + $0x40] sm:$0xf]
  %v61 = vld [vmem:[%s0 + $0x44] sm:$0xf]
  %v62 = vld [vmem:[%s0 + $0x48] sm:$0xf]
  %v63 = vld [vmem:[%s0 + $0x4c] sm:$0xf]
  %v64 = vld [vmem:[%s0 + $0x50] sm:$0xf]
  %v65 = vld [vmem:[%s0 + $0x54] sm:$0xf]
  %v66 = vld [vmem:[%s0 + $0x58] sm:$0xf]
  %v67 = vld [vmem:[%s0 + $0x5c] sm:$0xf]
  %v68 = vld [vmem:[%s0 + $0x60] sm:$0xf]
  %v69 = vld [vmem:[%s0 + $0x64] sm:$0xf]
  %v70 = vld [vmem:[%s0 + $0x68] sm:$0xf]
  %v71 = vld [vmem:[%s0 + $0x6c] sm:$0xf]
  %v72 = vld [vmem:[%s0 + $0x70] sm:$0xf]
  %v73 = vld [vmem:[%s0 + $0x74] sm:$0xf]
  %v74 = vld [vmem:[%s0 + $0x78] sm:$0xf]
  %v75 = vld [vmem:[%s0 + $0x7c] sm:$0xf]
  %v76 = vld [vmem:[%s0 + $0x80] sm:$0xf]
  %v77 = vld [vmem:[%s0 + $0x84] sm:$0xf]
  %v78 = vld [vmem:[%s0 + $0x88] sm:$0xf]
  %v79 = vld [vmem:[%s0 + $0x8c] sm:$0xf]
  %v80 = vld [vmem:[%s0 + $0x90] sm:$0xf]
  %v81 = vld [vmem:[%s0 + $0x94] sm:$0xf]
  %v82 = vld [vmem:[%s0 + $0x98] sm:$0xf]
  %v83 = vld [vmem:[%s0 + $0x9c] sm:$0xf]
  %v84 = vld [vmem:[%s0 + $0xa0] sm:$0xf]
  %v85 = vld [vmem:[%s0 + $0xa4] sm:$0xf]
  %v86 = vld [vmem:[%s0 + $0xa8] sm:$0xf]
  %v87 = vld [vmem:[%s0 + $0xac] sm:$0xf]
  %v88 = vld [vmem:[%s0 + $0xb0] sm:$0xf]
  %v89 = vld [vmem:[%s0 + $0xb4] sm:$0xf]
  %v90 = vld [vmem:[%s0 + $0xb8] sm:$0xf]
  %v91 = vld [vmem:[%s0 + $0xbc] sm:$0xf]
  %v92 = vld [vmem:[%s0 + $0xc0] sm:$0xf]
  %v93 = vld [vmem:[%s0 + $0xc4] sm:$0xf]
  %v94 = vld [vmem:[%s0 + $0xc8] sm:$0xf]
  %v95 = vld [vmem:[%s0 + $0xcc] sm:$0xf]
  %v96 = vld [vmem:[%s0 + $0xd0] sm:$0xf]
  %v97 = vld [vmem:[%s0 + $0xd4] sm:$0xf]
  %v98 = vld [vmem:[%s0 + $0xd8] sm:$0xf]
  %v99 = vld [vmem:[%s0 + $0xdc] sm:$0xf]
  %v100 = vld [vmem:[%s0 + $0xe0] sm:$0xf]
  %v101 = vld [vmem:[%s0 + $0xe4] sm:$0xf]
  %v102 = vld [vmem:[%s0 + $0xe8] sm:$0xf]
  %v103 = vld [vmem:[%s0 + $0xec] sm:$0xf]
  %v104 = vld [vmem:[%s0 + $0xf0] sm:$0xf]
  %v105 = vld [vmem:[%s0 + $0xf4] sm:$0xf]
  %v106 = vld [vmem:[%s0 + $0xf8] sm:$0xf]
  %v107 = vld [vmem:[%s0 + $0xfc] sm:$0xf]
  %v108 = vunpack.c.l.bf16 %v44
  %v109 = vunpack.c.l.bf16 %v45
  %v110 = vunpack.c.l.bf16 %v46
  %v111 = vunpack.c.l.bf16 %v47
  %v112 = vunpack.c.l.bf16 %v48
  %v113 = vunpack.c.l.bf16 %v49
  %v114 = vunpack.c.l.bf16 %v50
  %v115 = vunpack.c.l.bf16 %v51
  %v116 = vunpack.c.l.bf16 %v52
  %v117 = vunpack.c.l.bf16 %v53
  %v118 = vunpack.c.l.bf16 %v54
  %v119 = vunpack.c.l.bf16 %v55
  %v120 = vunpack.c.l.bf16 %v56
  %v121 = vunpack.c.l.bf16 %v57
  %v122 = vunpack.c.l.bf16 %v58
  %v123 = vunpack.c.l.bf16 %v59
  %v124 = vunpack.c.l.bf16 %v60
  %v125 = vunpack.c.l.bf16 %v61
  %v126 = vunpack.c.l.bf16 %v62
  %v127 = vunpack.c.l.bf16 %v63
  %v128 = vunpack.c.l.bf16 %v64
  %v129 = vunpack.c.l.bf16 %v65
  %v130 = vunpack.c.l.bf16 %v66
  %v131 = vunpack.c.l.bf16 %v67
  %v132 = vunpack.c.l.bf16 %v68
  %v133 = vunpack.c.l.bf16 %v69
  %v134 = vunpack.c.l.bf16 %v70
  %v135 = vunpack.c.l.bf16 %v71
  %v136 = vunpack.c.l.bf16 %v72
  %v137 = vunpack.c.l.bf16 %v73
  %v138 = vunpack.c.l.bf16 %v74
  %v139 = vunpack.c.l.bf16 %v75
  %v140 = vunpack.c.l.bf16 %v76
  %v141 = vunpack.c.l.bf16 %v77
  %v142 = vunpack.c.l.bf16 %v78
  %v143 = vunpack.c.l.bf16 %v79
  %v144 = vunpack.c.l.bf16 %v80
  %v145 = vunpack.c.l.bf16 %v81
  %v146 = vunpack.c.l.bf16 %v82
  %v147 = vunpack.c.l.bf16 %v83
  %v148 = vunpack.c.l.bf16 %v84
  %v149 = vunpack.c.l.bf16 %v85
  %v150 = vunpack.c.l.bf16 %v86
  %v151 = vunpack.c.l.bf16 %v87
  %v152 = vunpack.c.l.bf16 %v88
  %v153 = vunpack.c.l.bf16 %v89
  %v154 = vunpack.c.l.bf16 %v90
  %v155 = vunpack.c.l.bf16 %v91
  %v156 = vunpack.c.l.bf16 %v92
  %v157 = vunpack.c.l.bf16 %v93
  %v158 = vunpack.c.l.bf16 %v94
  %v159 = vunpack.c.l.bf16 %v95
  %v160 = vunpack.c.l.bf16 %v96
  %v161 = vunpack.c.l.bf16 %v97
  %v162 = vunpack.c.l.bf16 %v98
  %v163 = vunpack.c.l.bf16 %v99
  %v164 = vunpack.c.l.bf16 %v100
  %v165 = vunpack.c.l.bf16 %v101
  %v166 = vunpack.c.l.bf16 %v102
  %v167 = vunpack.c.l.bf16 %v103
  %v168 = vunpack.c.l.bf16 %v104
  %v169 = vunpack.c.l.bf16 %v105
  %v170 = vunpack.c.l.bf16 %v106
  %v171 = vunpack.c.l.bf16 %v107
  %v172 = vlaneseq
  %v173 = vshrl.u32 %v172, 7
  %v174 = vsub.s32 0, %v173
  %v175 = vrot.slane %v38, %v174
  %v176 = vmul.f32 %v108, %v175
  %v177 = vmul.f32 %v109, %v175
  %v178 = vmul.f32 %v110, %v175
  %v179 = vmul.f32 %v111, %v175
  %v180 = vmul.f32 %v112, %v175
  %v181 = vmul.f32 %v113, %v175
  %v182 = vmul.f32 %v114, %v175
  %v183 = vmul.f32 %v115, %v175
  %v184 = vmul.f32 %v116, %v175
  %v185 = vmul.f32 %v117, %v175
  %v186 = vmul.f32 %v118, %v175
  %v187 = vmul.f32 %v119, %v175
  %v188 = vmul.f32 %v120, %v175
  %v189 = vmul.f32 %v121, %v175
  %v190 = vmul.f32 %v122, %v175
  %v191 = vmul.f32 %v123, %v175
  %v192 = vmul.f32 %v124, %v175
  %v193 = vmul.f32 %v125, %v175
  %v194 = vmul.f32 %v126, %v175
  %v195 = vmul.f32 %v127, %v175
  %v196 = vmul.f32 %v128, %v175
  %v197 = vmul.f32 %v129, %v175
  %v198 = vmul.f32 %v130, %v175
  %v199 = vmul.f32 %v131, %v175
  %v200 = vmul.f32 %v132, %v175
  %v201 = vmul.f32 %v133, %v175
  %v202 = vmul.f32 %v134, %v175
  %v203 = vmul.f32 %v135, %v175
  %v204 = vmul.f32 %v136, %v175
  %v205 = vmul.f32 %v137, %v175
  %v206 = vmul.f32 %v138, %v175
  %v207 = vmul.f32 %v139, %v175
  %v208 = vmul.f32 %v140, %v175
  %v209 = vmul.f32 %v141, %v175
  %v210 = vmul.f32 %v142, %v175
  %v211 = vmul.f32 %v143, %v175
  %v212 = vmul.f32 %v144, %v175
  %v213 = vmul.f32 %v145, %v175
  %v214 = vmul.f32 %v146, %v175
  %v215 = vmul.f32 %v147, %v175
  %v216 = vmul.f32 %v148, %v175
  %v217 = vmul.f32 %v149, %v175
  %v218 = vmul.f32 %v150, %v175
  %v219 = vmul.f32 %v151, %v175
  %v220 = vmul.f32 %v152, %v175
  %v221 = vmul.f32 %v153, %v175
  %v222 = vmul.f32 %v154, %v175
  %v223 = vmul.f32 %v155, %v175
  %v224 = vmul.f32 %v156, %v175
  %v225 = vmul.f32 %v157, %v175
  %v226 = vmul.f32 %v158, %v175
  %v227 = vmul.f32 %v159, %v175
  %v228 = vmul.f32 %v160, %v175
  %v229 = vmul.f32 %v161, %v175
  %v230 = vmul.f32 %v162, %v175
  %v231 = vmul.f32 %v163, %v175
  %v232 = vmul.f32 %v164, %v175
  %v233 = vmul.f32 %v165, %v175
  %v234 = vmul.f32 %v166, %v175
  %v235 = vmul.f32 %v167, %v175
  %v236 = vmul.f32 %v168, %v175
  %v237 = vmul.f32 %v169, %v175
  %v238 = vmul.f32 %v170, %v175
  %v239 = vmul.f32 %v171, %v175
  %v240 = vlaneseq
  %v241 = vshrl.u32 %v240, 7
  %v242 = vsub.s32 1, %v241
  %v243 = vrot.slane %v43, %v242
  %v244 = vadd.f32 %v176, %v243
  %v245 = vadd.f32 %v177, %v243
  %v246 = vadd.f32 %v178, %v243
  %v247 = vadd.f32 %v179, %v243
  %v248 = vadd.f32 %v180, %v243
  %v249 = vadd.f32 %v181, %v243
  %v250 = vadd.f32 %v182, %v243
  %v251 = vadd.f32 %v183, %v243
  %v252 = vadd.f32 %v184, %v243
  %v253 = vadd.f32 %v185, %v243
  %v254 = vadd.f32 %v186, %v243
  %v255 = vadd.f32 %v187, %v243
  %v256 = vadd.f32 %v188, %v243
  %v257 = vadd.f32 %v189, %v243
  %v258 = vadd.f32 %v190, %v243
  %v259 = vadd.f32 %v191, %v243
  %v260 = vadd.f32 %v192, %v243
  %v261 = vadd.f32 %v193, %v243
  %v262 = vadd.f32 %v194, %v243
  %v263 = vadd.f32 %v195, %v243
  %v264 = vadd.f32 %v196, %v243
  %v265 = vadd.f32 %v197, %v243
  %v266 = vadd.f32 %v198, %v243
  %v267 = vadd.f32 %v199, %v243
  %v268 = vadd.f32 %v200, %v243
  %v269 = vadd.f32 %v201, %v243
  %v270 = vadd.f32 %v202, %v243
  %v271 = vadd.f32 %v203, %v243
  %v272 = vadd.f32 %v204, %v243
  %v273 = vadd.f32 %v205, %v243
  %v274 = vadd.f32 %v206, %v243
  %v275 = vadd.f32 %v207, %v243
  %v276 = vadd.f32 %v208, %v243
  %v277 = vadd.f32 %v209, %v243
  %v278 = vadd.f32 %v210, %v243
  %v279 = vadd.f32 %v211, %v243
  %v280 = vadd.f32 %v212, %v243
  %v281 = vadd.f32 %v213, %v243
  %v282 = vadd.f32 %v214, %v243
  %v283 = vadd.f32 %v215, %v243
  %v284 = vadd.f32 %v216, %v243
  %v285 = vadd.f32 %v217, %v243
  %v286 = vadd.f32 %v218, %v243
  %v287 = vadd.f32 %v219, %v243
  %v288 = vadd.f32 %v220, %v243
  %v289 = vadd.f32 %v221, %v243
  %v290 = vadd.f32 %v222, %v243
  %v291 = vadd.f32 %v223, %v243
  %v292 = vadd.f32 %v224, %v243
  %v293 = vadd.f32 %v225, %v243
  %v294 = vadd.f32 %v226, %v243
  %v295 = vadd.f32 %v227, %v243
  %v296 = vadd.f32 %v228, %v243
  %v297 = vadd.f32 %v229, %v243
  %v298 = vadd.f32 %v230, %v243
  %v299 = vadd.f32 %v231, %v243
  %v300 = vadd.f32 %v232, %v243
  %v301 = vadd.f32 %v233, %v243
  %v302 = vadd.f32 %v234, %v243
  %v303 = vadd.f32 %v235, %v243
  %v304 = vadd.f32 %v236, %v243
  %v305 = vadd.f32 %v237, %v243
  %v306 = vadd.f32 %v238, %v243
  %v307 = vadd.f32 %v239, %v243
  %v308 = vmax.f32 %v244, 0.0
  %v309 = vmax.f32 %v245, 0.0
  %v310 = vmax.f32 %v246, 0.0
  %v311 = vmax.f32 %v247, 0.0
  %v312 = vmax.f32 %v248, 0.0
  %v313 = vmax.f32 %v249, 0.0
  %v314 = vmax.f32 %v250, 0.0
  %v315 = vmax.f32 %v251, 0.0
  %v316 = vmax.f32 %v252, 0.0
  %v317 = vmax.f32 %v253, 0.0
  %v318 = vmax.f32 %v254, 0.0
  %v319 = vmax.f32 %v255, 0.0
  %v320 = vmax.f32 %v256, 0.0
  %v321 = vmax.f32 %v257, 0.0
  %v322 = vmax.f32 %v258, 0.0
  %v323 = vmax.f32 %v259, 0.0
  %v324 = vmax.f32 %v260, 0.0
  %v325 = vmax.f32 %v261, 0.0
  %v326 = vmax.f32 %v262, 0.0
  %v327 = vmax.f32 %v263, 0.0
  %v328 = vmax.f32 %v264, 0.0
  %v329 = vmax.f32 %v265, 0.0
  %v330 = vmax.f32 %v266, 0.0
  %v331 = vmax.f32 %v267, 0.0
  %v332 = vmax.f32 %v268, 0.0
  %v333 = vmax.f32 %v269, 0.0
  %v334 = vmax.f32 %v270, 0.0
  %v335 = vmax.f32 %v271, 0.0
  %v336 = vmax.f32 %v272, 0.0
  %v337 = vmax.f32 %v273, 0.0
  %v338 = vmax.f32 %v274, 0.0
  %v339 = vmax.f32 %v275, 0.0
  %v340 = vmax.f32 %v276, 0.0
  %v341 = vmax.f32 %v277, 0.0
  %v342 = vmax.f32 %v278, 0.0
  %v343 = vmax.f32 %v279, 0.0
  %v344 = vmax.f32 %v280, 0.0
  %v345 = vmax.f32 %v281, 0.0
  %v346 = vmax.f32 %v282, 0.0
  %v347 = vmax.f32 %v283, 0.0
  %v348 = vmax.f32 %v284, 0.0
  %v349 = vmax.f32 %v285, 0.0
  %v350 = vmax.f32 %v286, 0.0
  %v351 = vmax.f32 %v287, 0.0
  %v352 = vmax.f32 %v288, 0.0
  %v353 = vmax.f32 %v289, 0.0
  %v354 = vmax.f32 %v290, 0.0
  %v355 = vmax.f32 %v291, 0.0
  %v356 = vmax.f32 %v292, 0.0
  %v357 = vmax.f32 %v293, 0.0
  %v358 = vmax.f32 %v294, 0.0
  %v359 = vmax.f32 %v295, 0.0
  %v360 = vmax.f32 %v296, 0.0
  %v361 = vmax.f32 %v297, 0.0
  %v362 = vmax.f32 %v298, 0.0
  %v363 = vmax.f32 %v299, 0.0
  %v364 = vmax.f32 %v300, 0.0
  %v365 = vmax.f32 %v301, 0.0
  %v366 = vmax.f32 %v302, 0.0
  %v367 = vmax.f32 %v303, 0.0
  %v368 = vmax.f32 %v304, 0.0
  %v369 = vmax.f32 %v305, 0.0
  %v370 = vmax.f32 %v306, 0.0
  %v371 = vmax.f32 %v307, 0.0
  %v372 = vpack.c.bf16 %v309, %v308
  %v373 = vpack.c.bf16 %v311, %v310
  %v374 = vpack.c.bf16 %v313, %v312
  %v375 = vpack.c.bf16 %v315, %v314
  %v376 = vpack.c.bf16 %v317, %v316
  %v377 = vpack.c.bf16 %v319, %v318
  %v378 = vpack.c.bf16 %v321, %v320
  %v379 = vpack.c.bf16 %v323, %v322
  %v380 = vpack.c.bf16 %v325, %v324
  %v381 = vpack.c.bf16 %v327, %v326
  %v382 = vpack.c.bf16 %v329, %v328
  %v383 = vpack.c.bf16 %v331, %v330
  %v384 = vpack.c.bf16 %v333, %v332
  %v385 = vpack.c.bf16 %v335, %v334
  %v386 = vpack.c.bf16 %v337, %v336
  %v387 = vpack.c.bf16 %v339, %v338
  %v388 = vpack.c.bf16 %v341, %v340
  %v389 = vpack.c.bf16 %v343, %v342
  %v390 = vpack.c.bf16 %v345, %v344
  %v391 = vpack.c.bf16 %v347, %v346
  %v392 = vpack.c.bf16 %v349, %v348
  %v393 = vpack.c.bf16 %v351, %v350
  %v394 = vpack.c.bf16 %v353, %v352
  %v395 = vpack.c.bf16 %v355, %v354
  %v396 = vpack.c.bf16 %v357, %v356
  %v397 = vpack.c.bf16 %v359, %v358
  %v398 = vpack.c.bf16 %v361, %v360
  %v399 = vpack.c.bf16 %v363, %v362
  %v400 = vpack.c.bf16 %v365, %v364
  %v401 = vpack.c.bf16 %v367, %v366
  %v402 = vpack.c.bf16 %v369, %v368
  %v403 = vpack.c.bf16 %v371, %v370
  %v404 = vld [vmem:[%s3] sm:$0xf]
  %v405 = vld [vmem:[%s3 + $0x4] sm:$0xf]
  %v406 = vld [vmem:[%s3 + $0x8] sm:$0xf]
  %v407 = vld [vmem:[%s3 + $0xc] sm:$0xf]
  %v408 = vld [vmem:[%s3 + $0x10] sm:$0xf]
  %v409 = vld [vmem:[%s3 + $0x14] sm:$0xf]
  %v410 = vld [vmem:[%s3 + $0x18] sm:$0xf]
  %v411 = vld [vmem:[%s3 + $0x1c] sm:$0xf]
  %v412 = vld [vmem:[%s3 + $0x20] sm:$0xf]
  %v413 = vld [vmem:[%s3 + $0x24] sm:$0xf]
  %v414 = vld [vmem:[%s3 + $0x28] sm:$0xf]
  %v415 = vld [vmem:[%s3 + $0x2c] sm:$0xf]
  %v416 = vld [vmem:[%s3 + $0x30] sm:$0xf]
  %v417 = vld [vmem:[%s3 + $0x34] sm:$0xf]
  %v418 = vld [vmem:[%s3 + $0x38] sm:$0xf]
  %v419 = vld [vmem:[%s3 + $0x3c] sm:$0xf]
  %v436 = vunpack.c.l.b16 %v404
  %v437 = vunpack.c.l.b16 %v405
  %v438 = vunpack.c.l.b16 %v406
  %v439 = vunpack.c.l.b16 %v407
  %v440 = vunpack.c.l.b16 %v408
  %v441 = vunpack.c.l.b16 %v409
  %v442 = vunpack.c.l.b16 %v410
  %v443 = vunpack.c.l.b16 %v411
  %v444 = vunpack.c.l.b16 %v412
  %v445 = vunpack.c.l.b16 %v413
  %v446 = vunpack.c.l.b16 %v414
  %v447 = vunpack.c.l.b16 %v415
  %v448 = vunpack.c.l.b16 %v416
  %v449 = vunpack.c.l.b16 %v417
  %v450 = vunpack.c.l.b16 %v418
  %v451 = vunpack.c.l.b16 %v419
  %v452 = vpack.c.b16 %v437, %v436
  %v453 = vpack.c.b16 %v439, %v438
  %v454 = vpack.c.b16 %v441, %v440
  %v455 = vpack.c.b16 %v443, %v442
  %v456 = vpack.c.b16 %v445, %v444
  %v457 = vpack.c.b16 %v447, %v446
  %v458 = vpack.c.b16 %v449, %v448
  %v459 = vpack.c.b16 %v451, %v450
  %468 = vmatprep.subr.bf16.mxu0 0
  %469 = vmatpush1.bf16.msra.mxu0 %v452
  %470 = vmatprep.subr.bf16.mxu0 0
  %471 = vmatpush1.bf16.msra.mxu0 %v453
  %472 = vmatprep.subr.bf16.mxu0 0
  %473 = vmatpush1.bf16.msra.mxu0 %v454
  %474 = vmatprep.subr.bf16.mxu0 0
  %475 = vmatpush1.bf16.msra.mxu0 %v455
  %476 = vmatprep.subr.bf16.mxu0 0
  %477 = vmatpush1.bf16.msra.mxu0 %v456
  %478 = vmatprep.subr.bf16.mxu0 0
  %479 = vmatpush1.bf16.msra.mxu0 %v457
  %480 = vmatprep.subr.bf16.mxu0 0
  %481 = vmatpush1.bf16.msra.mxu0 %v458
  %482 = vmatprep.subr.bf16.mxu0 0
  %483 = vmatpush1.bf16.msra.mxu0 %v459
  %484 = vmatprep.subr.bf16.mxu0 0
  %485 = vmatpush1.bf16.msra.mxu0 0
  %486 = vmatprep.subr.bf16.mxu0 0
  %487 = vmatpush1.bf16.msra.mxu0 0
  %488 = vmatprep.subr.bf16.mxu0 0
  %489 = vmatpush1.bf16.msra.mxu0 0
  %490 = vmatprep.subr.bf16.mxu0 0
  %491 = vmatpush1.bf16.msra.mxu0 0
  %492 = vmatprep.subr.bf16.mxu0 0
  %493 = vmatpush1.bf16.msra.mxu0 0
  %494 = vmatprep.subr.bf16.mxu0 0
  %495 = vmatpush1.bf16.msra.mxu0 0
  %496 = vmatprep.subr.bf16.mxu0 0
  %497 = vmatpush1.bf16.msra.mxu0 0
  %498 = vmatprep.subr.bf16.mxu0 0
  %499 = vmatpush1.bf16.msra.mxu0 0
  %500 = vmatprep.mubr.bf16.mxu0 0
  %501 = vmatmul.mubr.bf16.gmra.mrb[0].mxu0 %v372
  %v502 = vpop.f32.mrb[0].mxu0
  %v503 = vadd.f32 0.0, %v502
  %v504 = vpop.f32.mrb[0].mxu0
  %v505 = vpop.f32.mrb[0].mxu0
  %v506 = vadd.f32 0.0, %v505
  %v507 = vpop.f32.mrb[0].mxu0
  %508 = vmatprep.mubr.bf16.mxu0 0
  %509 = vmatmul.mubr.bf16.gmra.mrb[0].mxu0 %v373
  %v510 = vpop.f32.mrb[0].mxu0
  %v511 = vadd.f32 0.0, %v510
  %v512 = vpop.f32.mrb[0].mxu0
  %v513 = vpop.f32.mrb[0].mxu0
  %v514 = vadd.f32 0.0, %v513
  %v515 = vpop.f32.mrb[0].mxu0
  %516 = vmatprep.mubr.bf16.mxu0 0
  %517 = vmatmul.mubr.bf16.gmra.mrb[0].mxu0 %v374
  %v518 = vpop.f32.mrb[0].mxu0
  %v519 = vadd.f32 0.0, %v518
  %v520 = vpop.f32.mrb[0].mxu0
  %v521 = vpop.f32.mrb[0].mxu0
  %v522 = vadd.f32 0.0, %v521
  %v523 = vpop.f32.mrb[0].mxu0
  %524 = vmatprep.mubr.bf16.mxu0 0
  %525 = vmatmul.mubr.bf16.gmra.mrb[0].mxu0 %v375
  %v526 = vpop.f32.mrb[0].mxu0
  %v527 = vadd.f32 0.0, %v526
  %v528 = vpop.f32.mrb[0].mxu0
  %v529 = vpop.f32.mrb[0].mxu0
  %v530 = vadd.f32 0.0, %v529
  %v531 = vpop.f32.mrb[0].mxu0
  %532 = vmatprep.mubr.bf16.mxu0 0
  %533 = vmatmul.mubr.bf16.gmra.mrb[0].mxu0 %v376
  %v534 = vpop.f32.mrb[0].mxu0
  %v535 = vadd.f32 0.0, %v534
  %v536 = vpop.f32.mrb[0].mxu0
  %v537 = vpop.f32.mrb[0].mxu0
  %v538 = vadd.f32 0.0, %v537
  %v539 = vpop.f32.mrb[0].mxu0
  %540 = vmatprep.mubr.bf16.mxu0 0
  %541 = vmatmul.mubr.bf16.gmra.mrb[0].mxu0 %v377
  %v542 = vpop.f32.mrb[0].mxu0
  %v543 = vadd.f32 0.0, %v542
  %v544 = vpop.f32.mrb[0].mxu0
  %v545 = vpop.f32.mrb[0].mxu0
  %v546 = vadd.f32 0.0, %v545
  %v547 = vpop.f32.mrb[0].mxu0
  %548 = vmatprep.mubr.bf16.mxu0 0
  %549 = vmatmul.mubr.bf16.gmra.mrb[0].mxu0 %v378
  %v550 = vpop.f32.mrb[0].mxu0
  %v551 = vadd.f32 0.0, %v550
  %v552 = vpop.f32.mrb[0].mxu0
  %v553 = vpop.f32.mrb[0].mxu0
  %v554 = vadd.f32 0.0, %v553
  %v555 = vpop.f32.mrb[0].mxu0
  %556 = vmatprep.mubr.bf16.mxu0 0
  %557 = vmatmul.mubr.bf16.gmra.mrb[0].mxu0 %v379
  %v558 = vpop.f32.mrb[0].mxu0
  %v559 = vadd.f32 0.0, %v558
  %v560 = vpop.f32.mrb[0].mxu0
  %v561 = vpop.f32.mrb[0].mxu0
  %v562 = vadd.f32 0.0, %v561
  %v563 = vpop.f32.mrb[0].mxu0
  %564 = vmatprep.mubr.bf16.mxu0 0
  %565 = vmatmul.mubr.bf16.gmra.mrb[0].mxu0 %v380
  %v566 = vpop.f32.mrb[0].mxu0
  %v567 = vadd.f32 0.0, %v566
  %v568 = vpop.f32.mrb[0].mxu0
  %v569 = vpop.f32.mrb[0].mxu0
  %v570 = vadd.f32 0.0, %v569
  %v571 = vpop.f32.mrb[0].mxu0
  %572 = vmatprep.mubr.bf16.mxu0 0
  %573 = vmatmul.mubr.bf16.gmra.mrb[0].mxu0 %v381
  %v574 = vpop.f32.mrb[0].mxu0
  %v575 = vadd.f32 0.0, %v574
  %v576 = vpop.f32.mrb[0].mxu0
  %v577 = vpop.f32.mrb[0].mxu0
  %v578 = vadd.f32 0.0, %v577
  %v579 = vpop.f32.mrb[0].mxu0
  %580 = vmatprep.mubr.bf16.mxu0 0
  %581 = vmatmul.mubr.bf16.gmra.mrb[0].mxu0 %v382
  %v582 = vpop.f32.mrb[0].mxu0
  %v583 = vadd.f32 0.0, %v582
  %v584 = vpop.f32.mrb[0].mxu0
  %v585 = vpop.f32.mrb[0].mxu0
  %v586 = vadd.f32 0.0, %v585
  %v587 = vpop.f32.mrb[0].mxu0
  %588 = vmatprep.mubr.bf16.mxu0 0
  %589 = vmatmul.mubr.bf16.gmra.mrb[0].mxu0 %v383
  %v590 = vpop.f32.mrb[0].mxu0
  %v591 = vadd.f32 0.0, %v590
  %v592 = vpop.f32.mrb[0].mxu0
  %v593 = vpop.f32.mrb[0].mxu0
  %v594 = vadd.f32 0.0, %v593
  %v595 = vpop.f32.mrb[0].mxu0
  %596 = vmatprep.mubr.bf16.mxu0 0
  %597 = vmatmul.mubr.bf16.gmra.mrb[0].mxu0 %v384
  %v598 = vpop.f32.mrb[0].mxu0
  %v599 = vadd.f32 0.0, %v598
  %v600 = vpop.f32.mrb[0].mxu0
  %v601 = vpop.f32.mrb[0].mxu0
  %v602 = vadd.f32 0.0, %v601
  %v603 = vpop.f32.mrb[0].mxu0
  %604 = vmatprep.mubr.bf16.mxu0 0
  %605 = vmatmul.mubr.bf16.gmra.mrb[0].mxu0 %v385
  %v606 = vpop.f32.mrb[0].mxu0
  %v607 = vadd.f32 0.0, %v606
  %v608 = vpop.f32.mrb[0].mxu0
  %v609 = vpop.f32.mrb[0].mxu0
  %v610 = vadd.f32 0.0, %v609
  %v611 = vpop.f32.mrb[0].mxu0
  %612 = vmatprep.mubr.bf16.mxu0 0
  %613 = vmatmul.mubr.bf16.gmra.mrb[0].mxu0 %v386
  %v614 = vpop.f32.mrb[0].mxu0
  %v615 = vadd.f32 0.0, %v614
  %v616 = vpop.f32.mrb[0].mxu0
  %v617 = vpop.f32.mrb[0].mxu0
  %v618 = vadd.f32 0.0, %v617
  %v619 = vpop.f32.mrb[0].mxu0
  %620 = vmatprep.mubr.bf16.mxu0 0
  %621 = vmatmul.mubr.bf16.gmra.mrb[0].mxu0 %v387
  %v622 = vpop.f32.mrb[0].mxu0
  %v623 = vadd.f32 0.0, %v622
  %v624 = vpop.f32.mrb[0].mxu0
  %v625 = vpop.f32.mrb[0].mxu0
  %v626 = vadd.f32 0.0, %v625
  %v627 = vpop.f32.mrb[0].mxu0
  %628 = vmatprep.mubr.bf16.mxu0 0
  %629 = vmatmul.mubr.bf16.gmra.mrb[0].mxu0 %v388
  %v630 = vpop.f32.mrb[0].mxu0
  %v631 = vadd.f32 0.0, %v630
  %v632 = vpop.f32.mrb[0].mxu0
  %v633 = vpop.f32.mrb[0].mxu0
  %v634 = vadd.f32 0.0, %v633
  %v635 = vpop.f32.mrb[0].mxu0
  %636 = vmatprep.mubr.bf16.mxu0 0
  %637 = vmatmul.mubr.bf16.gmra.mrb[0].mxu0 %v389
  %v638 = vpop.f32.mrb[0].mxu0
  %v639 = vadd.f32 0.0, %v638
  %v640 = vpop.f32.mrb[0].mxu0
  %v641 = vpop.f32.mrb[0].mxu0
  %v642 = vadd.f32 0.0, %v641
  %v643 = vpop.f32.mrb[0].mxu0
  %644 = vmatprep.mubr.bf16.mxu0 0
  %645 = vmatmul.mubr.bf16.gmra.mrb[0].mxu0 %v390
  %v646 = vpop.f32.mrb[0].mxu0
  %v647 = vadd.f32 0.0, %v646
  %v648 = vpop.f32.mrb[0].mxu0
  %v649 = vpop.f32.mrb[0].mxu0
  %v650 = vadd.f32 0.0, %v649
  %v651 = vpop.f32.mrb[0].mxu0
  %652 = vmatprep.mubr.bf16.mxu0 0
  %653 = vmatmul.mubr.bf16.gmra.mrb[0].mxu0 %v391
  %v654 = vpop.f32.mrb[0].mxu0
  %v655 = vadd.f32 0.0, %v654
  %v656 = vpop.f32.mrb[0].mxu0
  %v657 = vpop.f32.mrb[0].mxu0
  %v658 = vadd.f32 0.0, %v657
  %v659 = vpop.f32.mrb[0].mxu0
  %660 = vmatprep.mubr.bf16.mxu0 0
  %661 = vmatmul.mubr.bf16.gmra.mrb[0].mxu0 %v392
  %v662 = vpop.f32.mrb[0].mxu0
  %v663 = vadd.f32 0.0, %v662
  %v664 = vpop.f32.mrb[0].mxu0
  %v665 = vpop.f32.mrb[0].mxu0
  %v666 = vadd.f32 0.0, %v665
  %v667 = vpop.f32.mrb[0].mxu0
  %668 = vmatprep.mubr.bf16.mxu0 0
  %669 = vmatmul.mubr.bf16.gmra.mrb[0].mxu0 %v393
  %v670 = vpop.f32.mrb[0].mxu0
  %v671 = vadd.f32 0.0, %v670
  %v672 = vpop.f32.mrb[0].mxu0
  %v673 = vpop.f32.mrb[0].mxu0
  %v674 = vadd.f32 0.0, %v673
  %v675 = vpop.f32.mrb[0].mxu0
  %676 = vmatprep.mubr.bf16.mxu0 0
  %677 = vmatmul.mubr.bf16.gmra.mrb[0].mxu0 %v394
  %v678 = vpop.f32.mrb[0].mxu0
  %v679 = vadd.f32 0.0, %v678
  %v680 = vpop.f32.mrb[0].mxu0
  %v681 = vpop.f32.mrb[0].mxu0
  %v682 = vadd.f32 0.0, %v681
  %v683 = vpop.f32.mrb[0].mxu0
  %684 = vmatprep.mubr.bf16.mxu0 0
  %685 = vmatmul.mubr.bf16.gmra.mrb[0].mxu0 %v395
  %v686 = vpop.f32.mrb[0].mxu0
  %v687 = vadd.f32 0.0, %v686
  %v688 = vpop.f32.mrb[0].mxu0
  %v689 = vpop.f32.mrb[0].mxu0
  %v690 = vadd.f32 0.0, %v689
  %v691 = vpop.f32.mrb[0].mxu0
  %692 = vmatprep.mubr.bf16.mxu0 0
  %693 = vmatmul.mubr.bf16.gmra.mrb[0].mxu0 %v396
  %v694 = vpop.f32.mrb[0].mxu0
  %v695 = vadd.f32 0.0, %v694
  %v696 = vpop.f32.mrb[0].mxu0
  %v697 = vpop.f32.mrb[0].mxu0
  %v698 = vadd.f32 0.0, %v697
  %v699 = vpop.f32.mrb[0].mxu0
  %700 = vmatprep.mubr.bf16.mxu0 0
  %701 = vmatmul.mubr.bf16.gmra.mrb[0].mxu0 %v397
  %v702 = vpop.f32.mrb[0].mxu0
  %v703 = vadd.f32 0.0, %v702
  %v704 = vpop.f32.mrb[0].mxu0
  %v705 = vpop.f32.mrb[0].mxu0
  %v706 = vadd.f32 0.0, %v705
  %v707 = vpop.f32.mrb[0].mxu0
  %708 = vmatprep.mubr.bf16.mxu0 0
  %709 = vmatmul.mubr.bf16.gmra.mrb[0].mxu0 %v398
  %v710 = vpop.f32.mrb[0].mxu0
  %v711 = vadd.f32 0.0, %v710
  %v712 = vpop.f32.mrb[0].mxu0
  %v713 = vpop.f32.mrb[0].mxu0
  %v714 = vadd.f32 0.0, %v713
  %v715 = vpop.f32.mrb[0].mxu0
  %716 = vmatprep.mubr.bf16.mxu0 0
  %717 = vmatmul.mubr.bf16.gmra.mrb[0].mxu0 %v399
  %v718 = vpop.f32.mrb[0].mxu0
  %v719 = vadd.f32 0.0, %v718
  %v720 = vpop.f32.mrb[0].mxu0
  %v721 = vpop.f32.mrb[0].mxu0
  %v722 = vadd.f32 0.0, %v721
  %v723 = vpop.f32.mrb[0].mxu0
  %724 = vmatprep.mubr.bf16.mxu0 0
  %725 = vmatmul.mubr.bf16.gmra.mrb[0].mxu0 %v400
  %v726 = vpop.f32.mrb[0].mxu0
  %v727 = vadd.f32 0.0, %v726
  %v728 = vpop.f32.mrb[0].mxu0
  %v729 = vpop.f32.mrb[0].mxu0
  %v730 = vadd.f32 0.0, %v729
  %v731 = vpop.f32.mrb[0].mxu0
  %732 = vmatprep.mubr.bf16.mxu0 0
  %733 = vmatmul.mubr.bf16.gmra.mrb[0].mxu0 %v401
  %v734 = vpop.f32.mrb[0].mxu0
  %v735 = vadd.f32 0.0, %v734
  %v736 = vpop.f32.mrb[0].mxu0
  %v737 = vpop.f32.mrb[0].mxu0
  %v738 = vadd.f32 0.0, %v737
  %v739 = vpop.f32.mrb[0].mxu0
  %740 = vmatprep.mubr.bf16.mxu0 0
  %741 = vmatmul.mubr.bf16.gmra.mrb[0].mxu0 %v402
  %v742 = vpop.f32.mrb[0].mxu0
  %v743 = vadd.f32 0.0, %v742
  %v744 = vpop.f32.mrb[0].mxu0
  %v745 = vpop.f32.mrb[0].mxu0
  %v746 = vadd.f32 0.0, %v745
  %v747 = vpop.f32.mrb[0].mxu0
  %748 = vmatprep.mubr.bf16.mxu0 0
  %749 = vmatmul.mubr.bf16.gmra.mrb[0].mxu0 %v403
  %v750 = vpop.f32.mrb[0].mxu0
  %v751 = vadd.f32 0.0, %v750
  %v752 = vpop.f32.mrb[0].mxu0
  %v753 = vpop.f32.mrb[0].mxu0
  %v754 = vadd.f32 0.0, %v753
  %v755 = vpop.f32.mrb[0].mxu0
  %756 = vdwg.mxu0
  %v757 = vpack.c.bf16 %v506, %v503
  %v758 = vpack.c.bf16 %v514, %v511
  %v759 = vpack.c.bf16 %v522, %v519
  %v760 = vpack.c.bf16 %v530, %v527
  %v761 = vpack.c.bf16 %v538, %v535
  %v762 = vpack.c.bf16 %v546, %v543
  %v763 = vpack.c.bf16 %v554, %v551
  %v764 = vpack.c.bf16 %v562, %v559
  %v765 = vpack.c.bf16 %v570, %v567
  %v766 = vpack.c.bf16 %v578, %v575
  %v767 = vpack.c.bf16 %v586, %v583
  %v768 = vpack.c.bf16 %v594, %v591
  %v769 = vpack.c.bf16 %v602, %v599
  %v770 = vpack.c.bf16 %v610, %v607
  %v771 = vpack.c.bf16 %v618, %v615
  %v772 = vpack.c.bf16 %v626, %v623
  %v773 = vpack.c.bf16 %v634, %v631
  %v774 = vpack.c.bf16 %v642, %v639
  %v775 = vpack.c.bf16 %v650, %v647
  %v776 = vpack.c.bf16 %v658, %v655
  %v777 = vpack.c.bf16 %v666, %v663
  %v778 = vpack.c.bf16 %v674, %v671
  %v779 = vpack.c.bf16 %v682, %v679
  %v780 = vpack.c.bf16 %v690, %v687
  %v781 = vpack.c.bf16 %v698, %v695
  %v782 = vpack.c.bf16 %v706, %v703
  %v783 = vpack.c.bf16 %v714, %v711
  %v784 = vpack.c.bf16 %v722, %v719
  %v785 = vpack.c.bf16 %v730, %v727
  %v786 = vpack.c.bf16 %v738, %v735
  %v787 = vpack.c.bf16 %v746, %v743
  %v788 = vpack.c.bf16 %v754, %v751
  %v821 = vunpack.c.l.b16 %v757
  %v822 = vunpack.c.h.b16 %v757
  %v823 = vunpack.c.l.b16 %v758
  %v824 = vunpack.c.h.b16 %v758
  %v825 = vunpack.c.l.b16 %v759
  %v826 = vunpack.c.h.b16 %v759
  %v827 = vunpack.c.l.b16 %v760
  %v828 = vunpack.c.h.b16 %v760
  %v829 = vunpack.c.l.b16 %v761
  %v830 = vunpack.c.h.b16 %v761
  %v831 = vunpack.c.l.b16 %v762
  %v832 = vunpack.c.h.b16 %v762
  %v833 = vunpack.c.l.b16 %v763
  %v834 = vunpack.c.h.b16 %v763
  %v835 = vunpack.c.l.b16 %v764
  %v836 = vunpack.c.h.b16 %v764
  %v837 = vunpack.c.l.b16 %v765
  %v838 = vunpack.c.h.b16 %v765
  %v839 = vunpack.c.l.b16 %v766
  %v840 = vunpack.c.h.b16 %v766
  %v841 = vunpack.c.l.b16 %v767
  %v842 = vunpack.c.h.b16 %v767
  %v843 = vunpack.c.l.b16 %v768
  %v844 = vunpack.c.h.b16 %v768
  %v845 = vunpack.c.l.b16 %v769
  %v846 = vunpack.c.h.b16 %v769
  %v847 = vunpack.c.l.b16 %v770
  %v848 = vunpack.c.h.b16 %v770
  %v849 = vunpack.c.l.b16 %v771
  %v850 = vunpack.c.h.b16 %v771
  %v851 = vunpack.c.l.b16 %v772
  %v852 = vunpack.c.h.b16 %v772
  %v853 = vunpack.c.l.b16 %v773
  %v854 = vunpack.c.h.b16 %v773
  %v855 = vunpack.c.l.b16 %v774
  %v856 = vunpack.c.h.b16 %v774
  %v857 = vunpack.c.l.b16 %v775
  %v858 = vunpack.c.h.b16 %v775
  %v859 = vunpack.c.l.b16 %v776
  %v860 = vunpack.c.h.b16 %v776
  %v861 = vunpack.c.l.b16 %v777
  %v862 = vunpack.c.h.b16 %v777
  %v863 = vunpack.c.l.b16 %v778
  %v864 = vunpack.c.h.b16 %v778
  %v865 = vunpack.c.l.b16 %v779
  %v866 = vunpack.c.h.b16 %v779
  %v867 = vunpack.c.l.b16 %v780
  %v868 = vunpack.c.h.b16 %v780
  %v869 = vunpack.c.l.b16 %v781
  %v870 = vunpack.c.h.b16 %v781
  %v871 = vunpack.c.l.b16 %v782
  %v872 = vunpack.c.h.b16 %v782
  %v873 = vunpack.c.l.b16 %v783
  %v874 = vunpack.c.h.b16 %v783
  %v875 = vunpack.c.l.b16 %v784
  %v876 = vunpack.c.h.b16 %v784
  %v877 = vunpack.c.l.b16 %v785
  %v878 = vunpack.c.h.b16 %v785
  %v879 = vunpack.c.l.b16 %v786
  %v880 = vunpack.c.h.b16 %v786
  %v881 = vunpack.c.l.b16 %v787
  %v882 = vunpack.c.h.b16 %v787
  %v883 = vunpack.c.l.b16 %v788
  %v884 = vunpack.c.h.b16 %v788
  %v885 = vpack.c.b16 %v821, %v821
  %v886 = vpack.c.b16 %v822, %v822
  %v887 = vpack.c.b16 %v823, %v823
  %v888 = vpack.c.b16 %v824, %v824
  %v889 = vpack.c.b16 %v825, %v825
  %v890 = vpack.c.b16 %v826, %v826
  %v891 = vpack.c.b16 %v827, %v827
  %v892 = vpack.c.b16 %v828, %v828
  %v893 = vpack.c.b16 %v829, %v829
  %v894 = vpack.c.b16 %v830, %v830
  %v895 = vpack.c.b16 %v831, %v831
  %v896 = vpack.c.b16 %v832, %v832
  %v897 = vpack.c.b16 %v833, %v833
  %v898 = vpack.c.b16 %v834, %v834
  %v899 = vpack.c.b16 %v835, %v835
  %v900 = vpack.c.b16 %v836, %v836
  %v901 = vpack.c.b16 %v837, %v837
  %v902 = vpack.c.b16 %v838, %v838
  %v903 = vpack.c.b16 %v839, %v839
  %v904 = vpack.c.b16 %v840, %v840
  %v905 = vpack.c.b16 %v841, %v841
  %v906 = vpack.c.b16 %v842, %v842
  %v907 = vpack.c.b16 %v843, %v843
  %v908 = vpack.c.b16 %v844, %v844
  %v909 = vpack.c.b16 %v845, %v845
  %v910 = vpack.c.b16 %v846, %v846
  %v911 = vpack.c.b16 %v847, %v847
  %v912 = vpack.c.b16 %v848, %v848
  %v913 = vpack.c.b16 %v849, %v849
  %v914 = vpack.c.b16 %v850, %v850
  %v915 = vpack.c.b16 %v851, %v851
  %v916 = vpack.c.b16 %v852, %v852
  %v917 = vpack.c.b16 %v853, %v853
  %v918 = vpack.c.b16 %v854, %v854
  %v919 = vpack.c.b16 %v855, %v855
  %v920 = vpack.c.b16 %v856, %v856
  %v921 = vpack.c.b16 %v857, %v857
  %v922 = vpack.c.b16 %v858, %v858
  %v923 = vpack.c.b16 %v859, %v859
  %v924 = vpack.c.b16 %v860, %v860
  %v925 = vpack.c.b16 %v861, %v861
  %v926 = vpack.c.b16 %v862, %v862
  %v927 = vpack.c.b16 %v863, %v863
  %v928 = vpack.c.b16 %v864, %v864
  %v929 = vpack.c.b16 %v865, %v865
  %v930 = vpack.c.b16 %v866, %v866
  %v931 = vpack.c.b16 %v867, %v867
  %v932 = vpack.c.b16 %v868, %v868
  %v933 = vpack.c.b16 %v869, %v869
  %v934 = vpack.c.b16 %v870, %v870
  %v935 = vpack.c.b16 %v871, %v871
  %v936 = vpack.c.b16 %v872, %v872
  %v937 = vpack.c.b16 %v873, %v873
  %v938 = vpack.c.b16 %v874, %v874
  %v939 = vpack.c.b16 %v875, %v875
  %v940 = vpack.c.b16 %v876, %v876
  %v941 = vpack.c.b16 %v877, %v877
  %v942 = vpack.c.b16 %v878, %v878
  %v943 = vpack.c.b16 %v879, %v879
  %v944 = vpack.c.b16 %v880, %v880
  %v945 = vpack.c.b16 %v881, %v881
  %v946 = vpack.c.b16 %v882, %v882
  %v947 = vpack.c.b16 %v883, %v883
  %v948 = vpack.c.b16 %v884, %v884
  %1013 = vst [vmem:[%s4] sm:$0xf] %v885
  %1014 = vst [vmem:[%s4 + $0x4] sm:$0xf] %v886
  %1015 = vst [vmem:[%s4 + $0x8] sm:$0xf] %v887
  %1016 = vst [vmem:[%s4 + $0xc] sm:$0xf] %v888
  %1017 = vst [vmem:[%s4 + $0x10] sm:$0xf] %v889
  %1018 = vst [vmem:[%s4 + $0x14] sm:$0xf] %v890
  %1019 = vst [vmem:[%s4 + $0x18] sm:$0xf] %v891
  %1020 = vst [vmem:[%s4 + $0x1c] sm:$0xf] %v892
  %1021 = vst [vmem:[%s4 + $0x20] sm:$0xf] %v893
  %1022 = vst [vmem:[%s4 + $0x24] sm:$0xf] %v894
  %1023 = vst [vmem:[%s4 + $0x28] sm:$0xf] %v895
  %1024 = vst [vmem:[%s4 + $0x2c] sm:$0xf] %v896
  %1025 = vst [vmem:[%s4 + $0x30] sm:$0xf] %v897
  %1026 = vst [vmem:[%s4 + $0x34] sm:$0xf] %v898
  %1027 = vst [vmem:[%s4 + $0x38] sm:$0xf] %v899
  %1028 = vst [vmem:[%s4 + $0x3c] sm:$0xf] %v900
  %1029 = vst [vmem:[%s4 + $0x40] sm:$0xf] %v901
  %1030 = vst [vmem:[%s4 + $0x44] sm:$0xf] %v902
  %1031 = vst [vmem:[%s4 + $0x48] sm:$0xf] %v903
  %1032 = vst [vmem:[%s4 + $0x4c] sm:$0xf] %v904
  %1033 = vst [vmem:[%s4 + $0x50] sm:$0xf] %v905
  %1034 = vst [vmem:[%s4 + $0x54] sm:$0xf] %v906
  %1035 = vst [vmem:[%s4 + $0x58] sm:$0xf] %v907
  %1036 = vst [vmem:[%s4 + $0x5c] sm:$0xf] %v908
  %1037 = vst [vmem:[%s4 + $0x60] sm:$0xf] %v909
  %1038 = vst [vmem:[%s4 + $0x64] sm:$0xf] %v910
  %1039 = vst [vmem:[%s4 + $0x68] sm:$0xf] %v911
  %1040 = vst [vmem:[%s4 + $0x6c] sm:$0xf] %v912
  %1041 = vst [vmem:[%s4 + $0x70] sm:$0xf] %v913
  %1042 = vst [vmem:[%s4 + $0x74] sm:$0xf] %v914
  %1043 = vst [vmem:[%s4 + $0x78] sm:$0xf] %v915
  %1044 = vst [vmem:[%s4 + $0x7c] sm:$0xf] %v916
  %1045 = vst [vmem:[%s4 + $0x80] sm:$0xf] %v917
  %1046 = vst [vmem:[%s4 + $0x84] sm:$0xf] %v918
  %1047 = vst [vmem:[%s4 + $0x88] sm:$0xf] %v919
  %1048 = vst [vmem:[%s4 + $0x8c] sm:$0xf] %v920
  %1049 = vst [vmem:[%s4 + $0x90] sm:$0xf] %v921
  %1050 = vst [vmem:[%s4 + $0x94] sm:$0xf] %v922
  %1051 = vst [vmem:[%s4 + $0x98] sm:$0xf] %v923
  %1052 = vst [vmem:[%s4 + $0x9c] sm:$0xf] %v924
  %1053 = vst [vmem:[%s4 + $0xa0] sm:$0xf] %v925
  %1054 = vst [vmem:[%s4 + $0xa4] sm:$0xf] %v926
  %1055 = vst [vmem:[%s4 + $0xa8] sm:$0xf] %v927
  %1056 = vst [vmem:[%s4 + $0xac] sm:$0xf] %v928
  %1057 = vst [vmem:[%s4 + $0xb0] sm:$0xf] %v929
  %1058 = vst [vmem:[%s4 + $0xb4] sm:$0xf] %v930
  %1059 = vst [vmem:[%s4 + $0xb8] sm:$0xf] %v931
  %1060 = vst [vmem:[%s4 + $0xbc] sm:$0xf] %v932
  %1061 = vst [vmem:[%s4 + $0xc0] sm:$0xf] %v933
  %1062 = vst [vmem:[%s4 + $0xc4] sm:$0xf] %v934
  %1063 = vst [vmem:[%s4 + $0xc8] sm:$0xf] %v935
  %1064 = vst [vmem:[%s4 + $0xcc] sm:$0xf] %v936
  %1065 = vst [vmem:[%s4 + $0xd0] sm:$0xf] %v937
  %1066 = vst [vmem:[%s4 + $0xd4] sm:$0xf] %v938
  %1067 = vst [vmem:[%s4 + $0xd8] sm:$0xf] %v939
  %1068 = vst [vmem:[%s4 + $0xdc] sm:$0xf] %v940
  %1069 = vst [vmem:[%s4 + $0xe0] sm:$0xf] %v941
  %1070 = vst [vmem:[%s4 + $0xe4] sm:$0xf] %v942
  %1071 = vst [vmem:[%s4 + $0xe8] sm:$0xf] %v943
  %1072 = vst [vmem:[%s4 + $0xec] sm:$0xf] %v944
  %1073 = vst [vmem:[%s4 + $0xf0] sm:$0xf] %v945
  %1074 = vst [vmem:[%s4 + $0xf4] sm:$0xf] %v946
  %1075 = vst [vmem:[%s4 + $0xf8] sm:$0xf] %v947
  %1076 = vst [vmem:[%s4 + $0xfc] sm:$0xf] %v948
  %v1077 = vadd.f32 %v503, %v506
  %v1078 = vadd.f32 %v1077, %v511
  %v1079 = vadd.f32 %v1078, %v514
  %v1080 = vadd.f32 %v1079, %v519
  %v1081 = vadd.f32 %v1080, %v522
  %v1082 = vadd.f32 %v1081, %v527
  %v1083 = vadd.f32 %v1082, %v530
  %v1084 = vadd.f32 %v1083, %v535
  %v1085 = vadd.f32 %v1084, %v538
  %v1086 = vadd.f32 %v1085, %v543
  %v1087 = vadd.f32 %v1086, %v546
  %v1088 = vadd.f32 %v1087, %v551
  %v1089 = vadd.f32 %v1088, %v554
  %v1090 = vadd.f32 %v1089, %v559
  %v1091 = vadd.f32 %v1090, %v562
  %v1092 = vadd.f32 %v1091, %v567
  %v1093 = vadd.f32 %v1092, %v570
  %v1094 = vadd.f32 %v1093, %v575
  %v1095 = vadd.f32 %v1094, %v578
  %v1096 = vadd.f32 %v1095, %v583
  %v1097 = vadd.f32 %v1096, %v586
  %v1098 = vadd.f32 %v1097, %v591
  %v1099 = vadd.f32 %v1098, %v594
  %v1100 = vadd.f32 %v1099, %v599
  %v1101 = vadd.f32 %v1100, %v602
  %v1102 = vadd.f32 %v1101, %v607
  %v1103 = vadd.f32 %v1102, %v610
  %v1104 = vadd.f32 %v1103, %v615
  %v1105 = vadd.f32 %v1104, %v618
  %v1106 = vadd.f32 %v1105, %v623
  %v1107 = vadd.f32 %v1106, %v626
  %v1108 = vadd.f32 %v1107, %v631
  %v1109 = vadd.f32 %v1108, %v634
  %v1110 = vadd.f32 %v1109, %v639
  %v1111 = vadd.f32 %v1110, %v642
  %v1112 = vadd.f32 %v1111, %v647
  %v1113 = vadd.f32 %v1112, %v650
  %v1114 = vadd.f32 %v1113, %v655
  %v1115 = vadd.f32 %v1114, %v658
  %v1116 = vadd.f32 %v1115, %v663
  %v1117 = vadd.f32 %v1116, %v666
  %v1118 = vadd.f32 %v1117, %v671
  %v1119 = vadd.f32 %v1118, %v674
  %v1120 = vadd.f32 %v1119, %v679
  %v1121 = vadd.f32 %v1120, %v682
  %v1122 = vadd.f32 %v1121, %v687
  %v1123 = vadd.f32 %v1122, %v690
  %v1124 = vadd.f32 %v1123, %v695
  %v1125 = vadd.f32 %v1124, %v698
  %v1126 = vadd.f32 %v1125, %v703
  %v1127 = vadd.f32 %v1126, %v706
  %v1128 = vadd.f32 %v1127, %v711
  %v1129 = vadd.f32 %v1128, %v714
  %v1130 = vadd.f32 %v1129, %v719
  %v1131 = vadd.f32 %v1130, %v722
  %v1132 = vadd.f32 %v1131, %v727
  %v1133 = vadd.f32 %v1132, %v730
  %v1134 = vadd.f32 %v1133, %v735
  %v1135 = vadd.f32 %v1134, %v738
  %v1136 = vadd.f32 %v1135, %v743
  %v1137 = vadd.f32 %v1136, %v746
  %v1138 = vadd.f32 %v1137, %v751
  %v1139 = vadd.f32 %v1138, %v754
  %v1140 = vrot.slane %v1139, 4
  %v1141 = vadd.f32 %v1139, %v1140
  %v1142 = vrot.slane %v1141, 2
  %v1143 = vadd.f32 %v1141, %v1142
  %v1144 = vrot.slane %v1143, 1
  %v1145 = vadd.f32 %v1143, %v1144
  %1146 = vst [vmem:[%s5] sm:$0x1] %v1145
  %v1147 = vmul.f32 %v503, %v503
  %v1148 = vmul.f32 %v506, %v506
  %v1149 = vmul.f32 %v511, %v511
  %v1150 = vmul.f32 %v514, %v514
  %v1151 = vmul.f32 %v519, %v519
  %v1152 = vmul.f32 %v522, %v522
  %v1153 = vmul.f32 %v527, %v527
  %v1154 = vmul.f32 %v530, %v530
  %v1155 = vmul.f32 %v535, %v535
  %v1156 = vmul.f32 %v538, %v538
  %v1157 = vmul.f32 %v543, %v543
  %v1158 = vmul.f32 %v546, %v546
  %v1159 = vmul.f32 %v551, %v551
  %v1160 = vmul.f32 %v554, %v554
  %v1161 = vmul.f32 %v559, %v559
  %v1162 = vmul.f32 %v562, %v562
  %v1163 = vmul.f32 %v567, %v567
  %v1164 = vmul.f32 %v570, %v570
  %v1165 = vmul.f32 %v575, %v575
  %v1166 = vmul.f32 %v578, %v578
  %v1167 = vmul.f32 %v583, %v583
  %v1168 = vmul.f32 %v586, %v586
  %v1169 = vmul.f32 %v591, %v591
  %v1170 = vmul.f32 %v594, %v594
  %v1171 = vmul.f32 %v599, %v599
  %v1172 = vmul.f32 %v602, %v602
  %v1173 = vmul.f32 %v607, %v607
  %v1174 = vmul.f32 %v610, %v610
  %v1175 = vmul.f32 %v615, %v615
  %v1176 = vmul.f32 %v618, %v618
  %v1177 = vmul.f32 %v623, %v623
  %v1178 = vmul.f32 %v626, %v626
  %v1179 = vmul.f32 %v631, %v631
  %v1180 = vmul.f32 %v634, %v634
  %v1181 = vmul.f32 %v639, %v639
  %v1182 = vmul.f32 %v642, %v642
  %v1183 = vmul.f32 %v647, %v647
  %v1184 = vmul.f32 %v650, %v650
  %v1185 = vmul.f32 %v655, %v655
  %v1186 = vmul.f32 %v658, %v658
  %v1187 = vmul.f32 %v663, %v663
  %v1188 = vmul.f32 %v666, %v666
  %v1189 = vmul.f32 %v671, %v671
  %v1190 = vmul.f32 %v674, %v674
  %v1191 = vmul.f32 %v679, %v679
  %v1192 = vmul.f32 %v682, %v682
  %v1193 = vmul.f32 %v687, %v687
  %v1194 = vmul.f32 %v690, %v690
  %v1195 = vmul.f32 %v695, %v695
  %v1196 = vmul.f32 %v698, %v698
  %v1197 = vmul.f32 %v703, %v703
  %v1198 = vmul.f32 %v706, %v706
  %v1199 = vmul.f32 %v711, %v711
  %v1200 = vmul.f32 %v714, %v714
  %v1201 = vmul.f32 %v719, %v719
  %v1202 = vmul.f32 %v722, %v722
  %v1203 = vmul.f32 %v727, %v727
  %v1204 = vmul.f32 %v730, %v730
  %v1205 = vmul.f32 %v735, %v735
  %v1206 = vmul.f32 %v738, %v738
  %v1207 = vmul.f32 %v743, %v743
  %v1208 = vmul.f32 %v746, %v746
  %v1209 = vmul.f32 %v751, %v751
  %v1210 = vmul.f32 %v754, %v754
  %v1211 = vadd.f32 %v1147, %v1148
  %v1212 = vadd.f32 %v1211, %v1149
  %v1213 = vadd.f32 %v1212, %v1150
  %v1214 = vadd.f32 %v1213, %v1151
  %v1215 = vadd.f32 %v1214, %v1152
  %v1216 = vadd.f32 %v1215, %v1153
  %v1217 = vadd.f32 %v1216, %v1154
  %v1218 = vadd.f32 %v1217, %v1155
  %v1219 = vadd.f32 %v1218, %v1156
  %v1220 = vadd.f32 %v1219, %v1157
  %v1221 = vadd.f32 %v1220, %v1158
  %v1222 = vadd.f32 %v1221, %v1159
  %v1223 = vadd.f32 %v1222, %v1160
  %v1224 = vadd.f32 %v1223, %v1161
  %v1225 = vadd.f32 %v1224, %v1162
  %v1226 = vadd.f32 %v1225, %v1163
  %v1227 = vadd.f32 %v1226, %v1164
  %v1228 = vadd.f32 %v1227, %v1165
  %v1229 = vadd.f32 %v1228, %v1166
  %v1230 = vadd.f32 %v1229, %v1167
  %v1231 = vadd.f32 %v1230, %v1168
  %v1232 = vadd.f32 %v1231, %v1169
  %v1233 = vadd.f32 %v1232, %v1170
  %v1234 = vadd.f32 %v1233, %v1171
  %v1235 = vadd.f32 %v1234, %v1172
  %v1236 = vadd.f32 %v1235, %v1173
  %v1237 = vadd.f32 %v1236, %v1174
  %v1238 = vadd.f32 %v1237, %v1175
  %v1239 = vadd.f32 %v1238, %v1176
  %v1240 = vadd.f32 %v1239, %v1177
  %v1241 = vadd.f32 %v1240, %v1178
  %v1242 = vadd.f32 %v1241, %v1179
  %v1243 = vadd.f32 %v1242, %v1180
  %v1244 = vadd.f32 %v1243, %v1181
  %v1245 = vadd.f32 %v1244, %v1182
  %v1246 = vadd.f32 %v1245, %v1183
  %v1247 = vadd.f32 %v1246, %v1184
  %v1248 = vadd.f32 %v1247, %v1185
  %v1249 = vadd.f32 %v1248, %v1186
  %v1250 = vadd.f32 %v1249, %v1187
  %v1251 = vadd.f32 %v1250, %v1188
  %v1252 = vadd.f32 %v1251, %v1189
  %v1253 = vadd.f32 %v1252, %v1190
  %v1254 = vadd.f32 %v1253, %v1191
  %v1255 = vadd.f32 %v1254, %v1192
  %v1256 = vadd.f32 %v1255, %v1193
  %v1257 = vadd.f32 %v1256, %v1194
  %v1258 = vadd.f32 %v1257, %v1195
  %v1259 = vadd.f32 %v1258, %v1196
  %v1260 = vadd.f32 %v1259, %v1197
  %v1261 = vadd.f32 %v1260, %v1198
  %v1262 = vadd.f32 %v1261, %v1199
  %v1263 = vadd.f32 %v1262, %v1200
  %v1264 = vadd.f32 %v1263, %v1201
  %v1265 = vadd.f32 %v1264, %v1202
  %v1266 = vadd.f32 %v1265, %v1203
  %v1267 = vadd.f32 %v1266, %v1204
  %v1268 = vadd.f32 %v1267, %v1205
  %v1269 = vadd.f32 %v1268, %v1206
  %v1270 = vadd.f32 %v1269, %v1207
  %v1271 = vadd.f32 %v1270, %v1208
  %v1272 = vadd.f32 %v1271, %v1209
  %v1273 = vadd.f32 %v1272, %v1210
  %v1274 = vrot.slane %v1273, 4
  %v1275 = vadd.f32 %v1273, %v1274
  %v1276 = vrot.slane %v1275, 2
  %v1277 = vadd.f32 %v1275, %v1276
  %v1278 = vrot.slane %v1277, 1
  %v1279 = vadd.f32 %v1277, %v1278
  %1280 = vst [vmem:[%s5 + $0x1] sm:$0x1] %v1279
  // Predicated region
  $region18: #{bottleneck_forward.6} parent=0 // pred_check
    _
  $region19: #{bottleneck_forward.6} parent=0 // pred_check_branch
    %1282 = sbr.rel (0) target = $region21
  $region20: #{bottleneck_forward.6} parent=0 // pred_region
    _
  $region21: #{bottleneck_forward.6} parent=0 // pred_fallthru
    _
  // Predicated region
  $region22: #{bottleneck_forward.6} parent=0 // pred_check
    _
  $region23: #{bottleneck_forward.6} parent=0 // pred_check_branch
    %1284 = sbr.rel (0) target = $region25
  $region24: #{bottleneck_forward.6} parent=0 // pred_region
    _
  $region25: #{bottleneck_forward.6} parent=0 // pred_fallthru
    _
  // Predicated region
  $region26: #{bottleneck_forward.6} parent=0 // pred_check
    _
  $region27: #{bottleneck_forward.6} parent=0 // pred_check_branch
    %1286 = sbr.rel (0) target = $region29
  $region28: #{bottleneck_forward.6} parent=0 // pred_region
    _
  $region29: #{bottleneck_forward.6} parent=0 // pred_fallthru
    _
  // Predicated region
  $region30: #{bottleneck_forward.6} parent=0 // pred_check
    _
  $region31: #{bottleneck_forward.6} parent=0 // pred_check_branch
    %1288 = sbr.rel (0) target = $region33
  $region32: #{bottleneck_forward.6} parent=0 // pred_region
    _
  $region33: #{bottleneck_forward.6} parent=0 // pred_fallthru
    _

// kernel: bottleneck_forward.7
$region0: #{bottleneck_forward.7}
  #allocation0 [shape = 'u32[]', space=smem, size = 0x4, offset = 0x4, fixed_abs, tag = 'smem constant byte address 0x4 - core index']
  #allocation1 [shape = 'u32[144,128]{1,0:T(1,128)}', space=vmem, size = 0x12000, scoped, tag = 'internal scratch']
  %s0 = inlined_call_operand.vmem [shape: bf16[512,128], index: 0, kind: input, shape index: {}]
  %s1 = inlined_call_operand.vmem [shape: f32[1,2,128], index: 1, kind: input, shape index: {}]
  %s2 = inlined_call_operand.vmem [shape: f32[2,128], index: 2, kind: input, shape index: {}]
  %s3 = inlined_call_operand.vmem [shape: bf16[512,128], index: 3, kind: input, shape index: {}]
  %s4 = inlined_call_operand.vmem [shape: f32[512,128], index: 4, kind: output, shape index: {}]
  %s5 = sld [smem:[#allocation0]]
  $region26: #{bottleneck_forward.7} parent=0
    _
  %s7 = ssub.s32 1, %s5
  %s8 = scalar_select 0, %s7, %s5
  // Predicated region
  $region2: #{bottleneck_forward.7} parent=0 // pred_check
    _
  $region3: #{bottleneck_forward.7} parent=0 // pred_check_branch
    %10 = sbr.rel (0) target = $region5
  $region4: #{bottleneck_forward.7} parent=0 // pred_region
    _
  $region5: #{bottleneck_forward.7} parent=0 // pred_fallthru
    _
  // Predicated region
  $region6: #{bottleneck_forward.7} parent=0 // pred_check
    _
  $region7: #{bottleneck_forward.7} parent=0 // pred_check_branch
    %12 = sbr.rel (0) target = $region9
  $region8: #{bottleneck_forward.7} parent=0 // pred_region
    _
  $region9: #{bottleneck_forward.7} parent=0 // pred_fallthru
    _
  // Predicated region
  $region10: #{bottleneck_forward.7} parent=0 // pred_check
    _
  $region11: #{bottleneck_forward.7} parent=0 // pred_check_branch
    %14 = sbr.rel (0) target = $region13
  $region12: #{bottleneck_forward.7} parent=0 // pred_region
    _
  $region13: #{bottleneck_forward.7} parent=0 // pred_fallthru
    _
  // Predicated region
  $region14: #{bottleneck_forward.7} parent=0 // pred_check
    _
  $region15: #{bottleneck_forward.7} parent=0 // pred_check_branch
    %16 = sbr.rel (0) target = $region17
  $region16: #{bottleneck_forward.7} parent=0 // pred_region
    _
  $region17: #{bottleneck_forward.7} parent=0 // pred_fallthru
    _
  %v17 = vld [vmem:[%s1] sm:$0x3]
  %v18 = vld [vmem:[%s2] sm:$0x3]
  %v19 = vadd.f32 %v17, 0.0
  %v20 = vmul.f32 %v19, 0.001953125
  %v21 = vmul.f32 %v20, %v20
  %v23 = vrot.slane %v21, 7
  %v25 = vsub.f32 %v20, %v23
  %v26 = vadd.f32 %v25, 1e-05
  %v27 = vrsqrt.pop %v26
  %v29 = vrot.slane %v27, 1
  %v31 = vmul.f32 %v18, %v29
  %v32 = vmul.f32 %v20, %v31
  %v34 = vrot.slane %v32, 7
  %v36 = vsub.f32 %v18, %v34
  %v37 = vld [vmem:[%s0] sm:$0xf]
  %v38 = vld [vmem:[%s0 + $0x4] sm:$0xf]
  %v39 = vld [vmem:[%s0 + $0x8] sm:$0xf]
  %v40 = vld [vmem:[%s0 + $0xc] sm:$0xf]
  %v41 = vld [vmem:[%s0 + $0x10] sm:$0xf]
  %v42 = vld [vmem:[%s0 + $0x14] sm:$0xf]
  %v43 = vld [vmem:[%s0 + $0x18] sm:$0xf]
  %v44 = vld [vmem:[%s0 + $0x1c] sm:$0xf]
  %v45 = vld [vmem:[%s0 + $0x20] sm:$0xf]
  %v46 = vld [vmem:[%s0 + $0x24] sm:$0xf]
  %v47 = vld [vmem:[%s0 + $0x28] sm:$0xf]
  %v48 = vld [vmem:[%s0 + $0x2c] sm:$0xf]
  %v49 = vld [vmem:[%s0 + $0x30] sm:$0xf]
  %v50 = vld [vmem:[%s0 + $0x34] sm:$0xf]
  %v51 = vld [vmem:[%s0 + $0x38] sm:$0xf]
  %v52 = vld [vmem:[%s0 + $0x3c] sm:$0xf]
  %v53 = vld [vmem:[%s0 + $0x40] sm:$0xf]
  %v54 = vld [vmem:[%s0 + $0x44] sm:$0xf]
  %v55 = vld [vmem:[%s0 + $0x48] sm:$0xf]
  %v56 = vld [vmem:[%s0 + $0x4c] sm:$0xf]
  %v57 = vld [vmem:[%s0 + $0x50] sm:$0xf]
  %v58 = vld [vmem:[%s0 + $0x54] sm:$0xf]
  %v59 = vld [vmem:[%s0 + $0x58] sm:$0xf]
  %v60 = vld [vmem:[%s0 + $0x5c] sm:$0xf]
  %v61 = vld [vmem:[%s0 + $0x60] sm:$0xf]
  %v62 = vld [vmem:[%s0 + $0x64] sm:$0xf]
  %v63 = vld [vmem:[%s0 + $0x68] sm:$0xf]
  %v64 = vld [vmem:[%s0 + $0x6c] sm:$0xf]
  %v65 = vld [vmem:[%s0 + $0x70] sm:$0xf]
  %v66 = vld [vmem:[%s0 + $0x74] sm:$0xf]
  %v67 = vld [vmem:[%s0 + $0x78] sm:$0xf]
  %v68 = vld [vmem:[%s0 + $0x7c] sm:$0xf]
  %v69 = vld [vmem:[%s0 + $0x80] sm:$0xf]
  %v70 = vld [vmem:[%s0 + $0x84] sm:$0xf]
  %v71 = vld [vmem:[%s0 + $0x88] sm:$0xf]
  %v72 = vld [vmem:[%s0 + $0x8c] sm:$0xf]
  %v73 = vld [vmem:[%s0 + $0x90] sm:$0xf]
  %v74 = vld [vmem:[%s0 + $0x94] sm:$0xf]
  %v75 = vld [vmem:[%s0 + $0x98] sm:$0xf]
  %v76 = vld [vmem:[%s0 + $0x9c] sm:$0xf]
  %v77 = vld [vmem:[%s0 + $0xa0] sm:$0xf]
  %v78 = vld [vmem:[%s0 + $0xa4] sm:$0xf]
  %v79 = vld [vmem:[%s0 + $0xa8] sm:$0xf]
  %v80 = vld [vmem:[%s0 + $0xac] sm:$0xf]
  %v81 = vld [vmem:[%s0 + $0xb0] sm:$0xf]
  %v82 = vld [vmem:[%s0 + $0xb4] sm:$0xf]
  %v83 = vld [vmem:[%s0 + $0xb8] sm:$0xf]
  %v84 = vld [vmem:[%s0 + $0xbc] sm:$0xf]
  %v85 = vld [vmem:[%s0 + $0xc0] sm:$0xf]
  %v86 = vld [vmem:[%s0 + $0xc4] sm:$0xf]
  %v87 = vld [vmem:[%s0 + $0xc8] sm:$0xf]
  %v88 = vld [vmem:[%s0 + $0xcc] sm:$0xf]
  %v89 = vld [vmem:[%s0 + $0xd0] sm:$0xf]
  %v90 = vld [vmem:[%s0 + $0xd4] sm:$0xf]
  %v91 = vld [vmem:[%s0 + $0xd8] sm:$0xf]
  %v92 = vld [vmem:[%s0 + $0xdc] sm:$0xf]
  %v93 = vld [vmem:[%s0 + $0xe0] sm:$0xf]
  %v94 = vld [vmem:[%s0 + $0xe4] sm:$0xf]
  %v95 = vld [vmem:[%s0 + $0xe8] sm:$0xf]
  %v96 = vld [vmem:[%s0 + $0xec] sm:$0xf]
  %v97 = vld [vmem:[%s0 + $0xf0] sm:$0xf]
  %v98 = vld [vmem:[%s0 + $0xf4] sm:$0xf]
  %v99 = vld [vmem:[%s0 + $0xf8] sm:$0xf]
  %v100 = vld [vmem:[%s0 + $0xfc] sm:$0xf]
  %v101 = vunpack.c.l.bf16 %v37
  %v102 = vunpack.c.l.bf16 %v38
  %v103 = vunpack.c.l.bf16 %v39
  %v104 = vunpack.c.l.bf16 %v40
  %v105 = vunpack.c.l.bf16 %v41
  %v106 = vunpack.c.l.bf16 %v42
  %v107 = vunpack.c.l.bf16 %v43
  %v108 = vunpack.c.l.bf16 %v44
  %v109 = vunpack.c.l.bf16 %v45
  %v110 = vunpack.c.l.bf16 %v46
  %v111 = vunpack.c.l.bf16 %v47
  %v112 = vunpack.c.l.bf16 %v48
  %v113 = vunpack.c.l.bf16 %v49
  %v114 = vunpack.c.l.bf16 %v50
  %v115 = vunpack.c.l.bf16 %v51
  %v116 = vunpack.c.l.bf16 %v52
  %v117 = vunpack.c.l.bf16 %v53
  %v118 = vunpack.c.l.bf16 %v54
  %v119 = vunpack.c.l.bf16 %v55
  %v120 = vunpack.c.l.bf16 %v56
  %v121 = vunpack.c.l.bf16 %v57
  %v122 = vunpack.c.l.bf16 %v58
  %v123 = vunpack.c.l.bf16 %v59
  %v124 = vunpack.c.l.bf16 %v60
  %v125 = vunpack.c.l.bf16 %v61
  %v126 = vunpack.c.l.bf16 %v62
  %v127 = vunpack.c.l.bf16 %v63
  %v128 = vunpack.c.l.bf16 %v64
  %v129 = vunpack.c.l.bf16 %v65
  %v130 = vunpack.c.l.bf16 %v66
  %v131 = vunpack.c.l.bf16 %v67
  %v132 = vunpack.c.l.bf16 %v68
  %v133 = vunpack.c.l.bf16 %v69
  %v134 = vunpack.c.l.bf16 %v70
  %v135 = vunpack.c.l.bf16 %v71
  %v136 = vunpack.c.l.bf16 %v72
  %v137 = vunpack.c.l.bf16 %v73
  %v138 = vunpack.c.l.bf16 %v74
  %v139 = vunpack.c.l.bf16 %v75
  %v140 = vunpack.c.l.bf16 %v76
  %v141 = vunpack.c.l.bf16 %v77
  %v142 = vunpack.c.l.bf16 %v78
  %v143 = vunpack.c.l.bf16 %v79
  %v144 = vunpack.c.l.bf16 %v80
  %v145 = vunpack.c.l.bf16 %v81
  %v146 = vunpack.c.l.bf16 %v82
  %v147 = vunpack.c.l.bf16 %v83
  %v148 = vunpack.c.l.bf16 %v84
  %v149 = vunpack.c.l.bf16 %v85
  %v150 = vunpack.c.l.bf16 %v86
  %v151 = vunpack.c.l.bf16 %v87
  %v152 = vunpack.c.l.bf16 %v88
  %v153 = vunpack.c.l.bf16 %v89
  %v154 = vunpack.c.l.bf16 %v90
  %v155 = vunpack.c.l.bf16 %v91
  %v156 = vunpack.c.l.bf16 %v92
  %v157 = vunpack.c.l.bf16 %v93
  %v158 = vunpack.c.l.bf16 %v94
  %v159 = vunpack.c.l.bf16 %v95
  %v160 = vunpack.c.l.bf16 %v96
  %v161 = vunpack.c.l.bf16 %v97
  %v162 = vunpack.c.l.bf16 %v98
  %v163 = vunpack.c.l.bf16 %v99
  %v164 = vunpack.c.l.bf16 %v100
  %v165 = vlaneseq
  %v166 = vshrl.u32 %v165, 7
  %v167 = vsub.s32 0, %v166
  %v168 = vrot.slane %v31, %v167
  %v169 = vmul.f32 %v101, %v168
  %v170 = vmul.f32 %v102, %v168
  %v171 = vmul.f32 %v103, %v168
  %v172 = vmul.f32 %v104, %v168
  %v173 = vmul.f32 %v105, %v168
  %v174 = vmul.f32 %v106, %v168
  %v175 = vmul.f32 %v107, %v168
  %v176 = vmul.f32 %v108, %v168
  %v177 = vmul.f32 %v109, %v168
  %v178 = vmul.f32 %v110, %v168
  %v179 = vmul.f32 %v111, %v168
  %v180 = vmul.f32 %v112, %v168
  %v181 = vmul.f32 %v113, %v168
  %v182 = vmul.f32 %v114, %v168
  %v183 = vmul.f32 %v115, %v168
  %v184 = vmul.f32 %v116, %v168
  %v185 = vmul.f32 %v117, %v168
  %v186 = vmul.f32 %v118, %v168
  %v187 = vmul.f32 %v119, %v168
  %v188 = vmul.f32 %v120, %v168
  %v189 = vmul.f32 %v121, %v168
  %v190 = vmul.f32 %v122, %v168
  %v191 = vmul.f32 %v123, %v168
  %v192 = vmul.f32 %v124, %v168
  %v193 = vmul.f32 %v125, %v168
  %v194 = vmul.f32 %v126, %v168
  %v195 = vmul.f32 %v127, %v168
  %v196 = vmul.f32 %v128, %v168
  %v197 = vmul.f32 %v129, %v168
  %v198 = vmul.f32 %v130, %v168
  %v199 = vmul.f32 %v131, %v168
  %v200 = vmul.f32 %v132, %v168
  %v201 = vmul.f32 %v133, %v168
  %v202 = vmul.f32 %v134, %v168
  %v203 = vmul.f32 %v135, %v168
  %v204 = vmul.f32 %v136, %v168
  %v205 = vmul.f32 %v137, %v168
  %v206 = vmul.f32 %v138, %v168
  %v207 = vmul.f32 %v139, %v168
  %v208 = vmul.f32 %v140, %v168
  %v209 = vmul.f32 %v141, %v168
  %v210 = vmul.f32 %v142, %v168
  %v211 = vmul.f32 %v143, %v168
  %v212 = vmul.f32 %v144, %v168
  %v213 = vmul.f32 %v145, %v168
  %v214 = vmul.f32 %v146, %v168
  %v215 = vmul.f32 %v147, %v168
  %v216 = vmul.f32 %v148, %v168
  %v217 = vmul.f32 %v149, %v168
  %v218 = vmul.f32 %v150, %v168
  %v219 = vmul.f32 %v151, %v168
  %v220 = vmul.f32 %v152, %v168
  %v221 = vmul.f32 %v153, %v168
  %v222 = vmul.f32 %v154, %v168
  %v223 = vmul.f32 %v155, %v168
  %v224 = vmul.f32 %v156, %v168
  %v225 = vmul.f32 %v157, %v168
  %v226 = vmul.f32 %v158, %v168
  %v227 = vmul.f32 %v159, %v168
  %v228 = vmul.f32 %v160, %v168
  %v229 = vmul.f32 %v161, %v168
  %v230 = vmul.f32 %v162, %v168
  %v231 = vmul.f32 %v163, %v168
  %v232 = vmul.f32 %v164, %v168
  %v233 = vlaneseq
  %v234 = vshrl.u32 %v233, 7
  %v235 = vsub.s32 1, %v234
  %v236 = vrot.slane %v36, %v235
  %v237 = vadd.f32 %v169, %v236
  %v238 = vadd.f32 %v170, %v236
  %v239 = vadd.f32 %v171, %v236
  %v240 = vadd.f32 %v172, %v236
  %v241 = vadd.f32 %v173, %v236
  %v242 = vadd.f32 %v174, %v236
  %v243 = vadd.f32 %v175, %v236
  %v244 = vadd.f32 %v176, %v236
  %v245 = vadd.f32 %v177, %v236
  %v246 = vadd.f32 %v178, %v236
  %v247 = vadd.f32 %v179, %v236
  %v248 = vadd.f32 %v180, %v236
  %v249 = vadd.f32 %v181, %v236
  %v250 = vadd.f32 %v182, %v236
  %v251 = vadd.f32 %v183, %v236
  %v252 = vadd.f32 %v184, %v236
  %v253 = vadd.f32 %v185, %v236
  %v254 = vadd.f32 %v186, %v236
  %v255 = vadd.f32 %v187, %v236
  %v256 = vadd.f32 %v188, %v236
  %v257 = vadd.f32 %v189, %v236
  %v258 = vadd.f32 %v190, %v236
  %v259 = vadd.f32 %v191, %v236
  %v260 = vadd.f32 %v192, %v236
  %v261 = vadd.f32 %v193, %v236
  %v262 = vadd.f32 %v194, %v236
  %v263 = vadd.f32 %v195, %v236
  %v264 = vadd.f32 %v196, %v236
  %v265 = vadd.f32 %v197, %v236
  %v266 = vadd.f32 %v198, %v236
  %v267 = vadd.f32 %v199, %v236
  %v268 = vadd.f32 %v200, %v236
  %v269 = vadd.f32 %v201, %v236
  %v270 = vadd.f32 %v202, %v236
  %v271 = vadd.f32 %v203, %v236
  %v272 = vadd.f32 %v204, %v236
  %v273 = vadd.f32 %v205, %v236
  %v274 = vadd.f32 %v206, %v236
  %v275 = vadd.f32 %v207, %v236
  %v276 = vadd.f32 %v208, %v236
  %v277 = vadd.f32 %v209, %v236
  %v278 = vadd.f32 %v210, %v236
  %v279 = vadd.f32 %v211, %v236
  %v280 = vadd.f32 %v212, %v236
  %v281 = vadd.f32 %v213, %v236
  %v282 = vadd.f32 %v214, %v236
  %v283 = vadd.f32 %v215, %v236
  %v284 = vadd.f32 %v216, %v236
  %v285 = vadd.f32 %v217, %v236
  %v286 = vadd.f32 %v218, %v236
  %v287 = vadd.f32 %v219, %v236
  %v288 = vadd.f32 %v220, %v236
  %v289 = vadd.f32 %v221, %v236
  %v290 = vadd.f32 %v222, %v236
  %v291 = vadd.f32 %v223, %v236
  %v292 = vadd.f32 %v224, %v236
  %v293 = vadd.f32 %v225, %v236
  %v294 = vadd.f32 %v226, %v236
  %v295 = vadd.f32 %v227, %v236
  %v296 = vadd.f32 %v228, %v236
  %v297 = vadd.f32 %v229, %v236
  %v298 = vadd.f32 %v230, %v236
  %v299 = vadd.f32 %v231, %v236
  %v300 = vadd.f32 %v232, %v236
  %v301 = vld [vmem:[%s3] sm:$0xf]
  %v302 = vld [vmem:[%s3 + $0x4] sm:$0xf]
  %v303 = vld [vmem:[%s3 + $0x8] sm:$0xf]
  %v304 = vld [vmem:[%s3 + $0xc] sm:$0xf]
  %v305 = vld [vmem:[%s3 + $0x10] sm:$0xf]
  %v306 = vld [vmem:[%s3 + $0x14] sm:$0xf]
  %v307 = vld [vmem:[%s3 + $0x18] sm:$0xf]
  %v308 = vld [vmem:[%s3 + $0x1c] sm:$0xf]
  %v309 = vld [vmem:[%s3 + $0x20] sm:$0xf]
  %v310 = vld [vmem:[%s3 + $0x24] sm:$0xf]
  %v311 = vld [vmem:[%s3 + $0x28] sm:$0xf]
  %v312 = vld [vmem:[%s3 + $0x2c] sm:$0xf]
  %v313 = vld [vmem:[%s3 + $0x30] sm:$0xf]
  %v314 = vld [vmem:[%s3 + $0x34] sm:$0xf]
  %v315 = vld [vmem:[%s3 + $0x38] sm:$0xf]
  %v316 = vld [vmem:[%s3 + $0x3c] sm:$0xf]
  %v317 = vld [vmem:[%s3 + $0x40] sm:$0xf]
  %v318 = vld [vmem:[%s3 + $0x44] sm:$0xf]
  %v319 = vld [vmem:[%s3 + $0x48] sm:$0xf]
  %v320 = vld [vmem:[%s3 + $0x4c] sm:$0xf]
  %v321 = vld [vmem:[%s3 + $0x50] sm:$0xf]
  %v322 = vld [vmem:[%s3 + $0x54] sm:$0xf]
  %v323 = vld [vmem:[%s3 + $0x58] sm:$0xf]
  %v324 = vld [vmem:[%s3 + $0x5c] sm:$0xf]
  %v325 = vld [vmem:[%s3 + $0x60] sm:$0xf]
  %v326 = vld [vmem:[%s3 + $0x64] sm:$0xf]
  %v327 = vld [vmem:[%s3 + $0x68] sm:$0xf]
  %v328 = vld [vmem:[%s3 + $0x6c] sm:$0xf]
  %v329 = vld [vmem:[%s3 + $0x70] sm:$0xf]
  %v330 = vld [vmem:[%s3 + $0x74] sm:$0xf]
  %v331 = vld [vmem:[%s3 + $0x78] sm:$0xf]
  %v332 = vld [vmem:[%s3 + $0x7c] sm:$0xf]
  %v333 = vld [vmem:[%s3 + $0x80] sm:$0xf]
  %v334 = vld [vmem:[%s3 + $0x84] sm:$0xf]
  %v335 = vld [vmem:[%s3 + $0x88] sm:$0xf]
  %v336 = vld [vmem:[%s3 + $0x8c] sm:$0xf]
  %v337 = vld [vmem:[%s3 + $0x90] sm:$0xf]
  %v338 = vld [vmem:[%s3 + $0x94] sm:$0xf]
  %v339 = vld [vmem:[%s3 + $0x98] sm:$0xf]
  %v340 = vld [vmem:[%s3 + $0x9c] sm:$0xf]
  %v341 = vld [vmem:[%s3 + $0xa0] sm:$0xf]
  %v342 = vld [vmem:[%s3 + $0xa4] sm:$0xf]
  %v343 = vld [vmem:[%s3 + $0xa8] sm:$0xf]
  %v344 = vld [vmem:[%s3 + $0xac] sm:$0xf]
  %v345 = vld [vmem:[%s3 + $0xb0] sm:$0xf]
  %v346 = vld [vmem:[%s3 + $0xb4] sm:$0xf]
  %v347 = vld [vmem:[%s3 + $0xb8] sm:$0xf]
  %v348 = vld [vmem:[%s3 + $0xbc] sm:$0xf]
  %v349 = vld [vmem:[%s3 + $0xc0] sm:$0xf]
  %v350 = vld [vmem:[%s3 + $0xc4] sm:$0xf]
  %v351 = vld [vmem:[%s3 + $0xc8] sm:$0xf]
  %v352 = vld [vmem:[%s3 + $0xcc] sm:$0xf]
  %v353 = vld [vmem:[%s3 + $0xd0] sm:$0xf]
  %v354 = vld [vmem:[%s3 + $0xd4] sm:$0xf]
  %v355 = vld [vmem:[%s3 + $0xd8] sm:$0xf]
  %v356 = vld [vmem:[%s3 + $0xdc] sm:$0xf]
  %v357 = vld [vmem:[%s3 + $0xe0] sm:$0xf]
  %v358 = vld [vmem:[%s3 + $0xe4] sm:$0xf]
  %v359 = vld [vmem:[%s3 + $0xe8] sm:$0xf]
  %v360 = vld [vmem:[%s3 + $0xec] sm:$0xf]
  %v361 = vld [vmem:[%s3 + $0xf0] sm:$0xf]
  %v362 = vld [vmem:[%s3 + $0xf4] sm:$0xf]
  %v363 = vld [vmem:[%s3 + $0xf8] sm:$0xf]
  %v364 = vld [vmem:[%s3 + $0xfc] sm:$0xf]
  %v365 = vunpack.c.l.bf16 %v301
  %v366 = vunpack.c.l.bf16 %v302
  %v367 = vunpack.c.l.bf16 %v303
  %v368 = vunpack.c.l.bf16 %v304
  %v369 = vunpack.c.l.bf16 %v305
  %v370 = vunpack.c.l.bf16 %v306
  %v371 = vunpack.c.l.bf16 %v307
  %v372 = vunpack.c.l.bf16 %v308
  %v373 = vunpack.c.l.bf16 %v309
  %v374 = vunpack.c.l.bf16 %v310
  %v375 = vunpack.c.l.bf16 %v311
  %v376 = vunpack.c.l.bf16 %v312
  %v377 = vunpack.c.l.bf16 %v313
  %v378 = vunpack.c.l.bf16 %v314
  %v379 = vunpack.c.l.bf16 %v315
  %v380 = vunpack.c.l.bf16 %v316
  %v381 = vunpack.c.l.bf16 %v317
  %v382 = vunpack.c.l.bf16 %v318
  %v383 = vunpack.c.l.bf16 %v319
  %v384 = vunpack.c.l.bf16 %v320
  %v385 = vunpack.c.l.bf16 %v321
  %v386 = vunpack.c.l.bf16 %v322
  %v387 = vunpack.c.l.bf16 %v323
  %v388 = vunpack.c.l.bf16 %v324
  %v389 = vunpack.c.l.bf16 %v325
  %v390 = vunpack.c.l.bf16 %v326
  %v391 = vunpack.c.l.bf16 %v327
  %v392 = vunpack.c.l.bf16 %v328
  %v393 = vunpack.c.l.bf16 %v329
  %v394 = vunpack.c.l.bf16 %v330
  %v395 = vunpack.c.l.bf16 %v331
  %v396 = vunpack.c.l.bf16 %v332
  %v397 = vunpack.c.l.bf16 %v333
  %v398 = vunpack.c.l.bf16 %v334
  %v399 = vunpack.c.l.bf16 %v335
  %v400 = vunpack.c.l.bf16 %v336
  %v401 = vunpack.c.l.bf16 %v337
  %v402 = vunpack.c.l.bf16 %v338
  %v403 = vunpack.c.l.bf16 %v339
  %v404 = vunpack.c.l.bf16 %v340
  %v405 = vunpack.c.l.bf16 %v341
  %v406 = vunpack.c.l.bf16 %v342
  %v407 = vunpack.c.l.bf16 %v343
  %v408 = vunpack.c.l.bf16 %v344
  %v409 = vunpack.c.l.bf16 %v345
  %v410 = vunpack.c.l.bf16 %v346
  %v411 = vunpack.c.l.bf16 %v347
  %v412 = vunpack.c.l.bf16 %v348
  %v413 = vunpack.c.l.bf16 %v349
  %v414 = vunpack.c.l.bf16 %v350
  %v415 = vunpack.c.l.bf16 %v351
  %v416 = vunpack.c.l.bf16 %v352
  %v417 = vunpack.c.l.bf16 %v353
  %v418 = vunpack.c.l.bf16 %v354
  %v419 = vunpack.c.l.bf16 %v355
  %v420 = vunpack.c.l.bf16 %v356
  %v421 = vunpack.c.l.bf16 %v357
  %v422 = vunpack.c.l.bf16 %v358
  %v423 = vunpack.c.l.bf16 %v359
  %v424 = vunpack.c.l.bf16 %v360
  %v425 = vunpack.c.l.bf16 %v361
  %v426 = vunpack.c.l.bf16 %v362
  %v427 = vunpack.c.l.bf16 %v363
  %v428 = vunpack.c.l.bf16 %v364
  %v429 = vadd.f32 %v237, %v365
  %v430 = vadd.f32 %v238, %v366
  %v431 = vadd.f32 %v239, %v367
  %v432 = vadd.f32 %v240, %v368
  %v433 = vadd.f32 %v241, %v369
  %v434 = vadd.f32 %v242, %v370
  %v435 = vadd.f32 %v243, %v371
  %v436 = vadd.f32 %v244, %v372
  %v437 = vadd.f32 %v245, %v373
  %v438 = vadd.f32 %v246, %v374
  %v439 = vadd.f32 %v247, %v375
  %v440 = vadd.f32 %v248, %v376
  %v441 = vadd.f32 %v249, %v377
  %v442 = vadd.f32 %v250, %v378
  %v443 = vadd.f32 %v251, %v379
  %v444 = vadd.f32 %v252, %v380
  %v445 = vadd.f32 %v253, %v381
  %v446 = vadd.f32 %v254, %v382
  %v447 = vadd.f32 %v255, %v383
  %v448 = vadd.f32 %v256, %v384
  %v449 = vadd.f32 %v257, %v385
  %v450 = vadd.f32 %v258, %v386
  %v451 = vadd.f32 %v259, %v387
  %v452 = vadd.f32 %v260, %v388
  %v453 = vadd.f32 %v261, %v389
  %v454 = vadd.f32 %v262, %v390
  %v455 = vadd.f32 %v263, %v391
  %v456 = vadd.f32 %v264, %v392
  %v457 = vadd.f32 %v265, %v393
  %v458 = vadd.f32 %v266, %v394
  %v459 = vadd.f32 %v267, %v395
  %v460 = vadd.f32 %v268, %v396
  %v461 = vadd.f32 %v269, %v397
  %v462 = vadd.f32 %v270, %v398
  %v463 = vadd.f32 %v271, %v399
  %v464 = vadd.f32 %v272, %v400
  %v465 = vadd.f32 %v273, %v401
  %v466 = vadd.f32 %v274, %v402
  %v467 = vadd.f32 %v275, %v403
  %v468 = vadd.f32 %v276, %v404
  %v469 = vadd.f32 %v277, %v405
  %v470 = vadd.f32 %v278, %v406
  %v471 = vadd.f32 %v279, %v407
  %v472 = vadd.f32 %v280, %v408
  %v473 = vadd.f32 %v281, %v409
  %v474 = vadd.f32 %v282, %v410
  %v475 = vadd.f32 %v283, %v411
  %v476 = vadd.f32 %v284, %v412
  %v477 = vadd.f32 %v285, %v413
  %v478 = vadd.f32 %v286, %v414
  %v479 = vadd.f32 %v287, %v415
  %v480 = vadd.f32 %v288, %v416
  %v481 = vadd.f32 %v289, %v417
  %v482 = vadd.f32 %v290, %v418
  %v483 = vadd.f32 %v291, %v419
  %v484 = vadd.f32 %v292, %v420
  %v485 = vadd.f32 %v293, %v421
  %v486 = vadd.f32 %v294, %v422
  %v487 = vadd.f32 %v295, %v423
  %v488 = vadd.f32 %v296, %v424
  %v489 = vadd.f32 %v297, %v425
  %v490 = vadd.f32 %v298, %v426
  %v491 = vadd.f32 %v299, %v427
  %v492 = vadd.f32 %v300, %v428
  %v493 = vmax.f32 %v429, 0.0
  %v494 = vmax.f32 %v430, 0.0
  %v495 = vmax.f32 %v431, 0.0
  %v496 = vmax.f32 %v432, 0.0
  %v497 = vmax.f32 %v433, 0.0
  %v498 = vmax.f32 %v434, 0.0
  %v499 = vmax.f32 %v435, 0.0
  %v500 = vmax.f32 %v436, 0.0
  %v501 = vmax.f32 %v437, 0.0
  %v502 = vmax.f32 %v438, 0.0
  %v503 = vmax.f32 %v439, 0.0
  %v504 = vmax.f32 %v440, 0.0
  %v505 = vmax.f32 %v441, 0.0
  %v506 = vmax.f32 %v442, 0.0
  %v507 = vmax.f32 %v443, 0.0
  %v508 = vmax.f32 %v444, 0.0
  %v509 = vmax.f32 %v445, 0.0
  %v510 = vmax.f32 %v446, 0.0
  %v511 = vmax.f32 %v447, 0.0
  %v512 = vmax.f32 %v448, 0.0
  %v513 = vmax.f32 %v449, 0.0
  %v514 = vmax.f32 %v450, 0.0
  %v515 = vmax.f32 %v451, 0.0
  %v516 = vmax.f32 %v452, 0.0
  %v517 = vmax.f32 %v453, 0.0
  %v518 = vmax.f32 %v454, 0.0
  %v519 = vmax.f32 %v455, 0.0
  %v520 = vmax.f32 %v456, 0.0
  %v521 = vmax.f32 %v457, 0.0
  %v522 = vmax.f32 %v458, 0.0
  %v523 = vmax.f32 %v459, 0.0
  %v524 = vmax.f32 %v460, 0.0
  %v525 = vmax.f32 %v461, 0.0
  %v526 = vmax.f32 %v462, 0.0
  %v527 = vmax.f32 %v463, 0.0
  %v528 = vmax.f32 %v464, 0.0
  %v529 = vmax.f32 %v465, 0.0
  %v530 = vmax.f32 %v466, 0.0
  %v531 = vmax.f32 %v467, 0.0
  %v532 = vmax.f32 %v468, 0.0
  %v533 = vmax.f32 %v469, 0.0
  %v534 = vmax.f32 %v470, 0.0
  %v535 = vmax.f32 %v471, 0.0
  %v536 = vmax.f32 %v472, 0.0
  %v537 = vmax.f32 %v473, 0.0
  %v538 = vmax.f32 %v474, 0.0
  %v539 = vmax.f32 %v475, 0.0
  %v540 = vmax.f32 %v476, 0.0
  %v541 = vmax.f32 %v477, 0.0
  %v542 = vmax.f32 %v478, 0.0
  %v543 = vmax.f32 %v479, 0.0
  %v544 = vmax.f32 %v480, 0.0
  %v545 = vmax.f32 %v481, 0.0
  %v546 = vmax.f32 %v482, 0.0
  %v547 = vmax.f32 %v483, 0.0
  %v548 = vmax.f32 %v484, 0.0
  %v549 = vmax.f32 %v485, 0.0
  %v550 = vmax.f32 %v486, 0.0
  %v551 = vmax.f32 %v487, 0.0
  %v552 = vmax.f32 %v488, 0.0
  %v553 = vmax.f32 %v489, 0.0
  %v554 = vmax.f32 %v490, 0.0
  %v555 = vmax.f32 %v491, 0.0
  %v556 = vmax.f32 %v492, 0.0
  %557 = vst [vmem:[%s4] sm:$0xff] %v493
  %558 = vst [vmem:[%s4 + $0x8] sm:$0xff] %v494
  %559 = vst [vmem:[%s4 + $0x10] sm:$0xff] %v495
  %560 = vst [vmem:[%s4 + $0x18] sm:$0xff] %v496
  %561 = vst [vmem:[%s4 + $0x20] sm:$0xff] %v497
  %562 = vst [vmem:[%s4 + $0x28] sm:$0xff] %v498
  %563 = vst [vmem:[%s4 + $0x30] sm:$0xff] %v499
  %564 = vst [vmem:[%s4 + $0x38] sm:$0xff] %v500
  %565 = vst [vmem:[%s4 + $0x40] sm:$0xff] %v501
  %566 = vst [vmem:[%s4 + $0x48] sm:$0xff] %v502
  %567 = vst [vmem:[%s4 + $0x50] sm:$0xff] %v503
  %568 = vst [vmem:[%s4 + $0x58] sm:$0xff] %v504
  %569 = vst [vmem:[%s4 + $0x60] sm:$0xff] %v505
  %570 = vst [vmem:[%s4 + $0x68] sm:$0xff] %v506
  %571 = vst [vmem:[%s4 + $0x70] sm:$0xff] %v507
  %572 = vst [vmem:[%s4 + $0x78] sm:$0xff] %v508
  %573 = vst [vmem:[%s4 + $0x80] sm:$0xff] %v509
  %574 = vst [vmem:[%s4 + $0x88] sm:$0xff] %v510
  %575 = vst [vmem:[%s4 + $0x90] sm:$0xff] %v511
  %576 = vst [vmem:[%s4 + $0x98] sm:$0xff] %v512
  %577 = vst [vmem:[%s4 + $0xa0] sm:$0xff] %v513
  %578 = vst [vmem:[%s4 + $0xa8] sm:$0xff] %v514
  %579 = vst [vmem:[%s4 + $0xb0] sm:$0xff] %v515
  %580 = vst [vmem:[%s4 + $0xb8] sm:$0xff] %v516
  %581 = vst [vmem:[%s4 + $0xc0] sm:$0xff] %v517
  %582 = vst [vmem:[%s4 + $0xc8] sm:$0xff] %v518
  %583 = vst [vmem:[%s4 + $0xd0] sm:$0xff] %v519
  %584 = vst [vmem:[%s4 + $0xd8] sm:$0xff] %v520
  %585 = vst [vmem:[%s4 + $0xe0] sm:$0xff] %v521
  %586 = vst [vmem:[%s4 + $0xe8] sm:$0xff] %v522
  %587 = vst [vmem:[%s4 + $0xf0] sm:$0xff] %v523
  %588 = vst [vmem:[%s4 + $0xf8] sm:$0xff] %v524
  %589 = vst [vmem:[%s4 + $0x100] sm:$0xff] %v525
  %590 = vst [vmem:[%s4 + $0x108] sm:$0xff] %v526
  %591 = vst [vmem:[%s4 + $0x110] sm:$0xff] %v527
  %592 = vst [vmem:[%s4 + $0x118] sm:$0xff] %v528
  %593 = vst [vmem:[%s4 + $0x120] sm:$0xff] %v529
  %594 = vst [vmem:[%s4 + $0x128] sm:$0xff] %v530
  %595 = vst [vmem:[%s4 + $0x130] sm:$0xff] %v531
  %596 = vst [vmem:[%s4 + $0x138] sm:$0xff] %v532
  %597 = vst [vmem:[%s4 + $0x140] sm:$0xff] %v533
  %598 = vst [vmem:[%s4 + $0x148] sm:$0xff] %v534
  %599 = vst [vmem:[%s4 + $0x150] sm:$0xff] %v535
  %600 = vst [vmem:[%s4 + $0x158] sm:$0xff] %v536
  %601 = vst [vmem:[%s4 + $0x160] sm:$0xff] %v537
  %602 = vst [vmem:[%s4 + $0x168] sm:$0xff] %v538
  %603 = vst [vmem:[%s4 + $0x170] sm:$0xff] %v539
  %604 = vst [vmem:[%s4 + $0x178] sm:$0xff] %v540
  %605 = vst [vmem:[%s4 + $0x180] sm:$0xff] %v541
  %606 = vst [vmem:[%s4 + $0x188] sm:$0xff] %v542
  %607 = vst [vmem:[%s4 + $0x190] sm:$0xff] %v543
  %608 = vst [vmem:[%s4 + $0x198] sm:$0xff] %v544
  %609 = vst [vmem:[%s4 + $0x1a0] sm:$0xff] %v545
  %610 = vst [vmem:[%s4 + $0x1a8] sm:$0xff] %v546
  %611 = vst [vmem:[%s4 + $0x1b0] sm:$0xff] %v547
  %612 = vst [vmem:[%s4 + $0x1b8] sm:$0xff] %v548
  %613 = vst [vmem:[%s4 + $0x1c0] sm:$0xff] %v549
  %614 = vst [vmem:[%s4 + $0x1c8] sm:$0xff] %v550
  %615 = vst [vmem:[%s4 + $0x1d0] sm:$0xff] %v551
  %616 = vst [vmem:[%s4 + $0x1d8] sm:$0xff] %v552
  %617 = vst [vmem:[%s4 + $0x1e0] sm:$0xff] %v553
  %618 = vst [vmem:[%s4 + $0x1e8] sm:$0xff] %v554
  %619 = vst [vmem:[%s4 + $0x1f0] sm:$0xff] %v555
  %620 = vst [vmem:[%s4 + $0x1f8] sm:$0xff] %v556
  // Predicated region
  $region18: #{bottleneck_forward.7} parent=0 // pred_check
    _
  $region19: #{bottleneck_forward.7} parent=0 // pred_check_branch
    %622 = sbr.rel (0) target = $region21
  $region20: #{bottleneck_forward.7} parent=0 // pred_region
    _
  $region21: #{bottleneck_forward.7} parent=0 // pred_fallthru
    _
  // Predicated region
  $region22: #{bottleneck_forward.7} parent=0 // pred_check
    _
  $region23: #{bottleneck_forward.7} parent=0 // pred_check_branch
    %624 = sbr.rel (0) target = $region25
  $region24: #{bottleneck_forward.7} parent=0 // pred_region
    _
  $region25: #{bottleneck_forward.7} parent=0 // pred_fallthru
    _

// kernel: bottleneck_forward.5
$region0: #{bottleneck_forward.5}
  #allocation0 [shape = 'u32[]', space=smem, size = 0x4, offset = 0x4, fixed_abs, tag = 'smem constant byte address 0x4 - core index']
  #allocation1 [shape = 'u32[144,128]{1,0:T(1,128)}', space=vmem, size = 0x12000, scoped, tag = 'internal scratch']
  #allocation2 [shape = 'bf16[288,128]{1,0:T(16,128)(2,1)}', space=vmem, size = 0x12000, scoped, tag = 'scratch operand']
  #allocation3 [shape = 'bf16[288,128]{1,0:T(16,128)(2,1)}', space=vmem, size = 0x12000, scoped, tag = 'scratch operand']
  #allocation4 [shape = 'bf16[288,128]{1,0:T(16,128)(2,1)}', space=vmem, size = 0x12000, scoped, tag = 'scratch operand']
  %s0 = inlined_call_operand.vmem [shape: bf16[2,256,128], index: 0, kind: input, shape index: {}]
  %s1 = inlined_call_operand.vmem [shape: f32[1,2,128], index: 1, kind: input, shape index: {}]
  %s2 = inlined_call_operand.vmem [shape: f32[2,128], index: 2, kind: input, shape index: {}]
  %s3 = inlined_call_operand.vmem [shape: bf16[9,128,128], index: 3, kind: input, shape index: {}]
  %s4 = inlined_call_operand.vmem [shape: bf16[2,256,128], index: 4, kind: output, shape index: {0}]
  %s5 = inlined_call_operand.vmem [shape: f32[2,2,128], index: 5, kind: output, shape index: {1}]
  %6 = xla_tuple %s4, %s5
  %s7 = sld [smem:[#allocation0]]
  $region57: #{bottleneck_forward.5} parent=0
    _
  %s9 = ssub.s32 1, %s7
  %s10 = scalar_select 0, %s9, %s7
  loop: start=0, step=1, limit=4
  $region2: #{bottleneck_forward.5} parent=0 // loop_pre_header
    _
  $region3: #{bottleneck_forward.5} parent=0 // loop_header
    %s12 = sphi 0, %s16
    %p13 = scmp.ge.s32.totalorder %s12, 4
    %s22 = sphi 0, %s24
    %s25 = sphi 0, %s22
    %s26 = sphi 0, %s25
    %s42 = sphi 0, %s26
    %s46 = sphi 0, %s46
    %s48 = sphi 0, %s46
    %s49 = sphi 0, %s48
    %s63 = sphi 0, %s49
    %s67 = sphi 0, %s67
    %s69 = sphi 0, %s67
    %s70 = sphi 0, %s69
    %s84 = sphi 0, %s70
    %s88 = sphi 0, %s88
    %s90 = sphi 0, %s88
    %s91 = sphi 0, %s90
    %s105 = sphi 0, %s91
    %s111 = sphi 0, %s113
    %s114 = sphi 0, %s111
    %s115 = sphi 0, %s114
    %s131 = sphi 0, %s115
    %s137 = sphi 0, %s139
    %s140 = sphi 0, %s137
    %s141 = sphi 0, %s140
    %s157 = sphi 0, %s141
  $region4: #{bottleneck_forward.5} parent=0 // loop_header_branch
    %15 = sbr.rel (%p13) target = $region8
  $region5: #{bottleneck_forward.5} parent=0 // loop_body
    %s17 = ssub.s32 %s12, 1
    %s18 = ssub.s32 %s12, 2
    %s19 = sadd.s32 %s12, 1
    %s20 = ssub.s32 %s12, %s19
    %p21 = scmp.eq.s32.totalorder %s20, 0
    %s23 = sadd.s32 %s22, 1
    %s24 = scalar_select %p21, %s22, %s23
    %p27 = pneg %p21
    %p28 = scmp.eq.s32.totalorder %s12, 1
    %p29 = por %p27, %p28
    %p30 = scmp.ne.s32.totalorder %s22, %s25
    %p31 = scmp.eq.s32.totalorder %s12, 0
    %p32 = por %p30, %p31
    %p33 = scmp.ne.s32.totalorder %s22, %s25
    %p34 = scmp.eq.s32.totalorder %s17, 1
    %p35 = por %p33, %p34
    %p36 = scmp.ne.s32.totalorder %s25, %s26
    %p37 = scmp.eq.s32.totalorder %s17, 0
    %p38 = por %p36, %p37
    %p39 = scmp.ne.s32.totalorder %s25, %s26
    %p40 = scmp.eq.s32.totalorder %s18, 1
    %p41 = por %p39, %p40
    %p43 = scmp.ne.s32.totalorder %s26, %s42
    %p44 = scmp.eq.s32.totalorder %s18, 0
    %p45 = por %p43, %p44
    %s47 = sadd.s32 %s46, 1
    %p50 = scmp.eq.s32.totalorder %s12, 1
    %p51 = scmp.ne.s32.totalorder %s46, %s48
    %p52 = scmp.eq.s32.totalorder %s12, 0
    %p53 = por %p51, %p52
    %p54 = scmp.ne.s32.totalorder %s46, %s48
    %p55 = scmp.eq.s32.totalorder %s17, 1
    %p56 = por %p54, %p55
    %p57 = scmp.ne.s32.totalorder %s48, %s49
    %p58 = scmp.eq.s32.totalorder %s17, 0
    %p59 = por %p57, %p58
    %p60 = scmp.ne.s32.totalorder %s48, %s49
    %p61 = scmp.eq.s32.totalorder %s18, 1
    %p62 = por %p60, %p61
    %p64 = scmp.ne.s32.totalorder %s49, %s63
    %p65 = scmp.eq.s32.totalorder %s18, 0
    %p66 = por %p64, %p65
    %s68 = sadd.s32 %s67, 1
    %p71 = scmp.eq.s32.totalorder %s12, 1
    %p72 = scmp.ne.s32.totalorder %s67, %s69
    %p73 = scmp.eq.s32.totalorder %s12, 0
    %p74 = por %p72, %p73
    %p75 = scmp.ne.s32.totalorder %s67, %s69
    %p76 = scmp.eq.s32.totalorder %s17, 1
    %p77 = por %p75, %p76
    %p78 = scmp.ne.s32.totalorder %s69, %s70
    %p79 = scmp.eq.s32.totalorder %s17, 0
    %p80 = por %p78, %p79
    %p81 = scmp.ne.s32.totalorder %s69, %s70
    %p82 = scmp.eq.s32.totalorder %s18, 1
    %p83 = por %p81, %p82
    %p85 = scmp.ne.s32.totalorder %s70, %s84
    %p86 = scmp.eq.s32.totalorder %s18, 0
    %p87 = por %p85, %p86
    %s89 = sadd.s32 %s88, 1
    %p92 = scmp.eq.s32.totalorder %s12, 1
    %p93 = scmp.ne.s32.totalorder %s88, %s90
    %p94 = scmp.eq.s32.totalorder %s12, 0
    %p95 = por %p93, %p94
    %p96 = scmp.ne.s32.totalorder %s88, %s90
    %p97 = scmp.eq.s32.totalorder %s17, 1
    %p98 = por %p96, %p97
    %p99 = scmp.ne.s32.totalorder %s90, %s91
    %p100 = scmp.eq.s32.totalorder %s17, 0
    %p101 = por %p99, %p100
    %p102 = scmp.ne.s32.totalorder %s90, %s91
    %p103 = scmp.eq.s32.totalorder %s18, 1
    %p104 = por %p102, %p103
    %p106 = scmp.ne.s32.totalorder %s91, %s105
    %p107 = scmp.eq.s32.totalorder %s18, 0
    %p108 = por %p106, %p107
    %s109 = ssub.s32 %s12, %s19
    %p110 = scmp.eq.s32.totalorder %s109, 0
    %s112 = sadd.s32 %s111, 1
    %s113 = scalar_select %p110, %s111, %s112
    %p116 = pneg %p110
    %p117 = scmp.eq.s32.totalorder %s12, 1
    %p118 = por %p116, %p117
    %p119 = scmp.ne.s32.totalorder %s111, %s114
    %p120 = scmp.eq.s32.totalorder %s12, 0
    %p121 = por %p119, %p120
    %p122 = scmp.ne.s32.totalorder %s111, %s114
    %p123 = scmp.eq.s32.totalorder %s17, 1
    %p124 = por %p122, %p123
    %p125 = scmp.ne.s32.totalorder %s114, %s115
    %p126 = scmp.eq.s32.totalorder %s17, 0
    %p127 = por %p125, %p126
    %p128 = scmp.ne.s32.totalorder %s114, %s115
    %p129 = scmp.eq.s32.totalorder %s18, 1
    %p130 = por %p128, %p129
    %p132 = scmp.ne.s32.totalorder %s115, %s131
    %p133 = scmp.eq.s32.totalorder %s18, 0
    %p134 = por %p132, %p133
    %s135 = ssub.s32 %s12, %s19
    %p136 = scmp.eq.s32.totalorder %s135, 0
    %s138 = sadd.s32 %s137, 1
    %s139 = scalar_select %p136, %s137, %s138
    %p142 = pneg %p136
    %p143 = scmp.eq.s32.totalorder %s12, 1
    %p144 = por %p142, %p143
    %p145 = scmp.ne.s32.totalorder %s137, %s140
    %p146 = scmp.eq.s32.totalorder %s12, 0
    %p147 = por %p145, %p146
    %p148 = scmp.ne.s32.totalorder %s137, %s140
    %p149 = scmp.eq.s32.totalorder %s17, 1
    %p150 = por %p148, %p149
    %p151 = scmp.ne.s32.totalorder %s140, %s141
    %p152 = scmp.eq.s32.totalorder %s17, 0
    %p153 = por %p151, %p152
    %p154 = scmp.ne.s32.totalorder %s140, %s141
    %p155 = scmp.eq.s32.totalorder %s18, 1
    %p156 = por %p154, %p155
    %p158 = scmp.ne.s32.totalorder %s141, %s157
    %p159 = scmp.eq.s32.totalorder %s18, 0
    %p160 = por %p158, %p159
    %p161 = scmp.le.s32.totalorder 1, %s12
    %p162 = scmp.lt.s32.totalorder %s12, 3
    %p163 = pnand %p161, %p162
    %p164 = pneg %p163
    // Predicated region
    $region9: #{bottleneck_forward.5} parent=5 // pred_check
      _
    $region10: #{bottleneck_forward.5} parent=5 // pred_check_branch
      %166 = sbr.rel (%p163) target = $region12
    $region11: #{bottleneck_forward.5} parent=5 // pred_region
      %s167 = ssub.s32 %s12, 1
      // Predicated region
      $region13: #{bottleneck_forward.5} parent=11 // pred_check
        %p168 = pneg %p59
      $region14: #{bottleneck_forward.5} parent=11 // pred_check_branch
        %170 = sbr.rel (%p168) target = $region16
      $region15: #{bottleneck_forward.5} parent=11 // pred_region
        _
      $region16: #{bottleneck_forward.5} parent=11 // pred_fallthru
        _
      // Predicated region
      $region17: #{bottleneck_forward.5} parent=11 // pred_check
        %p171 = pneg %p80
      $region18: #{bottleneck_forward.5} parent=11 // pred_check_branch
        %173 = sbr.rel (%p171) target = $region20
      $region19: #{bottleneck_forward.5} parent=11 // pred_region
        _
      $region20: #{bottleneck_forward.5} parent=11 // pred_fallthru
        _
      // Predicated region
      $region21: #{bottleneck_forward.5} parent=11 // pred_check
        %p174 = pneg %p101
      $region22: #{bottleneck_forward.5} parent=11 // pred_check_branch
        %176 = sbr.rel (%p174) target = $region24
      $region23: #{bottleneck_forward.5} parent=11 // pred_region
        _
      $region24: #{bottleneck_forward.5} parent=11 // pred_fallthru
        _
    $region12: #{bottleneck_forward.5} parent=5 // pred_fallthru
      _
    %p177 = scmp.lt.s32.totalorder %s12, 2
    // Predicated region
    $region25: #{bottleneck_forward.5} parent=5 // pred_check
      %p178 = pneg %p177
    $region26: #{bottleneck_forward.5} parent=5 // pred_check_branch
      %180 = sbr.rel (%p178) target = $region28
    $region27: #{bottleneck_forward.5} parent=5 // pred_region
      // Predicated region
      $region29: #{bottleneck_forward.5} parent=27 // pred_check
        %p181 = pneg %p32
      $region30: #{bottleneck_forward.5} parent=27 // pred_check_branch
        %183 = sbr.rel (%p181) target = $region32
      $region31: #{bottleneck_forward.5} parent=27 // pred_region
        %p184 = scmp.lt.s32.totalorder %s12, 1
        %s185 = scalar_select %p184, %s12, 1
        %s186 = smul.addr %s185, 32
        %s187 = smul.addr %s186, 4
        %s188 = scalar_lea.vmem %s0, %s187
      $region32: #{bottleneck_forward.5} parent=27 // pred_fallthru
        _
    $region28: #{bottleneck_forward.5} parent=5 // pred_fallthru
      _
    %p189 = scmp.le.s32.totalorder 1, %s12
    %p190 = scmp.lt.s32.totalorder %s12, 3
    %p191 = pnand %p189, %p190
    %p192 = pneg %p191
    // Predicated region
    $region33: #{bottleneck_forward.5} parent=5 // pred_check
      _
    $region34: #{bottleneck_forward.5} parent=5 // pred_check_branch
      %194 = sbr.rel (%p191) target = $region36
    $region35: #{bottleneck_forward.5} parent=5 // pred_region
      %s195 = ssub.s32 %s12, 1
      %p196 = scmp.lt.s32.totalorder %s17, 1
      %s197 = scalar_select %p196, %s17, 1
      %s198 = smul.addr %s197, 32
      %s199 = smul.addr %s198, 4
      %s200 = scalar_lea.vmem %s0, %s199
      %p201 = pneg %p38
      %p202 = pneg %p35
      %p203 = pneg %p59
      %p204 = pneg %p56
      %p205 = pneg %p80
      %p206 = pneg %p77
      %p207 = pneg %p101
      %p208 = pneg %p98
      %p209 = pneg %p127
      %p210 = pneg %p124
      %p211 = scmp.lt.s32.totalorder %s17, 1
      %s212 = scalar_select %p211, %s17, 1
      %s213 = smul.addr %s212, 32
      %s214 = smul.addr %s213, 4
      %s215 = scalar_lea.vmem %s4, %s214
      %p216 = pneg %p153
      %p217 = pneg %p150
      %p218 = scmp.lt.s32.totalorder %s17, 1
      %s219 = scalar_select %p218, %s17, 1
      %s220 = smul.addr %s219, 2
      %s221 = scalar_lea.vmem %s5, %s220
      %p222 = scmp.lt.s32.totalorder %s17, 1
      %s223 = scalar_select %p222, %s17, 1
      %s224 = smul.addr %s223, 32
      %s225 = smul.addr %s224, 4
      %s226 = scalar_lea.vmem %s0, %s225
      %p227 = scmp.lt.s32.totalorder %s17, 1
      %s228 = scalar_select %p227, %s17, 1
      %s229 = smul.addr %s228, 32
      %s230 = smul.addr %s229, 4
      %s231 = scalar_lea.vmem %s4, %s230
      %p232 = scmp.lt.s32.totalorder %s17, 1
      %s233 = scalar_select %p232, %s17, 1
      %s234 = smul.addr %s233, 2
      %s235 = scalar_lea.vmem %s5, %s234
      %v239 = vld [vmem:[%s1] sm:$0x3]
      %v240 = vld [vmem:[%s2] sm:$0x3]
      %v241 = vadd.f32 %v239, 0.0
      %v242 = vmul.f32 %v241, 0.001953125
      %v243 = vmul.f32 %v242, %v242
      %v245 = vrot.slane %v243, 7
      %v247 = vsub.f32 %v242, %v245
      %v248 = vadd.f32 %v247, 1e-05
      %v249 = vrsqrt.pop %v248
      %v251 = vrot.slane %v249, 1
      %v253 = vmul.f32 %v240, %v251
      %v254 = vmul.f32 %v242, %v253
      %v256 = vrot.slane %v254, 7
      %v258 = vsub.f32 %v240, %v256
      %v259 = vld [vmem:[%s226] sm:$0xf]
      %v260 = vld [vmem:[%s226 + $0x4] sm:$0xf]
      %v261 = vld [vmem:[%s226 + $0x8] sm:$0xf]
      %v262 = vld [vmem:[%s226 + $0xc] sm:$0xf]
      %v263 = vld [vmem:[%s226 + $0x10] sm:$0xf]
      %v264 = vld [vmem:[%s226 + $0x14] sm:$0xf]
      %v265 = vld [vmem:[%s226 + $0x18] sm:$0xf]
      %v266 = vld [vmem:[%s226 + $0x1c] sm:$0xf]
      %v267 = vld [vmem:[%s226 + $0x20] sm:$0xf]
      %v268 = vld [vmem:[%s226 + $0x24] sm:$0xf]
      %v269 = vld [vmem:[%s226 + $0x28] sm:$0xf]
      %v270 = vld [vmem:[%s226 + $0x2c] sm:$0xf]
      %v271 = vld [vmem:[%s226 + $0x30] sm:$0xf]
      %v272 = vld [vmem:[%s226 + $0x34] sm:$0xf]
      %v273 = vld [vmem:[%s226 + $0x38] sm:$0xf]
      %v274 = vld [vmem:[%s226 + $0x3c] sm:$0xf]
      %v275 = vld [vmem:[%s226 + $0x40] sm:$0xf]
      %v276 = vld [vmem:[%s226 + $0x44] sm:$0xf]
      %v277 = vld [vmem:[%s226 + $0x48] sm:$0xf]
      %v278 = vld [vmem:[%s226 + $0x4c] sm:$0xf]
      %v279 = vld [vmem:[%s226 + $0x50] sm:$0xf]
      %v280 = vld [vmem:[%s226 + $0x54] sm:$0xf]
      %v281 = vld [vmem:[%s226 + $0x58] sm:$0xf]
      %v282 = vld [vmem:[%s226 + $0x5c] sm:$0xf]
      %v283 = vld [vmem:[%s226 + $0x60] sm:$0xf]
      %v284 = vld [vmem:[%s226 + $0x64] sm:$0xf]
      %v285 = vld [vmem:[%s226 + $0x68] sm:$0xf]
      %v286 = vld [vmem:[%s226 + $0x6c] sm:$0xf]
      %v287 = vld [vmem:[%s226 + $0x70] sm:$0xf]
      %v288 = vld [vmem:[%s226 + $0x74] sm:$0xf]
      %v289 = vld [vmem:[%s226 + $0x78] sm:$0xf]
      %v290 = vld [vmem:[%s226 + $0x7c] sm:$0xf]
      %v291 = vunpack.c.l.bf16 %v259
      %v292 = vunpack.c.l.bf16 %v260
      %v293 = vunpack.c.l.bf16 %v261
      %v294 = vunpack.c.l.bf16 %v262
      %v295 = vunpack.c.l.bf16 %v263
      %v296 = vunpack.c.l.bf16 %v264
      %v297 = vunpack.c.l.bf16 %v265
      %v298 = vunpack.c.l.bf16 %v266
      %v299 = vunpack.c.l.bf16 %v267
      %v300 = vunpack.c.l.bf16 %v268
      %v301 = vunpack.c.l.bf16 %v269
      %v302 = vunpack.c.l.bf16 %v270
      %v303 = vunpack.c.l.bf16 %v271
      %v304 = vunpack.c.l.bf16 %v272
      %v305 = vunpack.c.l.bf16 %v273
      %v306 = vunpack.c.l.bf16 %v274
      %v307 = vunpack.c.l.bf16 %v275
      %v308 = vunpack.c.l.bf16 %v276
      %v309 = vunpack.c.l.bf16 %v277
      %v310 = vunpack.c.l.bf16 %v278
      %v311 = vunpack.c.l.bf16 %v279
      %v312 = vunpack.c.l.bf16 %v280
      %v313 = vunpack.c.l.bf16 %v281
      %v314 = vunpack.c.l.bf16 %v282
      %v315 = vunpack.c.l.bf16 %v283
      %v316 = vunpack.c.l.bf16 %v284
      %v317 = vunpack.c.l.bf16 %v285
      %v318 = vunpack.c.l.bf16 %v286
      %v319 = vunpack.c.l.bf16 %v287
      %v320 = vunpack.c.l.bf16 %v288
      %v321 = vunpack.c.l.bf16 %v289
      %v322 = vunpack.c.l.bf16 %v290
      %v323 = vlaneseq
      %v324 = vshrl.u32 %v323, 7
      %v325 = vsub.s32 0, %v324
      %v326 = vrot.slane %v253, %v325
      %v327 = vmul.f32 %v291, %v326
      %v328 = vmul.f32 %v292, %v326
      %v329 = vmul.f32 %v293, %v326
      %v330 = vmul.f32 %v294, %v326
      %v331 = vmul.f32 %v295, %v326
      %v332 = vmul.f32 %v296, %v326
      %v333 = vmul.f32 %v297, %v326
      %v334 = vmul.f32 %v298, %v326
      %v335 = vmul.f32 %v299, %v326
      %v336 = vmul.f32 %v300, %v326
      %v337 = vmul.f32 %v301, %v326
      %v338 = vmul.f32 %v302, %v326
      %v339 = vmul.f32 %v303, %v326
      %v340 = vmul.f32 %v304, %v326
      %v341 = vmul.f32 %v305, %v326
      %v342 = vmul.f32 %v306, %v326
      %v343 = vmul.f32 %v307, %v326
      %v344 = vmul.f32 %v308, %v326
      %v345 = vmul.f32 %v309, %v326
      %v346 = vmul.f32 %v310, %v326
      %v347 = vmul.f32 %v311, %v326
      %v348 = vmul.f32 %v312, %v326
      %v349 = vmul.f32 %v313, %v326
      %v350 = vmul.f32 %v314, %v326
      %v351 = vmul.f32 %v315, %v326
      %v352 = vmul.f32 %v316, %v326
      %v353 = vmul.f32 %v317, %v326
      %v354 = vmul.f32 %v318, %v326
      %v355 = vmul.f32 %v319, %v326
      %v356 = vmul.f32 %v320, %v326
      %v357 = vmul.f32 %v321, %v326
      %v358 = vmul.f32 %v322, %v326
      %v359 = vlaneseq
      %v360 = vshrl.u32 %v359, 7
      %v361 = vsub.s32 1, %v360
      %v362 = vrot.slane %v258, %v361
      %v363 = vadd.f32 %v327, %v362
      %v364 = vadd.f32 %v328, %v362
      %v365 = vadd.f32 %v329, %v362
      %v366 = vadd.f32 %v330, %v362
      %v367 = vadd.f32 %v331, %v362
      %v368 = vadd.f32 %v332, %v362
      %v369 = vadd.f32 %v333, %v362
      %v370 = vadd.f32 %v334, %v362
      %v371 = vadd.f32 %v335, %v362
      %v372 = vadd.f32 %v336, %v362
      %v373 = vadd.f32 %v337, %v362
      %v374 = vadd.f32 %v338, %v362
      %v375 = vadd.f32 %v339, %v362
      %v376 = vadd.f32 %v340, %v362
      %v377 = vadd.f32 %v341, %v362
      %v378 = vadd.f32 %v342, %v362
      %v379 = vadd.f32 %v343, %v362
      %v380 = vadd.f32 %v344, %v362
      %v381 = vadd.f32 %v345, %v362
      %v382 = vadd.f32 %v346, %v362
      %v383 = vadd.f32 %v347, %v362
      %v384 = vadd.f32 %v348, %v362
      %v385 = vadd.f32 %v349, %v362
      %v386 = vadd.f32 %v350, %v362
      %v387 = vadd.f32 %v351, %v362
      %v388 = vadd.f32 %v352, %v362
      %v389 = vadd.f32 %v353, %v362
      %v390 = vadd.f32 %v354, %v362
      %v391 = vadd.f32 %v355, %v362
      %v392 = vadd.f32 %v356, %v362
      %v393 = vadd.f32 %v357, %v362
      %v394 = vadd.f32 %v358, %v362
      %v395 = vmax.f32 %v363, 0.0
      %v396 = vmax.f32 %v364, 0.0
      %v397 = vmax.f32 %v365, 0.0
      %v398 = vmax.f32 %v366, 0.0
      %v399 = vmax.f32 %v367, 0.0
      %v400 = vmax.f32 %v368, 0.0
      %v401 = vmax.f32 %v369, 0.0
      %v402 = vmax.f32 %v370, 0.0
      %v403 = vmax.f32 %v371, 0.0
      %v404 = vmax.f32 %v372, 0.0
      %v405 = vmax.f32 %v373, 0.0
      %v406 = vmax.f32 %v374, 0.0
      %v407 = vmax.f32 %v375, 0.0
      %v408 = vmax.f32 %v376, 0.0
      %v409 = vmax.f32 %v377, 0.0
      %v410 = vmax.f32 %v378, 0.0
      %v411 = vmax.f32 %v379, 0.0
      %v412 = vmax.f32 %v380, 0.0
      %v413 = vmax.f32 %v381, 0.0
      %v414 = vmax.f32 %v382, 0.0
      %v415 = vmax.f32 %v383, 0.0
      %v416 = vmax.f32 %v384, 0.0
      %v417 = vmax.f32 %v385, 0.0
      %v418 = vmax.f32 %v386, 0.0
      %v419 = vmax.f32 %v387, 0.0
      %v420 = vmax.f32 %v388, 0.0
      %v421 = vmax.f32 %v389, 0.0
      %v422 = vmax.f32 %v390, 0.0
      %v423 = vmax.f32 %v391, 0.0
      %v424 = vmax.f32 %v392, 0.0
      %v425 = vmax.f32 %v393, 0.0
      %v426 = vmax.f32 %v394, 0.0
      %v427 = vpack.c.bf16 %v396, %v395
      %v428 = vpack.c.bf16 %v398, %v397
      %v429 = vpack.c.bf16 %v400, %v399
      %v430 = vpack.c.bf16 %v402, %v401
      %v431 = vpack.c.bf16 %v404, %v403
      %v432 = vpack.c.bf16 %v406, %v405
      %v433 = vpack.c.bf16 %v408, %v407
      %v434 = vpack.c.bf16 %v410, %v409
      %v435 = vpack.c.bf16 %v412, %v411
      %v436 = vpack.c.bf16 %v414, %v413
      %v437 = vpack.c.bf16 %v416, %v415
      %v438 = vpack.c.bf16 %v418, %v417
      %v439 = vpack.c.bf16 %v420, %v419
      %v440 = vpack.c.bf16 %v422, %v421
      %v441 = vpack.c.bf16 %v424, %v423
      %v442 = vpack.c.bf16 %v426, %v425
      %443 = vst [vmem:[#allocation2] sm:$0xff] 0
      %444 = vst [vmem:[#allocation2 + $0x88] sm:$0xff] 0
      %445 = vst [vmem:[#allocation3] sm:$0xff] 0
      %446 = vst [vmem:[#allocation3 + $0x88] sm:$0xff] 0
      %447 = vst [vmem:[#allocation4] sm:$0xff] 0
      %448 = vst [vmem:[#allocation4 + $0x88] sm:$0xff] 0
      %449 = vst [vmem:[#allocation3 + $0x8] sm:$0xff] %v427
      %450 = vst [vmem:[#allocation3 + $0x10] sm:$0xff] %v428
      %451 = vst [vmem:[#allocation3 + $0x18] sm:$0xff] %v429
      %452 = vst [vmem:[#allocation3 + $0x20] sm:$0xff] %v430
      %453 = vst [vmem:[#allocation3 + $0x28] sm:$0xff] %v431
      %454 = vst [vmem:[#allocation3 + $0x30] sm:$0xff] %v432
      %455 = vst [vmem:[#allocation3 + $0x38] sm:$0xff] %v433
      %456 = vst [vmem:[#allocation3 + $0x40] sm:$0xff] %v434
      %457 = vst [vmem:[#allocation3 + $0x48] sm:$0xff] %v435
      %458 = vst [vmem:[#allocation3 + $0x50] sm:$0xff] %v436
      %459 = vst [vmem:[#allocation3 + $0x58] sm:$0xff] %v437
      %460 = vst [vmem:[#allocation3 + $0x60] sm:$0xff] %v438
      %461 = vst [vmem:[#allocation3 + $0x68] sm:$0xff] %v439
      %462 = vst [vmem:[#allocation3 + $0x70] sm:$0xff] %v440
      %463 = vst [vmem:[#allocation3 + $0x78] sm:$0xff] %v441
      %464 = vst [vmem:[#allocation3 + $0x80] sm:$0xff] %v442
      %v465 = vlaneseq
      %v466 = vshrl.u32 %v465, 7
      %v467 = vadd.s32 %v466, 8
      %v468 = vadd.s32 %v466, 16
      %v469 = vadd.s32 %v466, 24
      %v470 = vadd.s32 %v466, 32
      %v471 = vadd.s32 %v466, 40
      %v472 = vadd.s32 %v466, 48
      %v473 = vadd.s32 %v466, 56
      %v474 = vadd.s32 %v466, 64
      %v475 = vadd.s32 %v466, 72
      %v476 = vadd.s32 %v466, 80
      %v477 = vadd.s32 %v466, 88
      %v478 = vadd.s32 %v466, 96
      %v479 = vadd.s32 %v466, 104
      %v480 = vadd.s32 %v466, 112
      %v481 = vadd.s32 %v466, 120
      %v482 = vadd.s32 %v466, 128
      %v483 = vadd.s32 %v466, 136
      %v484 = vadd.s32 %v466, 144
      %v485 = vadd.s32 %v466, 152
      %v486 = vadd.s32 %v466, 160
      %v487 = vadd.s32 %v466, 168
      %v488 = vadd.s32 %v466, 176
      %v489 = vadd.s32 %v466, 184
      %v490 = vadd.s32 %v466, 192
      %v491 = vadd.s32 %v466, 200
      %v492 = vadd.s32 %v466, 208
      %v493 = vadd.s32 %v466, 216
      %v494 = vadd.s32 %v466, 224
      %v495 = vadd.s32 %v466, 232
      %v496 = vadd.s32 %v466, 240
      %v497 = vadd.s32 %v466, 248
      %vm498 = vcmp.lt.s32.totalorder %v466, 0
      %v499 = vsub.s32 0, %v466
      %v500 = vsel %vm498, %v499, %v466
      %v501 = vshrl.u32 %v500, 4
      %v502 = vand.u32 %v500, 15
      %v503 = vsub.s32 0, %v502
      %v504 = vsel %vm498, %v503, %v502
      %vm505 = vcmp.lt.s32.totalorder %v467, 0
      %v506 = vsub.s32 0, %v467
      %v507 = vsel %vm505, %v506, %v467
      %v508 = vshrl.u32 %v507, 4
      %v509 = vand.u32 %v507, 15
      %v510 = vsub.s32 0, %v509
      %v511 = vsel %vm505, %v510, %v509
      %vm512 = vcmp.lt.s32.totalorder %v468, 0
      %v513 = vsub.s32 0, %v468
      %v514 = vsel %vm512, %v513, %v468
      %v515 = vshrl.u32 %v514, 4
      %v516 = vand.u32 %v514, 15
      %v517 = vsub.s32 0, %v516
      %v518 = vsel %vm512, %v517, %v516
      %vm519 = vcmp.lt.s32.totalorder %v469, 0
      %v520 = vsub.s32 0, %v469
      %v521 = vsel %vm519, %v520, %v469
      %v522 = vshrl.u32 %v521, 4
      %v523 = vand.u32 %v521, 15
      %v524 = vsub.s32 0, %v523
      %v525 = vsel %vm519, %v524, %v523
      %vm526 = vcmp.lt.s32.totalorder %v470, 0
      %v527 = vsub.s32 0, %v470
      %v528 = vsel %vm526, %v527, %v470
      %v529 = vshrl.u32 %v528, 4
      %v530 = vand.u32 %v528, 15
      %v531 = vsub.s32 0, %v530
      %v532 = vsel %vm526, %v531, %v530
      %vm533 = vcmp.lt.s32.totalorder %v471, 0
      %v534 = vsub.s32 0, %v471
      %v535 = vsel %vm533, %v534, %v471
      %v536 = vshrl.u32 %v535, 4
      %v537 = vand.u32 %v535, 15
      %v538 = vsub.s32 0, %v537
      %v539 = vsel %vm533, %v538, %v537
      %vm540 = vcmp.lt.s32.totalorder %v472, 0
      %v541 = vsub.s32 0, %v472
      %v542 = vsel %vm540, %v541, %v472
      %v543 = vshrl.u32 %v542, 4
      %v544 = vand.u32 %v542, 15
      %v545 = vsub.s32 0, %v544
      %v546 = vsel %vm540, %v545, %v544
      %vm547 = vcmp.lt.s32.totalorder %v473, 0
      %v548 = vsub.s32 0, %v473
      %v549 = vsel %vm547, %v548, %v473
      %v550 = vshrl.u32 %v549, 4
      %v551 = vand.u32 %v549, 15
      %v552 = vsub.s32 0, %v551
      %v553 = vsel %vm547, %v552, %v551
      %vm554 = vcmp.lt.s32.totalorder %v474, 0
      %v555 = vsub.s32 0, %v474
      %v556 = vsel %vm554, %v555, %v474
      %v557 = vshrl.u32 %v556, 4
      %v558 = vand.u32 %v556, 15
      %v559 = vsub.s32 0, %v558
      %v560 = vsel %vm554, %v559, %v558
      %vm561 = vcmp.lt.s32.totalorder %v475, 0
      %v562 = vsub.s32 0, %v475
      %v563 = vsel %vm561, %v562, %v475
      %v564 = vshrl.u32 %v563, 4
      %v565 = vand.u32 %v563, 15
      %v566 = vsub.s32 0, %v565
      %v567 = vsel %vm561, %v566, %v565
      %vm568 = vcmp.lt.s32.totalorder %v476, 0
      %v569 = vsub.s32 0, %v476
      %v570 = vsel %vm568, %v569, %v476
      %v571 = vshrl.u32 %v570, 4
      %v572 = vand.u32 %v570, 15
      %v573 = vsub.s32 0, %v572
      %v574 = vsel %vm568, %v573, %v572
      %vm575 = vcmp.lt.s32.totalorder %v477, 0
      %v576 = vsub.s32 0, %v477
      %v577 = vsel %vm575, %v576, %v477
      %v578 = vshrl.u32 %v577, 4
      %v579 = vand.u32 %v577, 15
      %v580 = vsub.s32 0, %v579
      %v581 = vsel %vm575, %v580, %v579
      %vm582 = vcmp.lt.s32.totalorder %v478, 0
      %v583 = vsub.s32 0, %v478
      %v584 = vsel %vm582, %v583, %v478
      %v585 = vshrl.u32 %v584, 4
      %v586 = vand.u32 %v584, 15
      %v587 = vsub.s32 0, %v586
      %v588 = vsel %vm582, %v587, %v586
      %vm589 = vcmp.lt.s32.totalorder %v479, 0
      %v590 = vsub.s32 0, %v479
      %v591 = vsel %vm589, %v590, %v479
      %v592 = vshrl.u32 %v591, 4
      %v593 = vand.u32 %v591, 15
      %v594 = vsub.s32 0, %v593
      %v595 = vsel %vm589, %v594, %v593
      %vm596 = vcmp.lt.s32.totalorder %v480, 0
      %v597 = vsub.s32 0, %v480
      %v598 = vsel %vm596, %v597, %v480
      %v599 = vshrl.u32 %v598, 4
      %v600 = vand.u32 %v598, 15
      %v601 = vsub.s32 0, %v600
      %v602 = vsel %vm596, %v601, %v600
      %vm603 = vcmp.lt.s32.totalorder %v481, 0
      %v604 = vsub.s32 0, %v481
      %v605 = vsel %vm603, %v604, %v481
      %v606 = vshrl.u32 %v605, 4
      %v607 = vand.u32 %v605, 15
      %v608 = vsub.s32 0, %v607
      %v609 = vsel %vm603, %v608, %v607
      %vm610 = vcmp.lt.s32.totalorder %v482, 0
      %v611 = vsub.s32 0, %v482
      %v612 = vsel %vm610, %v611, %v482
      %v613 = vshrl.u32 %v612, 4
      %v614 = vand.u32 %v612, 15
      %v615 = vsub.s32 0, %v614
      %v616 = vsel %vm610, %v615, %v614
      %vm617 = vcmp.lt.s32.totalorder %v483, 0
      %v618 = vsub.s32 0, %v483
      %v619 = vsel %vm617, %v618, %v483
      %v620 = vshrl.u32 %v619, 4
      %v621 = vand.u32 %v619, 15
      %v622 = vsub.s32 0, %v621
      %v623 = vsel %vm617, %v622, %v621
      %vm624 = vcmp.lt.s32.totalorder %v484, 0
      %v625 = vsub.s32 0, %v484
      %v626 = vsel %vm624, %v625, %v484
      %v627 = vshrl.u32 %v626, 4
      %v628 = vand.u32 %v626, 15
      %v629 = vsub.s32 0, %v628
      %v630 = vsel %vm624, %v629, %v628
      %vm631 = vcmp.lt.s32.totalorder %v485, 0
      %v632 = vsub.s32 0, %v485
      %v633 = vsel %vm631, %v632, %v485
      %v634 = vshrl.u32 %v633, 4
      %v635 = vand.u32 %v633, 15
      %v636 = vsub.s32 0, %v635
      %v637 = vsel %vm631, %v636, %v635
      %vm638 = vcmp.lt.s32.totalorder %v486, 0
      %v639 = vsub.s32 0, %v486
      %v640 = vsel %vm638, %v639, %v486
      %v641 = vshrl.u32 %v640, 4
      %v642 = vand.u32 %v640, 15
      %v643 = vsub.s32 0, %v642
      %v644 = vsel %vm638, %v643, %v642
      %vm645 = vcmp.lt.s32.totalorder %v487, 0
      %v646 = vsub.s32 0, %v487
      %v647 = vsel %vm645, %v646, %v487
      %v648 = vshrl.u32 %v647, 4
      %v649 = vand.u32 %v647, 15
      %v650 = vsub.s32 0, %v649
      %v651 = vsel %vm645, %v650, %v649
      %vm652 = vcmp.lt.s32.totalorder %v488, 0
      %v653 = vsub.s32 0, %v488
      %v654 = vsel %vm652, %v653, %v488
      %v655 = vshrl.u32 %v654, 4
      %v656 = vand.u32 %v654, 15
      %v657 = vsub.s32 0, %v656
      %v658 = vsel %vm652, %v657, %v656
      %vm659 = vcmp.lt.s32.totalorder %v489, 0
      %v660 = vsub.s32 0, %v489
      %v661 = vsel %vm659, %v660, %v489
      %v662 = vshrl.u32 %v661, 4
      %v663 = vand.u32 %v661, 15
      %v664 = vsub.s32 0, %v663
      %v665 = vsel %vm659, %v664, %v663
      %vm666 = vcmp.lt.s32.totalorder %v490, 0
      %v667 = vsub.s32 0, %v490
      %v668 = vsel %vm666, %v667, %v490
      %v669 = vshrl.u32 %v668, 4
      %v670 = vand.u32 %v668, 15
      %v671 = vsub.s32 0, %v670
      %v672 = vsel %vm666, %v671, %v670
      %vm673 = vcmp.lt.s32.totalorder %v491, 0
      %v674 = vsub.s32 0, %v491
      %v675 = vsel %vm673, %v674, %v491
      %v676 = vshrl.u32 %v675, 4
      %v677 = vand.u32 %v675, 15
      %v678 = vsub.s32 0, %v677
      %v679 = vsel %vm673, %v678, %v677
      %vm680 = vcmp.lt.s32.totalorder %v492, 0
      %v681 = vsub.s32 0, %v492
      %v682 = vsel %vm680, %v681, %v492
      %v683 = vshrl.u32 %v682, 4
      %v684 = vand.u32 %v682, 15
      %v685 = vsub.s32 0, %v684
      %v686 = vsel %vm680, %v685, %v684
      %vm687 = vcmp.lt.s32.totalorder %v493, 0
      %v688 = vsub.s32 0, %v493
      %v689 = vsel %vm687, %v688, %v493
      %v690 = vshrl.u32 %v689, 4
      %v691 = vand.u32 %v689, 15
      %v692 = vsub.s32 0, %v691
      %v693 = vsel %vm687, %v692, %v691
      %vm694 = vcmp.lt.s32.totalorder %v494, 0
      %v695 = vsub.s32 0, %v494
      %v696 = vsel %vm694, %v695, %v494
      %v697 = vshrl.u32 %v696, 4
      %v698 = vand.u32 %v696, 15
      %v699 = vsub.s32 0, %v698
      %v700 = vsel %vm694, %v699, %v698
      %vm701 = vcmp.lt.s32.totalorder %v495, 0
      %v702 = vsub.s32 0, %v495
      %v703 = vsel %vm701, %v702, %v495
      %v704 = vshrl.u32 %v703, 4
      %v705 = vand.u32 %v703, 15
      %v706 = vsub.s32 0, %v705
      %v707 = vsel %vm701, %v706, %v705
      %vm708 = vcmp.lt.s32.totalorder %v496, 0
      %v709 = vsub.s32 0, %v496
      %v710 = vsel %vm708, %v709, %v496
      %v711 = vshrl.u32 %v710, 4
      %v712 = vand.u32 %v710, 15
      %v713 = vsub.s32 0, %v712
      %v714 = vsel %vm708, %v713, %v712
      %vm715 = vcmp.lt.s32.totalorder %v497, 0
      %v716 = vsub.s32 0, %v497
      %v717 = vsel %vm715, %v716, %v497
      %v718 = vshrl.u32 %v717, 4
      %v719 = vand.u32 %v717, 15
      %v720 = vsub.s32 0, %v719
      %v721 = vsel %vm715, %v720, %v719
      %vm722 = vcmp.ne.s32.totalorder %v504, 0
      %vm723 = vcmp.ne.s32.totalorder %v511, 0
      %vm724 = vcmp.ne.s32.totalorder %v518, 0
      %vm725 = vcmp.ne.s32.totalorder %v525, 0
      %vm726 = vcmp.ne.s32.totalorder %v532, 0
      %vm727 = vcmp.ne.s32.totalorder %v539, 0
      %vm728 = vcmp.ne.s32.totalorder %v546, 0
      %vm729 = vcmp.ne.s32.totalorder %v553, 0
      %vm730 = vcmp.ne.s32.totalorder %v560, 0
      %vm731 = vcmp.ne.s32.totalorder %v567, 0
      %vm732 = vcmp.ne.s32.totalorder %v574, 0
      %vm733 = vcmp.ne.s32.totalorder %v581, 0
      %vm734 = vcmp.ne.s32.totalorder %v588, 0
      %vm735 = vcmp.ne.s32.totalorder %v595, 0
      %vm736 = vcmp.ne.s32.totalorder %v602, 0
      %vm737 = vcmp.ne.s32.totalorder %v609, 0
      %vm738 = vcmp.ne.s32.totalorder %v616, 0
      %vm739 = vcmp.ne.s32.totalorder %v623, 0
      %vm740 = vcmp.ne.s32.totalorder %v630, 0
      %vm741 = vcmp.ne.s32.totalorder %v637, 0
      %vm742 = vcmp.ne.s32.totalorder %v644, 0
      %vm743 = vcmp.ne.s32.totalorder %v651, 0
      %vm744 = vcmp.ne.s32.totalorder %v658, 0
      %vm745 = vcmp.ne.s32.totalorder %v665, 0
      %vm746 = vcmp.ne.s32.totalorder %v672, 0
      %vm747 = vcmp.ne.s32.totalorder %v679, 0
      %vm748 = vcmp.ne.s32.totalorder %v686, 0
      %vm749 = vcmp.ne.s32.totalorder %v693, 0
      %vm750 = vcmp.ne.s32.totalorder %v700, 0
      %vm751 = vcmp.ne.s32.totalorder %v707, 0
      %vm752 = vcmp.ne.s32.totalorder %v714, 0
      %vm753 = vcmp.ne.s32.totalorder %v721, 0
      %vm754 = vcmp.lt.s32.totalorder %v504, 0
      %vm755 = vcmp.lt.s32.totalorder %v511, 0
      %vm756 = vcmp.lt.s32.totalorder %v518, 0
      %vm757 = vcmp.lt.s32.totalorder %v525, 0
      %vm758 = vcmp.lt.s32.totalorder %v532, 0
      %vm759 = vcmp.lt.s32.totalorder %v539, 0
      %vm760 = vcmp.lt.s32.totalorder %v546, 0
      %vm761 = vcmp.lt.s32.totalorder %v553, 0
      %vm762 = vcmp.lt.s32.totalorder %v560, 0
      %vm763 = vcmp.lt.s32.totalorder %v567, 0
      %vm764 = vcmp.lt.s32.totalorder %v574, 0
      %vm765 = vcmp.lt.s32.totalorder %v581, 0
      %vm766 = vcmp.lt.s32.totalorder %v588, 0
      %vm767 = vcmp.lt.s32.totalorder %v595, 0
      %vm768 = vcmp.lt.s32.totalorder %v602, 0
      %vm769 = vcmp.lt.s32.totalorder %v609, 0
      %vm770 = vcmp.lt.s32.totalorder %v616, 0
      %vm771 = vcmp.lt.s32.totalorder %v623, 0
      %vm772 = vcmp.lt.s32.totalorder %v630, 0
      %vm773 = vcmp.lt.s32.totalorder %v637, 0
      %vm774 = vcmp.lt.s32.totalorder %v644, 0
      %vm775 = vcmp.lt.s32.totalorder %v651, 0
      %vm776 = vcmp.lt.s32.totalorder %v658, 0
      %vm777 = vcmp.lt.s32.totalorder %v665, 0
      %vm778 = vcmp.lt.s32.totalorder %v672, 0
      %vm779 = vcmp.lt.s32.totalorder %v679, 0
      %vm780 = vcmp.lt.s32.totalorder %v686, 0
      %vm781 = vcmp.lt.s32.totalorder %v693, 0
      %vm782 = vcmp.lt.s32.totalorder %v700, 0
      %vm783 = vcmp.lt.s32.totalorder %v707, 0
      %vm784 = vcmp.lt.s32.totalorder %v714, 0
      %vm785 = vcmp.lt.s32.totalorder %v721, 0
      %vm786 = vmand %vm754, %vm722
      %vm787 = vmand %vm755, %vm723
      %vm788 = vmand %vm756, %vm724
      %vm789 = vmand %vm757, %vm725
      %vm790 = vmand %vm758, %vm726
      %vm791 = vmand %vm759, %vm727
      %vm792 = vmand %vm760, %vm728
      %vm793 = vmand %vm761, %vm729
      %vm794 = vmand %vm762, %vm730
      %vm795 = vmand %vm763, %vm731
      %vm796 = vmand %vm764, %vm732
      %vm797 = vmand %vm765, %vm733
      %vm798 = vmand %vm766, %vm734
      %vm799 = vmand %vm767, %vm735
      %vm800 = vmand %vm768, %vm736
      %vm801 = vmand %vm769, %vm737
      %vm802 = vmand %vm770, %vm738
      %vm803 = vmand %vm771, %vm739
      %vm804 = vmand %vm772, %vm740
      %vm805 = vmand %vm773, %vm741
      %vm806 = vmand %vm774, %vm742
      %vm807 = vmand %vm775, %vm743
      %vm808 = vmand %vm776, %vm744
      %vm809 = vmand %vm777, %vm745
      %vm810 = vmand %vm778, %vm746
      %vm811 = vmand %vm779, %vm747
      %vm812 = vmand %vm780, %vm748
      %vm813 = vmand %vm781, %vm749
      %vm814 = vmand %vm782, %vm750
      %vm815 = vmand %vm783, %vm751
      %vm816 = vmand %vm784, %vm752
      %vm817 = vmand %vm785, %vm753
      %v818 = vadd.s32 %v504, 16
      %v819 = vadd.s32 %v511, 16
      %v820 = vadd.s32 %v518, 16
      %v821 = vadd.s32 %v525, 16
      %v822 = vadd.s32 %v532, 16
      %v823 = vadd.s32 %v539, 16
      %v824 = vadd.s32 %v546, 16
      %v825 = vadd.s32 %v553, 16
      %v826 = vadd.s32 %v560, 16
      %v827 = vadd.s32 %v567, 16
      %v828 = vadd.s32 %v574, 16
      %v829 = vadd.s32 %v581, 16
      %v830 = vadd.s32 %v588, 16
      %v831 = vadd.s32 %v595, 16
      %v832 = vadd.s32 %v602, 16
      %v833 = vadd.s32 %v609, 16
      %v834 = vadd.s32 %v616, 16
      %v835 = vadd.s32 %v623, 16
      %v836 = vadd.s32 %v630, 16
      %v837 = vadd.s32 %v637, 16
      %v838 = vadd.s32 %v644, 16
      %v839 = vadd.s32 %v651, 16
      %v840 = vadd.s32 %v658, 16
      %v841 = vadd.s32 %v665, 16
      %v842 = vadd.s32 %v672, 16
      %v843 = vadd.s32 %v679, 16
      %v844 = vadd.s32 %v686, 16
      %v845 = vadd.s32 %v693, 16
      %v846 = vadd.s32 %v700, 16
      %v847 = vadd.s32 %v707, 16
      %v848 = vadd.s32 %v714, 16
      %v849 = vadd.s32 %v721, 16
      %v850 = vsel %vm786, %v818, %v504
      %v851 = vsel %vm787, %v819, %v511
      %v852 = vsel %vm788, %v820, %v518
      %v853 = vsel %vm789, %v821, %v525
      %v854 = vsel %vm790, %v822, %v532
      %v855 = vsel %vm791, %v823, %v539
      %v856 = vsel %vm792, %v824, %v546
      %v857 = vsel %vm793, %v825, %v553
      %v858 = vsel %vm794, %v826, %v560
      %v859 = vsel %vm795, %v827, %v567
      %v860 = vsel %vm796, %v828, %v574
      %v861 = vsel %vm797, %v829, %v581
      %v862 = vsel %vm798, %v830, %v588
      %v863 = vsel %vm799, %v831, %v595
      %v864 = vsel %vm800, %v832, %v602
      %v865 = vsel %vm801, %v833, %v609
      %v866 = vsel %vm802, %v834, %v616
      %v867 = vsel %vm803, %v835, %v623
      %v868 = vsel %vm804, %v836, %v630
      %v869 = vsel %vm805, %v837, %v637
      %v870 = vsel %vm806, %v838, %v644
      %v871 = vsel %vm807, %v839, %v651
      %v872 = vsel %vm808, %v840, %v658
      %v873 = vsel %vm809, %v841, %v665
      %v874 = vsel %vm810, %v842, %v672
      %v875 = vsel %vm811, %v843, %v679
      %v876 = vsel %vm812, %v844, %v686
      %v877 = vsel %vm813, %v845, %v693
      %v878 = vsel %vm814, %v846, %v700
      %v879 = vsel %vm815, %v847, %v707
      %v880 = vsel %vm816, %v848, %v714
      %v881 = vsel %vm817, %v849, %v721
      %v882 = vld [vmem:[#allocation3 + $0x8] sm:$0xff]
      %v883 = vld [vmem:[#allocation3 + $0x10] sm:$0xff]
      %v884 = vld [vmem:[#allocation3 + $0x18] sm:$0xff]
      %v885 = vld [vmem:[#allocation3 + $0x20] sm:$0xff]
      %v886 = vld [vmem:[#allocation3 + $0x28] sm:$0xff]
      %v887 = vld [vmem:[#allocation3 + $0x30] sm:$0xff]
      %v888 = vld [vmem:[#allocation3 + $0x38] sm:$0xff]
      %v889 = vld [vmem:[#allocation3 + $0x40] sm:$0xff]
      %v890 = vld [vmem:[#allocation3 + $0x48] sm:$0xff]
      %v891 = vld [vmem:[#allocation3 + $0x50] sm:$0xff]
      %v892 = vld [vmem:[#allocation3 + $0x58] sm:$0xff]
      %v893 = vld [vmem:[#allocation3 + $0x60] sm:$0xff]
      %v894 = vld [vmem:[#allocation3 + $0x68] sm:$0xff]
      %v895 = vld [vmem:[#allocation3 + $0x70] sm:$0xff]
      %v896 = vld [vmem:[#allocation3 + $0x78] sm:$0xff]
      %v897 = vld [vmem:[#allocation3 + $0x80] sm:$0xff]
      %v898 = vld [vmem:[#allocation3 + $0x88] sm:$0x1]
      %vm899 = vcmp.ne.s32.totalorder %v850, 15
      %vm900 = vcmp.ne.s32.totalorder %v851, 15
      %vm901 = vcmp.ne.s32.totalorder %v852, 15
      %vm902 = vcmp.ne.s32.totalorder %v853, 15
      %vm903 = vcmp.ne.s32.totalorder %v854, 15
      %vm904 = vcmp.ne.s32.totalorder %v855, 15
      %vm905 = vcmp.ne.s32.totalorder %v856, 15
      %vm906 = vcmp.ne.s32.totalorder %v857, 15
      %vm907 = vcmp.ne.s32.totalorder %v858, 15
      %vm908 = vcmp.ne.s32.totalorder %v859, 15
      %vm909 = vcmp.ne.s32.totalorder %v860, 15
      %vm910 = vcmp.ne.s32.totalorder %v861, 15
      %vm911 = vcmp.ne.s32.totalorder %v862, 15
      %vm912 = vcmp.ne.s32.totalorder %v863, 15
      %vm913 = vcmp.ne.s32.totalorder %v864, 15
      %vm914 = vcmp.ne.s32.totalorder %v865, 15
      %vm915 = vcmp.ne.s32.totalorder %v866, 15
      %vm916 = vcmp.ne.s32.totalorder %v867, 15
      %vm917 = vcmp.ne.s32.totalorder %v868, 15
      %vm918 = vcmp.ne.s32.totalorder %v869, 15
      %vm919 = vcmp.ne.s32.totalorder %v870, 15
      %vm920 = vcmp.ne.s32.totalorder %v871, 15
      %vm921 = vcmp.ne.s32.totalorder %v872, 15
      %vm922 = vcmp.ne.s32.totalorder %v873, 15
      %vm923 = vcmp.ne.s32.totalorder %v874, 15
      %vm924 = vcmp.ne.s32.totalorder %v875, 15
      %vm925 = vcmp.ne.s32.totalorder %v876, 15
      %vm926 = vcmp.ne.s32.totalorder %v877, 15
      %vm927 = vcmp.ne.s32.totalorder %v878, 15
      %vm928 = vcmp.ne.s32.totalorder %v879, 15
      %vm929 = vcmp.ne.s32.totalorder %v880, 15
      %vm930 = vcmp.ne.s32.totalorder %v881, 15
      %vm931 = vmpackc.low %vm899, %vm899
      %vm932 = vmpackc.low %vm900, %vm900
      %vm933 = vmpackc.low %vm901, %vm901
      %vm934 = vmpackc.low %vm902, %vm902
      %vm935 = vmpackc.low %vm903, %vm903
      %vm936 = vmpackc.low %vm904, %vm904
      %vm937 = vmpackc.low %vm905, %vm905
      %vm938 = vmpackc.low %vm906, %vm906
      %vm939 = vmpackc.low %vm907, %vm907
      %vm940 = vmpackc.low %vm908, %vm908
      %vm941 = vmpackc.low %vm909, %vm909
      %vm942 = vmpackc.low %vm910, %vm910
      %vm943 = vmpackc.low %vm911, %vm911
      %vm944 = vmpackc.low %vm912, %vm912
      %vm945 = vmpackc.low %vm913, %vm913
      %vm946 = vmpackc.low %vm914, %vm914
      %vm947 = vmpackc.low %vm915, %vm915
      %vm948 = vmpackc.low %vm916, %vm916
      %vm949 = vmpackc.low %vm917, %vm917
      %vm950 = vmpackc.low %vm918, %vm918
      %vm951 = vmpackc.low %vm919, %vm919
      %vm952 = vmpackc.low %vm920, %vm920
      %vm953 = vmpackc.low %vm921, %vm921
      %vm954 = vmpackc.low %vm922, %vm922
      %vm955 = vmpackc.low %vm923, %vm923
      %vm956 = vmpackc.low %vm924, %vm924
      %vm957 = vmpackc.low %vm925, %vm925
      %vm958 = vmpackc.low %vm926, %vm926
      %vm959 = vmpackc.low %vm927, %vm927
      %vm960 = vmpackc.low %vm928, %vm928
      %vm961 = vmpackc.low %vm929, %vm929
      %vm962 = vmpackc.low %vm930, %vm930
      %v963 = vsel %vm931, 65537, 0
      %v964 = vsel %vm932, 65537, 0
      %v965 = vsel %vm933, 65537, 0
      %v966 = vsel %vm934, 65537, 0
      %v967 = vsel %vm935, 65537, 0
      %v968 = vsel %vm936, 65537, 0
      %v969 = vsel %vm937, 65537, 0
      %v970 = vsel %vm938, 65537, 0
      %v971 = vsel %vm939, 65537, 0
      %v972 = vsel %vm940, 65537, 0
      %v973 = vsel %vm941, 65537, 0
      %v974 = vsel %vm942, 65537, 0
      %v975 = vsel %vm943, 65537, 0
      %v976 = vsel %vm944, 65537, 0
      %v977 = vsel %vm945, 65537, 0
      %v978 = vsel %vm946, 65537, 0
      %v979 = vsel %vm947, 65537, 0
      %v980 = vsel %vm948, 65537, 0
      %v981 = vsel %vm949, 65537, 0
      %v982 = vsel %vm950, 65537, 0
      %v983 = vsel %vm951, 65537, 0
      %v984 = vsel %vm952, 65537, 0
      %v985 = vsel %vm953, 65537, 0
      %v986 = vsel %vm954, 65537, 0
      %v987 = vsel %vm955, 65537, 0
      %v988 = vsel %vm956, 65537, 0
      %v989 = vsel %vm957, 65537, 0
      %v990 = vsel %vm958, 65537, 0
      %v991 = vsel %vm959, 65537, 0
      %v992 = vsel %vm960, 65537, 0
      %v993 = vsel %vm961, 65537, 0
      %v994 = vsel %vm962, 65537, 0
      %v995 = vunpack.c.l.b16 %v963
      %v996 = vunpack.c.l.b16 %v964
      %v997 = vunpack.c.l.b16 %v965
      %v998 = vunpack.c.l.b16 %v966
      %v999 = vunpack.c.l.b16 %v967
      %v1000 = vunpack.c.l.b16 %v968
      %v1001 = vunpack.c.l.b16 %v969
      %v1002 = vunpack.c.l.b16 %v970
      %v1003 = vunpack.c.l.b16 %v971
      %v1004 = vunpack.c.l.b16 %v972
      %v1005 = vunpack.c.l.b16 %v973
      %v1006 = vunpack.c.l.b16 %v974
      %v1007 = vunpack.c.l.b16 %v975
      %v1008 = vunpack.c.l.b16 %v976
      %v1009 = vunpack.c.l.b16 %v977
      %v1010 = vunpack.c.l.b16 %v978
      %v1011 = vunpack.c.l.b16 %v979
      %v1012 = vunpack.c.l.b16 %v980
      %v1013 = vunpack.c.l.b16 %v981
      %v1014 = vunpack.c.l.b16 %v982
      %v1015 = vunpack.c.l.b16 %v983
      %v1016 = vunpack.c.l.b16 %v984
      %v1017 = vunpack.c.l.b16 %v985
      %v1018 = vunpack.c.l.b16 %v986
      %v1019 = vunpack.c.l.b16 %v987
      %v1020 = vunpack.c.l.b16 %v988
      %v1021 = vunpack.c.l.b16 %v989
      %v1022 = vunpack.c.l.b16 %v990
      %v1023 = vunpack.c.l.b16 %v991
      %v1024 = vunpack.c.l.b16 %v992
      %v1025 = vunpack.c.l.b16 %v993
      %v1026 = vunpack.c.l.b16 %v994
      %v1027 = vpack.c.b16 %v996, %v995
      %v1028 = vpack.c.b16 %v998, %v997
      %v1029 = vpack.c.b16 %v1000, %v999
      %v1030 = vpack.c.b16 %v1002, %v1001
      %v1031 = vpack.c.b16 %v1004, %v1003
      %v1032 = vpack.c.b16 %v1006, %v1005
      %v1033 = vpack.c.b16 %v1008, %v1007
      %v1034 = vpack.c.b16 %v1010, %v1009
      %v1035 = vpack.c.b16 %v1012, %v1011
      %v1036 = vpack.c.b16 %v1014, %v1013
      %v1037 = vpack.c.b16 %v1016, %v1015
      %v1038 = vpack.c.b16 %v1018, %v1017
      %v1039 = vpack.c.b16 %v1020, %v1019
      %v1040 = vpack.c.b16 %v1022, %v1021
      %v1041 = vpack.c.b16 %v1024, %v1023
      %v1042 = vpack.c.b16 %v1026, %v1025
      %vm1043 = vsmask.f32 256
      %v1045 = vshrl.u32 %v1027, 16
      %v1047 = vrot.slane %v1045, 7
      %v1048 = vshll.u32 %v1027, 16
      %v1050 = vor.u32 %v1047, %v1048
      %v1052 = vshrl.u32 %v1028, 16
      %v1054 = vrot.slane %v1052, 7
      %v1055 = vshll.u32 %v1028, 16
      %v1057 = vor.u32 %v1054, %v1055
      %v1058 = vsel %vm1043, %v1047, %v1057
      %v1060 = vshrl.u32 %v1029, 16
      %v1062 = vrot.slane %v1060, 7
      %v1063 = vshll.u32 %v1029, 16
      %v1065 = vor.u32 %v1062, %v1063
      %v1066 = vsel %vm1043, %v1054, %v1065
      %v1068 = vshrl.u32 %v1030, 16
      %v1070 = vrot.slane %v1068, 7
      %v1071 = vshll.u32 %v1030, 16
      %v1073 = vor.u32 %v1070, %v1071
      %v1074 = vsel %vm1043, %v1062, %v1073
      %v1076 = vshrl.u32 %v1031, 16
      %v1078 = vrot.slane %v1076, 7
      %v1079 = vshll.u32 %v1031, 16
      %v1081 = vor.u32 %v1078, %v1079
      %v1082 = vsel %vm1043, %v1070, %v1081
      %v1084 = vshrl.u32 %v1032, 16
      %v1086 = vrot.slane %v1084, 7
      %v1087 = vshll.u32 %v1032, 16
      %v1089 = vor.u32 %v1086, %v1087
      %v1090 = vsel %vm1043, %v1078, %v1089
      %v1092 = vshrl.u32 %v1033, 16
      %v1094 = vrot.slane %v1092, 7
      %v1095 = vshll.u32 %v1033, 16
      %v1097 = vor.u32 %v1094, %v1095
      %v1098 = vsel %vm1043, %v1086, %v1097
      %v1100 = vshrl.u32 %v1034, 16
      %v1102 = vrot.slane %v1100, 7
      %v1103 = vshll.u32 %v1034, 16
      %v1105 = vor.u32 %v1102, %v1103
      %v1106 = vsel %vm1043, %v1094, %v1105
      %v1108 = vshrl.u32 %v1035, 16
      %v1110 = vrot.slane %v1108, 7
      %v1111 = vshll.u32 %v1035, 16
      %v1113 = vor.u32 %v1110, %v1111
      %v1114 = vsel %vm1043, %v1102, %v1113
      %v1116 = vshrl.u32 %v1036, 16
      %v1118 = vrot.slane %v1116, 7
      %v1119 = vshll.u32 %v1036, 16
      %v1121 = vor.u32 %v1118, %v1119
      %v1122 = vsel %vm1043, %v1110, %v1121
      %v1124 = vshrl.u32 %v1037, 16
      %v1126 = vrot.slane %v1124, 7
      %v1127 = vshll.u32 %v1037, 16
      %v1129 = vor.u32 %v1126, %v1127
      %v1130 = vsel %vm1043, %v1118, %v1129
      %v1132 = vshrl.u32 %v1038, 16
      %v1134 = vrot.slane %v1132, 7
      %v1135 = vshll.u32 %v1038, 16
      %v1137 = vor.u32 %v1134, %v1135
      %v1138 = vsel %vm1043, %v1126, %v1137
      %v1140 = vshrl.u32 %v1039, 16
      %v1142 = vrot.slane %v1140, 7
      %v1143 = vshll.u32 %v1039, 16
      %v1145 = vor.u32 %v1142, %v1143
      %v1146 = vsel %vm1043, %v1134, %v1145
      %v1148 = vshrl.u32 %v1040, 16
      %v1150 = vrot.slane %v1148, 7
      %v1151 = vshll.u32 %v1040, 16
      %v1153 = vor.u32 %v1150, %v1151
      %v1154 = vsel %vm1043, %v1142, %v1153
      %v1156 = vshrl.u32 %v1041, 16
      %v1158 = vrot.slane %v1156, 7
      %v1159 = vshll.u32 %v1041, 16
      %v1161 = vor.u32 %v1158, %v1159
      %v1162 = vsel %vm1043, %v1150, %v1161
      %v1164 = vshrl.u32 %v1042, 16
      %v1166 = vrot.slane %v1164, 7
      %v1167 = vshll.u32 %v1042, 16
      %v1169 = vor.u32 %v1166, %v1167
      %v1170 = vsel %vm1043, %v1158, %v1169
      %vm1171 = vcmp.ne.s16.totalorder %v1050, 0
      %vm1172 = vcmp.ne.s16.totalorder %v1058, 0
      %vm1173 = vcmp.ne.s16.totalorder %v1066, 0
      %vm1174 = vcmp.ne.s16.totalorder %v1074, 0
      %vm1175 = vcmp.ne.s16.totalorder %v1082, 0
      %vm1176 = vcmp.ne.s16.totalorder %v1090, 0
      %vm1177 = vcmp.ne.s16.totalorder %v1098, 0
      %vm1178 = vcmp.ne.s16.totalorder %v1106, 0
      %vm1179 = vcmp.ne.s16.totalorder %v1114, 0
      %vm1180 = vcmp.ne.s16.totalorder %v1122, 0
      %vm1181 = vcmp.ne.s16.totalorder %v1130, 0
      %vm1182 = vcmp.ne.s16.totalorder %v1138, 0
      %vm1183 = vcmp.ne.s16.totalorder %v1146, 0
      %vm1184 = vcmp.ne.s16.totalorder %v1154, 0
      %vm1185 = vcmp.ne.s16.totalorder %v1162, 0
      %vm1186 = vcmp.ne.s16.totalorder %v1170, 0
      %vm1187 = vcmp.ne.s16.totalorder %v1166, 0
      %v1188 = vsel %vm1171, %v882, 0
      %v1189 = vsel %vm1172, %v883, 0
      %v1190 = vsel %vm1173, %v884, 0
      %v1191 = vsel %vm1174, %v885, 0
      %v1192 = vsel %vm1175, %v886, 0
      %v1193 = vsel %vm1176, %v887, 0
      %v1194 = vsel %vm1177, %v888, 0
      %v1195 = vsel %vm1178, %v889, 0
      %v1196 = vsel %vm1179, %v890, 0
      %v1197 = vsel %vm1180, %v891, 0
      %v1198 = vsel %vm1181, %v892, 0
      %v1199 = vsel %vm1182, %v893, 0
      %v1200 = vsel %vm1183, %v894, 0
      %v1201 = vsel %vm1184, %v895, 0
      %v1202 = vsel %vm1185, %v896, 0
      %v1203 = vsel %vm1186, %v897, 0
      %v1204 = vsel %vm1187, %v898, 0
      %vm1205 = vsmask.f32 7424
      %v1207 = vshrl.u32 %v1188, 16
      %v1209 = vshll.u32 %v1188, 16
      %v1211 = vrot.slane %v1209, 1
      %v1212 = vor.u32 %v1207, %v1211
      %v1214 = vshll.u32 %v1189, 16
      %v1216 = vrot.slane %v1214, 1
      %v1217 = vsel %vm1205, %v1212, %v1216
      %v1218 = vshrl.u32 %v1189, 16
      %v1220 = vor.u32 %v1218, %v1216
      %v1222 = vshll.u32 %v1190, 16
      %v1224 = vrot.slane %v1222, 1
      %v1225 = vsel %vm1205, %v1220, %v1224
      %v1226 = vshrl.u32 %v1190, 16
      %v1228 = vor.u32 %v1226, %v1224
      %v1230 = vshll.u32 %v1191, 16
      %v1232 = vrot.slane %v1230, 1
      %v1233 = vsel %vm1205, %v1228, %v1232
      %v1234 = vshrl.u32 %v1191, 16
      %v1236 = vor.u32 %v1234, %v1232
      %v1238 = vshll.u32 %v1192, 16
      %v1240 = vrot.slane %v1238, 1
      %v1241 = vsel %vm1205, %v1236, %v1240
      %v1242 = vshrl.u32 %v1192, 16
      %v1244 = vor.u32 %v1242, %v1240
      %v1246 = vshll.u32 %v1193, 16
      %v1248 = vrot.slane %v1246, 1
      %v1249 = vsel %vm1205, %v1244, %v1248
      %v1250 = vshrl.u32 %v1193, 16
      %v1252 = vor.u32 %v1250, %v1248
      %v1254 = vshll.u32 %v1194, 16
      %v1256 = vrot.slane %v1254, 1
      %v1257 = vsel %vm1205, %v1252, %v1256
      %v1258 = vshrl.u32 %v1194, 16
      %v1260 = vor.u32 %v1258, %v1256
      %v1262 = vshll.u32 %v1195, 16
      %v1264 = vrot.slane %v1262, 1
      %v1265 = vsel %vm1205, %v1260, %v1264
      %v1266 = vshrl.u32 %v1195, 16
      %v1268 = vor.u32 %v1266, %v1264
      %v1270 = vshll.u32 %v1196, 16
      %v1272 = vrot.slane %v1270, 1
      %v1273 = vsel %vm1205, %v1268, %v1272
      %v1274 = vshrl.u32 %v1196, 16
      %v1276 = vor.u32 %v1274, %v1272
      %v1278 = vshll.u32 %v1197, 16
      %v1280 = vrot.slane %v1278, 1
      %v1281 = vsel %vm1205, %v1276, %v1280
      %v1282 = vshrl.u32 %v1197, 16
      %v1284 = vor.u32 %v1282, %v1280
      %v1286 = vshll.u32 %v1198, 16
      %v1288 = vrot.slane %v1286, 1
      %v1289 = vsel %vm1205, %v1284, %v1288
      %v1290 = vshrl.u32 %v1198, 16
      %v1292 = vor.u32 %v1290, %v1288
      %v1294 = vshll.u32 %v1199, 16
      %v1296 = vrot.slane %v1294, 1
      %v1297 = vsel %vm1205, %v1292, %v1296
      %v1298 = vshrl.u32 %v1199, 16
      %v1300 = vor.u32 %v1298, %v1296
      %v1302 = vshll.u32 %v1200, 16
      %v1304 = vrot.slane %v1302, 1
      %v1305 = vsel %vm1205, %v1300, %v1304
      %v1306 = vshrl.u32 %v1200, 16
      %v1308 = vor.u32 %v1306, %v1304
      %v1310 = vshll.u32 %v1201, 16
      %v1312 = vrot.slane %v1310, 1
      %v1313 = vsel %vm1205, %v1308, %v1312
      %v1314 = vshrl.u32 %v1201, 16
      %v1316 = vor.u32 %v1314, %v1312
      %v1318 = vshll.u32 %v1202, 16
      %v1320 = vrot.slane %v1318, 1
      %v1321 = vsel %vm1205, %v1316, %v1320
      %v1322 = vshrl.u32 %v1202, 16
      %v1324 = vor.u32 %v1322, %v1320
      %v1326 = vshll.u32 %v1203, 16
      %v1328 = vrot.slane %v1326, 1
      %v1329 = vsel %vm1205, %v1324, %v1328
      %v1330 = vshrl.u32 %v1203, 16
      %v1332 = vor.u32 %v1330, %v1328
      %v1334 = vshll.u32 %v1204, 16
      %v1336 = vrot.slane %v1334, 1
      %v1337 = vsel %vm1205, %v1332, %v1336
      %1354 = vst [vmem:[#allocation4 + $0x8] sm:$0xff] %v1217
      %1355 = vst [vmem:[#allocation4 + $0x10] sm:$0xff] %v1225
      %1356 = vst [vmem:[#allocation4 + $0x18] sm:$0xff] %v1233
      %1357 = vst [vmem:[#allocation4 + $0x20] sm:$0xff] %v1241
      %1358 = vst [vmem:[#allocation4 + $0x28] sm:$0xff] %v1249
      %1359 = vst [vmem:[#allocation4 + $0x30] sm:$0xff] %v1257
      %1360 = vst [vmem:[#allocation4 + $0x38] sm:$0xff] %v1265
      %1361 = vst [vmem:[#allocation4 + $0x40] sm:$0xff] %v1273
      %1362 = vst [vmem:[#allocation4 + $0x48] sm:$0xff] %v1281
      %1363 = vst [vmem:[#allocation4 + $0x50] sm:$0xff] %v1289
      %1364 = vst [vmem:[#allocation4 + $0x58] sm:$0xff] %v1297
      %1365 = vst [vmem:[#allocation4 + $0x60] sm:$0xff] %v1305
      %1366 = vst [vmem:[#allocation4 + $0x68] sm:$0xff] %v1313
      %1367 = vst [vmem:[#allocation4 + $0x70] sm:$0xff] %v1321
      %1368 = vst [vmem:[#allocation4 + $0x78] sm:$0xff] %v1329
      %1369 = vst [vmem:[#allocation4 + $0x80] sm:$0xff] %v1337
      %v1370 = vld [vmem:[#allocation3] sm:$0x80]
      %v1371 = vld [vmem:[#allocation3 + $0x8] sm:$0xff]
      %v1372 = vld [vmem:[#allocation3 + $0x10] sm:$0xff]
      %v1373 = vld [vmem:[#allocation3 + $0x18] sm:$0xff]
      %v1374 = vld [vmem:[#allocation3 + $0x20] sm:$0xff]
      %v1375 = vld [vmem:[#allocation3 + $0x28] sm:$0xff]
      %v1376 = vld [vmem:[#allocation3 + $0x30] sm:$0xff]
      %v1377 = vld [vmem:[#allocation3 + $0x38] sm:$0xff]
      %v1378 = vld [vmem:[#allocation3 + $0x40] sm:$0xff]
      %v1379 = vld [vmem:[#allocation3 + $0x48] sm:$0xff]
      %v1380 = vld [vmem:[#allocation3 + $0x50] sm:$0xff]
      %v1381 = vld [vmem:[#allocation3 + $0x58] sm:$0xff]
      %v1382 = vld [vmem:[#allocation3 + $0x60] sm:$0xff]
      %v1383 = vld [vmem:[#allocation3 + $0x68] sm:$0xff]
      %v1384 = vld [vmem:[#allocation3 + $0x70] sm:$0xff]
      %v1385 = vld [vmem:[#allocation3 + $0x78] sm:$0xff]
      %v1386 = vld [vmem:[#allocation3 + $0x80] sm:$0xff]
      %vm1387 = vcmp.ne.s32.totalorder %v850, 0
      %vm1388 = vcmp.ne.s32.totalorder %v851, 0
      %vm1389 = vcmp.ne.s32.totalorder %v852, 0
      %vm1390 = vcmp.ne.s32.totalorder %v853, 0
      %vm1391 = vcmp.ne.s32.totalorder %v854, 0
      %vm1392 = vcmp.ne.s32.totalorder %v855, 0
      %vm1393 = vcmp.ne.s32.totalorder %v856, 0
      %vm1394 = vcmp.ne.s32.totalorder %v857, 0
      %vm1395 = vcmp.ne.s32.totalorder %v858, 0
      %vm1396 = vcmp.ne.s32.totalorder %v859, 0
      %vm1397 = vcmp.ne.s32.totalorder %v860, 0
      %vm1398 = vcmp.ne.s32.totalorder %v861, 0
      %vm1399 = vcmp.ne.s32.totalorder %v862, 0
      %vm1400 = vcmp.ne.s32.totalorder %v863, 0
      %vm1401 = vcmp.ne.s32.totalorder %v864, 0
      %vm1402 = vcmp.ne.s32.totalorder %v865, 0
      %vm1403 = vcmp.ne.s32.totalorder %v866, 0
      %vm1404 = vcmp.ne.s32.totalorder %v867, 0
      %vm1405 = vcmp.ne.s32.totalorder %v868, 0
      %vm1406 = vcmp.ne.s32.totalorder %v869, 0
      %vm1407 = vcmp.ne.s32.totalorder %v870, 0
      %vm1408 = vcmp.ne.s32.totalorder %v871, 0
      %vm1409 = vcmp.ne.s32.totalorder %v872, 0
      %vm1410 = vcmp.ne.s32.totalorder %v873, 0
      %vm1411 = vcmp.ne.s32.totalorder %v874, 0
      %vm1412 = vcmp.ne.s32.totalorder %v875, 0
      %vm1413 = vcmp.ne.s32.totalorder %v876, 0
      %vm1414 = vcmp.ne.s32.totalorder %v877, 0
      %vm1415 = vcmp.ne.s32.totalorder %v878, 0
      %vm1416 = vcmp.ne.s32.totalorder %v879, 0
      %vm1417 = vcmp.ne.s32.totalorder %v880, 0
      %vm1418 = vcmp.ne.s32.totalorder %v881, 0
      %vm1419 = vmpackc.low %vm1387, %vm1387
      %vm1420 = vmpackc.low %vm1388, %vm1388
      %vm1421 = vmpackc.low %vm1389, %vm1389
      %vm1422 = vmpackc.low %vm1390, %vm1390
      %vm1423 = vmpackc.low %vm1391, %vm1391
      %vm1424 = vmpackc.low %vm1392, %vm1392
      %vm1425 = vmpackc.low %vm1393, %vm1393
      %vm1426 = vmpackc.low %vm1394, %vm1394
      %vm1427 = vmpackc.low %vm1395, %vm1395
      %vm1428 = vmpackc.low %vm1396, %vm1396
      %vm1429 = vmpackc.low %vm1397, %vm1397
      %vm1430 = vmpackc.low %vm1398, %vm1398
      %vm1431 = vmpackc.low %vm1399, %vm1399
      %vm1432 = vmpackc.low %vm1400, %vm1400
      %vm1433 = vmpackc.low %vm1401, %vm1401
      %vm1434 = vmpackc.low %vm1402, %vm1402
      %vm1435 = vmpackc.low %vm1403, %vm1403
      %vm1436 = vmpackc.low %vm1404, %vm1404
      %vm1437 = vmpackc.low %vm1405, %vm1405
      %vm1438 = vmpackc.low %vm1406, %vm1406
      %vm1439 = vmpackc.low %vm1407, %vm1407
      %vm1440 = vmpackc.low %vm1408, %vm1408
      %vm1441 = vmpackc.low %vm1409, %vm1409
      %vm1442 = vmpackc.low %vm1410, %vm1410
      %vm1443 = vmpackc.low %vm1411, %vm1411
      %vm1444 = vmpackc.low %vm1412, %vm1412
      %vm1445 = vmpackc.low %vm1413, %vm1413
      %vm1446 = vmpackc.low %vm1414, %vm1414
      %vm1447 = vmpackc.low %vm1415, %vm1415
      %vm1448 = vmpackc.low %vm1416, %vm1416
      %vm1449 = vmpackc.low %vm1417, %vm1417
      %vm1450 = vmpackc.low %vm1418, %vm1418
      %v1451 = vsel %vm1419, 65537, 0
      %v1452 = vsel %vm1420, 65537, 0
      %v1453 = vsel %vm1421, 65537, 0
      %v1454 = vsel %vm1422, 65537, 0
      %v1455 = vsel %vm1423, 65537, 0
      %v1456 = vsel %vm1424, 65537, 0
      %v1457 = vsel %vm1425, 65537, 0
      %v1458 = vsel %vm1426, 65537, 0
      %v1459 = vsel %vm1427, 65537, 0
      %v1460 = vsel %vm1428, 65537, 0
      %v1461 = vsel %vm1429, 65537, 0
      %v1462 = vsel %vm1430, 65537, 0
      %v1463 = vsel %vm1431, 65537, 0
      %v1464 = vsel %vm1432, 65537, 0
      %v1465 = vsel %vm1433, 65537, 0
      %v1466 = vsel %vm1434, 65537, 0
      %v1467 = vsel %vm1435, 65537, 0
      %v1468 = vsel %vm1436, 65537, 0
      %v1469 = vsel %vm1437, 65537, 0
      %v1470 = vsel %vm1438, 65537, 0
      %v1471 = vsel %vm1439, 65537, 0
      %v1472 = vsel %vm1440, 65537, 0
      %v1473 = vsel %vm1441, 65537, 0
      %v1474 = vsel %vm1442, 65537, 0
      %v1475 = vsel %vm1443, 65537, 0
      %v1476 = vsel %vm1444, 65537, 0
      %v1477 = vsel %vm1445, 65537, 0
      %v1478 = vsel %vm1446, 65537, 0
      %v1479 = vsel %vm1447, 65537, 0
      %v1480 = vsel %vm1448, 65537, 0
      %v1481 = vsel %vm1449, 65537, 0
      %v1482 = vsel %vm1450, 65537, 0
      %v1483 = vunpack.c.l.b16 %v1451
      %v1484 = vunpack.c.l.b16 %v1452
      %v1485 = vunpack.c.l.b16 %v1453
      %v1486 = vunpack.c.l.b16 %v1454
      %v1487 = vunpack.c.l.b16 %v1455
      %v1488 = vunpack.c.l.b16 %v1456
      %v1489 = vunpack.c.l.b16 %v1457
      %v1490 = vunpack.c.l.b16 %v1458
      %v1491 = vunpack.c.l.b16 %v1459
      %v1492 = vunpack.c.l.b16 %v1460
      %v1493 = vunpack.c.l.b16 %v1461
      %v1494 = vunpack.c.l.b16 %v1462
      %v1495 = vunpack.c.l.b16 %v1463
      %v1496 = vunpack.c.l.b16 %v1464
      %v1497 = vunpack.c.l.b16 %v1465
      %v1498 = vunpack.c.l.b16 %v1466
      %v1499 = vunpack.c.l.b16 %v1467
      %v1500 = vunpack.c.l.b16 %v1468
      %v1501 = vunpack.c.l.b16 %v1469
      %v1502 = vunpack.c.l.b16 %v1470
      %v1503 = vunpack.c.l.b16 %v1471
      %v1504 = vunpack.c.l.b16 %v1472
      %v1505 = vunpack.c.l.b16 %v1473
      %v1506 = vunpack.c.l.b16 %v1474
      %v1507 = vunpack.c.l.b16 %v1475
      %v1508 = vunpack.c.l.b16 %v1476
      %v1509 = vunpack.c.l.b16 %v1477
      %v1510 = vunpack.c.l.b16 %v1478
      %v1511 = vunpack.c.l.b16 %v1479
      %v1512 = vunpack.c.l.b16 %v1480
      %v1513 = vunpack.c.l.b16 %v1481
      %v1514 = vunpack.c.l.b16 %v1482
      %v1515 = vpack.c.b16 %v1484, %v1483
      %v1516 = vpack.c.b16 %v1486, %v1485
      %v1517 = vpack.c.b16 %v1488, %v1487
      %v1518 = vpack.c.b16 %v1490, %v1489
      %v1519 = vpack.c.b16 %v1492, %v1491
      %v1520 = vpack.c.b16 %v1494, %v1493
      %v1521 = vpack.c.b16 %v1496, %v1495
      %v1522 = vpack.c.b16 %v1498, %v1497
      %v1523 = vpack.c.b16 %v1500, %v1499
      %v1524 = vpack.c.b16 %v1502, %v1501
      %v1525 = vpack.c.b16 %v1504, %v1503
      %v1526 = vpack.c.b16 %v1506, %v1505
      %v1527 = vpack.c.b16 %v1508, %v1507
      %v1528 = vpack.c.b16 %v1510, %v1509
      %v1529 = vpack.c.b16 %v1512, %v1511
      %v1530 = vpack.c.b16 %v1514, %v1513
      %v1532 = vshll.u32 %v1515, 16
      %v1534 = vrot.slane %v1532, 1
      %v1535 = vshrl.u32 %v1515, 16
      %v1537 = vor.u32 %v1535, %v1534
      %v1539 = vshll.u32 %v1516, 16
      %v1541 = vrot.slane %v1539, 1
      %v1542 = vsel %vm1205, %v1537, %v1541
      %v1543 = vshrl.u32 %v1516, 16
      %v1545 = vor.u32 %v1543, %v1541
      %v1547 = vshll.u32 %v1517, 16
      %v1549 = vrot.slane %v1547, 1
      %v1550 = vsel %vm1205, %v1545, %v1549
      %v1551 = vshrl.u32 %v1517, 16
      %v1553 = vor.u32 %v1551, %v1549
      %v1555 = vshll.u32 %v1518, 16
      %v1557 = vrot.slane %v1555, 1
      %v1558 = vsel %vm1205, %v1553, %v1557
      %v1559 = vshrl.u32 %v1518, 16
      %v1561 = vor.u32 %v1559, %v1557
      %v1563 = vshll.u32 %v1519, 16
      %v1565 = vrot.slane %v1563, 1
      %v1566 = vsel %vm1205, %v1561, %v1565
      %v1567 = vshrl.u32 %v1519, 16
      %v1569 = vor.u32 %v1567, %v1565
      %v1571 = vshll.u32 %v1520, 16
      %v1573 = vrot.slane %v1571, 1
      %v1574 = vsel %vm1205, %v1569, %v1573
      %v1575 = vshrl.u32 %v1520, 16
      %v1577 = vor.u32 %v1575, %v1573
      %v1579 = vshll.u32 %v1521, 16
      %v1581 = vrot.slane %v1579, 1
      %v1582 = vsel %vm1205, %v1577, %v1581
      %v1583 = vshrl.u32 %v1521, 16
      %v1585 = vor.u32 %v1583, %v1581
      %v1587 = vshll.u32 %v1522, 16
      %v1589 = vrot.slane %v1587, 1
      %v1590 = vsel %vm1205, %v1585, %v1589
      %v1591 = vshrl.u32 %v1522, 16
      %v1593 = vor.u32 %v1591, %v1589
      %v1595 = vshll.u32 %v1523, 16
      %v1597 = vrot.slane %v1595, 1
      %v1598 = vsel %vm1205, %v1593, %v1597
      %v1599 = vshrl.u32 %v1523, 16
      %v1601 = vor.u32 %v1599, %v1597
      %v1603 = vshll.u32 %v1524, 16
      %v1605 = vrot.slane %v1603, 1
      %v1606 = vsel %vm1205, %v1601, %v1605
      %v1607 = vshrl.u32 %v1524, 16
      %v1609 = vor.u32 %v1607, %v1605
      %v1611 = vshll.u32 %v1525, 16
      %v1613 = vrot.slane %v1611, 1
      %v1614 = vsel %vm1205, %v1609, %v1613
      %v1615 = vshrl.u32 %v1525, 16
      %v1617 = vor.u32 %v1615, %v1613
      %v1619 = vshll.u32 %v1526, 16
      %v1621 = vrot.slane %v1619, 1
      %v1622 = vsel %vm1205, %v1617, %v1621
      %v1623 = vshrl.u32 %v1526, 16
      %v1625 = vor.u32 %v1623, %v1621
      %v1627 = vshll.u32 %v1527, 16
      %v1629 = vrot.slane %v1627, 1
      %v1630 = vsel %vm1205, %v1625, %v1629
      %v1631 = vshrl.u32 %v1527, 16
      %v1633 = vor.u32 %v1631, %v1629
      %v1635 = vshll.u32 %v1528, 16
      %v1637 = vrot.slane %v1635, 1
      %v1638 = vsel %vm1205, %v1633, %v1637
      %v1639 = vshrl.u32 %v1528, 16
      %v1641 = vor.u32 %v1639, %v1637
      %v1643 = vshll.u32 %v1529, 16
      %v1645 = vrot.slane %v1643, 1
      %v1646 = vsel %vm1205, %v1641, %v1645
      %v1647 = vshrl.u32 %v1529, 16
      %v1649 = vor.u32 %v1647, %v1645
      %v1651 = vshll.u32 %v1530, 16
      %v1653 = vrot.slane %v1651, 1
      %v1654 = vsel %vm1205, %v1649, %v1653
      %v1655 = vshrl.u32 %v1530, 16
      %v1657 = vor.u32 %v1655, %v1653
      %vm1658 = vcmp.ne.s16.totalorder %v1534, 0
      %vm1659 = vcmp.ne.s16.totalorder %v1542, 0
      %vm1660 = vcmp.ne.s16.totalorder %v1550, 0
      %vm1661 = vcmp.ne.s16.totalorder %v1558, 0
      %vm1662 = vcmp.ne.s16.totalorder %v1566, 0
      %vm1663 = vcmp.ne.s16.totalorder %v1574, 0
      %vm1664 = vcmp.ne.s16.totalorder %v1582, 0
      %vm1665 = vcmp.ne.s16.totalorder %v1590, 0
      %vm1666 = vcmp.ne.s16.totalorder %v1598, 0
      %vm1667 = vcmp.ne.s16.totalorder %v1606, 0
      %vm1668 = vcmp.ne.s16.totalorder %v1614, 0
      %vm1669 = vcmp.ne.s16.totalorder %v1622, 0
      %vm1670 = vcmp.ne.s16.totalorder %v1630, 0
      %vm1671 = vcmp.ne.s16.totalorder %v1638, 0
      %vm1672 = vcmp.ne.s16.totalorder %v1646, 0
      %vm1673 = vcmp.ne.s16.totalorder %v1654, 0
      %vm1674 = vcmp.ne.s16.totalorder %v1657, 0
      %v1675 = vsel %vm1658, %v1370, 0
      %v1676 = vsel %vm1659, %v1371, 0
      %v1677 = vsel %vm1660, %v1372, 0
      %v1678 = vsel %vm1661, %v1373, 0
      %v1679 = vsel %vm1662, %v1374, 0
      %v1680 = vsel %vm1663, %v1375, 0
      %v1681 = vsel %vm1664, %v1376, 0
      %v1682 = vsel %vm1665, %v1377, 0
      %v1683 = vsel %vm1666, %v1378, 0
      %v1684 = vsel %vm1667, %v1379, 0
      %v1685 = vsel %vm1668, %v1380, 0
      %v1686 = vsel %vm1669, %v1381, 0
      %v1687 = vsel %vm1670, %v1382, 0
      %v1688 = vsel %vm1671, %v1383, 0
      %v1689 = vsel %vm1672, %v1384, 0
      %v1690 = vsel %vm1673, %v1385, 0
      %v1691 = vsel %vm1674, %v1386, 0
      %v1693 = vshrl.u32 %v1675, 16
      %v1695 = vrot.slane %v1693, 7
      %v1697 = vshrl.u32 %v1676, 16
      %v1699 = vrot.slane %v1697, 7
      %v1700 = vshll.u32 %v1676, 16
      %v1702 = vor.u32 %v1699, %v1700
      %v1703 = vsel %vm1043, %v1695, %v1702
      %v1705 = vshrl.u32 %v1677, 16
      %v1707 = vrot.slane %v1705, 7
      %v1708 = vshll.u32 %v1677, 16
      %v1710 = vor.u32 %v1707, %v1708
      %v1711 = vsel %vm1043, %v1699, %v1710
      %v1713 = vshrl.u32 %v1678, 16
      %v1715 = vrot.slane %v1713, 7
      %v1716 = vshll.u32 %v1678, 16
      %v1718 = vor.u32 %v1715, %v1716
      %v1719 = vsel %vm1043, %v1707, %v1718
      %v1721 = vshrl.u32 %v1679, 16
      %v1723 = vrot.slane %v1721, 7
      %v1724 = vshll.u32 %v1679, 16
      %v1726 = vor.u32 %v1723, %v1724
      %v1727 = vsel %vm1043, %v1715, %v1726
      %v1729 = vshrl.u32 %v1680, 16
      %v1731 = vrot.slane %v1729, 7
      %v1732 = vshll.u32 %v1680, 16
      %v1734 = vor.u32 %v1731, %v1732
      %v1735 = vsel %vm1043, %v1723, %v1734
      %v1737 = vshrl.u32 %v1681, 16
      %v1739 = vrot.slane %v1737, 7
      %v1740 = vshll.u32 %v1681, 16
      %v1742 = vor.u32 %v1739, %v1740
      %v1743 = vsel %vm1043, %v1731, %v1742
      %v1745 = vshrl.u32 %v1682, 16
      %v1747 = vrot.slane %v1745, 7
      %v1748 = vshll.u32 %v1682, 16
      %v1750 = vor.u32 %v1747, %v1748
      %v1751 = vsel %vm1043, %v1739, %v1750
      %v1753 = vshrl.u32 %v1683, 16
      %v1755 = vrot.slane %v1753, 7
      %v1756 = vshll.u32 %v1683, 16
      %v1758 = vor.u32 %v1755, %v1756
      %v1759 = vsel %vm1043, %v1747, %v1758
      %v1761 = vshrl.u32 %v1684, 16
      %v1763 = vrot.slane %v1761, 7
      %v1764 = vshll.u32 %v1684, 16
      %v1766 = vor.u32 %v1763, %v1764
      %v1767 = vsel %vm1043, %v1755, %v1766
      %v1769 = vshrl.u32 %v1685, 16
      %v1771 = vrot.slane %v1769, 7
      %v1772 = vshll.u32 %v1685, 16
      %v1774 = vor.u32 %v1771, %v1772
      %v1775 = vsel %vm1043, %v1763, %v1774
      %v1777 = vshrl.u32 %v1686, 16
      %v1779 = vrot.slane %v1777, 7
      %v1780 = vshll.u32 %v1686, 16
      %v1782 = vor.u32 %v1779, %v1780
      %v1783 = vsel %vm1043, %v1771, %v1782
      %v1785 = vshrl.u32 %v1687, 16
      %v1787 = vrot.slane %v1785, 7
      %v1788 = vshll.u32 %v1687, 16
      %v1790 = vor.u32 %v1787, %v1788
      %v1791 = vsel %vm1043, %v1779, %v1790
      %v1793 = vshrl.u32 %v1688, 16
      %v1795 = vrot.slane %v1793, 7
      %v1796 = vshll.u32 %v1688, 16
      %v1798 = vor.u32 %v1795, %v1796
      %v1799 = vsel %vm1043, %v1787, %v1798
      %v1801 = vshrl.u32 %v1689, 16
      %v1803 = vrot.slane %v1801, 7
      %v1804 = vshll.u32 %v1689, 16
      %v1806 = vor.u32 %v1803, %v1804
      %v1807 = vsel %vm1043, %v1795, %v1806
      %v1809 = vshrl.u32 %v1690, 16
      %v1811 = vrot.slane %v1809, 7
      %v1812 = vshll.u32 %v1690, 16
      %v1814 = vor.u32 %v1811, %v1812
      %v1815 = vsel %vm1043, %v1803, %v1814
      %v1817 = vshrl.u32 %v1691, 16
      %v1819 = vrot.slane %v1817, 7
      %v1820 = vshll.u32 %v1691, 16
      %v1822 = vor.u32 %v1819, %v1820
      %v1823 = vsel %vm1043, %v1811, %v1822
      %1840 = vst [vmem:[#allocation2 + $0x8] sm:$0xff] %v1703
      %1841 = vst [vmem:[#allocation2 + $0x10] sm:$0xff] %v1711
      %1842 = vst [vmem:[#allocation2 + $0x18] sm:$0xff] %v1719
      %1843 = vst [vmem:[#allocation2 + $0x20] sm:$0xff] %v1727
      %1844 = vst [vmem:[#allocation2 + $0x28] sm:$0xff] %v1735
      %1845 = vst [vmem:[#allocation2 + $0x30] sm:$0xff] %v1743
      %1846 = vst [vmem:[#allocation2 + $0x38] sm:$0xff] %v1751
      %1847 = vst [vmem:[#allocation2 + $0x40] sm:$0xff] %v1759
      %1848 = vst [vmem:[#allocation2 + $0x48] sm:$0xff] %v1767
      %1849 = vst [vmem:[#allocation2 + $0x50] sm:$0xff] %v1775
      %1850 = vst [vmem:[#allocation2 + $0x58] sm:$0xff] %v1783
      %1851 = vst [vmem:[#allocation2 + $0x60] sm:$0xff] %v1791
      %1852 = vst [vmem:[#allocation2 + $0x68] sm:$0xff] %v1799
      %1853 = vst [vmem:[#allocation2 + $0x70] sm:$0xff] %v1807
      %1854 = vst [vmem:[#allocation2 + $0x78] sm:$0xff] %v1815
      %1855 = vst [vmem:[#allocation2 + $0x80] sm:$0xff] %v1823
      %v1856 = vld [vmem:[#allocation2] sm:$0xff]
      %v1857 = vld [vmem:[#allocation2 + $0x8] sm:$0xff]
      %v1858 = vld [vmem:[#allocation2 + $0x10] sm:$0xff]
      %v1859 = vld [vmem:[#allocation2 + $0x18] sm:$0xff]
      %v1860 = vld [vmem:[#allocation2 + $0x20] sm:$0xff]
      %v1861 = vld [vmem:[#allocation2 + $0x28] sm:$0xff]
      %v1862 = vld [vmem:[#allocation2 + $0x30] sm:$0xff]
      %v1863 = vld [vmem:[#allocation2 + $0x38] sm:$0xff]
      %v1864 = vld [vmem:[#allocation2 + $0x40] sm:$0xff]
      %v1865 = vld [vmem:[#allocation2 + $0x48] sm:$0xff]
      %v1866 = vld [vmem:[#allocation2 + $0x50] sm:$0xff]
      %v1867 = vld [vmem:[#allocation2 + $0x58] sm:$0xff]
      %v1868 = vld [vmem:[#allocation2 + $0x60] sm:$0xff]
      %v1869 = vld [vmem:[#allocation2 + $0x68] sm:$0xff]
      %v1870 = vld [vmem:[#allocation2 + $0x70] sm:$0xff]
      %v1871 = vld [vmem:[#allocation2 + $0x78] sm:$0xff]
      %v1872 = vld [vmem:[%s3] sm:$0xf]
      %v1873 = vld [vmem:[%s3 + $0x4] sm:$0xf]
      %v1874 = vld [vmem:[%s3 + $0x8] sm:$0xf]
      %v1875 = vld [vmem:[%s3 + $0xc] sm:$0xf]
      %v1876 = vld [vmem:[%s3 + $0x10] sm:$0xf]
      %v1877 = vld [vmem:[%s3 + $0x14] sm:$0xf]
      %v1878 = vld [vmem:[%s3 + $0x18] sm:$0xf]
      %v1879 = vld [vmem:[%s3 + $0x1c] sm:$0xf]
      %v1880 = vld [vmem:[%s3 + $0x20] sm:$0xf]
      %v1881 = vld [vmem:[%s3 + $0x24] sm:$0xf]
      %v1882 = vld [vmem:[%s3 + $0x28] sm:$0xf]
      %v1883 = vld [vmem:[%s3 + $0x2c] sm:$0xf]
      %v1884 = vld [vmem:[%s3 + $0x30] sm:$0xf]
      %v1885 = vld [vmem:[%s3 + $0x34] sm:$0xf]
      %v1886 = vld [vmem:[%s3 + $0x38] sm:$0xf]
      %v1887 = vld [vmem:[%s3 + $0x3c] sm:$0xf]
      %v1888 = vld [vmem:[#allocation3] sm:$0xff]
      %v1889 = vld [vmem:[#allocation3 + $0x8] sm:$0xff]
      %v1890 = vld [vmem:[#allocation3 + $0x10] sm:$0xff]
      %v1891 = vld [vmem:[#allocation3 + $0x18] sm:$0xff]
      %v1892 = vld [vmem:[#allocation3 + $0x20] sm:$0xff]
      %v1893 = vld [vmem:[#allocation3 + $0x28] sm:$0xff]
      %v1894 = vld [vmem:[#allocation3 + $0x30] sm:$0xff]
      %v1895 = vld [vmem:[#allocation3 + $0x38] sm:$0xff]
      %v1896 = vld [vmem:[#allocation3 + $0x40] sm:$0xff]
      %v1897 = vld [vmem:[#allocation3 + $0x48] sm:$0xff]
      %v1898 = vld [vmem:[#allocation3 + $0x50] sm:$0xff]
      %v1899 = vld [vmem:[#allocation3 + $0x58] sm:$0xff]
      %v1900 = vld [vmem:[#allocation3 + $0x60] sm:$0xff]
      %v1901 = vld [vmem:[#allocation3 + $0x68] sm:$0xff]
      %v1902 = vld [vmem:[#allocation3 + $0x70] sm:$0xff]
      %v1903 = vld [vmem:[#allocation3 + $0x78] sm:$0xff]
      %s1904 = scalar_lea.vmem %s3, 64
      %v1905 = vld [vmem:[%s1904] sm:$0xf]
      %v1906 = vld [vmem:[%s1904 + $0x4] sm:$0xf]
      %v1907 = vld [vmem:[%s1904 + $0x8] sm:$0xf]
      %v1908 = vld [vmem:[%s1904 + $0xc] sm:$0xf]
      %v1909 = vld [vmem:[%s1904 + $0x10] sm:$0xf]
      %v1910 = vld [vmem:[%s1904 + $0x14] sm:$0xf]
      %v1911 = vld [vmem:[%s1904 + $0x18] sm:$0xf]
      %v1912 = vld [vmem:[%s1904 + $0x1c] sm:$0xf]
      %v1913 = vld [vmem:[%s1904 + $0x20] sm:$0xf]
      %v1914 = vld [vmem:[%s1904 + $0x24] sm:$0xf]
      %v1915 = vld [vmem:[%s1904 + $0x28] sm:$0xf]
      %v1916 = vld [vmem:[%s1904 + $0x2c] sm:$0xf]
      %v1917 = vld [vmem:[%s1904 + $0x30] sm:$0xf]
      %v1918 = vld [vmem:[%s1904 + $0x34] sm:$0xf]
      %v1919 = vld [vmem:[%s1904 + $0x38] sm:$0xf]
      %v1920 = vld [vmem:[%s1904 + $0x3c] sm:$0xf]
      %v1937 = vunpack.c.l.b16 %v1905
      %v1938 = vunpack.c.l.b16 %v1906
      %v1939 = vunpack.c.l.b16 %v1907
      %v1940 = vunpack.c.l.b16 %v1908
      %v1941 = vunpack.c.l.b16 %v1909
      %v1942 = vunpack.c.l.b16 %v1910
      %v1943 = vunpack.c.l.b16 %v1911
      %v1944 = vunpack.c.l.b16 %v1912
      %v1945 = vunpack.c.l.b16 %v1913
      %v1946 = vunpack.c.l.b16 %v1914
      %v1947 = vunpack.c.l.b16 %v1915
      %v1948 = vunpack.c.l.b16 %v1916
      %v1949 = vunpack.c.l.b16 %v1917
      %v1950 = vunpack.c.l.b16 %v1918
      %v1951 = vunpack.c.l.b16 %v1919
      %v1952 = vunpack.c.l.b16 %v1920
      %v1953 = vpack.c.b16 %v1938, %v1937
      %v1954 = vpack.c.b16 %v1940, %v1939
      %v1955 = vpack.c.b16 %v1942, %v1941
      %v1956 = vpack.c.b16 %v1944, %v1943
      %v1957 = vpack.c.b16 %v1946, %v1945
      %v1958 = vpack.c.b16 %v1948, %v1947
      %v1959 = vpack.c.b16 %v1950, %v1949
      %v1960 = vpack.c.b16 %v1952, %v1951
      %1969 = vmatprep.subr.bf16.mxu0 0
      %1970 = vmatpush1.bf16.msra.mxu0 %v1953
      %1971 = vmatprep.subr.bf16.mxu0 0
      %1972 = vmatpush1.bf16.msra.mxu0 %v1954
      %1973 = vmatprep.subr.bf16.mxu0 0
      %1974 = vmatpush1.bf16.msra.mxu0 %v1955
      %1975 = vmatprep.subr.bf16.mxu0 0
      %1976 = vmatpush1.bf16.msra.mxu0 %v1956
      %1977 = vmatprep.subr.bf16.mxu0 0
      %1978 = vmatpush1.bf16.msra.mxu0 %v1957
      %1979 = vmatprep.subr.bf16.mxu0 0
      %1980 = vmatpush1.bf16.msra.mxu0 %v1958
      %1981 = vmatprep.subr.bf16.mxu0 0
      %1982 = vmatpush1.bf16.msra.mxu0 %v1959
      %1983 = vmatprep.subr.bf16.mxu0 0
      %1984 = vmatpush1.bf16.msra.mxu0 %v1960
      %1985 = vmatprep.subr.bf16.mxu0 0
      %1986 = vmatpush1.bf16.msra.mxu0 0
      %1987 = vmatprep.subr.bf16.mxu0 0
      %1988 = vmatpush1.bf16.msra.mxu0 0
      %1989 = vmatprep.subr.bf16.mxu0 0
      %1990 = vmatpush1.bf16.msra.mxu0 0
      %1991 = vmatprep.subr.bf16.mxu0 0
      %1992 = vmatpush1.bf16.msra.mxu0 0
      %1993 = vmatprep.subr.bf16.mxu0 0
      %1994 = vmatpush1.bf16.msra.mxu0 0
      %1995 = vmatprep.subr.bf16.mxu0 0
      %1996 = vmatpush1.bf16.msra.mxu0 0
      %1997 = vmatprep.subr.bf16.mxu0 0
      %1998 = vmatpush1.bf16.msra.mxu0 0
      %1999 = vmatprep.subr.bf16.mxu0 0
      %2000 = vmatpush1.bf16.msra.mxu0 0
      %2001 = vmatprep.mubr.bf16.mxu0 0
      %2002 = vmatmul.mubr.bf16.gmra.mrb[0].mxu0 %v1888
      %v2003 = vpop.f32.mrb[0].mxu0
      %v2004 = vadd.f32 0.0, %v2003
      %v2005 = vpop.f32.mrb[0].mxu0
      %v2006 = vpop.f32.mrb[0].mxu0
      %v2007 = vadd.f32 0.0, %v2006
      %v2008 = vpop.f32.mrb[0].mxu0
      %2009 = vmatprep.mubr.bf16.mxu0 0
      %2010 = vmatmul.mubr.bf16.gmra.mrb[0].mxu0 %v1889
      %v2011 = vpop.f32.mrb[0].mxu0
      %v2012 = vadd.f32 0.0, %v2011
      %v2013 = vpop.f32.mrb[0].mxu0
      %v2014 = vpop.f32.mrb[0].mxu0
      %v2015 = vadd.f32 0.0, %v2014
      %v2016 = vpop.f32.mrb[0].mxu0
      %2017 = vmatprep.mubr.bf16.mxu0 0
      %2018 = vmatmul.mubr.bf16.gmra.mrb[0].mxu0 %v1890
      %v2019 = vpop.f32.mrb[0].mxu0
      %v2020 = vadd.f32 0.0, %v2019
      %v2021 = vpop.f32.mrb[0].mxu0
      %v2022 = vpop.f32.mrb[0].mxu0
      %v2023 = vadd.f32 0.0, %v2022
      %v2024 = vpop.f32.mrb[0].mxu0
      %2025 = vmatprep.mubr.bf16.mxu0 0
      %2026 = vmatmul.mubr.bf16.gmra.mrb[0].mxu0 %v1891
      %v2027 = vpop.f32.mrb[0].mxu0
      %v2028 = vadd.f32 0.0, %v2027
      %v2029 = vpop.f32.mrb[0].mxu0
      %v2030 = vpop.f32.mrb[0].mxu0
      %v2031 = vadd.f32 0.0, %v2030
      %v2032 = vpop.f32.mrb[0].mxu0
      %2033 = vmatprep.mubr.bf16.mxu0 0
      %2034 = vmatmul.mubr.bf16.gmra.mrb[0].mxu0 %v1892
      %v2035 = vpop.f32.mrb[0].mxu0
      %v2036 = vadd.f32 0.0, %v2035
      %v2037 = vpop.f32.mrb[0].mxu0
      %v2038 = vpop.f32.mrb[0].mxu0
      %v2039 = vadd.f32 0.0, %v2038
      %v2040 = vpop.f32.mrb[0].mxu0
      %2041 = vmatprep.mubr.bf16.mxu0 0
      %2042 = vmatmul.mubr.bf16.gmra.mrb[0].mxu0 %v1893
      %v2043 = vpop.f32.mrb[0].mxu0
      %v2044 = vadd.f32 0.0, %v2043
      %v2045 = vpop.f32.mrb[0].mxu0
      %v2046 = vpop.f32.mrb[0].mxu0
      %v2047 = vadd.f32 0.0, %v2046
      %v2048 = vpop.f32.mrb[0].mxu0
      %2049 = vmatprep.mubr.bf16.mxu0 0
      %2050 = vmatmul.mubr.bf16.gmra.mrb[0].mxu0 %v1894
      %v2051 = vpop.f32.mrb[0].mxu0
      %v2052 = vadd.f32 0.0, %v2051
      %v2053 = vpop.f32.mrb[0].mxu0
      %v2054 = vpop.f32.mrb[0].mxu0
      %v2055 = vadd.f32 0.0, %v2054
      %v2056 = vpop.f32.mrb[0].mxu0
      %2057 = vmatprep.mubr.bf16.mxu0 0
      %2058 = vmatmul.mubr.bf16.gmra.mrb[0].mxu0 %v1895
      %v2059 = vpop.f32.mrb[0].mxu0
      %v2060 = vadd.f32 0.0, %v2059
      %v2061 = vpop.f32.mrb[0].mxu0
      %v2062 = vpop.f32.mrb[0].mxu0
      %v2063 = vadd.f32 0.0, %v2062
      %v2064 = vpop.f32.mrb[0].mxu0
      %2065 = vmatprep.mubr.bf16.mxu0 0
      %2066 = vmatmul.mubr.bf16.gmra.mrb[0].mxu0 %v1896
      %v2067 = vpop.f32.mrb[0].mxu0
      %v2068 = vadd.f32 0.0, %v2067
      %v2069 = vpop.f32.mrb[0].mxu0
      %v2070 = vpop.f32.mrb[0].mxu0
      %v2071 = vadd.f32 0.0, %v2070
      %v2072 = vpop.f32.mrb[0].mxu0
      %2073 = vmatprep.mubr.bf16.mxu0 0
      %2074 = vmatmul.mubr.bf16.gmra.mrb[0].mxu0 %v1897
      %v2075 = vpop.f32.mrb[0].mxu0
      %v2076 = vadd.f32 0.0, %v2075
      %v2077 = vpop.f32.mrb[0].mxu0
      %v2078 = vpop.f32.mrb[0].mxu0
      %v2079 = vadd.f32 0.0, %v2078
      %v2080 = vpop.f32.mrb[0].mxu0
      %2081 = vmatprep.mubr.bf16.mxu0 0
      %2082 = vmatmul.mubr.bf16.gmra.mrb[0].mxu0 %v1898
      %v2083 = vpop.f32.mrb[0].mxu0
      %v2084 = vadd.f32 0.0, %v2083
      %v2085 = vpop.f32.mrb[0].mxu0
      %v2086 = vpop.f32.mrb[0].mxu0
      %v2087 = vadd.f32 0.0, %v2086
      %v2088 = vpop.f32.mrb[0].mxu0
      %2089 = vmatprep.mubr.bf16.mxu0 0
      %2090 = vmatmul.mubr.bf16.gmra.mrb[0].mxu0 %v1899
      %v2091 = vpop.f32.mrb[0].mxu0
      %v2092 = vadd.f32 0.0, %v2091
      %v2093 = vpop.f32.mrb[0].mxu0
      %v2094 = vpop.f32.mrb[0].mxu0
      %v2095 = vadd.f32 0.0, %v2094
      %v2096 = vpop.f32.mrb[0].mxu0
      %2097 = vmatprep.mubr.bf16.mxu0 0
      %2098 = vmatmul.mubr.bf16.gmra.mrb[0].mxu0 %v1900
      %v2099 = vpop.f32.mrb[0].mxu0
      %v2100 = vadd.f32 0.0, %v2099
      %v2101 = vpop.f32.mrb[0].mxu0
      %v2102 = vpop.f32.mrb[0].mxu0
      %v2103 = vadd.f32 0.0, %v2102
      %v2104 = vpop.f32.mrb[0].mxu0
      %2105 = vmatprep.mubr.bf16.mxu0 0
      %2106 = vmatmul.mubr.bf16.gmra.mrb[0].mxu0 %v1901
      %v2107 = vpop.f32.mrb[0].mxu0
      %v2108 = vadd.f32 0.0, %v2107
      %v2109 = vpop.f32.mrb[0].mxu0
      %v2110 = vpop.f32.mrb[0].mxu0
      %v2111 = vadd.f32 0.0, %v2110
      %v2112 = vpop.f32.mrb[0].mxu0
      %2113 = vmatprep.mubr.bf16.mxu0 0
      %2114 = vmatmul.mubr.bf16.gmra.mrb[0].mxu0 %v1902
      %v2115 = vpop.f32.mrb[0].mxu0
      %v2116 = vadd.f32 0.0, %v2115
      %v2117 = vpop.f32.mrb[0].mxu0
      %v2118 = vpop.f32.mrb[0].mxu0
      %v2119 = vadd.f32 0.0, %v2118
      %v2120 = vpop.f32.mrb[0].mxu0
      %2121 = vmatprep.mubr.bf16.mxu0 0
      %2122 = vmatmul.mubr.bf16.gmra.mrb[0].mxu0 %v1903
      %v2123 = vpop.f32.mrb[0].mxu0
      %v2124 = vadd.f32 0.0, %v2123
      %v2125 = vpop.f32.mrb[0].mxu0
      %v2126 = vpop.f32.mrb[0].mxu0
      %v2127 = vadd.f32 0.0, %v2126
      %v2128 = vpop.f32.mrb[0].mxu0
      %2129 = vdwg.mxu0
      %v2146 = vunpack.c.l.b16 %v1872
      %v2147 = vunpack.c.l.b16 %v1873
      %v2148 = vunpack.c.l.b16 %v1874
      %v2149 = vunpack.c.l.b16 %v1875
      %v2150 = vunpack.c.l.b16 %v1876
      %v2151 = vunpack.c.l.b16 %v1877
      %v2152 = vunpack.c.l.b16 %v1878
      %v2153 = vunpack.c.l.b16 %v1879
      %v2154 = vunpack.c.l.b16 %v1880
      %v2155 = vunpack.c.l.b16 %v1881
      %v2156 = vunpack.c.l.b16 %v1882
      %v2157 = vunpack.c.l.b16 %v1883
      %v2158 = vunpack.c.l.b16 %v1884
      %v2159 = vunpack.c.l.b16 %v1885
      %v2160 = vunpack.c.l.b16 %v1886
      %v2161 = vunpack.c.l.b16 %v1887
      %v2162 = vpack.c.b16 %v2147, %v2146
      %v2163 = vpack.c.b16 %v2149, %v2148
      %v2164 = vpack.c.b16 %v2151, %v2150
      %v2165 = vpack.c.b16 %v2153, %v2152
      %v2166 = vpack.c.b16 %v2155, %v2154
      %v2167 = vpack.c.b16 %v2157, %v2156
      %v2168 = vpack.c.b16 %v2159, %v2158
      %v2169 = vpack.c.b16 %v2161, %v2160
      %2178 = vmatprep.subr.bf16.mxu0 0
      %2179 = vmatpush1.bf16.msra.mxu0 %v2162
      %2180 = vmatprep.subr.bf16.mxu0 0
      %2181 = vmatpush1.bf16.msra.mxu0 %v2163
      %2182 = vmatprep.subr.bf16.mxu0 0
      %2183 = vmatpush1.bf16.msra.mxu0 %v2164
      %2184 = vmatprep.subr.bf16.mxu0 0
      %2185 = vmatpush1.bf16.msra.mxu0 %v2165
      %2186 = vmatprep.subr.bf16.mxu0 0
      %2187 = vmatpush1.bf16.msra.mxu0 %v2166
      %2188 = vmatprep.subr.bf16.mxu0 0
      %2189 = vmatpush1.bf16.msra.mxu0 %v2167
      %2190 = vmatprep.subr.bf16.mxu0 0
      %2191 = vmatpush1.bf16.msra.mxu0 %v2168
      %2192 = vmatprep.subr.bf16.mxu0 0
      %2193 = vmatpush1.bf16.msra.mxu0 %v2169
      %2194 = vmatprep.subr.bf16.mxu0 0
      %2195 = vmatpush1.bf16.msra.mxu0 0
      %2196 = vmatprep.subr.bf16.mxu0 0
      %2197 = vmatpush1.bf16.msra.mxu0 0
      %2198 = vmatprep.subr.bf16.mxu0 0
      %2199 = vmatpush1.bf16.msra.mxu0 0
      %2200 = vmatprep.subr.bf16.mxu0 0
      %2201 = vmatpush1.bf16.msra.mxu0 0
      %2202 = vmatprep.subr.bf16.mxu0 0
      %2203 = vmatpush1.bf16.msra.mxu0 0
      %2204 = vmatprep.subr.bf16.mxu0 0
      %2205 = vmatpush1.bf16.msra.mxu0 0
      %2206 = vmatprep.subr.bf16.mxu0 0
      %2207 = vmatpush1.bf16.msra.mxu0 0
      %2208 = vmatprep.subr.bf16.mxu0 0
      %2209 = vmatpush1.bf16.msra.mxu0 0
      %2210 = vmatprep.mubr.bf16.mxu0 0
      %2211 = vmatmul.mubr.bf16.gmra.mrb[0].mxu0 %v1856
      %v2212 = vpop.f32.mrb[0].mxu0
      %v2213 = vadd.f32 %v2004, %v2212
      %v2214 = vpop.f32.mrb[0].mxu0
      %v2215 = vpop.f32.mrb[0].mxu0
      %v2216 = vadd.f32 %v2007, %v2215
      %v2217 = vpop.f32.mrb[0].mxu0
      %2218 = vmatprep.mubr.bf16.mxu0 0
      %2219 = vmatmul.mubr.bf16.gmra.mrb[0].mxu0 %v1857
      %v2220 = vpop.f32.mrb[0].mxu0
      %v2221 = vadd.f32 %v2012, %v2220
      %v2222 = vpop.f32.mrb[0].mxu0
      %v2223 = vpop.f32.mrb[0].mxu0
      %v2224 = vadd.f32 %v2015, %v2223
      %v2225 = vpop.f32.mrb[0].mxu0
      %2226 = vmatprep.mubr.bf16.mxu0 0
      %2227 = vmatmul.mubr.bf16.gmra.mrb[0].mxu0 %v1858
      %v2228 = vpop.f32.mrb[0].mxu0
      %v2229 = vadd.f32 %v2020, %v2228
      %v2230 = vpop.f32.mrb[0].mxu0
      %v2231 = vpop.f32.mrb[0].mxu0
      %v2232 = vadd.f32 %v2023, %v2231
      %v2233 = vpop.f32.mrb[0].mxu0
      %2234 = vmatprep.mubr.bf16.mxu0 0
      %2235 = vmatmul.mubr.bf16.gmra.mrb[0].mxu0 %v1859
      %v2236 = vpop.f32.mrb[0].mxu0
      %v2237 = vadd.f32 %v2028, %v2236
      %v2238 = vpop.f32.mrb[0].mxu0
      %v2239 = vpop.f32.mrb[0].mxu0
      %v2240 = vadd.f32 %v2031, %v2239
      %v2241 = vpop.f32.mrb[0].mxu0
      %2242 = vmatprep.mubr.bf16.mxu0 0
      %2243 = vmatmul.mubr.bf16.gmra.mrb[0].mxu0 %v1860
      %v2244 = vpop.f32.mrb[0].mxu0
      %v2245 = vadd.f32 %v2036, %v2244
      %v2246 = vpop.f32.mrb[0].mxu0
      %v2247 = vpop.f32.mrb[0].mxu0
      %v2248 = vadd.f32 %v2039, %v2247
      %v2249 = vpop.f32.mrb[0].mxu0
      %2250 = vmatprep.mubr.bf16.mxu0 0
      %2251 = vmatmul.mubr.bf16.gmra.mrb[0].mxu0 %v1861
      %v2252 = vpop.f32.mrb[0].mxu0
      %v2253 = vadd.f32 %v2044, %v2252
      %v2254 = vpop.f32.mrb[0].mxu0
      %v2255 = vpop.f32.mrb[0].mxu0
      %v2256 = vadd.f32 %v2047, %v2255
      %v2257 = vpop.f32.mrb[0].mxu0
      %2258 = vmatprep.mubr.bf16.mxu0 0
      %2259 = vmatmul.mubr.bf16.gmra.mrb[0].mxu0 %v1862
      %v2260 = vpop.f32.mrb[0].mxu0
      %v2261 = vadd.f32 %v2052, %v2260
      %v2262 = vpop.f32.mrb[0].mxu0
      %v2263 = vpop.f32.mrb[0].mxu0
      %v2264 = vadd.f32 %v2055, %v2263
      %v2265 = vpop.f32.mrb[0].mxu0
      %2266 = vmatprep.mubr.bf16.mxu0 0
      %2267 = vmatmul.mubr.bf16.gmra.mrb[0].mxu0 %v1863
      %v2268 = vpop.f32.mrb[0].mxu0
      %v2269 = vadd.f32 %v2060, %v2268
      %v2270 = vpop.f32.mrb[0].mxu0
      %v2271 = vpop.f32.mrb[0].mxu0
      %v2272 = vadd.f32 %v2063, %v2271
      %v2273 = vpop.f32.mrb[0].mxu0
      %2274 = vmatprep.mubr.bf16.mxu0 0
      %2275 = vmatmul.mubr.bf16.gmra.mrb[0].mxu0 %v1864
      %v2276 = vpop.f32.mrb[0].mxu0
      %v2277 = vadd.f32 %v2068, %v2276
      %v2278 = vpop.f32.mrb[0].mxu0
      %v2279 = vpop.f32.mrb[0].mxu0
      %v2280 = vadd.f32 %v2071, %v2279
      %v2281 = vpop.f32.mrb[0].mxu0
      %2282 = vmatprep.mubr.bf16.mxu0 0
      %2283 = vmatmul.mubr.bf16.gmra.mrb[0].mxu0 %v1865
      %v2284 = vpop.f32.mrb[0].mxu0
      %v2285 = vadd.f32 %v2076, %v2284
      %v2286 = vpop.f32.mrb[0].mxu0
      %v2287 = vpop.f32.mrb[0].mxu0
      %v2288 = vadd.f32 %v2079, %v2287
      %v2289 = vpop.f32.mrb[0].mxu0
      %2290 = vmatprep.mubr.bf16.mxu0 0
      %2291 = vmatmul.mubr.bf16.gmra.mrb[0].mxu0 %v1866
      %v2292 = vpop.f32.mrb[0].mxu0
      %v2293 = vadd.f32 %v2084, %v2292
      %v2294 = vpop.f32.mrb[0].mxu0
      %v2295 = vpop.f32.mrb[0].mxu0
      %v2296 = vadd.f32 %v2087, %v2295
      %v2297 = vpop.f32.mrb[0].mxu0
      %2298 = vmatprep.mubr.bf16.mxu0 0
      %2299 = vmatmul.mubr.bf16.gmra.mrb[0].mxu0 %v1867
      %v2300 = vpop.f32.mrb[0].mxu0
      %v2301 = vadd.f32 %v2092, %v2300
      %v2302 = vpop.f32.mrb[0].mxu0
      %v2303 = vpop.f32.mrb[0].mxu0
      %v2304 = vadd.f32 %v2095, %v2303
      %v2305 = vpop.f32.mrb[0].mxu0
      %2306 = vmatprep.mubr.bf16.mxu0 0
      %2307 = vmatmul.mubr.bf16.gmra.mrb[0].mxu0 %v1868
      %v2308 = vpop.f32.mrb[0].mxu0
      %v2309 = vadd.f32 %v2100, %v2308
      %v2310 = vpop.f32.mrb[0].mxu0
      %v2311 = vpop.f32.mrb[0].mxu0
      %v2312 = vadd.f32 %v2103, %v2311
      %v2313 = vpop.f32.mrb[0].mxu0
      %2314 = vmatprep.mubr.bf16.mxu0 0
      %2315 = vmatmul.mubr.bf16.gmra.mrb[0].mxu0 %v1869
      %v2316 = vpop.f32.mrb[0].mxu0
      %v2317 = vadd.f32 %v2108, %v2316
      %v2318 = vpop.f32.mrb[0].mxu0
      %v2319 = vpop.f32.mrb[0].mxu0
      %v2320 = vadd.f32 %v2111, %v2319
      %v2321 = vpop.f32.mrb[0].mxu0
      %2322 = vmatprep.mubr.bf16.mxu0 0
      %2323 = vmatmul.mubr.bf16.gmra.mrb[0].mxu0 %v1870
      %v2324 = vpop.f32.mrb[0].mxu0
      %v2325 = vadd.f32 %v2116, %v2324
      %v2326 = vpop.f32.mrb[0].mxu0
      %v2327 = vpop.f32.mrb[0].mxu0
      %v2328 = vadd.f32 %v2119, %v2327
      %v2329 = vpop.f32.mrb[0].mxu0
      %2330 = vmatprep.mubr.bf16.mxu0 0
      %2331 = vmatmul.mubr.bf16.gmra.mrb[0].mxu0 %v1871
      %v2332 = vpop.f32.mrb[0].mxu0
      %v2333 = vadd.f32 %v2124, %v2332
      %v2334 = vpop.f32.mrb[0].mxu0
      %v2335 = vpop.f32.mrb[0].mxu0
      %v2336 = vadd.f32 %v2127, %v2335
      %v2337 = vpop.f32.mrb[0].mxu0
      %2338 = vdwg.mxu0
      %v2339 = vld [vmem:[#allocation4] sm:$0xff]
      %v2340 = vld [vmem:[#allocation4 + $0x8] sm:$0xff]
      %v2341 = vld [vmem:[#allocation4 + $0x10] sm:$0xff]
      %v2342 = vld [vmem:[#allocation4 + $0x18] sm:$0xff]
      %v2343 = vld [vmem:[#allocation4 + $0x20] sm:$0xff]
      %v2344 = vld [vmem:[#allocation4 + $0x28] sm:$0xff]
      %v2345 = vld [vmem:[#allocation4 + $0x30] sm:$0xff]
      %v2346 = vld [vmem:[#allocation4 + $0x38] sm:$0xff]
      %v2347 = vld [vmem:[#allocation4 + $0x40] sm:$0xff]
      %v2348 = vld [vmem:[#allocation4 + $0x48] sm:$0xff]
      %v2349 = vld [vmem:[#allocation4 + $0x50] sm:$0xff]
      %v2350 = vld [vmem:[#allocation4 + $0x58] sm:$0xff]
      %v2351 = vld [vmem:[#allocation4 + $0x60] sm:$0xff]
      %v2352 = vld [vmem:[#allocation4 + $0x68] sm:$0xff]
      %v2353 = vld [vmem:[#allocation4 + $0x70] sm:$0xff]
      %v2354 = vld [vmem:[#allocation4 + $0x78] sm:$0xff]
      %s2355 = scalar_lea.vmem %s3, 128
      %v2356 = vld [vmem:[%s2355] sm:$0xf]
      %v2357 = vld [vmem:[%s2355 + $0x4] sm:$0xf]
      %v2358 = vld [vmem:[%s2355 + $0x8] sm:$0xf]
      %v2359 = vld [vmem:[%s2355 + $0xc] sm:$0xf]
      %v2360 = vld [vmem:[%s2355 + $0x10] sm:$0xf]
      %v2361 = vld [vmem:[%s2355 + $0x14] sm:$0xf]
      %v2362 = vld [vmem:[%s2355 + $0x18] sm:$0xf]
      %v2363 = vld [vmem:[%s2355 + $0x1c] sm:$0xf]
      %v2364 = vld [vmem:[%s2355 + $0x20] sm:$0xf]
      %v2365 = vld [vmem:[%s2355 + $0x24] sm:$0xf]
      %v2366 = vld [vmem:[%s2355 + $0x28] sm:$0xf]
      %v2367 = vld [vmem:[%s2355 + $0x2c] sm:$0xf]
      %v2368 = vld [vmem:[%s2355 + $0x30] sm:$0xf]
      %v2369 = vld [vmem:[%s2355 + $0x34] sm:$0xf]
      %v2370 = vld [vmem:[%s2355 + $0x38] sm:$0xf]
      %v2371 = vld [vmem:[%s2355 + $0x3c] sm:$0xf]
      %v2388 = vunpack.c.l.b16 %v2356
      %v2389 = vunpack.c.l.b16 %v2357
      %v2390 = vunpack.c.l.b16 %v2358
      %v2391 = vunpack.c.l.b16 %v2359
      %v2392 = vunpack.c.l.b16 %v2360
      %v2393 = vunpack.c.l.b16 %v2361
      %v2394 = vunpack.c.l.b16 %v2362
      %v2395 = vunpack.c.l.b16 %v2363
      %v2396 = vunpack.c.l.b16 %v2364
      %v2397 = vunpack.c.l.b16 %v2365
      %v2398 = vunpack.c.l.b16 %v2366
      %v2399 = vunpack.c.l.b16 %v2367
      %v2400 = vunpack.c.l.b16 %v2368
      %v2401 = vunpack.c.l.b16 %v2369
      %v2402 = vunpack.c.l.b16 %v2370
      %v2403 = vunpack.c.l.b16 %v2371
      %v2404 = vpack.c.b16 %v2389, %v2388
      %v2405 = vpack.c.b16 %v2391, %v2390
      %v2406 = vpack.c.b16 %v2393, %v2392
      %v2407 = vpack.c.b16 %v2395, %v2394
      %v2408 = vpack.c.b16 %v2397, %v2396
      %v2409 = vpack.c.b16 %v2399, %v2398
      %v2410 = vpack.c.b16 %v2401, %v2400
      %v2411 = vpack.c.b16 %v2403, %v2402
      %2420 = vmatprep.subr.bf16.mxu0 0
      %2421 = vmatpush1.bf16.msra.mxu0 %v2404
      %2422 = vmatprep.subr.bf16.mxu0 0
      %2423 = vmatpush1.bf16.msra.mxu0 %v2405
      %2424 = vmatprep.subr.bf16.mxu0 0
      %2425 = vmatpush1.bf16.msra.mxu0 %v2406
      %2426 = vmatprep.subr.bf16.mxu0 0
      %2427 = vmatpush1.bf16.msra.mxu0 %v2407
      %2428 = vmatprep.subr.bf16.mxu0 0
      %2429 = vmatpush1.bf16.msra.mxu0 %v2408
      %2430 = vmatprep.subr.bf16.mxu0 0
      %2431 = vmatpush1.bf16.msra.mxu0 %v2409
      %2432 = vmatprep.subr.bf16.mxu0 0
      %2433 = vmatpush1.bf16.msra.mxu0 %v2410
      %2434 = vmatprep.subr.bf16.mxu0 0
      %2435 = vmatpush1.bf16.msra.mxu0 %v2411
      %2436 = vmatprep.subr.bf16.mxu0 0
      %2437 = vmatpush1.bf16.msra.mxu0 0
      %2438 = vmatprep.subr.bf16.mxu0 0
      %2439 = vmatpush1.bf16.msra.mxu0 0
      %2440 = vmatprep.subr.bf16.mxu0 0
      %2441 = vmatpush1.bf16.msra.mxu0 0
      %2442 = vmatprep.subr.bf16.mxu0 0
      %2443 = vmatpush1.bf16.msra.mxu0 0
      %2444 = vmatprep.subr.bf16.mxu0 0
      %2445 = vmatpush1.bf16.msra.mxu0 0
      %2446 = vmatprep.subr.bf16.mxu0 0
      %2447 = vmatpush1.bf16.msra.mxu0 0
      %2448 = vmatprep.subr.bf16.mxu0 0
      %2449 = vmatpush1.bf16.msra.mxu0 0
      %2450 = vmatprep.subr.bf16.mxu0 0
      %2451 = vmatpush1.bf16.msra.mxu0 0
      %2452 = vmatprep.mubr.bf16.mxu0 0
      %2453 = vmatmul.mubr.bf16.gmra.mrb[0].mxu0 %v2339
      %v2454 = vpop.f32.mrb[0].mxu0
      %v2455 = vadd.f32 0.0, %v2454
      %v2456 = vpop.f32.mrb[0].mxu0
      %v2457 = vpop.f32.mrb[0].mxu0
      %v2458 = vadd.f32 0.0, %v2457
      %v2459 = vpop.f32.mrb[0].mxu0
      %2460 = vmatprep.mubr.bf16.mxu0 0
      %2461 = vmatmul.mubr.bf16.gmra.mrb[0].mxu0 %v2340
      %v2462 = vpop.f32.mrb[0].mxu0
      %v2463 = vadd.f32 0.0, %v2462
      %v2464 = vpop.f32.mrb[0].mxu0
      %v2465 = vpop.f32.mrb[0].mxu0
      %v2466 = vadd.f32 0.0, %v2465
      %v2467 = vpop.f32.mrb[0].mxu0
      %2468 = vmatprep.mubr.bf16.mxu0 0
      %2469 = vmatmul.mubr.bf16.gmra.mrb[0].mxu0 %v2341
      %v2470 = vpop.f32.mrb[0].mxu0
      %v2471 = vadd.f32 0.0, %v2470
      %v2472 = vpop.f32.mrb[0].mxu0
      %v2473 = vpop.f32.mrb[0].mxu0
      %v2474 = vadd.f32 0.0, %v2473
      %v2475 = vpop.f32.mrb[0].mxu0
      %2476 = vmatprep.mubr.bf16.mxu0 0
      %2477 = vmatmul.mubr.bf16.gmra.mrb[0].mxu0 %v2342
      %v2478 = vpop.f32.mrb[0].mxu0
      %v2479 = vadd.f32 0.0, %v2478
      %v2480 = vpop.f32.mrb[0].mxu0
      %v2481 = vpop.f32.mrb[0].mxu0
      %v2482 = vadd.f32 0.0, %v2481
      %v2483 = vpop.f32.mrb[0].mxu0
      %2484 = vmatprep.mubr.bf16.mxu0 0
      %2485 = vmatmul.mubr.bf16.gmra.mrb[0].mxu0 %v2343
      %v2486 = vpop.f32.mrb[0].mxu0
      %v2487 = vadd.f32 0.0, %v2486
      %v2488 = vpop.f32.mrb[0].mxu0
      %v2489 = vpop.f32.mrb[0].mxu0
      %v2490 = vadd.f32 0.0, %v2489
      %v2491 = vpop.f32.mrb[0].mxu0
      %2492 = vmatprep.mubr.bf16.mxu0 0
      %2493 = vmatmul.mubr.bf16.gmra.mrb[0].mxu0 %v2344
      %v2494 = vpop.f32.mrb[0].mxu0
      %v2495 = vadd.f32 0.0, %v2494
      %v2496 = vpop.f32.mrb[0].mxu0
      %v2497 = vpop.f32.mrb[0].mxu0
      %v2498 = vadd.f32 0.0, %v2497
      %v2499 = vpop.f32.mrb[0].mxu0
      %2500 = vmatprep.mubr.bf16.mxu0 0
      %2501 = vmatmul.mubr.bf16.gmra.mrb[0].mxu0 %v2345
      %v2502 = vpop.f32.mrb[0].mxu0
      %v2503 = vadd.f32 0.0, %v2502
      %v2504 = vpop.f32.mrb[0].mxu0
      %v2505 = vpop.f32.mrb[0].mxu0
      %v2506 = vadd.f32 0.0, %v2505
      %v2507 = vpop.f32.mrb[0].mxu0
      %2508 = vmatprep.mubr.bf16.mxu0 0
      %2509 = vmatmul.mubr.bf16.gmra.mrb[0].mxu0 %v2346
      %v2510 = vpop.f32.mrb[0].mxu0
      %v2511 = vadd.f32 0.0, %v2510
      %v2512 = vpop.f32.mrb[0].mxu0
      %v2513 = vpop.f32.mrb[0].mxu0
      %v2514 = vadd.f32 0.0, %v2513
      %v2515 = vpop.f32.mrb[0].mxu0
      %2516 = vmatprep.mubr.bf16.mxu0 0
      %2517 = vmatmul.mubr.bf16.gmra.mrb[0].mxu0 %v2347
      %v2518 = vpop.f32.mrb[0].mxu0
      %v2519 = vadd.f32 0.0, %v2518
      %v2520 = vpop.f32.mrb[0].mxu0
      %v2521 = vpop.f32.mrb[0].mxu0
      %v2522 = vadd.f32 0.0, %v2521
      %v2523 = vpop.f32.mrb[0].mxu0
      %2524 = vmatprep.mubr.bf16.mxu0 0
      %2525 = vmatmul.mubr.bf16.gmra.mrb[0].mxu0 %v2348
      %v2526 = vpop.f32.mrb[0].mxu0
      %v2527 = vadd.f32 0.0, %v2526
      %v2528 = vpop.f32.mrb[0].mxu0
      %v2529 = vpop.f32.mrb[0].mxu0
      %v2530 = vadd.f32 0.0, %v2529
      %v2531 = vpop.f32.mrb[0].mxu0
      %2532 = vmatprep.mubr.bf16.mxu0 0
      %2533 = vmatmul.mubr.bf16.gmra.mrb[0].mxu0 %v2349
      %v2534 = vpop.f32.mrb[0].mxu0
      %v2535 = vadd.f32 0.0, %v2534
      %v2536 = vpop.f32.mrb[0].mxu0
      %v2537 = vpop.f32.mrb[0].mxu0
      %v2538 = vadd.f32 0.0, %v2537
      %v2539 = vpop.f32.mrb[0].mxu0
      %2540 = vmatprep.mubr.bf16.mxu0 0
      %2541 = vmatmul.mubr.bf16.gmra.mrb[0].mxu0 %v2350
      %v2542 = vpop.f32.mrb[0].mxu0
      %v2543 = vadd.f32 0.0, %v2542
      %v2544 = vpop.f32.mrb[0].mxu0
      %v2545 = vpop.f32.mrb[0].mxu0
      %v2546 = vadd.f32 0.0, %v2545
      %v2547 = vpop.f32.mrb[0].mxu0
      %2548 = vmatprep.mubr.bf16.mxu0 0
      %2549 = vmatmul.mubr.bf16.gmra.mrb[0].mxu0 %v2351
      %v2550 = vpop.f32.mrb[0].mxu0
      %v2551 = vadd.f32 0.0, %v2550
      %v2552 = vpop.f32.mrb[0].mxu0
      %v2553 = vpop.f32.mrb[0].mxu0
      %v2554 = vadd.f32 0.0, %v2553
      %v2555 = vpop.f32.mrb[0].mxu0
      %2556 = vmatprep.mubr.bf16.mxu0 0
      %2557 = vmatmul.mubr.bf16.gmra.mrb[0].mxu0 %v2352
      %v2558 = vpop.f32.mrb[0].mxu0
      %v2559 = vadd.f32 0.0, %v2558
      %v2560 = vpop.f32.mrb[0].mxu0
      %v2561 = vpop.f32.mrb[0].mxu0
      %v2562 = vadd.f32 0.0, %v2561
      %v2563 = vpop.f32.mrb[0].mxu0
      %2564 = vmatprep.mubr.bf16.mxu0 0
      %2565 = vmatmul.mubr.bf16.gmra.mrb[0].mxu0 %v2353
      %v2566 = vpop.f32.mrb[0].mxu0
      %v2567 = vadd.f32 0.0, %v2566
      %v2568 = vpop.f32.mrb[0].mxu0
      %v2569 = vpop.f32.mrb[0].mxu0
      %v2570 = vadd.f32 0.0, %v2569
      %v2571 = vpop.f32.mrb[0].mxu0
      %2572 = vmatprep.mubr.bf16.mxu0 0
      %2573 = vmatmul.mubr.bf16.gmra.mrb[0].mxu0 %v2354
      %v2574 = vpop.f32.mrb[0].mxu0
      %v2575 = vadd.f32 0.0, %v2574
      %v2576 = vpop.f32.mrb[0].mxu0
      %v2577 = vpop.f32.mrb[0].mxu0
      %v2578 = vadd.f32 0.0, %v2577
      %v2579 = vpop.f32.mrb[0].mxu0
      %2580 = vdwg.mxu0
      %v2581 = vadd.f32 %v2213, %v2455
      %v2582 = vadd.f32 %v2216, %v2458
      %v2583 = vadd.f32 %v2221, %v2463
      %v2584 = vadd.f32 %v2224, %v2466
      %v2585 = vadd.f32 %v2229, %v2471
      %v2586 = vadd.f32 %v2232, %v2474
      %v2587 = vadd.f32 %v2237, %v2479
      %v2588 = vadd.f32 %v2240, %v2482
      %v2589 = vadd.f32 %v2245, %v2487
      %v2590 = vadd.f32 %v2248, %v2490
      %v2591 = vadd.f32 %v2253, %v2495
      %v2592 = vadd.f32 %v2256, %v2498
      %v2593 = vadd.f32 %v2261, %v2503
      %v2594 = vadd.f32 %v2264, %v2506
      %v2595 = vadd.f32 %v2269, %v2511
      %v2596 = vadd.f32 %v2272, %v2514
      %v2597 = vadd.f32 %v2277, %v2519
      %v2598 = vadd.f32 %v2280, %v2522
      %v2599 = vadd.f32 %v2285, %v2527
      %v2600 = vadd.f32 %v2288, %v2530
      %v2601 = vadd.f32 %v2293, %v2535
      %v2602 = vadd.f32 %v2296, %v2538
      %v2603 = vadd.f32 %v2301, %v2543
      %v2604 = vadd.f32 %v2304, %v2546
      %v2605 = vadd.f32 %v2309, %v2551
      %v2606 = vadd.f32 %v2312, %v2554
      %v2607 = vadd.f32 %v2317, %v2559
      %v2608 = vadd.f32 %v2320, %v2562
      %v2609 = vadd.f32 %v2325, %v2567
      %v2610 = vadd.f32 %v2328, %v2570
      %v2611 = vadd.f32 %v2333, %v2575
      %v2612 = vadd.f32 %v2336, %v2578
      %v2613 = vld [vmem:[#allocation2 + $0x8] sm:$0xff]
      %v2614 = vld [vmem:[#allocation2 + $0x10] sm:$0xff]
      %v2615 = vld [vmem:[#allocation2 + $0x18] sm:$0xff]
      %v2616 = vld [vmem:[#allocation2 + $0x20] sm:$0xff]
      %v2617 = vld [vmem:[#allocation2 + $0x28] sm:$0xff]
      %v2618 = vld [vmem:[#allocation2 + $0x30] sm:$0xff]
      %v2619 = vld [vmem:[#allocation2 + $0x38] sm:$0xff]
      %v2620 = vld [vmem:[#allocation2 + $0x40] sm:$0xff]
      %v2621 = vld [vmem:[#allocation2 + $0x48] sm:$0xff]
      %v2622 = vld [vmem:[#allocation2 + $0x50] sm:$0xff]
      %v2623 = vld [vmem:[#allocation2 + $0x58] sm:$0xff]
      %v2624 = vld [vmem:[#allocation2 + $0x60] sm:$0xff]
      %v2625 = vld [vmem:[#allocation2 + $0x68] sm:$0xff]
      %v2626 = vld [vmem:[#allocation2 + $0x70] sm:$0xff]
      %v2627 = vld [vmem:[#allocation2 + $0x78] sm:$0xff]
      %v2628 = vld [vmem:[#allocation2 + $0x80] sm:$0xff]
      %s2629 = scalar_lea.vmem %s3, 192
      %v2630 = vld [vmem:[%s2629] sm:$0xf]
      %v2631 = vld [vmem:[%s2629 + $0x4] sm:$0xf]
      %v2632 = vld [vmem:[%s2629 + $0x8] sm:$0xf]
      %v2633 = vld [vmem:[%s2629 + $0xc] sm:$0xf]
      %v2634 = vld [vmem:[%s2629 + $0x10] sm:$0xf]
      %v2635 = vld [vmem:[%s2629 + $0x14] sm:$0xf]
      %v2636 = vld [vmem:[%s2629 + $0x18] sm:$0xf]
      %v2637 = vld [vmem:[%s2629 + $0x1c] sm:$0xf]
      %v2638 = vld [vmem:[%s2629 + $0x20] sm:$0xf]
      %v2639 = vld [vmem:[%s2629 + $0x24] sm:$0xf]
      %v2640 = vld [vmem:[%s2629 + $0x28] sm:$0xf]
      %v2641 = vld [vmem:[%s2629 + $0x2c] sm:$0xf]
      %v2642 = vld [vmem:[%s2629 + $0x30] sm:$0xf]
      %v2643 = vld [vmem:[%s2629 + $0x34] sm:$0xf]
      %v2644 = vld [vmem:[%s2629 + $0x38] sm:$0xf]
      %v2645 = vld [vmem:[%s2629 + $0x3c] sm:$0xf]
      %v2662 = vunpack.c.l.b16 %v2630
      %v2663 = vunpack.c.l.b16 %v2631
      %v2664 = vunpack.c.l.b16 %v2632
      %v2665 = vunpack.c.l.b16 %v2633
      %v2666 = vunpack.c.l.b16 %v2634
      %v2667 = vunpack.c.l.b16 %v2635
      %v2668 = vunpack.c.l.b16 %v2636
      %v2669 = vunpack.c.l.b16 %v2637
      %v2670 = vunpack.c.l.b16 %v2638
      %v2671 = vunpack.c.l.b16 %v2639
      %v2672 = vunpack.c.l.b16 %v2640
      %v2673 = vunpack.c.l.b16 %v2641
      %v2674 = vunpack.c.l.b16 %v2642
      %v2675 = vunpack.c.l.b16 %v2643
      %v2676 = vunpack.c.l.b16 %v2644
      %v2677 = vunpack.c.l.b16 %v2645
      %v2678 = vpack.c.b16 %v2663, %v2662
      %v2679 = vpack.c.b16 %v2665, %v2664
      %v2680 = vpack.c.b16 %v2667, %v2666
      %v2681 = vpack.c.b16 %v2669, %v2668
      %v2682 = vpack.c.b16 %v2671, %v2670
      %v2683 = vpack.c.b16 %v2673, %v2672
      %v2684 = vpack.c.b16 %v2675, %v2674
      %v2685 = vpack.c.b16 %v2677, %v2676
      %2694 = vmatprep.subr.bf16.mxu0 0
      %2695 = vmatpush1.bf16.msra.mxu0 %v2678
      %2696 = vmatprep.subr.bf16.mxu0 0
      %2697 = vmatpush1.bf16.msra.mxu0 %v2679
      %2698 = vmatprep.subr.bf16.mxu0 0
      %2699 = vmatpush1.bf16.msra.mxu0 %v2680
      %2700 = vmatprep.subr.bf16.mxu0 0
      %2701 = vmatpush1.bf16.msra.mxu0 %v2681
      %2702 = vmatprep.subr.bf16.mxu0 0
      %2703 = vmatpush1.bf16.msra.mxu0 %v2682
      %2704 = vmatprep.subr.bf16.mxu0 0
      %2705 = vmatpush1.bf16.msra.mxu0 %v2683
      %2706 = vmatprep.subr.bf16.mxu0 0
      %2707 = vmatpush1.bf16.msra.mxu0 %v2684
      %2708 = vmatprep.subr.bf16.mxu0 0
      %2709 = vmatpush1.bf16.msra.mxu0 %v2685
      %2710 = vmatprep.subr.bf16.mxu0 0
      %2711 = vmatpush1.bf16.msra.mxu0 0
      %2712 = vmatprep.subr.bf16.mxu0 0
      %2713 = vmatpush1.bf16.msra.mxu0 0
      %2714 = vmatprep.subr.bf16.mxu0 0
      %2715 = vmatpush1.bf16.msra.mxu0 0
      %2716 = vmatprep.subr.bf16.mxu0 0
      %2717 = vmatpush1.bf16.msra.mxu0 0
      %2718 = vmatprep.subr.bf16.mxu0 0
      %2719 = vmatpush1.bf16.msra.mxu0 0
      %2720 = vmatprep.subr.bf16.mxu0 0
      %2721 = vmatpush1.bf16.msra.mxu0 0
      %2722 = vmatprep.subr.bf16.mxu0 0
      %2723 = vmatpush1.bf16.msra.mxu0 0
      %2724 = vmatprep.subr.bf16.mxu0 0
      %2725 = vmatpush1.bf16.msra.mxu0 0
      %2726 = vmatprep.mubr.bf16.mxu0 0
      %2727 = vmatmul.mubr.bf16.gmra.mrb[0].mxu0 %v2613
      %v2728 = vpop.f32.mrb[0].mxu0
      %v2729 = vadd.f32 0.0, %v2728
      %v2730 = vpop.f32.mrb[0].mxu0
      %v2731 = vpop.f32.mrb[0].mxu0
      %v2732 = vadd.f32 0.0, %v2731
      %v2733 = vpop.f32.mrb[0].mxu0
      %2734 = vmatprep.mubr.bf16.mxu0 0
      %2735 = vmatmul.mubr.bf16.gmra.mrb[0].mxu0 %v2614
      %v2736 = vpop.f32.mrb[0].mxu0
      %v2737 = vadd.f32 0.0, %v2736
      %v2738 = vpop.f32.mrb[0].mxu0
      %v2739 = vpop.f32.mrb[0].mxu0
      %v2740 = vadd.f32 0.0, %v2739
      %v2741 = vpop.f32.mrb[0].mxu0
      %2742 = vmatprep.mubr.bf16.mxu0 0
      %2743 = vmatmul.mubr.bf16.gmra.mrb[0].mxu0 %v2615
      %v2744 = vpop.f32.mrb[0].mxu0
      %v2745 = vadd.f32 0.0, %v2744
      %v2746 = vpop.f32.mrb[0].mxu0
      %v2747 = vpop.f32.mrb[0].mxu0
      %v2748 = vadd.f32 0.0, %v2747
      %v2749 = vpop.f32.mrb[0].mxu0
      %2750 = vmatprep.mubr.bf16.mxu0 0
      %2751 = vmatmul.mubr.bf16.gmra.mrb[0].mxu0 %v2616
      %v2752 = vpop.f32.mrb[0].mxu0
      %v2753 = vadd.f32 0.0, %v2752
      %v2754 = vpop.f32.mrb[0].mxu0
      %v2755 = vpop.f32.mrb[0].mxu0
      %v2756 = vadd.f32 0.0, %v2755
      %v2757 = vpop.f32.mrb[0].mxu0
      %2758 = vmatprep.mubr.bf16.mxu0 0
      %2759 = vmatmul.mubr.bf16.gmra.mrb[0].mxu0 %v2617
      %v2760 = vpop.f32.mrb[0].mxu0
      %v2761 = vadd.f32 0.0, %v2760
      %v2762 = vpop.f32.mrb[0].mxu0
      %v2763 = vpop.f32.mrb[0].mxu0
      %v2764 = vadd.f32 0.0, %v2763
      %v2765 = vpop.f32.mrb[0].mxu0
      %2766 = vmatprep.mubr.bf16.mxu0 0
      %2767 = vmatmul.mubr.bf16.gmra.mrb[0].mxu0 %v2618
      %v2768 = vpop.f32.mrb[0].mxu0
      %v2769 = vadd.f32 0.0, %v2768
      %v2770 = vpop.f32.mrb[0].mxu0
      %v2771 = vpop.f32.mrb[0].mxu0
      %v2772 = vadd.f32 0.0, %v2771
      %v2773 = vpop.f32.mrb[0].mxu0
      %2774 = vmatprep.mubr.bf16.mxu0 0
      %2775 = vmatmul.mubr.bf16.gmra.mrb[0].mxu0 %v2619
      %v2776 = vpop.f32.mrb[0].mxu0
      %v2777 = vadd.f32 0.0, %v2776
      %v2778 = vpop.f32.mrb[0].mxu0
      %v2779 = vpop.f32.mrb[0].mxu0
      %v2780 = vadd.f32 0.0, %v2779
      %v2781 = vpop.f32.mrb[0].mxu0
      %2782 = vmatprep.mubr.bf16.mxu0 0
      %2783 = vmatmul.mubr.bf16.gmra.mrb[0].mxu0 %v2620
      %v2784 = vpop.f32.mrb[0].mxu0
      %v2785 = vadd.f32 0.0, %v2784
      %v2786 = vpop.f32.mrb[0].mxu0
      %v2787 = vpop.f32.mrb[0].mxu0
      %v2788 = vadd.f32 0.0, %v2787
      %v2789 = vpop.f32.mrb[0].mxu0
      %2790 = vmatprep.mubr.bf16.mxu0 0
      %2791 = vmatmul.mubr.bf16.gmra.mrb[0].mxu0 %v2621
      %v2792 = vpop.f32.mrb[0].mxu0
      %v2793 = vadd.f32 0.0, %v2792
      %v2794 = vpop.f32.mrb[0].mxu0
      %v2795 = vpop.f32.mrb[0].mxu0
      %v2796 = vadd.f32 0.0, %v2795
      %v2797 = vpop.f32.mrb[0].mxu0
      %2798 = vmatprep.mubr.bf16.mxu0 0
      %2799 = vmatmul.mubr.bf16.gmra.mrb[0].mxu0 %v2622
      %v2800 = vpop.f32.mrb[0].mxu0
      %v2801 = vadd.f32 0.0, %v2800
      %v2802 = vpop.f32.mrb[0].mxu0
      %v2803 = vpop.f32.mrb[0].mxu0
      %v2804 = vadd.f32 0.0, %v2803
      %v2805 = vpop.f32.mrb[0].mxu0
      %2806 = vmatprep.mubr.bf16.mxu0 0
      %2807 = vmatmul.mubr.bf16.gmra.mrb[0].mxu0 %v2623
      %v2808 = vpop.f32.mrb[0].mxu0
      %v2809 = vadd.f32 0.0, %v2808
      %v2810 = vpop.f32.mrb[0].mxu0
      %v2811 = vpop.f32.mrb[0].mxu0
      %v2812 = vadd.f32 0.0, %v2811
      %v2813 = vpop.f32.mrb[0].mxu0
      %2814 = vmatprep.mubr.bf16.mxu0 0
      %2815 = vmatmul.mubr.bf16.gmra.mrb[0].mxu0 %v2624
      %v2816 = vpop.f32.mrb[0].mxu0
      %v2817 = vadd.f32 0.0, %v2816
      %v2818 = vpop.f32.mrb[0].mxu0
      %v2819 = vpop.f32.mrb[0].mxu0
      %v2820 = vadd.f32 0.0, %v2819
      %v2821 = vpop.f32.mrb[0].mxu0
      %2822 = vmatprep.mubr.bf16.mxu0 0
      %2823 = vmatmul.mubr.bf16.gmra.mrb[0].mxu0 %v2625
      %v2824 = vpop.f32.mrb[0].mxu0
      %v2825 = vadd.f32 0.0, %v2824
      %v2826 = vpop.f32.mrb[0].mxu0
      %v2827 = vpop.f32.mrb[0].mxu0
      %v2828 = vadd.f32 0.0, %v2827
      %v2829 = vpop.f32.mrb[0].mxu0
      %2830 = vmatprep.mubr.bf16.mxu0 0
      %2831 = vmatmul.mubr.bf16.gmra.mrb[0].mxu0 %v2626
      %v2832 = vpop.f32.mrb[0].mxu0
      %v2833 = vadd.f32 0.0, %v2832
      %v2834 = vpop.f32.mrb[0].mxu0
      %v2835 = vpop.f32.mrb[0].mxu0
      %v2836 = vadd.f32 0.0, %v2835
      %v2837 = vpop.f32.mrb[0].mxu0
      %2838 = vmatprep.mubr.bf16.mxu0 0
      %2839 = vmatmul.mubr.bf16.gmra.mrb[0].mxu0 %v2627
      %v2840 = vpop.f32.mrb[0].mxu0
      %v2841 = vadd.f32 0.0, %v2840
      %v2842 = vpop.f32.mrb[0].mxu0
      %v2843 = vpop.f32.mrb[0].mxu0
      %v2844 = vadd.f32 0.0, %v2843
      %v2845 = vpop.f32.mrb[0].mxu0
      %2846 = vmatprep.mubr.bf16.mxu0 0
      %2847 = vmatmul.mubr.bf16.gmra.mrb[0].mxu0 %v2628
      %v2848 = vpop.f32.mrb[0].mxu0
      %v2849 = vadd.f32 0.0, %v2848
      %v2850 = vpop.f32.mrb[0].mxu0
      %v2851 = vpop.f32.mrb[0].mxu0
      %v2852 = vadd.f32 0.0, %v2851
      %v2853 = vpop.f32.mrb[0].mxu0
      %2854 = vdwg.mxu0
      %v2855 = vadd.f32 %v2581, %v2729
      %v2856 = vadd.f32 %v2582, %v2732
      %v2857 = vadd.f32 %v2583, %v2737
      %v2858 = vadd.f32 %v2584, %v2740
      %v2859 = vadd.f32 %v2585, %v2745
      %v2860 = vadd.f32 %v2586, %v2748
      %v2861 = vadd.f32 %v2587, %v2753
      %v2862 = vadd.f32 %v2588, %v2756
      %v2863 = vadd.f32 %v2589, %v2761
      %v2864 = vadd.f32 %v2590, %v2764
      %v2865 = vadd.f32 %v2591, %v2769
      %v2866 = vadd.f32 %v2592, %v2772
      %v2867 = vadd.f32 %v2593, %v2777
      %v2868 = vadd.f32 %v2594, %v2780
      %v2869 = vadd.f32 %v2595, %v2785
      %v2870 = vadd.f32 %v2596, %v2788
      %v2871 = vadd.f32 %v2597, %v2793
      %v2872 = vadd.f32 %v2598, %v2796
      %v2873 = vadd.f32 %v2599, %v2801
      %v2874 = vadd.f32 %v2600, %v2804
      %v2875 = vadd.f32 %v2601, %v2809
      %v2876 = vadd.f32 %v2602, %v2812
      %v2877 = vadd.f32 %v2603, %v2817
      %v2878 = vadd.f32 %v2604, %v2820
      %v2879 = vadd.f32 %v2605, %v2825
      %v2880 = vadd.f32 %v2606, %v2828
      %v2881 = vadd.f32 %v2607, %v2833
      %v2882 = vadd.f32 %v2608, %v2836
      %v2883 = vadd.f32 %v2609, %v2841
      %v2884 = vadd.f32 %v2610, %v2844
      %v2885 = vadd.f32 %v2611, %v2849
      %v2886 = vadd.f32 %v2612, %v2852
      %v2887 = vld [vmem:[#allocation3 + $0x8] sm:$0xff]
      %v2888 = vld [vmem:[#allocation3 + $0x10] sm:$0xff]
      %v2889 = vld [vmem:[#allocation3 + $0x18] sm:$0xff]
      %v2890 = vld [vmem:[#allocation3 + $0x20] sm:$0xff]
      %v2891 = vld [vmem:[#allocation3 + $0x28] sm:$0xff]
      %v2892 = vld [vmem:[#allocation3 + $0x30] sm:$0xff]
      %v2893 = vld [vmem:[#allocation3 + $0x38] sm:$0xff]
      %v2894 = vld [vmem:[#allocation3 + $0x40] sm:$0xff]
      %v2895 = vld [vmem:[#allocation3 + $0x48] sm:$0xff]
      %v2896 = vld [vmem:[#allocation3 + $0x50] sm:$0xff]
      %v2897 = vld [vmem:[#allocation3 + $0x58] sm:$0xff]
      %v2898 = vld [vmem:[#allocation3 + $0x60] sm:$0xff]
      %v2899 = vld [vmem:[#allocation3 + $0x68] sm:$0xff]
      %v2900 = vld [vmem:[#allocation3 + $0x70] sm:$0xff]
      %v2901 = vld [vmem:[#allocation3 + $0x78] sm:$0xff]
      %v2902 = vld [vmem:[#allocation3 + $0x80] sm:$0xff]
      %s2903 = scalar_lea.vmem %s3, 256
      %v2904 = vld [vmem:[%s2903] sm:$0xf]
      %v2905 = vld [vmem:[%s2903 + $0x4] sm:$0xf]
      %v2906 = vld [vmem:[%s2903 + $0x8] sm:$0xf]
      %v2907 = vld [vmem:[%s2903 + $0xc] sm:$0xf]
      %v2908 = vld [vmem:[%s2903 + $0x10] sm:$0xf]
      %v2909 = vld [vmem:[%s2903 + $0x14] sm:$0xf]
      %v2910 = vld [vmem:[%s2903 + $0x18] sm:$0xf]
      %v2911 = vld [vmem:[%s2903 + $0x1c] sm:$0xf]
      %v2912 = vld [vmem:[%s2903 + $0x20] sm:$0xf]
      %v2913 = vld [vmem:[%s2903 + $0x24] sm:$0xf]
      %v2914 = vld [vmem:[%s2903 + $0x28] sm:$0xf]
      %v2915 = vld [vmem:[%s2903 + $0x2c] sm:$0xf]
      %v2916 = vld [vmem:[%s2903 + $0x30] sm:$0xf]
      %v2917 = vld [vmem:[%s2903 + $0x34] sm:$0xf]
      %v2918 = vld [vmem:[%s2903 + $0x38] sm:$0xf]
      %v2919 = vld [vmem:[%s2903 + $0x3c] sm:$0xf]
      %v2936 = vunpack.c.l.b16 %v2904
      %v2937 = vunpack.c.l.b16 %v2905
      %v2938 = vunpack.c.l.b16 %v2906
      %v2939 = vunpack.c.l.b16 %v2907
      %v2940 = vunpack.c.l.b16 %v2908
      %v2941 = vunpack.c.l.b16 %v2909
      %v2942 = vunpack.c.l.b16 %v2910
      %v2943 = vunpack.c.l.b16 %v2911
      %v2944 = vunpack.c.l.b16 %v2912
      %v2945 = vunpack.c.l.b16 %v2913
      %v2946 = vunpack.c.l.b16 %v2914
      %v2947 = vunpack.c.l.b16 %v2915
      %v2948 = vunpack.c.l.b16 %v2916
      %v2949 = vunpack.c.l.b16 %v2917
      %v2950 = vunpack.c.l.b16 %v2918
      %v2951 = vunpack.c.l.b16 %v2919
      %v2952 = vpack.c.b16 %v2937, %v2936
      %v2953 = vpack.c.b16 %v2939, %v2938
      %v2954 = vpack.c.b16 %v2941, %v2940
      %v2955 = vpack.c.b16 %v2943, %v2942
      %v2956 = vpack.c.b16 %v2945, %v2944
      %v2957 = vpack.c.b16 %v2947, %v2946
      %v2958 = vpack.c.b16 %v2949, %v2948
      %v2959 = vpack.c.b16 %v2951, %v2950
      %2968 = vmatprep.subr.bf16.mxu0 0
      %2969 = vmatpush1.bf16.msra.mxu0 %v2952
      %2970 = vmatprep.subr.bf16.mxu0 0
      %2971 = vmatpush1.bf16.msra.mxu0 %v2953
      %2972 = vmatprep.subr.bf16.mxu0 0
      %2973 = vmatpush1.bf16.msra.mxu0 %v2954
      %2974 = vmatprep.subr.bf16.mxu0 0
      %2975 = vmatpush1.bf16.msra.mxu0 %v2955
      %2976 = vmatprep.subr.bf16.mxu0 0
      %2977 = vmatpush1.bf16.msra.mxu0 %v2956
      %2978 = vmatprep.subr.bf16.mxu0 0
      %2979 = vmatpush1.bf16.msra.mxu0 %v2957
      %2980 = vmatprep.subr.bf16.mxu0 0
      %2981 = vmatpush1.bf16.msra.mxu0 %v2958
      %2982 = vmatprep.subr.bf16.mxu0 0
      %2983 = vmatpush1.bf16.msra.mxu0 %v2959
      %2984 = vmatprep.subr.bf16.mxu0 0
      %2985 = vmatpush1.bf16.msra.mxu0 0
      %2986 = vmatprep.subr.bf16.mxu0 0
      %2987 = vmatpush1.bf16.msra.mxu0 0
      %2988 = vmatprep.subr.bf16.mxu0 0
      %2989 = vmatpush1.bf16.msra.mxu0 0
      %2990 = vmatprep.subr.bf16.mxu0 0
      %2991 = vmatpush1.bf16.msra.mxu0 0
      %2992 = vmatprep.subr.bf16.mxu0 0
      %2993 = vmatpush1.bf16.msra.mxu0 0
      %2994 = vmatprep.subr.bf16.mxu0 0
      %2995 = vmatpush1.bf16.msra.mxu0 0
      %2996 = vmatprep.subr.bf16.mxu0 0
      %2997 = vmatpush1.bf16.msra.mxu0 0
      %2998 = vmatprep.subr.bf16.mxu0 0
      %2999 = vmatpush1.bf16.msra.mxu0 0
      %3000 = vmatprep.mubr.bf16.mxu0 0
      %3001 = vmatmul.mubr.bf16.gmra.mrb[0].mxu0 %v2887
      %v3002 = vpop.f32.mrb[0].mxu0
      %v3003 = vadd.f32 0.0, %v3002
      %v3004 = vpop.f32.mrb[0].mxu0
      %v3005 = vpop.f32.mrb[0].mxu0
      %v3006 = vadd.f32 0.0, %v3005
      %v3007 = vpop.f32.mrb[0].mxu0
      %3008 = vmatprep.mubr.bf16.mxu0 0
      %3009 = vmatmul.mubr.bf16.gmra.mrb[0].mxu0 %v2888
      %v3010 = vpop.f32.mrb[0].mxu0
      %v3011 = vadd.f32 0.0, %v3010
      %v3012 = vpop.f32.mrb[0].mxu0
      %v3013 = vpop.f32.mrb[0].mxu0
      %v3014 = vadd.f32 0.0, %v3013
      %v3015 = vpop.f32.mrb[0].mxu0
      %3016 = vmatprep.mubr.bf16.mxu0 0
      %3017 = vmatmul.mubr.bf16.gmra.mrb[0].mxu0 %v2889
      %v3018 = vpop.f32.mrb[0].mxu0
      %v3019 = vadd.f32 0.0, %v3018
      %v3020 = vpop.f32.mrb[0].mxu0
      %v3021 = vpop.f32.mrb[0].mxu0
      %v3022 = vadd.f32 0.0, %v3021
      %v3023 = vpop.f32.mrb[0].mxu0
      %3024 = vmatprep.mubr.bf16.mxu0 0
      %3025 = vmatmul.mubr.bf16.gmra.mrb[0].mxu0 %v2890
      %v3026 = vpop.f32.mrb[0].mxu0
      %v3027 = vadd.f32 0.0, %v3026
      %v3028 = vpop.f32.mrb[0].mxu0
      %v3029 = vpop.f32.mrb[0].mxu0
      %v3030 = vadd.f32 0.0, %v3029
      %v3031 = vpop.f32.mrb[0].mxu0
      %3032 = vmatprep.mubr.bf16.mxu0 0
      %3033 = vmatmul.mubr.bf16.gmra.mrb[0].mxu0 %v2891
      %v3034 = vpop.f32.mrb[0].mxu0
      %v3035 = vadd.f32 0.0, %v3034
      %v3036 = vpop.f32.mrb[0].mxu0
      %v3037 = vpop.f32.mrb[0].mxu0
      %v3038 = vadd.f32 0.0, %v3037
      %v3039 = vpop.f32.mrb[0].mxu0
      %3040 = vmatprep.mubr.bf16.mxu0 0
      %3041 = vmatmul.mubr.bf16.gmra.mrb[0].mxu0 %v2892
      %v3042 = vpop.f32.mrb[0].mxu0
      %v3043 = vadd.f32 0.0, %v3042
      %v3044 = vpop.f32.mrb[0].mxu0
      %v3045 = vpop.f32.mrb[0].mxu0
      %v3046 = vadd.f32 0.0, %v3045
      %v3047 = vpop.f32.mrb[0].mxu0
      %3048 = vmatprep.mubr.bf16.mxu0 0
      %3049 = vmatmul.mubr.bf16.gmra.mrb[0].mxu0 %v2893
      %v3050 = vpop.f32.mrb[0].mxu0
      %v3051 = vadd.f32 0.0, %v3050
      %v3052 = vpop.f32.mrb[0].mxu0
      %v3053 = vpop.f32.mrb[0].mxu0
      %v3054 = vadd.f32 0.0, %v3053
      %v3055 = vpop.f32.mrb[0].mxu0
      %3056 = vmatprep.mubr.bf16.mxu0 0
      %3057 = vmatmul.mubr.bf16.gmra.mrb[0].mxu0 %v2894
      %v3058 = vpop.f32.mrb[0].mxu0
      %v3059 = vadd.f32 0.0, %v3058
      %v3060 = vpop.f32.mrb[0].mxu0
      %v3061 = vpop.f32.mrb[0].mxu0
      %v3062 = vadd.f32 0.0, %v3061
      %v3063 = vpop.f32.mrb[0].mxu0
      %3064 = vmatprep.mubr.bf16.mxu0 0
      %3065 = vmatmul.mubr.bf16.gmra.mrb[0].mxu0 %v2895
      %v3066 = vpop.f32.mrb[0].mxu0
      %v3067 = vadd.f32 0.0, %v3066
      %v3068 = vpop.f32.mrb[0].mxu0
      %v3069 = vpop.f32.mrb[0].mxu0
      %v3070 = vadd.f32 0.0, %v3069
      %v3071 = vpop.f32.mrb[0].mxu0
      %3072 = vmatprep.mubr.bf16.mxu0 0
      %3073 = vmatmul.mubr.bf16.gmra.mrb[0].mxu0 %v2896
      %v3074 = vpop.f32.mrb[0].mxu0
      %v3075 = vadd.f32 0.0, %v3074
      %v3076 = vpop.f32.mrb[0].mxu0
      %v3077 = vpop.f32.mrb[0].mxu0
      %v3078 = vadd.f32 0.0, %v3077
      %v3079 = vpop.f32.mrb[0].mxu0
      %3080 = vmatprep.mubr.bf16.mxu0 0
      %3081 = vmatmul.mubr.bf16.gmra.mrb[0].mxu0 %v2897
      %v3082 = vpop.f32.mrb[0].mxu0
      %v3083 = vadd.f32 0.0, %v3082
      %v3084 = vpop.f32.mrb[0].mxu0
      %v3085 = vpop.f32.mrb[0].mxu0
      %v3086 = vadd.f32 0.0, %v3085
      %v3087 = vpop.f32.mrb[0].mxu0
      %3088 = vmatprep.mubr.bf16.mxu0 0
      %3089 = vmatmul.mubr.bf16.gmra.mrb[0].mxu0 %v2898
      %v3090 = vpop.f32.mrb[0].mxu0
      %v3091 = vadd.f32 0.0, %v3090
      %v3092 = vpop.f32.mrb[0].mxu0
      %v3093 = vpop.f32.mrb[0].mxu0
      %v3094 = vadd.f32 0.0, %v3093
      %v3095 = vpop.f32.mrb[0].mxu0
      %3096 = vmatprep.mubr.bf16.mxu0 0
      %3097 = vmatmul.mubr.bf16.gmra.mrb[0].mxu0 %v2899
      %v3098 = vpop.f32.mrb[0].mxu0
      %v3099 = vadd.f32 0.0, %v3098
      %v3100 = vpop.f32.mrb[0].mxu0
      %v3101 = vpop.f32.mrb[0].mxu0
      %v3102 = vadd.f32 0.0, %v3101
      %v3103 = vpop.f32.mrb[0].mxu0
      %3104 = vmatprep.mubr.bf16.mxu0 0
      %3105 = vmatmul.mubr.bf16.gmra.mrb[0].mxu0 %v2900
      %v3106 = vpop.f32.mrb[0].mxu0
      %v3107 = vadd.f32 0.0, %v3106
      %v3108 = vpop.f32.mrb[0].mxu0
      %v3109 = vpop.f32.mrb[0].mxu0
      %v3110 = vadd.f32 0.0, %v3109
      %v3111 = vpop.f32.mrb[0].mxu0
      %3112 = vmatprep.mubr.bf16.mxu0 0
      %3113 = vmatmul.mubr.bf16.gmra.mrb[0].mxu0 %v2901
      %v3114 = vpop.f32.mrb[0].mxu0
      %v3115 = vadd.f32 0.0, %v3114
      %v3116 = vpop.f32.mrb[0].mxu0
      %v3117 = vpop.f32.mrb[0].mxu0
      %v3118 = vadd.f32 0.0, %v3117
      %v3119 = vpop.f32.mrb[0].mxu0
      %3120 = vmatprep.mubr.bf16.mxu0 0
      %3121 = vmatmul.mubr.bf16.gmra.mrb[0].mxu0 %v2902
      %v3122 = vpop.f32.mrb[0].mxu0
      %v3123 = vadd.f32 0.0, %v3122
      %v3124 = vpop.f32.mrb[0].mxu0
      %v3125 = vpop.f32.mrb[0].mxu0
      %v3126 = vadd.f32 0.0, %v3125
      %v3127 = vpop.f32.mrb[0].mxu0
      %3128 = vdwg.mxu0
      %v3129 = vadd.f32 %v2855, %v3003
      %v3130 = vadd.f32 %v2856, %v3006
      %v3131 = vadd.f32 %v2857, %v3011
      %v3132 = vadd.f32 %v2858, %v3014
      %v3133 = vadd.f32 %v2859, %v3019
      %v3134 = vadd.f32 %v2860, %v3022
      %v3135 = vadd.f32 %v2861, %v3027
      %v3136 = vadd.f32 %v2862, %v3030
      %v3137 = vadd.f32 %v2863, %v3035
      %v3138 = vadd.f32 %v2864, %v3038
      %v3139 = vadd.f32 %v2865, %v3043
      %v3140 = vadd.f32 %v2866, %v3046
      %v3141 = vadd.f32 %v2867, %v3051
      %v3142 = vadd.f32 %v2868, %v3054
      %v3143 = vadd.f32 %v2869, %v3059
      %v3144 = vadd.f32 %v2870, %v3062
      %v3145 = vadd.f32 %v2871, %v3067
      %v3146 = vadd.f32 %v2872, %v3070
      %v3147 = vadd.f32 %v2873, %v3075
      %v3148 = vadd.f32 %v2874, %v3078
      %v3149 = vadd.f32 %v2875, %v3083
      %v3150 = vadd.f32 %v2876, %v3086
      %v3151 = vadd.f32 %v2877, %v3091
      %v3152 = vadd.f32 %v2878, %v3094
      %v3153 = vadd.f32 %v2879, %v3099
      %v3154 = vadd.f32 %v2880, %v3102
      %v3155 = vadd.f32 %v2881, %v3107
      %v3156 = vadd.f32 %v2882, %v3110
      %v3157 = vadd.f32 %v2883, %v3115
      %v3158 = vadd.f32 %v2884, %v3118
      %v3159 = vadd.f32 %v2885, %v3123
      %v3160 = vadd.f32 %v2886, %v3126
      %v3161 = vld [vmem:[#allocation4 + $0x8] sm:$0xff]
      %v3162 = vld [vmem:[#allocation4 + $0x10] sm:$0xff]
      %v3163 = vld [vmem:[#allocation4 + $0x18] sm:$0xff]
      %v3164 = vld [vmem:[#allocation4 + $0x20] sm:$0xff]
      %v3165 = vld [vmem:[#allocation4 + $0x28] sm:$0xff]
      %v3166 = vld [vmem:[#allocation4 + $0x30] sm:$0xff]
      %v3167 = vld [vmem:[#allocation4 + $0x38] sm:$0xff]
      %v3168 = vld [vmem:[#allocation4 + $0x40] sm:$0xff]
      %v3169 = vld [vmem:[#allocation4 + $0x48] sm:$0xff]
      %v3170 = vld [vmem:[#allocation4 + $0x50] sm:$0xff]
      %v3171 = vld [vmem:[#allocation4 + $0x58] sm:$0xff]
      %v3172 = vld [vmem:[#allocation4 + $0x60] sm:$0xff]
      %v3173 = vld [vmem:[#allocation4 + $0x68] sm:$0xff]
      %v3174 = vld [vmem:[#allocation4 + $0x70] sm:$0xff]
      %v3175 = vld [vmem:[#allocation4 + $0x78] sm:$0xff]
      %v3176 = vld [vmem:[#allocation4 + $0x80] sm:$0xff]
      %s3177 = scalar_lea.vmem %s3, 320
      %v3178 = vld [vmem:[%s3177] sm:$0xf]
      %v3179 = vld [vmem:[%s3177 + $0x4] sm:$0xf]
      %v3180 = vld [vmem:[%s3177 + $0x8] sm:$0xf]
      %v3181 = vld [vmem:[%s3177 + $0xc] sm:$0xf]
      %v3182 = vld [vmem:[%s3177 + $0x10] sm:$0xf]
      %v3183 = vld [vmem:[%s3177 + $0x14] sm:$0xf]
      %v3184 = vld [vmem:[%s3177 + $0x18] sm:$0xf]
      %v3185 = vld [vmem:[%s3177 + $0x1c] sm:$0xf]
      %v3186 = vld [vmem:[%s3177 + $0x20] sm:$0xf]
      %v3187 = vld [vmem:[%s3177 + $0x24] sm:$0xf]
      %v3188 = vld [vmem:[%s3177 + $0x28] sm:$0xf]
      %v3189 = vld [vmem:[%s3177 + $0x2c] sm:$0xf]
      %v3190 = vld [vmem:[%s3177 + $0x30] sm:$0xf]
      %v3191 = vld [vmem:[%s3177 + $0x34] sm:$0xf]
      %v3192 = vld [vmem:[%s3177 + $0x38] sm:$0xf]
      %v3193 = vld [vmem:[%s3177 + $0x3c] sm:$0xf]
      %v3210 = vunpack.c.l.b16 %v3178
      %v3211 = vunpack.c.l.b16 %v3179
      %v3212 = vunpack.c.l.b16 %v3180
      %v3213 = vunpack.c.l.b16 %v3181
      %v3214 = vunpack.c.l.b16 %v3182
      %v3215 = vunpack.c.l.b16 %v3183
      %v3216 = vunpack.c.l.b16 %v3184
      %v3217 = vunpack.c.l.b16 %v3185
      %v3218 = vunpack.c.l.b16 %v3186
      %v3219 = vunpack.c.l.b16 %v3187
      %v3220 = vunpack.c.l.b16 %v3188
      %v3221 = vunpack.c.l.b16 %v3189
      %v3222 = vunpack.c.l.b16 %v3190
      %v3223 = vunpack.c.l.b16 %v3191
      %v3224 = vunpack.c.l.b16 %v3192
      %v3225 = vunpack.c.l.b16 %v3193
      %v3226 = vpack.c.b16 %v3211, %v3210
      %v3227 = vpack.c.b16 %v3213, %v3212
      %v3228 = vpack.c.b16 %v3215, %v3214
      %v3229 = vpack.c.b16 %v3217, %v3216
      %v3230 = vpack.c.b16 %v3219, %v3218
      %v3231 = vpack.c.b16 %v3221, %v3220
      %v3232 = vpack.c.b16 %v3223, %v3222
      %v3233 = vpack.c.b16 %v3225, %v3224
      %3242 = vmatprep.subr.bf16.mxu0 0
      %3243 = vmatpush1.bf16.msra.mxu0 %v3226
      %3244 = vmatprep.subr.bf16.mxu0 0
      %3245 = vmatpush1.bf16.msra.mxu0 %v3227
      %3246 = vmatprep.subr.bf16.mxu0 0
      %3247 = vmatpush1.bf16.msra.mxu0 %v3228
      %3248 = vmatprep.subr.bf16.mxu0 0
      %3249 = vmatpush1.bf16.msra.mxu0 %v3229
      %3250 = vmatprep.subr.bf16.mxu0 0
      %3251 = vmatpush1.bf16.msra.mxu0 %v3230
      %3252 = vmatprep.subr.bf16.mxu0 0
      %3253 = vmatpush1.bf16.msra.mxu0 %v3231
      %3254 = vmatprep.subr.bf16.mxu0 0
      %3255 = vmatpush1.bf16.msra.mxu0 %v3232
      %3256 = vmatprep.subr.bf16.mxu0 0
      %3257 = vmatpush1.bf16.msra.mxu0 %v3233
      %3258 = vmatprep.subr.bf16.mxu0 0
      %3259 = vmatpush1.bf16.msra.mxu0 0
      %3260 = vmatprep.subr.bf16.mxu0 0
      %3261 = vmatpush1.bf16.msra.mxu0 0
      %3262 = vmatprep.subr.bf16.mxu0 0
      %3263 = vmatpush1.bf16.msra.mxu0 0
      %3264 = vmatprep.subr.bf16.mxu0 0
      %3265 = vmatpush1.bf16.msra.mxu0 0
      %3266 = vmatprep.subr.bf16.mxu0 0
      %3267 = vmatpush1.bf16.msra.mxu0 0
      %3268 = vmatprep.subr.bf16.mxu0 0
      %3269 = vmatpush1.bf16.msra.mxu0 0
      %3270 = vmatprep.subr.bf16.mxu0 0
      %3271 = vmatpush1.bf16.msra.mxu0 0
      %3272 = vmatprep.subr.bf16.mxu0 0
      %3273 = vmatpush1.bf16.msra.mxu0 0
      %3274 = vmatprep.mubr.bf16.mxu0 0
      %3275 = vmatmul.mubr.bf16.gmra.mrb[0].mxu0 %v3161
      %v3276 = vpop.f32.mrb[0].mxu0
      %v3277 = vadd.f32 0.0, %v3276
      %v3278 = vpop.f32.mrb[0].mxu0
      %v3279 = vpop.f32.mrb[0].mxu0
      %v3280 = vadd.f32 0.0, %v3279
      %v3281 = vpop.f32.mrb[0].mxu0
      %3282 = vmatprep.mubr.bf16.mxu0 0
      %3283 = vmatmul.mubr.bf16.gmra.mrb[0].mxu0 %v3162
      %v3284 = vpop.f32.mrb[0].mxu0
      %v3285 = vadd.f32 0.0, %v3284
      %v3286 = vpop.f32.mrb[0].mxu0
      %v3287 = vpop.f32.mrb[0].mxu0
      %v3288 = vadd.f32 0.0, %v3287
      %v3289 = vpop.f32.mrb[0].mxu0
      %3290 = vmatprep.mubr.bf16.mxu0 0
      %3291 = vmatmul.mubr.bf16.gmra.mrb[0].mxu0 %v3163
      %v3292 = vpop.f32.mrb[0].mxu0
      %v3293 = vadd.f32 0.0, %v3292
      %v3294 = vpop.f32.mrb[0].mxu0
      %v3295 = vpop.f32.mrb[0].mxu0
      %v3296 = vadd.f32 0.0, %v3295
      %v3297 = vpop.f32.mrb[0].mxu0
      %3298 = vmatprep.mubr.bf16.mxu0 0
      %3299 = vmatmul.mubr.bf16.gmra.mrb[0].mxu0 %v3164
      %v3300 = vpop.f32.mrb[0].mxu0
      %v3301 = vadd.f32 0.0, %v3300
      %v3302 = vpop.f32.mrb[0].mxu0
      %v3303 = vpop.f32.mrb[0].mxu0
      %v3304 = vadd.f32 0.0, %v3303
      %v3305 = vpop.f32.mrb[0].mxu0
      %3306 = vmatprep.mubr.bf16.mxu0 0
      %3307 = vmatmul.mubr.bf16.gmra.mrb[0].mxu0 %v3165
      %v3308 = vpop.f32.mrb[0].mxu0
      %v3309 = vadd.f32 0.0, %v3308
      %v3310 = vpop.f32.mrb[0].mxu0
      %v3311 = vpop.f32.mrb[0].mxu0
      %v3312 = vadd.f32 0.0, %v3311
      %v3313 = vpop.f32.mrb[0].mxu0
      %3314 = vmatprep.mubr.bf16.mxu0 0
      %3315 = vmatmul.mubr.bf16.gmra.mrb[0].mxu0 %v3166
      %v3316 = vpop.f32.mrb[0].mxu0
      %v3317 = vadd.f32 0.0, %v3316
      %v3318 = vpop.f32.mrb[0].mxu0
      %v3319 = vpop.f32.mrb[0].mxu0
      %v3320 = vadd.f32 0.0, %v3319
      %v3321 = vpop.f32.mrb[0].mxu0
      %3322 = vmatprep.mubr.bf16.mxu0 0
      %3323 = vmatmul.mubr.bf16.gmra.mrb[0].mxu0 %v3167
      %v3324 = vpop.f32.mrb[0].mxu0
      %v3325 = vadd.f32 0.0, %v3324
      %v3326 = vpop.f32.mrb[0].mxu0
      %v3327 = vpop.f32.mrb[0].mxu0
      %v3328 = vadd.f32 0.0, %v3327
      %v3329 = vpop.f32.mrb[0].mxu0
      %3330 = vmatprep.mubr.bf16.mxu0 0
      %3331 = vmatmul.mubr.bf16.gmra.mrb[0].mxu0 %v3168
      %v3332 = vpop.f32.mrb[0].mxu0
      %v3333 = vadd.f32 0.0, %v3332
      %v3334 = vpop.f32.mrb[0].mxu0
      %v3335 = vpop.f32.mrb[0].mxu0
      %v3336 = vadd.f32 0.0, %v3335
      %v3337 = vpop.f32.mrb[0].mxu0
      %3338 = vmatprep.mubr.bf16.mxu0 0
      %3339 = vmatmul.mubr.bf16.gmra.mrb[0].mxu0 %v3169
      %v3340 = vpop.f32.mrb[0].mxu0
      %v3341 = vadd.f32 0.0, %v3340
      %v3342 = vpop.f32.mrb[0].mxu0
      %v3343 = vpop.f32.mrb[0].mxu0
      %v3344 = vadd.f32 0.0, %v3343
      %v3345 = vpop.f32.mrb[0].mxu0
      %3346 = vmatprep.mubr.bf16.mxu0 0
      %3347 = vmatmul.mubr.bf16.gmra.mrb[0].mxu0 %v3170
      %v3348 = vpop.f32.mrb[0].mxu0
      %v3349 = vadd.f32 0.0, %v3348
      %v3350 = vpop.f32.mrb[0].mxu0
      %v3351 = vpop.f32.mrb[0].mxu0
      %v3352 = vadd.f32 0.0, %v3351
      %v3353 = vpop.f32.mrb[0].mxu0
      %3354 = vmatprep.mubr.bf16.mxu0 0
      %3355 = vmatmul.mubr.bf16.gmra.mrb[0].mxu0 %v3171
      %v3356 = vpop.f32.mrb[0].mxu0
      %v3357 = vadd.f32 0.0, %v3356
      %v3358 = vpop.f32.mrb[0].mxu0
      %v3359 = vpop.f32.mrb[0].mxu0
      %v3360 = vadd.f32 0.0, %v3359
      %v3361 = vpop.f32.mrb[0].mxu0
      %3362 = vmatprep.mubr.bf16.mxu0 0
      %3363 = vmatmul.mubr.bf16.gmra.mrb[0].mxu0 %v3172
      %v3364 = vpop.f32.mrb[0].mxu0
      %v3365 = vadd.f32 0.0, %v3364
      %v3366 = vpop.f32.mrb[0].mxu0
      %v3367 = vpop.f32.mrb[0].mxu0
      %v3368 = vadd.f32 0.0, %v3367
      %v3369 = vpop.f32.mrb[0].mxu0
      %3370 = vmatprep.mubr.bf16.mxu0 0
      %3371 = vmatmul.mubr.bf16.gmra.mrb[0].mxu0 %v3173
      %v3372 = vpop.f32.mrb[0].mxu0
      %v3373 = vadd.f32 0.0, %v3372
      %v3374 = vpop.f32.mrb[0].mxu0
      %v3375 = vpop.f32.mrb[0].mxu0
      %v3376 = vadd.f32 0.0, %v3375
      %v3377 = vpop.f32.mrb[0].mxu0
      %3378 = vmatprep.mubr.bf16.mxu0 0
      %3379 = vmatmul.mubr.bf16.gmra.mrb[0].mxu0 %v3174
      %v3380 = vpop.f32.mrb[0].mxu0
      %v3381 = vadd.f32 0.0, %v3380
      %v3382 = vpop.f32.mrb[0].mxu0
      %v3383 = vpop.f32.mrb[0].mxu0
      %v3384 = vadd.f32 0.0, %v3383
      %v3385 = vpop.f32.mrb[0].mxu0
      %3386 = vmatprep.mubr.bf16.mxu0 0
      %3387 = vmatmul.mubr.bf16.gmra.mrb[0].mxu0 %v3175
      %v3388 = vpop.f32.mrb[0].mxu0
      %v3389 = vadd.f32 0.0, %v3388
      %v3390 = vpop.f32.mrb[0].mxu0
      %v3391 = vpop.f32.mrb[0].mxu0
      %v3392 = vadd.f32 0.0, %v3391
      %v3393 = vpop.f32.mrb[0].mxu0
      %3394 = vmatprep.mubr.bf16.mxu0 0
      %3395 = vmatmul.mubr.bf16.gmra.mrb[0].mxu0 %v3176
      %v3396 = vpop.f32.mrb[0].mxu0
      %v3397 = vadd.f32 0.0, %v3396
      %v3398 = vpop.f32.mrb[0].mxu0
      %v3399 = vpop.f32.mrb[0].mxu0
      %v3400 = vadd.f32 0.0, %v3399
      %v3401 = vpop.f32.mrb[0].mxu0
      %3402 = vdwg.mxu0
      %v3403 = vadd.f32 %v3129, %v3277
      %v3404 = vadd.f32 %v3130, %v3280
      %v3405 = vadd.f32 %v3131, %v3285
      %v3406 = vadd.f32 %v3132, %v3288
      %v3407 = vadd.f32 %v3133, %v3293
      %v3408 = vadd.f32 %v3134, %v3296
      %v3409 = vadd.f32 %v3135, %v3301
      %v3410 = vadd.f32 %v3136, %v3304
      %v3411 = vadd.f32 %v3137, %v3309
      %v3412 = vadd.f32 %v3138, %v3312
      %v3413 = vadd.f32 %v3139, %v3317
      %v3414 = vadd.f32 %v3140, %v3320
      %v3415 = vadd.f32 %v3141, %v3325
      %v3416 = vadd.f32 %v3142, %v3328
      %v3417 = vadd.f32 %v3143, %v3333
      %v3418 = vadd.f32 %v3144, %v3336
      %v3419 = vadd.f32 %v3145, %v3341
      %v3420 = vadd.f32 %v3146, %v3344
      %v3421 = vadd.f32 %v3147, %v3349
      %v3422 = vadd.f32 %v3148, %v3352
      %v3423 = vadd.f32 %v3149, %v3357
      %v3424 = vadd.f32 %v3150, %v3360
      %v3425 = vadd.f32 %v3151, %v3365
      %v3426 = vadd.f32 %v3152, %v3368
      %v3427 = vadd.f32 %v3153, %v3373
      %v3428 = vadd.f32 %v3154, %v3376
      %v3429 = vadd.f32 %v3155, %v3381
      %v3430 = vadd.f32 %v3156, %v3384
      %v3431 = vadd.f32 %v3157, %v3389
      %v3432 = vadd.f32 %v3158, %v3392
      %v3433 = vadd.f32 %v3159, %v3397
      %v3434 = vadd.f32 %v3160, %v3400
      %v3435 = vld [vmem:[#allocation2 + $0x10] sm:$0xff]
      %v3436 = vld [vmem:[#allocation2 + $0x18] sm:$0xff]
      %v3437 = vld [vmem:[#allocation2 + $0x20] sm:$0xff]
      %v3438 = vld [vmem:[#allocation2 + $0x28] sm:$0xff]
      %v3439 = vld [vmem:[#allocation2 + $0x30] sm:$0xff]
      %v3440 = vld [vmem:[#allocation2 + $0x38] sm:$0xff]
      %v3441 = vld [vmem:[#allocation2 + $0x40] sm:$0xff]
      %v3442 = vld [vmem:[#allocation2 + $0x48] sm:$0xff]
      %v3443 = vld [vmem:[#allocation2 + $0x50] sm:$0xff]
      %v3444 = vld [vmem:[#allocation2 + $0x58] sm:$0xff]
      %v3445 = vld [vmem:[#allocation2 + $0x60] sm:$0xff]
      %v3446 = vld [vmem:[#allocation2 + $0x68] sm:$0xff]
      %v3447 = vld [vmem:[#allocation2 + $0x70] sm:$0xff]
      %v3448 = vld [vmem:[#allocation2 + $0x78] sm:$0xff]
      %v3449 = vld [vmem:[#allocation2 + $0x80] sm:$0xff]
      %v3450 = vld [vmem:[#allocation2 + $0x88] sm:$0xff]
      %s3451 = scalar_lea.vmem %s3, 384
      %v3452 = vld [vmem:[%s3451] sm:$0xf]
      %v3453 = vld [vmem:[%s3451 + $0x4] sm:$0xf]
      %v3454 = vld [vmem:[%s3451 + $0x8] sm:$0xf]
      %v3455 = vld [vmem:[%s3451 + $0xc] sm:$0xf]
      %v3456 = vld [vmem:[%s3451 + $0x10] sm:$0xf]
      %v3457 = vld [vmem:[%s3451 + $0x14] sm:$0xf]
      %v3458 = vld [vmem:[%s3451 + $0x18] sm:$0xf]
      %v3459 = vld [vmem:[%s3451 + $0x1c] sm:$0xf]
      %v3460 = vld [vmem:[%s3451 + $0x20] sm:$0xf]
      %v3461 = vld [vmem:[%s3451 + $0x24] sm:$0xf]
      %v3462 = vld [vmem:[%s3451 + $0x28] sm:$0xf]
      %v3463 = vld [vmem:[%s3451 + $0x2c] sm:$0xf]
      %v3464 = vld [vmem:[%s3451 + $0x30] sm:$0xf]
      %v3465 = vld [vmem:[%s3451 + $0x34] sm:$0xf]
      %v3466 = vld [vmem:[%s3451 + $0x38] sm:$0xf]
      %v3467 = vld [vmem:[%s3451 + $0x3c] sm:$0xf]
      %v3484 = vunpack.c.l.b16 %v3452
      %v3485 = vunpack.c.l.b16 %v3453
      %v3486 = vunpack.c.l.b16 %v3454
      %v3487 = vunpack.c.l.b16 %v3455
      %v3488 = vunpack.c.l.b16 %v3456
      %v3489 = vunpack.c.l.b16 %v3457
      %v3490 = vunpack.c.l.b16 %v3458
      %v3491 = vunpack.c.l.b16 %v3459
      %v3492 = vunpack.c.l.b16 %v3460
      %v3493 = vunpack.c.l.b16 %v3461
      %v3494 = vunpack.c.l.b16 %v3462
      %v3495 = vunpack.c.l.b16 %v3463
      %v3496 = vunpack.c.l.b16 %v3464
      %v3497 = vunpack.c.l.b16 %v3465
      %v3498 = vunpack.c.l.b16 %v3466
      %v3499 = vunpack.c.l.b16 %v3467
      %v3500 = vpack.c.b16 %v3485, %v3484
      %v3501 = vpack.c.b16 %v3487, %v3486
      %v3502 = vpack.c.b16 %v3489, %v3488
      %v3503 = vpack.c.b16 %v3491, %v3490
      %v3504 = vpack.c.b16 %v3493, %v3492
      %v3505 = vpack.c.b16 %v3495, %v3494
      %v3506 = vpack.c.b16 %v3497, %v3496
      %v3507 = vpack.c.b16 %v3499, %v3498
      %3516 = vmatprep.subr.bf16.mxu0 0
      %3517 = vmatpush1.bf16.msra.mxu0 %v3500
      %3518 = vmatprep.subr.bf16.mxu0 0
      %3519 = vmatpush1.bf16.msra.mxu0 %v3501
      %3520 = vmatprep.subr.bf16.mxu0 0
      %3521 = vmatpush1.bf16.msra.mxu0 %v3502
      %3522 = vmatprep.subr.bf16.mxu0 0
      %3523 = vmatpush1.bf16.msra.mxu0 %v3503
      %3524 = vmatprep.subr.bf16.mxu0 0
      %3525 = vmatpush1.bf16.msra.mxu0 %v3504
      %3526 = vmatprep.subr.bf16.mxu0 0
      %3527 = vmatpush1.bf16.msra.mxu0 %v3505
      %3528 = vmatprep.subr.bf16.mxu0 0
      %3529 = vmatpush1.bf16.msra.mxu0 %v3506
      %3530 = vmatprep.subr.bf16.mxu0 0
      %3531 = vmatpush1.bf16.msra.mxu0 %v3507
      %3532 = vmatprep.subr.bf16.mxu0 0
      %3533 = vmatpush1.bf16.msra.mxu0 0
      %3534 = vmatprep.subr.bf16.mxu0 0
      %3535 = vmatpush1.bf16.msra.mxu0 0
      %3536 = vmatprep.subr.bf16.mxu0 0
      %3537 = vmatpush1.bf16.msra.mxu0 0
      %3538 = vmatprep.subr.bf16.mxu0 0
      %3539 = vmatpush1.bf16.msra.mxu0 0
      %3540 = vmatprep.subr.bf16.mxu0 0
      %3541 = vmatpush1.bf16.msra.mxu0 0
      %3542 = vmatprep.subr.bf16.mxu0 0
      %3543 = vmatpush1.bf16.msra.mxu0 0
      %3544 = vmatprep.subr.bf16.mxu0 0
      %3545 = vmatpush1.bf16.msra.mxu0 0
      %3546 = vmatprep.subr.bf16.mxu0 0
      %3547 = vmatpush1.bf16.msra.mxu0 0
      %3548 = vmatprep.mubr.bf16.mxu0 0
      %3549 = vmatmul.mubr.bf16.gmra.mrb[0].mxu0 %v3435
      %v3550 = vpop.f32.mrb[0].mxu0
      %v3551 = vadd.f32 0.0, %v3550
      %v3552 = vpop.f32.mrb[0].mxu0
      %v3553 = vpop.f32.mrb[0].mxu0
      %v3554 = vadd.f32 0.0, %v3553
      %v3555 = vpop.f32.mrb[0].mxu0
      %3556 = vmatprep.mubr.bf16.mxu0 0
      %3557 = vmatmul.mubr.bf16.gmra.mrb[0].mxu0 %v3436
      %v3558 = vpop.f32.mrb[0].mxu0
      %v3559 = vadd.f32 0.0, %v3558
      %v3560 = vpop.f32.mrb[0].mxu0
      %v3561 = vpop.f32.mrb[0].mxu0
      %v3562 = vadd.f32 0.0, %v3561
      %v3563 = vpop.f32.mrb[0].mxu0
      %3564 = vmatprep.mubr.bf16.mxu0 0
      %3565 = vmatmul.mubr.bf16.gmra.mrb[0].mxu0 %v3437
      %v3566 = vpop.f32.mrb[0].mxu0
      %v3567 = vadd.f32 0.0, %v3566
      %v3568 = vpop.f32.mrb[0].mxu0
      %v3569 = vpop.f32.mrb[0].mxu0
      %v3570 = vadd.f32 0.0, %v3569
      %v3571 = vpop.f32.mrb[0].mxu0
      %3572 = vmatprep.mubr.bf16.mxu0 0
      %3573 = vmatmul.mubr.bf16.gmra.mrb[0].mxu0 %v3438
      %v3574 = vpop.f32.mrb[0].mxu0
      %v3575 = vadd.f32 0.0, %v3574
      %v3576 = vpop.f32.mrb[0].mxu0
      %v3577 = vpop.f32.mrb[0].mxu0
      %v3578 = vadd.f32 0.0, %v3577
      %v3579 = vpop.f32.mrb[0].mxu0
      %3580 = vmatprep.mubr.bf16.mxu0 0
      %3581 = vmatmul.mubr.bf16.gmra.mrb[0].mxu0 %v3439
      %v3582 = vpop.f32.mrb[0].mxu0
      %v3583 = vadd.f32 0.0, %v3582
      %v3584 = vpop.f32.mrb[0].mxu0
      %v3585 = vpop.f32.mrb[0].mxu0
      %v3586 = vadd.f32 0.0, %v3585
      %v3587 = vpop.f32.mrb[0].mxu0
      %3588 = vmatprep.mubr.bf16.mxu0 0
      %3589 = vmatmul.mubr.bf16.gmra.mrb[0].mxu0 %v3440
      %v3590 = vpop.f32.mrb[0].mxu0
      %v3591 = vadd.f32 0.0, %v3590
      %v3592 = vpop.f32.mrb[0].mxu0
      %v3593 = vpop.f32.mrb[0].mxu0
      %v3594 = vadd.f32 0.0, %v3593
      %v3595 = vpop.f32.mrb[0].mxu0
      %3596 = vmatprep.mubr.bf16.mxu0 0
      %3597 = vmatmul.mubr.bf16.gmra.mrb[0].mxu0 %v3441
      %v3598 = vpop.f32.mrb[0].mxu0
      %v3599 = vadd.f32 0.0, %v3598
      %v3600 = vpop.f32.mrb[0].mxu0
      %v3601 = vpop.f32.mrb[0].mxu0
      %v3602 = vadd.f32 0.0, %v3601
      %v3603 = vpop.f32.mrb[0].mxu0
      %3604 = vmatprep.mubr.bf16.mxu0 0
      %3605 = vmatmul.mubr.bf16.gmra.mrb[0].mxu0 %v3442
      %v3606 = vpop.f32.mrb[0].mxu0
      %v3607 = vadd.f32 0.0, %v3606
      %v3608 = vpop.f32.mrb[0].mxu0
      %v3609 = vpop.f32.mrb[0].mxu0
      %v3610 = vadd.f32 0.0, %v3609
      %v3611 = vpop.f32.mrb[0].mxu0
      %3612 = vmatprep.mubr.bf16.mxu0 0
      %3613 = vmatmul.mubr.bf16.gmra.mrb[0].mxu0 %v3443
      %v3614 = vpop.f32.mrb[0].mxu0
      %v3615 = vadd.f32 0.0, %v3614
      %v3616 = vpop.f32.mrb[0].mxu0
      %v3617 = vpop.f32.mrb[0].mxu0
      %v3618 = vadd.f32 0.0, %v3617
      %v3619 = vpop.f32.mrb[0].mxu0
      %3620 = vmatprep.mubr.bf16.mxu0 0
      %3621 = vmatmul.mubr.bf16.gmra.mrb[0].mxu0 %v3444
      %v3622 = vpop.f32.mrb[0].mxu0
      %v3623 = vadd.f32 0.0, %v3622
      %v3624 = vpop.f32.mrb[0].mxu0
      %v3625 = vpop.f32.mrb[0].mxu0
      %v3626 = vadd.f32 0.0, %v3625
      %v3627 = vpop.f32.mrb[0].mxu0
      %3628 = vmatprep.mubr.bf16.mxu0 0
      %3629 = vmatmul.mubr.bf16.gmra.mrb[0].mxu0 %v3445
      %v3630 = vpop.f32.mrb[0].mxu0
      %v3631 = vadd.f32 0.0, %v3630
      %v3632 = vpop.f32.mrb[0].mxu0
      %v3633 = vpop.f32.mrb[0].mxu0
      %v3634 = vadd.f32 0.0, %v3633
      %v3635 = vpop.f32.mrb[0].mxu0
      %3636 = vmatprep.mubr.bf16.mxu0 0
      %3637 = vmatmul.mubr.bf16.gmra.mrb[0].mxu0 %v3446
      %v3638 = vpop.f32.mrb[0].mxu0
      %v3639 = vadd.f32 0.0, %v3638
      %v3640 = vpop.f32.mrb[0].mxu0
      %v3641 = vpop.f32.mrb[0].mxu0
      %v3642 = vadd.f32 0.0, %v3641
      %v3643 = vpop.f32.mrb[0].mxu0
      %3644 = vmatprep.mubr.bf16.mxu0 0
      %3645 = vmatmul.mubr.bf16.gmra.mrb[0].mxu0 %v3447
      %v3646 = vpop.f32.mrb[0].mxu0
      %v3647 = vadd.f32 0.0, %v3646
      %v3648 = vpop.f32.mrb[0].mxu0
      %v3649 = vpop.f32.mrb[0].mxu0
      %v3650 = vadd.f32 0.0, %v3649
      %v3651 = vpop.f32.mrb[0].mxu0
      %3652 = vmatprep.mubr.bf16.mxu0 0
      %3653 = vmatmul.mubr.bf16.gmra.mrb[0].mxu0 %v3448
      %v3654 = vpop.f32.mrb[0].mxu0
      %v3655 = vadd.f32 0.0, %v3654
      %v3656 = vpop.f32.mrb[0].mxu0
      %v3657 = vpop.f32.mrb[0].mxu0
      %v3658 = vadd.f32 0.0, %v3657
      %v3659 = vpop.f32.mrb[0].mxu0
      %3660 = vmatprep.mubr.bf16.mxu0 0
      %3661 = vmatmul.mubr.bf16.gmra.mrb[0].mxu0 %v3449
      %v3662 = vpop.f32.mrb[0].mxu0
      %v3663 = vadd.f32 0.0, %v3662
      %v3664 = vpop.f32.mrb[0].mxu0
      %v3665 = vpop.f32.mrb[0].mxu0
      %v3666 = vadd.f32 0.0, %v3665
      %v3667 = vpop.f32.mrb[0].mxu0
      %3668 = vmatprep.mubr.bf16.mxu0 0
      %3669 = vmatmul.mubr.bf16.gmra.mrb[0].mxu0 %v3450
      %v3670 = vpop.f32.mrb[0].mxu0
      %v3671 = vadd.f32 0.0, %v3670
      %v3672 = vpop.f32.mrb[0].mxu0
      %v3673 = vpop.f32.mrb[0].mxu0
      %v3674 = vadd.f32 0.0, %v3673
      %v3675 = vpop.f32.mrb[0].mxu0
      %3676 = vdwg.mxu0
      %v3677 = vadd.f32 %v3403, %v3551
      %v3678 = vadd.f32 %v3404, %v3554
      %v3679 = vadd.f32 %v3405, %v3559
      %v3680 = vadd.f32 %v3406, %v3562
      %v3681 = vadd.f32 %v3407, %v3567
      %v3682 = vadd.f32 %v3408, %v3570
      %v3683 = vadd.f32 %v3409, %v3575
      %v3684 = vadd.f32 %v3410, %v3578
      %v3685 = vadd.f32 %v3411, %v3583
      %v3686 = vadd.f32 %v3412, %v3586
      %v3687 = vadd.f32 %v3413, %v3591
      %v3688 = vadd.f32 %v3414, %v3594
      %v3689 = vadd.f32 %v3415, %v3599
      %v3690 = vadd.f32 %v3416, %v3602
      %v3691 = vadd.f32 %v3417, %v3607
      %v3692 = vadd.f32 %v3418, %v3610
      %v3693 = vadd.f32 %v3419, %v3615
      %v3694 = vadd.f32 %v3420, %v3618
      %v3695 = vadd.f32 %v3421, %v3623
      %v3696 = vadd.f32 %v3422, %v3626
      %v3697 = vadd.f32 %v3423, %v3631
      %v3698 = vadd.f32 %v3424, %v3634
      %v3699 = vadd.f32 %v3425, %v3639
      %v3700 = vadd.f32 %v3426, %v3642
      %v3701 = vadd.f32 %v3427, %v3647
      %v3702 = vadd.f32 %v3428, %v3650
      %v3703 = vadd.f32 %v3429, %v3655
      %v3704 = vadd.f32 %v3430, %v3658
      %v3705 = vadd.f32 %v3431, %v3663
      %v3706 = vadd.f32 %v3432, %v3666
      %v3707 = vadd.f32 %v3433, %v3671
      %v3708 = vadd.f32 %v3434, %v3674
      %v3709 = vld [vmem:[#allocation3 + $0x10] sm:$0xff]
      %v3710 = vld [vmem:[#allocation3 + $0x18] sm:$0xff]
      %v3711 = vld [vmem:[#allocation3 + $0x20] sm:$0xff]
      %v3712 = vld [vmem:[#allocation3 + $0x28] sm:$0xff]
      %v3713 = vld [vmem:[#allocation3 + $0x30] sm:$0xff]
      %v3714 = vld [vmem:[#allocation3 + $0x38] sm:$0xff]
      %v3715 = vld [vmem:[#allocation3 + $0x40] sm:$0xff]
      %v3716 = vld [vmem:[#allocation3 + $0x48] sm:$0xff]
      %v3717 = vld [vmem:[#allocation3 + $0x50] sm:$0xff]
      %v3718 = vld [vmem:[#allocation3 + $0x58] sm:$0xff]
      %v3719 = vld [vmem:[#allocation3 + $0x60] sm:$0xff]
      %v3720 = vld [vmem:[#allocation3 + $0x68] sm:$0xff]
      %v3721 = vld [vmem:[#allocation3 + $0x70] sm:$0xff]
      %v3722 = vld [vmem:[#allocation3 + $0x78] sm:$0xff]
      %v3723 = vld [vmem:[#allocation3 + $0x80] sm:$0xff]
      %v3724 = vld [vmem:[#allocation3 + $0x88] sm:$0xff]
      %s3725 = scalar_lea.vmem %s3, 448
      %v3726 = vld [vmem:[%s3725] sm:$0xf]
      %v3727 = vld [vmem:[%s3725 + $0x4] sm:$0xf]
      %v3728 = vld [vmem:[%s3725 + $0x8] sm:$0xf]
      %v3729 = vld [vmem:[%s3725 + $0xc] sm:$0xf]
      %v3730 = vld [vmem:[%s3725 + $0x10] sm:$0xf]
      %v3731 = vld [vmem:[%s3725 + $0x14] sm:$0xf]
      %v3732 = vld [vmem:[%s3725 + $0x18] sm:$0xf]
      %v3733 = vld [vmem:[%s3725 + $0x1c] sm:$0xf]
      %v3734 = vld [vmem:[%s3725 + $0x20] sm:$0xf]
      %v3735 = vld [vmem:[%s3725 + $0x24] sm:$0xf]
      %v3736 = vld [vmem:[%s3725 + $0x28] sm:$0xf]
      %v3737 = vld [vmem:[%s3725 + $0x2c] sm:$0xf]
      %v3738 = vld [vmem:[%s3725 + $0x30] sm:$0xf]
      %v3739 = vld [vmem:[%s3725 + $0x34] sm:$0xf]
      %v3740 = vld [vmem:[%s3725 + $0x38] sm:$0xf]
      %v3741 = vld [vmem:[%s3725 + $0x3c] sm:$0xf]
      %v3758 = vunpack.c.l.b16 %v3726
      %v3759 = vunpack.c.l.b16 %v3727
      %v3760 = vunpack.c.l.b16 %v3728
      %v3761 = vunpack.c.l.b16 %v3729
      %v3762 = vunpack.c.l.b16 %v3730
      %v3763 = vunpack.c.l.b16 %v3731
      %v3764 = vunpack.c.l.b16 %v3732
      %v3765 = vunpack.c.l.b16 %v3733
      %v3766 = vunpack.c.l.b16 %v3734
      %v3767 = vunpack.c.l.b16 %v3735
      %v3768 = vunpack.c.l.b16 %v3736
      %v3769 = vunpack.c.l.b16 %v3737
      %v3770 = vunpack.c.l.b16 %v3738
      %v3771 = vunpack.c.l.b16 %v3739
      %v3772 = vunpack.c.l.b16 %v3740
      %v3773 = vunpack.c.l.b16 %v3741
      %v3774 = vpack.c.b16 %v3759, %v3758
      %v3775 = vpack.c.b16 %v3761, %v3760
      %v3776 = vpack.c.b16 %v3763, %v3762
      %v3777 = vpack.c.b16 %v3765, %v3764
      %v3778 = vpack.c.b16 %v3767, %v3766
      %v3779 = vpack.c.b16 %v3769, %v3768
      %v3780 = vpack.c.b16 %v3771, %v3770
      %v3781 = vpack.c.b16 %v3773, %v3772
      %3790 = vmatprep.subr.bf16.mxu0 0
      %3791 = vmatpush1.bf16.msra.mxu0 %v3774
      %3792 = vmatprep.subr.bf16.mxu0 0
      %3793 = vmatpush1.bf16.msra.mxu0 %v3775
      %3794 = vmatprep.subr.bf16.mxu0 0
      %3795 = vmatpush1.bf16.msra.mxu0 %v3776
      %3796 = vmatprep.subr.bf16.mxu0 0
      %3797 = vmatpush1.bf16.msra.mxu0 %v3777
      %3798 = vmatprep.subr.bf16.mxu0 0
      %3799 = vmatpush1.bf16.msra.mxu0 %v3778
      %3800 = vmatprep.subr.bf16.mxu0 0
      %3801 = vmatpush1.bf16.msra.mxu0 %v3779
      %3802 = vmatprep.subr.bf16.mxu0 0
      %3803 = vmatpush1.bf16.msra.mxu0 %v3780
      %3804 = vmatprep.subr.bf16.mxu0 0
      %3805 = vmatpush1.bf16.msra.mxu0 %v3781
      %3806 = vmatprep.subr.bf16.mxu0 0
      %3807 = vmatpush1.bf16.msra.mxu0 0
      %3808 = vmatprep.subr.bf16.mxu0 0
      %3809 = vmatpush1.bf16.msra.mxu0 0
      %3810 = vmatprep.subr.bf16.mxu0 0
      %3811 = vmatpush1.bf16.msra.mxu0 0
      %3812 = vmatprep.subr.bf16.mxu0 0
      %3813 = vmatpush1.bf16.msra.mxu0 0
      %3814 = vmatprep.subr.bf16.mxu0 0
      %3815 = vmatpush1.bf16.msra.mxu0 0
      %3816 = vmatprep.subr.bf16.mxu0 0
      %3817 = vmatpush1.bf16.msra.mxu0 0
      %3818 = vmatprep.subr.bf16.mxu0 0
      %3819 = vmatpush1.bf16.msra.mxu0 0
      %3820 = vmatprep.subr.bf16.mxu0 0
      %3821 = vmatpush1.bf16.msra.mxu0 0
      %3822 = vmatprep.mubr.bf16.mxu0 0
      %3823 = vmatmul.mubr.bf16.gmra.mrb[0].mxu0 %v3709
      %v3824 = vpop.f32.mrb[0].mxu0
      %v3825 = vadd.f32 0.0, %v3824
      %v3826 = vpop.f32.mrb[0].mxu0
      %v3827 = vpop.f32.mrb[0].mxu0
      %v3828 = vadd.f32 0.0, %v3827
      %v3829 = vpop.f32.mrb[0].mxu0
      %3830 = vmatprep.mubr.bf16.mxu0 0
      %3831 = vmatmul.mubr.bf16.gmra.mrb[0].mxu0 %v3710
      %v3832 = vpop.f32.mrb[0].mxu0
      %v3833 = vadd.f32 0.0, %v3832
      %v3834 = vpop.f32.mrb[0].mxu0
      %v3835 = vpop.f32.mrb[0].mxu0
      %v3836 = vadd.f32 0.0, %v3835
      %v3837 = vpop.f32.mrb[0].mxu0
      %3838 = vmatprep.mubr.bf16.mxu0 0
      %3839 = vmatmul.mubr.bf16.gmra.mrb[0].mxu0 %v3711
      %v3840 = vpop.f32.mrb[0].mxu0
      %v3841 = vadd.f32 0.0, %v3840
      %v3842 = vpop.f32.mrb[0].mxu0
      %v3843 = vpop.f32.mrb[0].mxu0
      %v3844 = vadd.f32 0.0, %v3843
      %v3845 = vpop.f32.mrb[0].mxu0
      %3846 = vmatprep.mubr.bf16.mxu0 0
      %3847 = vmatmul.mubr.bf16.gmra.mrb[0].mxu0 %v3712
      %v3848 = vpop.f32.mrb[0].mxu0
      %v3849 = vadd.f32 0.0, %v3848
      %v3850 = vpop.f32.mrb[0].mxu0
      %v3851 = vpop.f32.mrb[0].mxu0
      %v3852 = vadd.f32 0.0, %v3851
      %v3853 = vpop.f32.mrb[0].mxu0
      %3854 = vmatprep.mubr.bf16.mxu0 0
      %3855 = vmatmul.mubr.bf16.gmra.mrb[0].mxu0 %v3713
      %v3856 = vpop.f32.mrb[0].mxu0
      %v3857 = vadd.f32 0.0, %v3856
      %v3858 = vpop.f32.mrb[0].mxu0
      %v3859 = vpop.f32.mrb[0].mxu0
      %v3860 = vadd.f32 0.0, %v3859
      %v3861 = vpop.f32.mrb[0].mxu0
      %3862 = vmatprep.mubr.bf16.mxu0 0
      %3863 = vmatmul.mubr.bf16.gmra.mrb[0].mxu0 %v3714
      %v3864 = vpop.f32.mrb[0].mxu0
      %v3865 = vadd.f32 0.0, %v3864
      %v3866 = vpop.f32.mrb[0].mxu0
      %v3867 = vpop.f32.mrb[0].mxu0
      %v3868 = vadd.f32 0.0, %v3867
      %v3869 = vpop.f32.mrb[0].mxu0
      %3870 = vmatprep.mubr.bf16.mxu0 0
      %3871 = vmatmul.mubr.bf16.gmra.mrb[0].mxu0 %v3715
      %v3872 = vpop.f32.mrb[0].mxu0
      %v3873 = vadd.f32 0.0, %v3872
      %v3874 = vpop.f32.mrb[0].mxu0
      %v3875 = vpop.f32.mrb[0].mxu0
      %v3876 = vadd.f32 0.0, %v3875
      %v3877 = vpop.f32.mrb[0].mxu0
      %3878 = vmatprep.mubr.bf16.mxu0 0
      %3879 = vmatmul.mubr.bf16.gmra.mrb[0].mxu0 %v3716
      %v3880 = vpop.f32.mrb[0].mxu0
      %v3881 = vadd.f32 0.0, %v3880
      %v3882 = vpop.f32.mrb[0].mxu0
      %v3883 = vpop.f32.mrb[0].mxu0
      %v3884 = vadd.f32 0.0, %v3883
      %v3885 = vpop.f32.mrb[0].mxu0
      %3886 = vmatprep.mubr.bf16.mxu0 0
      %3887 = vmatmul.mubr.bf16.gmra.mrb[0].mxu0 %v3717
      %v3888 = vpop.f32.mrb[0].mxu0
      %v3889 = vadd.f32 0.0, %v3888
      %v3890 = vpop.f32.mrb[0].mxu0
      %v3891 = vpop.f32.mrb[0].mxu0
      %v3892 = vadd.f32 0.0, %v3891
      %v3893 = vpop.f32.mrb[0].mxu0
      %3894 = vmatprep.mubr.bf16.mxu0 0
      %3895 = vmatmul.mubr.bf16.gmra.mrb[0].mxu0 %v3718
      %v3896 = vpop.f32.mrb[0].mxu0
      %v3897 = vadd.f32 0.0, %v3896
      %v3898 = vpop.f32.mrb[0].mxu0
      %v3899 = vpop.f32.mrb[0].mxu0
      %v3900 = vadd.f32 0.0, %v3899
      %v3901 = vpop.f32.mrb[0].mxu0
      %3902 = vmatprep.mubr.bf16.mxu0 0
      %3903 = vmatmul.mubr.bf16.gmra.mrb[0].mxu0 %v3719
      %v3904 = vpop.f32.mrb[0].mxu0
      %v3905 = vadd.f32 0.0, %v3904
      %v3906 = vpop.f32.mrb[0].mxu0
      %v3907 = vpop.f32.mrb[0].mxu0
      %v3908 = vadd.f32 0.0, %v3907
      %v3909 = vpop.f32.mrb[0].mxu0
      %3910 = vmatprep.mubr.bf16.mxu0 0
      %3911 = vmatmul.mubr.bf16.gmra.mrb[0].mxu0 %v3720
      %v3912 = vpop.f32.mrb[0].mxu0
      %v3913 = vadd.f32 0.0, %v3912
      %v3914 = vpop.f32.mrb[0].mxu0
      %v3915 = vpop.f32.mrb[0].mxu0
      %v3916 = vadd.f32 0.0, %v3915
      %v3917 = vpop.f32.mrb[0].mxu0
      %3918 = vmatprep.mubr.bf16.mxu0 0
      %3919 = vmatmul.mubr.bf16.gmra.mrb[0].mxu0 %v3721
      %v3920 = vpop.f32.mrb[0].mxu0
      %v3921 = vadd.f32 0.0, %v3920
      %v3922 = vpop.f32.mrb[0].mxu0
      %v3923 = vpop.f32.mrb[0].mxu0
      %v3924 = vadd.f32 0.0, %v3923
      %v3925 = vpop.f32.mrb[0].mxu0
      %3926 = vmatprep.mubr.bf16.mxu0 0
      %3927 = vmatmul.mubr.bf16.gmra.mrb[0].mxu0 %v3722
      %v3928 = vpop.f32.mrb[0].mxu0
      %v3929 = vadd.f32 0.0, %v3928
      %v3930 = vpop.f32.mrb[0].mxu0
      %v3931 = vpop.f32.mrb[0].mxu0
      %v3932 = vadd.f32 0.0, %v3931
      %v3933 = vpop.f32.mrb[0].mxu0
      %3934 = vmatprep.mubr.bf16.mxu0 0
      %3935 = vmatmul.mubr.bf16.gmra.mrb[0].mxu0 %v3723
      %v3936 = vpop.f32.mrb[0].mxu0
      %v3937 = vadd.f32 0.0, %v3936
      %v3938 = vpop.f32.mrb[0].mxu0
      %v3939 = vpop.f32.mrb[0].mxu0
      %v3940 = vadd.f32 0.0, %v3939
      %v3941 = vpop.f32.mrb[0].mxu0
      %3942 = vmatprep.mubr.bf16.mxu0 0
      %3943 = vmatmul.mubr.bf16.gmra.mrb[0].mxu0 %v3724
      %v3944 = vpop.f32.mrb[0].mxu0
      %v3945 = vadd.f32 0.0, %v3944
      %v3946 = vpop.f32.mrb[0].mxu0
      %v3947 = vpop.f32.mrb[0].mxu0
      %v3948 = vadd.f32 0.0, %v3947
      %v3949 = vpop.f32.mrb[0].mxu0
      %3950 = vdwg.mxu0
      %v3951 = vadd.f32 %v3677, %v3825
      %v3952 = vadd.f32 %v3678, %v3828
      %v3953 = vadd.f32 %v3679, %v3833
      %v3954 = vadd.f32 %v3680, %v3836
      %v3955 = vadd.f32 %v3681, %v3841
      %v3956 = vadd.f32 %v3682, %v3844
      %v3957 = vadd.f32 %v3683, %v3849
      %v3958 = vadd.f32 %v3684, %v3852
      %v3959 = vadd.f32 %v3685, %v3857
      %v3960 = vadd.f32 %v3686, %v3860
      %v3961 = vadd.f32 %v3687, %v3865
      %v3962 = vadd.f32 %v3688, %v3868
      %v3963 = vadd.f32 %v3689, %v3873
      %v3964 = vadd.f32 %v3690, %v3876
      %v3965 = vadd.f32 %v3691, %v3881
      %v3966 = vadd.f32 %v3692, %v3884
      %v3967 = vadd.f32 %v3693, %v3889
      %v3968 = vadd.f32 %v3694, %v3892
      %v3969 = vadd.f32 %v3695, %v3897
      %v3970 = vadd.f32 %v3696, %v3900
      %v3971 = vadd.f32 %v3697, %v3905
      %v3972 = vadd.f32 %v3698, %v3908
      %v3973 = vadd.f32 %v3699, %v3913
      %v3974 = vadd.f32 %v3700, %v3916
      %v3975 = vadd.f32 %v3701, %v3921
      %v3976 = vadd.f32 %v3702, %v3924
      %v3977 = vadd.f32 %v3703, %v3929
      %v3978 = vadd.f32 %v3704, %v3932
      %v3979 = vadd.f32 %v3705, %v3937
      %v3980 = vadd.f32 %v3706, %v3940
      %v3981 = vadd.f32 %v3707, %v3945
      %v3982 = vadd.f32 %v3708, %v3948
      %v3983 = vld [vmem:[#allocation4 + $0x10] sm:$0xff]
      %v3984 = vld [vmem:[#allocation4 + $0x18] sm:$0xff]
      %v3985 = vld [vmem:[#allocation4 + $0x20] sm:$0xff]
      %v3986 = vld [vmem:[#allocation4 + $0x28] sm:$0xff]
      %v3987 = vld [vmem:[#allocation4 + $0x30] sm:$0xff]
      %v3988 = vld [vmem:[#allocation4 + $0x38] sm:$0xff]
      %v3989 = vld [vmem:[#allocation4 + $0x40] sm:$0xff]
      %v3990 = vld [vmem:[#allocation4 + $0x48] sm:$0xff]
      %v3991 = vld [vmem:[#allocation4 + $0x50] sm:$0xff]
      %v3992 = vld [vmem:[#allocation4 + $0x58] sm:$0xff]
      %v3993 = vld [vmem:[#allocation4 + $0x60] sm:$0xff]
      %v3994 = vld [vmem:[#allocation4 + $0x68] sm:$0xff]
      %v3995 = vld [vmem:[#allocation4 + $0x70] sm:$0xff]
      %v3996 = vld [vmem:[#allocation4 + $0x78] sm:$0xff]
      %v3997 = vld [vmem:[#allocation4 + $0x80] sm:$0xff]
      %v3998 = vld [vmem:[#allocation4 + $0x88] sm:$0xff]
      %s3999 = scalar_lea.vmem %s3, 512
      %v4000 = vld [vmem:[%s3999] sm:$0xf]
      %v4001 = vld [vmem:[%s3999 + $0x4] sm:$0xf]
      %v4002 = vld [vmem:[%s3999 + $0x8] sm:$0xf]
      %v4003 = vld [vmem:[%s3999 + $0xc] sm:$0xf]
      %v4004 = vld [vmem:[%s3999 + $0x10] sm:$0xf]
      %v4005 = vld [vmem:[%s3999 + $0x14] sm:$0xf]
      %v4006 = vld [vmem:[%s3999 + $0x18] sm:$0xf]
      %v4007 = vld [vmem:[%s3999 + $0x1c] sm:$0xf]
      %v4008 = vld [vmem:[%s3999 + $0x20] sm:$0xf]
      %v4009 = vld [vmem:[%s3999 + $0x24] sm:$0xf]
      %v4010 = vld [vmem:[%s3999 + $0x28] sm:$0xf]
      %v4011 = vld [vmem:[%s3999 + $0x2c] sm:$0xf]
      %v4012 = vld [vmem:[%s3999 + $0x30] sm:$0xf]
      %v4013 = vld [vmem:[%s3999 + $0x34] sm:$0xf]
      %v4014 = vld [vmem:[%s3999 + $0x38] sm:$0xf]
      %v4015 = vld [vmem:[%s3999 + $0x3c] sm:$0xf]
      %v4032 = vunpack.c.l.b16 %v4000
      %v4033 = vunpack.c.l.b16 %v4001
      %v4034 = vunpack.c.l.b16 %v4002
      %v4035 = vunpack.c.l.b16 %v4003
      %v4036 = vunpack.c.l.b16 %v4004
      %v4037 = vunpack.c.l.b16 %v4005
      %v4038 = vunpack.c.l.b16 %v4006
      %v4039 = vunpack.c.l.b16 %v4007
      %v4040 = vunpack.c.l.b16 %v4008
      %v4041 = vunpack.c.l.b16 %v4009
      %v4042 = vunpack.c.l.b16 %v4010
      %v4043 = vunpack.c.l.b16 %v4011
      %v4044 = vunpack.c.l.b16 %v4012
      %v4045 = vunpack.c.l.b16 %v4013
      %v4046 = vunpack.c.l.b16 %v4014
      %v4047 = vunpack.c.l.b16 %v4015
      %v4048 = vpack.c.b16 %v4033, %v4032
      %v4049 = vpack.c.b16 %v4035, %v4034
      %v4050 = vpack.c.b16 %v4037, %v4036
      %v4051 = vpack.c.b16 %v4039, %v4038
      %v4052 = vpack.c.b16 %v4041, %v4040
      %v4053 = vpack.c.b16 %v4043, %v4042
      %v4054 = vpack.c.b16 %v4045, %v4044
      %v4055 = vpack.c.b16 %v4047, %v4046
      %4064 = vmatprep.subr.bf16.mxu0 0
      %4065 = vmatpush1.bf16.msra.mxu0 %v4048
      %4066 = vmatprep.subr.bf16.mxu0 0
      %4067 = vmatpush1.bf16.msra.mxu0 %v4049
      %4068 = vmatprep.subr.bf16.mxu0 0
      %4069 = vmatpush1.bf16.msra.mxu0 %v4050
      %4070 = vmatprep.subr.bf16.mxu0 0
      %4071 = vmatpush1.bf16.msra.mxu0 %v4051
      %4072 = vmatprep.subr.bf16.mxu0 0
      %4073 = vmatpush1.bf16.msra.mxu0 %v4052
      %4074 = vmatprep.subr.bf16.mxu0 0
      %4075 = vmatpush1.bf16.msra.mxu0 %v4053
      %4076 = vmatprep.subr.bf16.mxu0 0
      %4077 = vmatpush1.bf16.msra.mxu0 %v4054
      %4078 = vmatprep.subr.bf16.mxu0 0
      %4079 = vmatpush1.bf16.msra.mxu0 %v4055
      %4080 = vmatprep.subr.bf16.mxu0 0
      %4081 = vmatpush1.bf16.msra.mxu0 0
      %4082 = vmatprep.subr.bf16.mxu0 0
      %4083 = vmatpush1.bf16.msra.mxu0 0
      %4084 = vmatprep.subr.bf16.mxu0 0
      %4085 = vmatpush1.bf16.msra.mxu0 0
      %4086 = vmatprep.subr.bf16.mxu0 0
      %4087 = vmatpush1.bf16.msra.mxu0 0
      %4088 = vmatprep.subr.bf16.mxu0 0
      %4089 = vmatpush1.bf16.msra.mxu0 0
      %4090 = vmatprep.subr.bf16.mxu0 0
      %4091 = vmatpush1.bf16.msra.mxu0 0
      %4092 = vmatprep.subr.bf16.mxu0 0
      %4093 = vmatpush1.bf16.msra.mxu0 0
      %4094 = vmatprep.subr.bf16.mxu0 0
      %4095 = vmatpush1.bf16.msra.mxu0 0
      %4096 = vmatprep.mubr.bf16.mxu0 0
      %4097 = vmatmul.mubr.bf16.gmra.mrb[0].mxu0 %v3983
      %v4098 = vpop.f32.mrb[0].mxu0
      %v4099 = vadd.f32 0.0, %v4098
      %v4100 = vpop.f32.mrb[0].mxu0
      %v4101 = vpop.f32.mrb[0].mxu0
      %v4102 = vadd.f32 0.0, %v4101
      %v4103 = vpop.f32.mrb[0].mxu0
      %4104 = vmatprep.mubr.bf16.mxu0 0
      %4105 = vmatmul.mubr.bf16.gmra.mrb[0].mxu0 %v3984
      %v4106 = vpop.f32.mrb[0].mxu0
      %v4107 = vadd.f32 0.0, %v4106
      %v4108 = vpop.f32.mrb[0].mxu0
      %v4109 = vpop.f32.mrb[0].mxu0
      %v4110 = vadd.f32 0.0, %v4109
      %v4111 = vpop.f32.mrb[0].mxu0
      %4112 = vmatprep.mubr.bf16.mxu0 0
      %4113 = vmatmul.mubr.bf16.gmra.mrb[0].mxu0 %v3985
      %v4114 = vpop.f32.mrb[0].mxu0
      %v4115 = vadd.f32 0.0, %v4114
      %v4116 = vpop.f32.mrb[0].mxu0
      %v4117 = vpop.f32.mrb[0].mxu0
      %v4118 = vadd.f32 0.0, %v4117
      %v4119 = vpop.f32.mrb[0].mxu0
      %4120 = vmatprep.mubr.bf16.mxu0 0
      %4121 = vmatmul.mubr.bf16.gmra.mrb[0].mxu0 %v3986
      %v4122 = vpop.f32.mrb[0].mxu0
      %v4123 = vadd.f32 0.0, %v4122
      %v4124 = vpop.f32.mrb[0].mxu0
      %v4125 = vpop.f32.mrb[0].mxu0
      %v4126 = vadd.f32 0.0, %v4125
      %v4127 = vpop.f32.mrb[0].mxu0
      %4128 = vmatprep.mubr.bf16.mxu0 0
      %4129 = vmatmul.mubr.bf16.gmra.mrb[0].mxu0 %v3987
      %v4130 = vpop.f32.mrb[0].mxu0
      %v4131 = vadd.f32 0.0, %v4130
      %v4132 = vpop.f32.mrb[0].mxu0
      %v4133 = vpop.f32.mrb[0].mxu0
      %v4134 = vadd.f32 0.0, %v4133
      %v4135 = vpop.f32.mrb[0].mxu0
      %4136 = vmatprep.mubr.bf16.mxu0 0
      %4137 = vmatmul.mubr.bf16.gmra.mrb[0].mxu0 %v3988
      %v4138 = vpop.f32.mrb[0].mxu0
      %v4139 = vadd.f32 0.0, %v4138
      %v4140 = vpop.f32.mrb[0].mxu0
      %v4141 = vpop.f32.mrb[0].mxu0
      %v4142 = vadd.f32 0.0, %v4141
      %v4143 = vpop.f32.mrb[0].mxu0
      %4144 = vmatprep.mubr.bf16.mxu0 0
      %4145 = vmatmul.mubr.bf16.gmra.mrb[0].mxu0 %v3989
      %v4146 = vpop.f32.mrb[0].mxu0
      %v4147 = vadd.f32 0.0, %v4146
      %v4148 = vpop.f32.mrb[0].mxu0
      %v4149 = vpop.f32.mrb[0].mxu0
      %v4150 = vadd.f32 0.0, %v4149
      %v4151 = vpop.f32.mrb[0].mxu0
      %4152 = vmatprep.mubr.bf16.mxu0 0
      %4153 = vmatmul.mubr.bf16.gmra.mrb[0].mxu0 %v3990
      %v4154 = vpop.f32.mrb[0].mxu0
      %v4155 = vadd.f32 0.0, %v4154
      %v4156 = vpop.f32.mrb[0].mxu0
      %v4157 = vpop.f32.mrb[0].mxu0
      %v4158 = vadd.f32 0.0, %v4157
      %v4159 = vpop.f32.mrb[0].mxu0
      %4160 = vmatprep.mubr.bf16.mxu0 0
      %4161 = vmatmul.mubr.bf16.gmra.mrb[0].mxu0 %v3991
      %v4162 = vpop.f32.mrb[0].mxu0
      %v4163 = vadd.f32 0.0, %v4162
      %v4164 = vpop.f32.mrb[0].mxu0
      %v4165 = vpop.f32.mrb[0].mxu0
      %v4166 = vadd.f32 0.0, %v4165
      %v4167 = vpop.f32.mrb[0].mxu0
      %4168 = vmatprep.mubr.bf16.mxu0 0
      %4169 = vmatmul.mubr.bf16.gmra.mrb[0].mxu0 %v3992
      %v4170 = vpop.f32.mrb[0].mxu0
      %v4171 = vadd.f32 0.0, %v4170
      %v4172 = vpop.f32.mrb[0].mxu0
      %v4173 = vpop.f32.mrb[0].mxu0
      %v4174 = vadd.f32 0.0, %v4173
      %v4175 = vpop.f32.mrb[0].mxu0
      %4176 = vmatprep.mubr.bf16.mxu0 0
      %4177 = vmatmul.mubr.bf16.gmra.mrb[0].mxu0 %v3993
      %v4178 = vpop.f32.mrb[0].mxu0
      %v4179 = vadd.f32 0.0, %v4178
      %v4180 = vpop.f32.mrb[0].mxu0
      %v4181 = vpop.f32.mrb[0].mxu0
      %v4182 = vadd.f32 0.0, %v4181
      %v4183 = vpop.f32.mrb[0].mxu0
      %4184 = vmatprep.mubr.bf16.mxu0 0
      %4185 = vmatmul.mubr.bf16.gmra.mrb[0].mxu0 %v3994
      %v4186 = vpop.f32.mrb[0].mxu0
      %v4187 = vadd.f32 0.0, %v4186
      %v4188 = vpop.f32.mrb[0].mxu0
      %v4189 = vpop.f32.mrb[0].mxu0
      %v4190 = vadd.f32 0.0, %v4189
      %v4191 = vpop.f32.mrb[0].mxu0
      %4192 = vmatprep.mubr.bf16.mxu0 0
      %4193 = vmatmul.mubr.bf16.gmra.mrb[0].mxu0 %v3995
      %v4194 = vpop.f32.mrb[0].mxu0
      %v4195 = vadd.f32 0.0, %v4194
      %v4196 = vpop.f32.mrb[0].mxu0
      %v4197 = vpop.f32.mrb[0].mxu0
      %v4198 = vadd.f32 0.0, %v4197
      %v4199 = vpop.f32.mrb[0].mxu0
      %4200 = vmatprep.mubr.bf16.mxu0 0
      %4201 = vmatmul.mubr.bf16.gmra.mrb[0].mxu0 %v3996
      %v4202 = vpop.f32.mrb[0].mxu0
      %v4203 = vadd.f32 0.0, %v4202
      %v4204 = vpop.f32.mrb[0].mxu0
      %v4205 = vpop.f32.mrb[0].mxu0
      %v4206 = vadd.f32 0.0, %v4205
      %v4207 = vpop.f32.mrb[0].mxu0
      %4208 = vmatprep.mubr.bf16.mxu0 0
      %4209 = vmatmul.mubr.bf16.gmra.mrb[0].mxu0 %v3997
      %v4210 = vpop.f32.mrb[0].mxu0
      %v4211 = vadd.f32 0.0, %v4210
      %v4212 = vpop.f32.mrb[0].mxu0
      %v4213 = vpop.f32.mrb[0].mxu0
      %v4214 = vadd.f32 0.0, %v4213
      %v4215 = vpop.f32.mrb[0].mxu0
      %4216 = vmatprep.mubr.bf16.mxu0 0
      %4217 = vmatmul.mubr.bf16.gmra.mrb[0].mxu0 %v3998
      %v4218 = vpop.f32.mrb[0].mxu0
      %v4219 = vadd.f32 0.0, %v4218
      %v4220 = vpop.f32.mrb[0].mxu0
      %v4221 = vpop.f32.mrb[0].mxu0
      %v4222 = vadd.f32 0.0, %v4221
      %v4223 = vpop.f32.mrb[0].mxu0
      %4224 = vdwg.mxu0
      %v4225 = vadd.f32 %v3951, %v4099
      %v4226 = vadd.f32 %v3952, %v4102
      %v4227 = vadd.f32 %v3953, %v4107
      %v4228 = vadd.f32 %v3954, %v4110
      %v4229 = vadd.f32 %v3955, %v4115
      %v4230 = vadd.f32 %v3956, %v4118
      %v4231 = vadd.f32 %v3957, %v4123
      %v4232 = vadd.f32 %v3958, %v4126
      %v4233 = vadd.f32 %v3959, %v4131
      %v4234 = vadd.f32 %v3960, %v4134
      %v4235 = vadd.f32 %v3961, %v4139
      %v4236 = vadd.f32 %v3962, %v4142
      %v4237 = vadd.f32 %v3963, %v4147
      %v4238 = vadd.f32 %v3964, %v4150
      %v4239 = vadd.f32 %v3965, %v4155
      %v4240 = vadd.f32 %v3966, %v4158
      %v4241 = vadd.f32 %v3967, %v4163
      %v4242 = vadd.f32 %v3968, %v4166
      %v4243 = vadd.f32 %v3969, %v4171
      %v4244 = vadd.f32 %v3970, %v4174
      %v4245 = vadd.f32 %v3971, %v4179
      %v4246 = vadd.f32 %v3972, %v4182
      %v4247 = vadd.f32 %v3973, %v4187
      %v4248 = vadd.f32 %v3974, %v4190
      %v4249 = vadd.f32 %v3975, %v4195
      %v4250 = vadd.f32 %v3976, %v4198
      %v4251 = vadd.f32 %v3977, %v4203
      %v4252 = vadd.f32 %v3978, %v4206
      %v4253 = vadd.f32 %v3979, %v4211
      %v4254 = vadd.f32 %v3980, %v4214
      %v4255 = vadd.f32 %v3981, %v4219
      %v4256 = vadd.f32 %v3982, %v4222
      %v4257 = vpack.c.bf16 %v4226, %v4225
      %v4258 = vpack.c.bf16 %v4228, %v4227
      %v4259 = vpack.c.bf16 %v4230, %v4229
      %v4260 = vpack.c.bf16 %v4232, %v4231
      %v4261 = vpack.c.bf16 %v4234, %v4233
      %v4262 = vpack.c.bf16 %v4236, %v4235
      %v4263 = vpack.c.bf16 %v4238, %v4237
      %v4264 = vpack.c.bf16 %v4240, %v4239
      %v4265 = vpack.c.bf16 %v4242, %v4241
      %v4266 = vpack.c.bf16 %v4244, %v4243
      %v4267 = vpack.c.bf16 %v4246, %v4245
      %v4268 = vpack.c.bf16 %v4248, %v4247
      %v4269 = vpack.c.bf16 %v4250, %v4249
      %v4270 = vpack.c.bf16 %v4252, %v4251
      %v4271 = vpack.c.bf16 %v4254, %v4253
      %v4272 = vpack.c.bf16 %v4256, %v4255
      %v4289 = vunpack.c.l.b16 %v4257
      %v4290 = vunpack.c.h.b16 %v4257
      %v4291 = vunpack.c.l.b16 %v4258
      %v4292 = vunpack.c.h.b16 %v4258
      %v4293 = vunpack.c.l.b16 %v4259
      %v4294 = vunpack.c.h.b16 %v4259
      %v4295 = vunpack.c.l.b16 %v4260
      %v4296 = vunpack.c.h.b16 %v4260
      %v4297 = vunpack.c.l.b16 %v4261
      %v4298 = vunpack.c.h.b16 %v4261
      %v4299 = vunpack.c.l.b16 %v4262
      %v4300 = vunpack.c.h.b16 %v4262
      %v4301 = vunpack.c.l.b16 %v4263
      %v4302 = vunpack.c.h.b16 %v4263
      %v4303 = vunpack.c.l.b16 %v4264
      %v4304 = vunpack.c.h.b16 %v4264
      %v4305 = vunpack.c.l.b16 %v4265
      %v4306 = vunpack.c.h.b16 %v4265
      %v4307 = vunpack.c.l.b16 %v4266
      %v4308 = vunpack.c.h.b16 %v4266
      %v4309 = vunpack.c.l.b16 %v4267
      %v4310 = vunpack.c.h.b16 %v4267
      %v4311 = vunpack.c.l.b16 %v4268
      %v4312 = vunpack.c.h.b16 %v4268
      %v4313 = vunpack.c.l.b16 %v4269
      %v4314 = vunpack.c.h.b16 %v4269
      %v4315 = vunpack.c.l.b16 %v4270
      %v4316 = vunpack.c.h.b16 %v4270
      %v4317 = vunpack.c.l.b16 %v4271
      %v4318 = vunpack.c.h.b16 %v4271
      %v4319 = vunpack.c.l.b16 %v4272
      %v4320 = vunpack.c.h.b16 %v4272
      %v4321 = vpack.c.b16 %v4289, %v4289
      %v4322 = vpack.c.b16 %v4290, %v4290
      %v4323 = vpack.c.b16 %v4291, %v4291
      %v4324 = vpack.c.b16 %v4292, %v4292
      %v4325 = vpack.c.b16 %v4293, %v4293
      %v4326 = vpack.c.b16 %v4294, %v4294
      %v4327 = vpack.c.b16 %v4295, %v4295
      %v4328 = vpack.c.b16 %v4296, %v4296
      %v4329 = vpack.c.b16 %v4297, %v4297
      %v4330 = vpack.c.b16 %v4298, %v4298
      %v4331 = vpack.c.b16 %v4299, %v4299
      %v4332 = vpack.c.b16 %v4300, %v4300
      %v4333 = vpack.c.b16 %v4301, %v4301
      %v4334 = vpack.c.b16 %v4302, %v4302
      %v4335 = vpack.c.b16 %v4303, %v4303
      %v4336 = vpack.c.b16 %v4304, %v4304
      %v4337 = vpack.c.b16 %v4305, %v4305
      %v4338 = vpack.c.b16 %v4306, %v4306
      %v4339 = vpack.c.b16 %v4307, %v4307
      %v4340 = vpack.c.b16 %v4308, %v4308
      %v4341 = vpack.c.b16 %v4309, %v4309
      %v4342 = vpack.c.b16 %v4310, %v4310
      %v4343 = vpack.c.b16 %v4311, %v4311
      %v4344 = vpack.c.b16 %v4312, %v4312
      %v4345 = vpack.c.b16 %v4313, %v4313
      %v4346 = vpack.c.b16 %v4314, %v4314
      %v4347 = vpack.c.b16 %v4315, %v4315
      %v4348 = vpack.c.b16 %v4316, %v4316
      %v4349 = vpack.c.b16 %v4317, %v4317
      %v4350 = vpack.c.b16 %v4318, %v4318
      %v4351 = vpack.c.b16 %v4319, %v4319
      %v4352 = vpack.c.b16 %v4320, %v4320
      %4385 = vst [vmem:[%s231] sm:$0xf] %v4321
      %4386 = vst [vmem:[%s231 + $0x4] sm:$0xf] %v4322
      %4387 = vst [vmem:[%s231 + $0x8] sm:$0xf] %v4323
      %4388 = vst [vmem:[%s231 + $0xc] sm:$0xf] %v4324
      %4389 = vst [vmem:[%s231 + $0x10] sm:$0xf] %v4325
      %4390 = vst [vmem:[%s231 + $0x14] sm:$0xf] %v4326
      %4391 = vst [vmem:[%s231 + $0x18] sm:$0xf] %v4327
      %4392 = vst [vmem:[%s231 + $0x1c] sm:$0xf] %v4328
      %4393 = vst [vmem:[%s231 + $0x20] sm:$0xf] %v4329
      %4394 = vst [vmem:[%s231 + $0x24] sm:$0xf] %v4330
      %4395 = vst [vmem:[%s231 + $0x28] sm:$0xf] %v4331
      %4396 = vst [vmem:[%s231 + $0x2c] sm:$0xf] %v4332
      %4397 = vst [vmem:[%s231 + $0x30] sm:$0xf] %v4333
      %4398 = vst [vmem:[%s231 + $0x34] sm:$0xf] %v4334
      %4399 = vst [vmem:[%s231 + $0x38] sm:$0xf] %v4335
      %4400 = vst [vmem:[%s231 + $0x3c] sm:$0xf] %v4336
      %4401 = vst [vmem:[%s231 + $0x40] sm:$0xf] %v4337
      %4402 = vst [vmem:[%s231 + $0x44] sm:$0xf] %v4338
      %4403 = vst [vmem:[%s231 + $0x48] sm:$0xf] %v4339
      %4404 = vst [vmem:[%s231 + $0x4c] sm:$0xf] %v4340
      %4405 = vst [vmem:[%s231 + $0x50] sm:$0xf] %v4341
      %4406 = vst [vmem:[%s231 + $0x54] sm:$0xf] %v4342
      %4407 = vst [vmem:[%s231 + $0x58] sm:$0xf] %v4343
      %4408 = vst [vmem:[%s231 + $0x5c] sm:$0xf] %v4344
      %4409 = vst [vmem:[%s231 + $0x60] sm:$0xf] %v4345
      %4410 = vst [vmem:[%s231 + $0x64] sm:$0xf] %v4346
      %4411 = vst [vmem:[%s231 + $0x68] sm:$0xf] %v4347
      %4412 = vst [vmem:[%s231 + $0x6c] sm:$0xf] %v4348
      %4413 = vst [vmem:[%s231 + $0x70] sm:$0xf] %v4349
      %4414 = vst [vmem:[%s231 + $0x74] sm:$0xf] %v4350
      %4415 = vst [vmem:[%s231 + $0x78] sm:$0xf] %v4351
      %4416 = vst [vmem:[%s231 + $0x7c] sm:$0xf] %v4352
      %v4417 = vadd.f32 %v4225, %v4226
      %v4418 = vadd.f32 %v4417, %v4227
      %v4419 = vadd.f32 %v4418, %v4228
      %v4420 = vadd.f32 %v4419, %v4229
      %v4421 = vadd.f32 %v4420, %v4230
      %v4422 = vadd.f32 %v4421, %v4231
      %v4423 = vadd.f32 %v4422, %v4232
      %v4424 = vadd.f32 %v4423, %v4233
      %v4425 = vadd.f32 %v4424, %v4234
      %v4426 = vadd.f32 %v4425, %v4235
      %v4427 = vadd.f32 %v4426, %v4236
      %v4428 = vadd.f32 %v4427, %v4237
      %v4429 = vadd.f32 %v4428, %v4238
      %v4430 = vadd.f32 %v4429, %v4239
      %v4431 = vadd.f32 %v4430, %v4240
      %v4432 = vadd.f32 %v4431, %v4241
      %v4433 = vadd.f32 %v4432, %v4242
      %v4434 = vadd.f32 %v4433, %v4243
      %v4435 = vadd.f32 %v4434, %v4244
      %v4436 = vadd.f32 %v4435, %v4245
      %v4437 = vadd.f32 %v4436, %v4246
      %v4438 = vadd.f32 %v4437, %v4247
      %v4439 = vadd.f32 %v4438, %v4248
      %v4440 = vadd.f32 %v4439, %v4249
      %v4441 = vadd.f32 %v4440, %v4250
      %v4442 = vadd.f32 %v4441, %v4251
      %v4443 = vadd.f32 %v4442, %v4252
      %v4444 = vadd.f32 %v4443, %v4253
      %v4445 = vadd.f32 %v4444, %v4254
      %v4446 = vadd.f32 %v4445, %v4255
      %v4447 = vadd.f32 %v4446, %v4256
      %v4448 = vrot.slane %v4447, 4
      %v4449 = vadd.f32 %v4447, %v4448
      %v4450 = vrot.slane %v4449, 2
      %v4451 = vadd.f32 %v4449, %v4450
      %v4452 = vrot.slane %v4451, 1
      %v4453 = vadd.f32 %v4451, %v4452
      %4454 = vst [vmem:[%s235] sm:$0x1] %v4453
      %v4455 = vmul.f32 %v4225, %v4225
      %v4456 = vmul.f32 %v4226, %v4226
      %v4457 = vmul.f32 %v4227, %v4227
      %v4458 = vmul.f32 %v4228, %v4228
      %v4459 = vmul.f32 %v4229, %v4229
      %v4460 = vmul.f32 %v4230, %v4230
      %v4461 = vmul.f32 %v4231, %v4231
      %v4462 = vmul.f32 %v4232, %v4232
      %v4463 = vmul.f32 %v4233, %v4233
      %v4464 = vmul.f32 %v4234, %v4234
      %v4465 = vmul.f32 %v4235, %v4235
      %v4466 = vmul.f32 %v4236, %v4236
      %v4467 = vmul.f32 %v4237, %v4237
      %v4468 = vmul.f32 %v4238, %v4238
      %v4469 = vmul.f32 %v4239, %v4239
      %v4470 = vmul.f32 %v4240, %v4240
      %v4471 = vmul.f32 %v4241, %v4241
      %v4472 = vmul.f32 %v4242, %v4242
      %v4473 = vmul.f32 %v4243, %v4243
      %v4474 = vmul.f32 %v4244, %v4244
      %v4475 = vmul.f32 %v4245, %v4245
      %v4476 = vmul.f32 %v4246, %v4246
      %v4477 = vmul.f32 %v4247, %v4247
      %v4478 = vmul.f32 %v4248, %v4248
      %v4479 = vmul.f32 %v4249, %v4249
      %v4480 = vmul.f32 %v4250, %v4250
      %v4481 = vmul.f32 %v4251, %v4251
      %v4482 = vmul.f32 %v4252, %v4252
      %v4483 = vmul.f32 %v4253, %v4253
      %v4484 = vmul.f32 %v4254, %v4254
      %v4485 = vmul.f32 %v4255, %v4255
      %v4486 = vmul.f32 %v4256, %v4256
      %v4487 = vadd.f32 %v4455, %v4456
      %v4488 = vadd.f32 %v4487, %v4457
      %v4489 = vadd.f32 %v4488, %v4458
      %v4490 = vadd.f32 %v4489, %v4459
      %v4491 = vadd.f32 %v4490, %v4460
      %v4492 = vadd.f32 %v4491, %v4461
      %v4493 = vadd.f32 %v4492, %v4462
      %v4494 = vadd.f32 %v4493, %v4463
      %v4495 = vadd.f32 %v4494, %v4464
      %v4496 = vadd.f32 %v4495, %v4465
      %v4497 = vadd.f32 %v4496, %v4466
      %v4498 = vadd.f32 %v4497, %v4467
      %v4499 = vadd.f32 %v4498, %v4468
      %v4500 = vadd.f32 %v4499, %v4469
      %v4501 = vadd.f32 %v4500, %v4470
      %v4502 = vadd.f32 %v4501, %v4471
      %v4503 = vadd.f32 %v4502, %v4472
      %v4504 = vadd.f32 %v4503, %v4473
      %v4505 = vadd.f32 %v4504, %v4474
      %v4506 = vadd.f32 %v4505, %v4475
      %v4507 = vadd.f32 %v4506, %v4476
      %v4508 = vadd.f32 %v4507, %v4477
      %v4509 = vadd.f32 %v4508, %v4478
      %v4510 = vadd.f32 %v4509, %v4479
      %v4511 = vadd.f32 %v4510, %v4480
      %v4512 = vadd.f32 %v4511, %v4481
      %v4513 = vadd.f32 %v4512, %v4482
      %v4514 = vadd.f32 %v4513, %v4483
      %v4515 = vadd.f32 %v4514, %v4484
      %v4516 = vadd.f32 %v4515, %v4485
      %v4517 = vadd.f32 %v4516, %v4486
      %v4518 = vrot.slane %v4517, 4
      %v4519 = vadd.f32 %v4517, %v4518
      %v4520 = vrot.slane %v4519, 2
      %v4521 = vadd.f32 %v4519, %v4520
      %v4522 = vrot.slane %v4521, 1
      %v4523 = vadd.f32 %v4521, %v4522
      %4524 = vst [vmem:[%s235 + $0x1] sm:$0x1] %v4523
      %p4525 = scmp.lt.s32.totalorder %s17, 1
      %s4526 = scalar_select %p4525, %s17, 1
      %s4527 = smul.addr %s4526, 32
      %s4528 = smul.addr %s4527, 4
      %s4529 = scalar_lea.vmem %s4, %s4528
      %p4530 = scmp.lt.s32.totalorder %s17, 1
      %s4531 = scalar_select %p4530, %s17, 1
      %s4532 = smul.addr %s4531, 2
      %s4533 = scalar_lea.vmem %s5, %s4532
      // Predicated region
      $region37: #{bottleneck_forward.5} parent=35 // pred_check
        %p4534 = pneg %p124
      $region38: #{bottleneck_forward.5} parent=35 // pred_check_branch
        %4536 = sbr.rel (%p4534) target = $region40
      $region39: #{bottleneck_forward.5} parent=35 // pred_region
        _
      $region40: #{bottleneck_forward.5} parent=35 // pred_fallthru
        _
      // Predicated region
      $region41: #{bottleneck_forward.5} parent=35 // pred_check
        %p4537 = pneg %p150
      $region42: #{bottleneck_forward.5} parent=35 // pred_check_branch
        %4539 = sbr.rel (%p4537) target = $region44
      $region43: #{bottleneck_forward.5} parent=35 // pred_region
        _
      $region44: #{bottleneck_forward.5} parent=35 // pred_fallthru
        _
    $region36: #{bottleneck_forward.5} parent=5 // pred_fallthru
      _
    %p4540 = scmp.le.s32.totalorder 2, %s12
    // Predicated region
    $region45: #{bottleneck_forward.5} parent=5 // pred_check
      %p4541 = pneg %p4540
    $region46: #{bottleneck_forward.5} parent=5 // pred_check_branch
      %4543 = sbr.rel (%p4541) target = $region48
    $region47: #{bottleneck_forward.5} parent=5 // pred_region
      %s4544 = ssub.s32 %s12, 2
      // Predicated region
      $region49: #{bottleneck_forward.5} parent=47 // pred_check
        %p4545 = pneg %p130
      $region50: #{bottleneck_forward.5} parent=47 // pred_check_branch
        %4547 = sbr.rel (%p4545) target = $region52
      $region51: #{bottleneck_forward.5} parent=47 // pred_region
        %p4548 = scmp.lt.s32.totalorder %s18, 1
        %s4549 = scalar_select %p4548, %s18, 1
        %s4550 = smul.addr %s4549, 32
        %s4551 = smul.addr %s4550, 4
        %s4552 = scalar_lea.vmem %s4, %s4551
      $region52: #{bottleneck_forward.5} parent=47 // pred_fallthru
        _
      // Predicated region
      $region53: #{bottleneck_forward.5} parent=47 // pred_check
        %p4553 = pneg %p156
      $region54: #{bottleneck_forward.5} parent=47 // pred_check_branch
        %4555 = sbr.rel (%p4553) target = $region56
      $region55: #{bottleneck_forward.5} parent=47 // pred_region
        %p4556 = scmp.lt.s32.totalorder %s18, 1
        %s4557 = scalar_select %p4556, %s18, 1
        %s4558 = smul.addr %s4557, 2
        %s4559 = scalar_lea.vmem %s5, %s4558
      $region56: #{bottleneck_forward.5} parent=47 // pred_fallthru
        _
    $region48: #{bottleneck_forward.5} parent=5 // pred_fallthru
      _
  $region6: #{bottleneck_forward.5} parent=0 // loop_footer
    %s16 = sadd.s32 1, %s12
  $region7: #{bottleneck_forward.5} parent=0 // loop_footer_branch
    %11 = sbr.rel target = $region3
  $region8: #{bottleneck_forward.5} parent=0 // loop_exit
    _

</llo_original>
